<compile_context>
chip_gen: v5e
topology: v5e:2x2
jax: 0.10.0
libtpu: 0.0.40
codegen_flags: <defaults>
</compile_context>

<pallas_src>
import functools

import jax
import jax.numpy as jnp
import numpy as np
from jax.experimental import pallas as pl
from jax.experimental.pallas import tpu as pltpu


# ----------------------------------------------------------------------------
# helpers
# ----------------------------------------------------------------------------
def _round_up(x, m):
    return (x + m - 1) // m * m


def _m_tile(m):
    """M tile: whole array (rounded to 8 sublanes) when small, 256 otherwise."""
    if m <= 512:
        t = max(8, _round_up(m, 8))
        return t, t
    return 256, _round_up(m, 256)


def _sigmoid(x):
    return 1.0 / (1.0 + jnp.exp(-x))


def _lstm_gate_update(gates, c_prev, n):
    """gates: (rows, 4n) pre-activation ordered [i|f|o|g]; c_prev: (rows, n)."""
    i = _sigmoid(gates[:, 0 * n:1 * n])
    f = _sigmoid(gates[:, 1 * n:2 * n])
    o = _sigmoid(gates[:, 2 * n:3 * n])
    g = jnp.tanh(gates[:, 3 * n:4 * n])
    c_new = f * c_prev + i * g
    h_new = o * jnp.tanh(c_new)
    return h_new, c_new


# ----------------------------------------------------------------------------
# GEMM + bias + activation kernel (bf16 operands, f32 MXU accumulation)
# ----------------------------------------------------------------------------
def _mm_kernel(x_ref, w_ref, b_ref, o_ref, acc_ref, *, act):
    @pl.when(pl.program_id(1) == 0)
    def _():
        acc_ref[...] = jnp.zeros_like(acc_ref)

    acc_ref[...] += jnp.dot(x_ref[...], w_ref[...],
                            preferred_element_type=jnp.float32)
    y = acc_ref[...] + b_ref[...]
    if act == "tanh":
        y = jnp.tanh(y)
    o_ref[...] = y.astype(o_ref.dtype)


def matmul_bias_act(x, w, b, act="none"):
    """y = act(x @ w + b).  x:(M,K), w:(K,N), b:(N,).

    K and N are padded to multiples of 128 (lane-dense loads/stores), M is
    tiled only when large, K is tiled only when very large.  Elementwise math
    stays in f32."""
    M, K = x.shape
    K2, N = w.shape
    assert K == K2 and b.shape == (N,)
    TMl, Mp = _m_tile(M)
    Np = _round_up(N, 128)
    Kp = _round_up(K, 128)
    if Kp <= 4096:
        TK = Kp
    else:
        TK = 2048
        Kp = _round_up(K, TK)
    xp = jnp.pad(x.astype(jnp.float32),
                 ((0, Mp - M), (0, Kp - K))).astype(jnp.bfloat16)
    wp = jnp.pad(w.astype(jnp.float32),
                 ((0, Kp - K), (0, Np - N))).astype(jnp.bfloat16)
    bp = jnp.pad(b.astype(jnp.float32), (0, Np - N)).reshape(1, Np)
    out = pl.pallas_call(
        functools.partial(_mm_kernel, act=act),
        out_shape=jax.ShapeDtypeStruct((Mp, Np), jnp.float32),
        grid_spec=pltpu.PrefetchScalarGridSpec(
            num_scalar_prefetch=0,
            grid=(Mp // TMl, Kp // TK),
            in_specs=[
                pl.BlockSpec((TMl, TK), lambda i, k: (i, k)),
                pl.BlockSpec((TK, Np), lambda i, k: (k, 0)),
                pl.BlockSpec((1, Np), lambda i, k: (0, 0)),
            ],
            out_specs=pl.BlockSpec((TMl, Np), lambda i, k: (i, 0)),
            scratch_shapes=[pltpu.VMEM((TMl, Np), jnp.float32)],
        ),
        compiler_params=pltpu.CompilerParams(
            dimension_semantics=("parallel", "arbitrary")),
    )(xp, wp, bp)
    return out[:M, :N]


# ----------------------------------------------------------------------------
# Fused ConvLSTM recurrence: one pallas_call per layer, grid over time.
# The 3x3 recurrent conv is folded into a dense (H*W*hc, 4*H*W*hc) matrix,
# kept resident in VMEM (constant index_map), so every timestep is one small
# MXU matmul plus fused gate math, with h/c carried in VMEM scratch.
# ----------------------------------------------------------------------------
def _convlstm_step_kernel(xc_ref, d_ref, h_ref, h_st, c_st, *, n):
    @pl.when(pl.program_id(0) == 0)
    def _():
        h_st[...] = jnp.zeros_like(h_st)
        c_st[...] = jnp.zeros_like(c_st)

    gates = xc_ref[0] + jnp.dot(h_st[...].astype(jnp.bfloat16), d_ref[...],
                                preferred_element_type=jnp.float32)
    h_new, c_new = _lstm_gate_update(gates, c_st[...], n)
    h_st[...] = h_new
    c_st[...] = c_new
    h_ref[0] = h_new


def convlstm_recurrent(xc, d):
    """xc: (T, B, 4n) x-contribution (+bias), lanes ordered (gate, y, x, c);
    d: (n, 4n) dense recurrent weight.  Returns h sequence (T, B, n)."""
    T, B, four_n = xc.shape
    n = d.shape[0]
    assert four_n == 4 * n
    return pl.pallas_call(
        functools.partial(_convlstm_step_kernel, n=n),
        out_shape=jax.ShapeDtypeStruct((T, B, n), jnp.float32),
        grid_spec=pltpu.PrefetchScalarGridSpec(
            num_scalar_prefetch=0,
            grid=(T,),
            in_specs=[
                pl.BlockSpec((1, B, 4 * n), lambda t: (t, 0, 0)),
                pl.BlockSpec((n, 4 * n), lambda t: (0, 0)),  # resident weight
            ],
            out_specs=pl.BlockSpec((1, B, n), lambda t: (t, 0, 0)),
            scratch_shapes=[pltpu.VMEM((B, n), jnp.float32),
                            pltpu.VMEM((B, n), jnp.float32)],
        ),
        compiler_params=pltpu.CompilerParams(
            dimension_semantics=("arbitrary",)),
    )(xc.astype(jnp.float32), d.astype(jnp.bfloat16))


# Fallback fused pointwise kernel (only used when the dense recurrent matrix
# would be too large, i.e. big post-encoder spatial dims).
def _lstm_pointwise_kernel(g_ref, c_ref, h_out, c_out, *, n):
    h_new, c_new = _lstm_gate_update(g_ref[...], c_ref[...], n)
    h_out[...] = h_new
    c_out[...] = c_new


def lstm_pointwise(gates, c_prev):
    M, hc = c_prev.shape
    TMl, Mp = _m_tile(M)
    gp = jnp.pad(gates.astype(jnp.float32), ((0, Mp - M), (0, 0)))
    cp = jnp.pad(c_prev.astype(jnp.float32), ((0, Mp - M), (0, 0)))
    h, c = pl.pallas_call(
        functools.partial(_lstm_pointwise_kernel, n=hc),
        out_shape=(jax.ShapeDtypeStruct((Mp, hc), jnp.float32),
                   jax.ShapeDtypeStruct((Mp, hc), jnp.float32)),
        grid_spec=pltpu.PrefetchScalarGridSpec(
            num_scalar_prefetch=0,
            grid=(Mp // TMl,),
            in_specs=[pl.BlockSpec((TMl, 4 * hc), lambda i: (i, 0)),
                      pl.BlockSpec((TMl, hc), lambda i: (i, 0))],
            out_specs=(pl.BlockSpec((TMl, hc), lambda i: (i, 0)),
                       pl.BlockSpec((TMl, hc), lambda i: (i, 0))),
        ),
        compiler_params=pltpu.CompilerParams(
            dimension_semantics=("parallel",)),
    )(gp, cp)
    return h[:M], c[:M]


# ----------------------------------------------------------------------------
# Conv / ConvTranspose via im2col / col2im (index shuffling in XLA glue,
# all FLOPs in the Pallas GEMM kernel)
# ----------------------------------------------------------------------------
def im2col_nhwc(x, kh, kw, stride, padding=0):
    """x: (N,H,W,C) -> cols (N*OH*OW, kh*kw*C), columns ordered (ky, kx, c)."""
    if padding:
        x = jnp.pad(x, ((0, 0), (padding, padding), (padding, padding), (0, 0)))
    N, H, W, C = x.shape
    OH = (H - kh) // stride + 1
    OW = (W - kw) // stride + 1
    pieces = []
    for ky in range(kh):
        for kx in range(kw):
            pieces.append(x[:, ky:ky + (OH - 1) * stride + 1:stride,
                            kx:kx + (OW - 1) * stride + 1:stride, :])
    cols = jnp.concatenate(pieces, axis=-1)
    return cols.reshape(N * OH * OW, kh * kw * C), OH, OW


def conv2d(x, w_mat, b, kh, kw, stride, padding=0, act="none"):
    """NHWC conv via im2col + Pallas GEMM.  w_mat: (kh*kw*IC, OC)."""
    N = x.shape[0]
    cols, OH, OW = im2col_nhwc(x, kh, kw, stride, padding)
    y = matmul_bias_act(cols, w_mat, b, act=act)
    return y.reshape(N, OH, OW, -1)


def col2im_add_nhwc(y, N, H, W, OC, kh, kw, stride):
    """Adjoint of im2col (scatter-add of overlapping taps) for transposed conv.
    y: (N*H*W, OC*kh*kw), columns ordered (oc, ky, kx)."""
    OH = (H - 1) * stride + kh
    OW = (W - 1) * stride + kw
    y = y.reshape(N, H, W, OC, kh, kw)
    out = jnp.zeros((N, OH, OW, OC), jnp.float32)
    for ky in range(kh):
        for kx in range(kw):
            out = out.at[:, ky:ky + (H - 1) * stride + 1:stride,
                         kx:kx + (W - 1) * stride + 1:stride, :].add(
                             y[:, :, :, :, ky, kx])
    return out


def conv_transpose2d(x, w_mat, b, kh, kw, stride, act="none"):
    """NHWC transposed conv as lane-dense GEMM + col2im scatter-add (no
    zero-dilated input / im2col).  w_mat: PyTorch (IC,OC,kh,kw) -> (IC, OC*kh*kw)."""
    N, H, W, IC = x.shape
    OC = w_mat.shape[1] // (kh * kw)
    y = matmul_bias_act(x.reshape(N * H * W, IC), w_mat,
                        jnp.zeros((w_mat.shape[1],), jnp.float32), act="none")
    out = col2im_add_nhwc(y, N, H, W, OC, kh, kw, stride)
    out = out + b.reshape(1, 1, 1, OC)   # bias once per output element
    if act == "tanh":                    # tiny epilogue, left to XLA glue
        out = jnp.tanh(out)
    return out


# ----------------------------------------------------------------------------
# ConvLSTM (hidden_channels=[64, 32, 64], kernel=3, padding=1, batch_first)
# ----------------------------------------------------------------------------
def conv_lstm(frames, lstm_params, T, B):
    """frames: (T*B, H, W, C), rows ordered (t, b).  Returns same layout with
    the last layer's hidden channels."""
    for lp in lstm_params:
        _, H, W, _ = frames.shape
        hc = lp["b"].shape[0] // 4
        # Non-recurrent gate contribution (+ bias) for ALL timesteps: one GEMM.
        cols, _, _ = im2col_nhwc(frames, 3, 3, 1, padding=1)
        xc = matmul_bias_act(cols, lp["wx"], lp["b"], act="none")  # (T*B*H*W, 4hc)
        if lp["d"] is not None:
            n = H * W * hc
            assert lp["d"].shape[0] == n, "prepare_params frame size mismatch"
            xc = xc.reshape(T, B, H, W, 4, hc).transpose(0, 1, 4, 2, 3, 5)
            xc = xc.reshape(T, B, 4 * n)        # lanes ordered (gate, y, x, c)
            h_seq = convlstm_recurrent(xc, lp["d"])
            frames = h_seq.reshape(T * B, H, W, hc)
        else:
            # TODO(synk): large-spatial fallback keeps a python time loop
            # (im2col of h in glue + recurrent GEMM + fused pointwise kernel).
            xc = xc.reshape(T, B * H * W, 4 * hc)
            zero_b = jnp.zeros((4 * hc,), jnp.float32)
            h = jnp.zeros((B, H, W, hc), jnp.float32)
            c = jnp.zeros((B * H * W, hc), jnp.float32)
            outs = []
            for t in range(T):
                hcols, _, _ = im2col_nhwc(h, 3, 3, 1, padding=1)
                gates = xc[t] + matmul_bias_act(hcols, lp["wh"], zero_b)
                hf, c = lstm_pointwise(gates, c)
                h = hf.reshape(B, H, W, hc)
                outs.append(hf)
            frames = jnp.stack(outs, 0).reshape(T * B, H, W, hc)
    return frames


# ----------------------------------------------------------------------------
# Parameters (deterministic synthetic init) and one-time weight repacking
# ----------------------------------------------------------------------------
def init_params(key, in_channels=1):
    ks = jax.random.split(key, 14)

    def u(k, shape, fan_in):
        bound = 1.0 / float(fan_in) ** 0.5
        return jax.random.uniform(k, shape, jnp.float32, -bound, bound)

    p = {}
    p["conv1_w"] = u(ks[0], (128, in_channels, 11, 11), in_channels * 121)
    p["conv1_b"] = u(ks[1], (128,), in_channels * 121)
    p["conv2_w"] = u(ks[2], (64, 128, 5, 5), 128 * 25)
    p["conv2_b"] = u(ks[3], (64,), 128 * 25)
    hidden = [64, 32, 64]
    cins = [64, 64, 32]
    lstm = []
    for l, (cin, hc) in enumerate(zip(cins, hidden)):
        fan = (cin + hc) * 9
        lstm.append((u(ks[4 + 2 * l], (4 * hc, cin + hc, 3, 3), fan),
                     u(ks[5 + 2 * l], (4 * hc,), fan)))
    p["lstm"] = lstm
    p["deconv1_w"] = u(ks[10], (64, 128, 5, 5), 128 * 25)
    p["deconv1_b"] = u(ks[11], (128,), 128 * 25)
    p["deconv2_w"] = u(ks[12], (128, in_channels, 11, 11), in_channels * 121)
    p["deconv2_b"] = u(ks[13], (in_channels,), in_channels * 121)
    return p


def _dense_recurrent_matrix(w_h, H, W):
    """Fold the 3x3 (pad=1) recurrent conv into a dense matrix mapping the
    flattened hidden state (lanes (y,x,c)) to flattened gates (lanes (g,y,x,c))."""
    hc4, hci, kh, kw = w_h.shape
    hc = hc4 // 4
    D = np.zeros((H * W * hci, 4 * H * W * hc), np.float32)
    for dy in range(kh):
        for dx in range(kw):
            tap = w_h[:, :, dy, dx].T          # (hc_in, 4*hc), cols (gate, c_out)
            for y in range(H):
                yi = y + dy - 1
                if yi < 0 or yi >= H:
                    continue
                for x in range(W):
                    xi = x + dx - 1
                    if xi < 0 or xi >= W:
                        continue
                    r0 = (yi * W + xi) * hci
                    for g in range(4):
                        c0 = g * H * W * hc + (y * W + x) * hc
                        D[r0:r0 + hci, c0:c0 + hc] = tap[:, g * hc:(g + 1) * hc]
    return D


def prepare_params(p, frame_hw):
    """One-time host-side repack of PyTorch-layout weights into GEMM-friendly
    matrices: conv weights -> (kh*kw*IC, OC), deconv weights -> (IC, OC*kh*kw),
    ConvLSTM gate conv split into x-part matrix + dense recurrent matrix."""
    H0, W0 = frame_hw
    H1, W1 = (H0 - 11) // 4 + 1, (W0 - 11) // 4 + 1
    H2, W2 = (H1 - 5) // 2 + 1, (W1 - 5) // 2 + 1
    g = lambda a: np.asarray(jax.device_get(a), np.float32)
    q = {}
    w = g(p["conv1_w"])
    q["conv1_w"] = jnp.asarray(w.transpose(2, 3, 1, 0).reshape(-1, w.shape[0]))
    q["conv1_b"] = jnp.asarray(g(p["conv1_b"]))
    w = g(p["conv2_w"])
    q["conv2_w"] = jnp.asarray(w.transpose(2, 3, 1, 0).reshape(-1, w.shape[0]))
    q["conv2_b"] = jnp.asarray(g(p["conv2_b"]))
    lstm = []
    for wl, bl in p["lstm"]:
        wl, bl = g(wl), g(bl)
        hc = wl.shape[0] // 4
        cin = wl.shape[1] - hc
        wx = wl[:, :cin].transpose(2, 3, 1, 0).reshape(-1, 4 * hc)
        wh = wl[:, cin:].transpose(2, 3, 1, 0).reshape(-1, 4 * hc)
        if H2 * W2 * hc <= 1024:  # dense recurrent matrix fits easily in VMEM
            d = jnp.asarray(_dense_recurrent_matrix(wl[:, cin:], H2, W2))
        else:
            d = None
        lstm.append(dict(wx=jnp.asarray(wx), wh=jnp.asarray(wh),
                         b=jnp.asarray(bl), d=d))
    q["lstm"] = lstm
    w = g(p["deconv1_w"])
    q["deconv1_w"] = jnp.asarray(w.reshape(w.shape[0], -1))
    q["deconv1_b"] = jnp.asarray(g(p["deconv1_b"]))
    w = g(p["deconv2_w"])
    q["deconv2_w"] = jnp.asarray(w.reshape(w.shape[0], -1))
    q["deconv2_b"] = jnp.asarray(g(p["deconv2_b"]))
    return q


# ----------------------------------------------------------------------------
# Forward pass
# ----------------------------------------------------------------------------
def video_autoencoder_lstm(x, q):
    """x: (B, T, C, H, W) -> (B, T, C, OH, OW)."""
    B, T, C, H, W = x.shape
    # t-major NHWC frames so per-timestep ConvLSTM blocks are contiguous rows.
    frames = x.transpose(1, 0, 3, 4, 2).reshape(T * B, H, W, C)
    # conv encoder
    frames = conv2d(frames, q["conv1_w"], q["conv1_b"], 11, 11, stride=4,
                    act="tanh")
    frames = conv2d(frames, q["conv2_w"], q["conv2_b"], 5, 5, stride=2,
                    act="none")
    # ConvLSTM encoder/decoder (eval mode: dropout omitted)
    frames = conv_lstm(frames, q["lstm"], T, B)
    # deconv decoder
    frames = conv_transpose2d(frames, q["deconv1_w"], q["deconv1_b"], 5, 5,
                              stride=2, act="tanh")
    frames = conv_transpose2d(frames, q["deconv2_w"], q["deconv2_b"], 11, 11,
                              stride=4, act="tanh")
    TB, OH, OW, OC = frames.shape
    return frames.reshape(T, B, OH, OW, OC).transpose(1, 0, 4, 2, 3)


if __name__ == "__main__":
    key = jax.random.PRNGKey(0)
    pkey, xkey = jax.random.split(key)
    params = init_params(pkey, in_channels=1)
    prepared = prepare_params(params, frame_hw=(36, 36))
    # B=2, T=2, C=1, H=W=36  ->  encoder feature maps (T*B, 2, 2, 64)
    x = jax.random.normal(xkey, (2, 2, 1, 36, 36), jnp.float32)
    fwd = jax.jit(video_autoencoder_lstm)
    y = fwd(x, prepared)
    jax.block_until_ready(y)
    assert y.shape == (2, 2, 1, 35, 35), y.shape
    print("KERNEL_OK")
</pallas_src>

<mosaic_0001>
module attributes {stable_mosaic.version = 11 : i64} {
  func.func @_mm_kernel(%arg0: i32, %arg1: i32, %arg2: memref<200x128xbf16, #tpu.memory_space<vmem>>, %arg3: memref<128x128xbf16, #tpu.memory_space<vmem>>, %arg4: memref<1x128xf32, #tpu.memory_space<vmem>>, %arg5: memref<200x128xf32, #tpu.memory_space<vmem>>, %arg6: memref<200x128xf32, #tpu.memory_space<vmem>>) attributes {dimension_semantics = [#tpu.dimension_semantics<parallel>, #tpu.dimension_semantics<arbitrary>], iteration_bounds = array<i64: 1, 1>, scalar_prefetch = 0 : i64, scratch_operands = 1 : i64, tpu.core_type = #tpu.core_type<tc>, window_params = [{transform_indices = @transform_0, window_bounds = array<i64: 200, 128>}, {transform_indices = @transform_1, window_bounds = array<i64: 128, 128>}, {pipeline_mode = #tpu.pipeline_mode<synchronous>, transform_indices = @transform_2, window_bounds = array<i64: 1, 128>}, {transform_indices = @transform_3, window_bounds = array<i64: 200, 128>}]} {
    %c0_i32 = arith.constant 0 : i32
    %0 = arith.cmpi eq, %arg1, %c0_i32 : i32
    %1 = arith.extui %0 : i1 to i32
    %c0_i32_0 = arith.constant 0 : i32
    %2 = arith.cmpi ne, %1, %c0_i32_0 : i32
    scf.if %2 {
      %cst_14 = arith.constant 0.000000e+00 : f32
      %15 = vector.broadcast %cst_14 : f32 to vector<200x128xf32>
      %c0_15 = arith.constant 0 : index
      %c0_16 = arith.constant 0 : index
      %16 = vector.load %arg6[%c0_15, %c0_16] : memref<200x128xf32, #tpu.memory_space<vmem>>, vector<200x128xf32>
      tpu.vector_store %arg6[%c0_15, %c0_16], %15 {strides = array<i32>} : memref<200x128xf32, #tpu.memory_space<vmem>>, vector<200x128xf32>,
    } else {
    }
    %c0 = arith.constant 0 : index
    %c0_1 = arith.constant 0 : index
    %3 = vector.load %arg6[%c0, %c0_1] : memref<200x128xf32, #tpu.memory_space<vmem>>, vector<200x128xf32>
    %c0_2 = arith.constant 0 : index
    %c0_3 = arith.constant 0 : index
    %4 = vector.load %arg2[%c0_2, %c0_3] : memref<200x128xbf16, #tpu.memory_space<vmem>>, vector<200x128xbf16>
    %c0_4 = arith.constant 0 : index
    %c0_5 = arith.constant 0 : index
    %5 = vector.load %arg3[%c0_4, %c0_5] : memref<128x128xbf16, #tpu.memory_space<vmem>>, vector<128x128xbf16>
    %cst = arith.constant dense<0.000000e+00> : vector<200x128xf32>
    %6 = tpu.matmul %4, %5, %cst {dimension_numbers = #tpu.dot_dimension_numbers<[1], [0], [0], [1], [0, 0, 1, 1], [], []>} : vector<200x128xbf16>, vector<128x128xbf16>, vector<200x128xf32> -> vector<200x128xf32>
    %7 = arith.addf %3, %6 : vector<200x128xf32>
    %c0_6 = arith.constant 0 : index
    %c0_7 = arith.constant 0 : index
    %8 = vector.load %arg6[%c0_6, %c0_7] : memref<200x128xf32, #tpu.memory_space<vmem>>, vector<200x128xf32>
    tpu.vector_store %arg6[%c0_6, %c0_7], %7 {strides = array<i32>} : memref<200x128xf32, #tpu.memory_space<vmem>>, vector<200x128xf32>,
    %c0_8 = arith.constant 0 : index
    %c0_9 = arith.constant 0 : index
    %9 = vector.load %arg6[%c0_8, %c0_9] : memref<200x128xf32, #tpu.memory_space<vmem>>, vector<200x128xf32>
    %c0_10 = arith.constant 0 : index
    %c0_11 = arith.constant 0 : index
    %10 = vector.load %arg4[%c0_10, %c0_11] : memref<1x128xf32, #tpu.memory_space<vmem>>, vector<1x128xf32>
    %11 = vector.broadcast %10 : vector<1x128xf32> to vector<200x128xf32>
    %12 = arith.addf %9, %11 : vector<200x128xf32>
    %13 = math.tanh %12 : vector<200x128xf32>
    %c0_12 = arith.constant 0 : index
    %c0_13 = arith.constant 0 : index
    %14 = vector.load %arg5[%c0_12, %c0_13] : memref<200x128xf32, #tpu.memory_space<vmem>>, vector<200x128xf32>
    tpu.vector_store %arg5[%c0_12, %c0_13], %13 {strides = array<i32>} : memref<200x128xf32, #tpu.memory_space<vmem>>, vector<200x128xf32>,
    return
  }
  func.func @transform_0(%arg0: i32, %arg1: i32) -> (i32, i32) {
    %c0_i32 = arith.constant 0 : i32
    return %arg0, %arg1 : i32, i32
  }
  func.func @transform_1(%arg0: i32, %arg1: i32) -> (i32, i32) {
    %c0_i32 = arith.constant 0 : i32
    %c0_i32_0 = arith.constant 0 : i32
    return %arg1, %c0_i32 : i32, i32
  }
  func.func @transform_2(%arg0: i32, %arg1: i32) -> (i32, i32) {
    %c0_i32 = arith.constant 0 : i32
    %c0_i32_0 = arith.constant 0 : i32
    %c0_i32_1 = arith.constant 0 : i32
    return %c0_i32, %c0_i32_0 : i32, i32
  }
  func.func @transform_3(%arg0: i32, %arg1: i32) -> (i32, i32) {
    %c0_i32 = arith.constant 0 : i32
    %c0_i32_0 = arith.constant 0 : i32
    return %arg0, %c0_i32 : i32, i32
  }
}

module attributes {stable_mosaic.version = 11 : i64} {
  func.func @_mm_kernel(%arg0: i32, %arg1: i32, %arg2: memref<16x3200xbf16, #tpu.memory_space<vmem>>, %arg3: memref<3200x128xbf16, #tpu.memory_space<vmem>>, %arg4: memref<1x128xf32, #tpu.memory_space<vmem>>, %arg5: memref<16x128xf32, #tpu.memory_space<vmem>>, %arg6: memref<16x128xf32, #tpu.memory_space<vmem>>) attributes {dimension_semantics = [#tpu.dimension_semantics<parallel>, #tpu.dimension_semantics<arbitrary>], iteration_bounds = array<i64: 1, 1>, scalar_prefetch = 0 : i64, scratch_operands = 1 : i64, tpu.core_type = #tpu.core_type<tc>, window_params = [{transform_indices = @transform_0, window_bounds = array<i64: 16, 3200>}, {transform_indices = @transform_1, window_bounds = array<i64: 3200, 128>}, {pipeline_mode = #tpu.pipeline_mode<synchronous>, transform_indices = @transform_2, window_bounds = array<i64: 1, 128>}, {transform_indices = @transform_3, window_bounds = array<i64: 16, 128>}]} {
    %c0_i32 = arith.constant 0 : i32
    %0 = arith.cmpi eq, %arg1, %c0_i32 : i32
    %1 = arith.extui %0 : i1 to i32
    %c0_i32_0 = arith.constant 0 : i32
    %2 = arith.cmpi ne, %1, %c0_i32_0 : i32
    scf.if %2 {
      %cst_14 = arith.constant 0.000000e+00 : f32
      %14 = vector.broadcast %cst_14 : f32 to vector<16x128xf32>
      %c0_15 = arith.constant 0 : index
      %c0_16 = arith.constant 0 : index
      %15 = vector.load %arg6[%c0_15, %c0_16] : memref<16x128xf32, #tpu.memory_space<vmem>>, vector<16x128xf32>
      tpu.vector_store %arg6[%c0_15, %c0_16], %14 {strides = array<i32>} : memref<16x128xf32, #tpu.memory_space<vmem>>, vector<16x128xf32>,
    } else {
    }
    %c0 = arith.constant 0 : index
    %c0_1 = arith.constant 0 : index
    %3 = vector.load %arg6[%c0, %c0_1] : memref<16x128xf32, #tpu.memory_space<vmem>>, vector<16x128xf32>
    %c0_2 = arith.constant 0 : index
    %c0_3 = arith.constant 0 : index
    %4 = vector.load %arg2[%c0_2, %c0_3] : memref<16x3200xbf16, #tpu.memory_space<vmem>>, vector<16x3200xbf16>
    %c0_4 = arith.constant 0 : index
    %c0_5 = arith.constant 0 : index
    %5 = vector.load %arg3[%c0_4, %c0_5] : memref<3200x128xbf16, #tpu.memory_space<vmem>>, vector<3200x128xbf16>
    %cst = arith.constant dense<0.000000e+00> : vector<16x128xf32>
    %6 = tpu.matmul %4, %5, %cst {dimension_numbers = #tpu.dot_dimension_numbers<[1], [0], [0], [1], [0, 0, 1, 1], [], []>} : vector<16x3200xbf16>, vector<3200x128xbf16>, vector<16x128xf32> -> vector<16x128xf32>
    %7 = arith.addf %3, %6 : vector<16x128xf32>
    %c0_6 = arith.constant 0 : index
    %c0_7 = arith.constant 0 : index
    %8 = vector.load %arg6[%c0_6, %c0_7] : memref<16x128xf32, #tpu.memory_space<vmem>>, vector<16x128xf32>
    tpu.vector_store %arg6[%c0_6, %c0_7], %7 {strides = array<i32>} : memref<16x128xf32, #tpu.memory_space<vmem>>, vector<16x128xf32>,
    %c0_8 = arith.constant 0 : index
    %c0_9 = arith.constant 0 : index
    %9 = vector.load %arg6[%c0_8, %c0_9] : memref<16x128xf32, #tpu.memory_space<vmem>>, vector<16x128xf32>
    %c0_10 = arith.constant 0 : index
    %c0_11 = arith.constant 0 : index
    %10 = vector.load %arg4[%c0_10, %c0_11] : memref<1x128xf32, #tpu.memory_space<vmem>>, vector<1x128xf32>
    %11 = vector.broadcast %10 : vector<1x128xf32> to vector<16x128xf32>
    %12 = arith.addf %9, %11 : vector<16x128xf32>
    %c0_12 = arith.constant 0 : index
    %c0_13 = arith.constant 0 : index
    %13 = vector.load %arg5[%c0_12, %c0_13] : memref<16x128xf32, #tpu.memory_space<vmem>>, vector<16x128xf32>
    tpu.vector_store %arg5[%c0_12, %c0_13], %12 {strides = array<i32>} : memref<16x128xf32, #tpu.memory_space<vmem>>, vector<16x128xf32>,
    return
  }
  func.func @transform_0(%arg0: i32, %arg1: i32) -> (i32, i32) {
    %c0_i32 = arith.constant 0 : i32
    return %arg0, %arg1 : i32, i32
  }
  func.func @transform_1(%arg0: i32, %arg1: i32) -> (i32, i32) {
    %c0_i32 = arith.constant 0 : i32
    %c0_i32_0 = arith.constant 0 : i32
    return %arg1, %c0_i32 : i32, i32
  }
  func.func @transform_2(%arg0: i32, %arg1: i32) -> (i32, i32) {
    %c0_i32 = arith.constant 0 : i32
    %c0_i32_0 = arith.constant 0 : i32
    %c0_i32_1 = arith.constant 0 : i32
    return %c0_i32, %c0_i32_0 : i32, i32
  }
  func.func @transform_3(%arg0: i32, %arg1: i32) -> (i32, i32) {
    %c0_i32 = arith.constant 0 : i32
    %c0_i32_0 = arith.constant 0 : i32
    return %arg0, %c0_i32 : i32, i32
  }
}

module attributes {stable_mosaic.version = 11 : i64} {
  func.func @_mm_kernel(%arg0: i32, %arg1: i32, %arg2: memref<16x640xbf16, #tpu.memory_space<vmem>>, %arg3: memref<640x256xbf16, #tpu.memory_space<vmem>>, %arg4: memref<1x256xf32, #tpu.memory_space<vmem>>, %arg5: memref<16x256xf32, #tpu.memory_space<vmem>>, %arg6: memref<16x256xf32, #tpu.memory_space<vmem>>) attributes {dimension_semantics = [#tpu.dimension_semantics<parallel>, #tpu.dimension_semantics<arbitrary>], iteration_bounds = array<i64: 1, 1>, scalar_prefetch = 0 : i64, scratch_operands = 1 : i64, tpu.core_type = #tpu.core_type<tc>, window_params = [{transform_indices = @transform_0, window_bounds = array<i64: 16, 640>}, {transform_indices = @transform_1, window_bounds = array<i64: 640, 256>}, {pipeline_mode = #tpu.pipeline_mode<synchronous>, transform_indices = @transform_2, window_bounds = array<i64: 1, 256>}, {transform_indices = @transform_3, window_bounds = array<i64: 16, 256>}]} {
    %c0_i32 = arith.constant 0 : i32
    %0 = arith.cmpi eq, %arg1, %c0_i32 : i32
    %1 = arith.extui %0 : i1 to i32
    %c0_i32_0 = arith.constant 0 : i32
    %2 = arith.cmpi ne, %1, %c0_i32_0 : i32
    scf.if %2 {
      %cst_14 = arith.constant 0.000000e+00 : f32
      %14 = vector.broadcast %cst_14 : f32 to vector<16x256xf32>
      %c0_15 = arith.constant 0 : index
      %c0_16 = arith.constant 0 : index
      %15 = vector.load %arg6[%c0_15, %c0_16] : memref<16x256xf32, #tpu.memory_space<vmem>>, vector<16x256xf32>
      tpu.vector_store %arg6[%c0_15, %c0_16], %14 {strides = array<i32>} : memref<16x256xf32, #tpu.memory_space<vmem>>, vector<16x256xf32>,
    } else {
    }
    %c0 = arith.constant 0 : index
    %c0_1 = arith.constant 0 : index
    %3 = vector.load %arg6[%c0, %c0_1] : memref<16x256xf32, #tpu.memory_space<vmem>>, vector<16x256xf32>
    %c0_2 = arith.constant 0 : index
    %c0_3 = arith.constant 0 : index
    %4 = vector.load %arg2[%c0_2, %c0_3] : memref<16x640xbf16, #tpu.memory_space<vmem>>, vector<16x640xbf16>
    %c0_4 = arith.constant 0 : index
    %c0_5 = arith.constant 0 : index
    %5 = vector.load %arg3[%c0_4, %c0_5] : memref<640x256xbf16, #tpu.memory_space<vmem>>, vector<640x256xbf16>
    %cst = arith.constant dense<0.000000e+00> : vector<16x256xf32>
    %6 = tpu.matmul %4, %5, %cst {dimension_numbers = #tpu.dot_dimension_numbers<[1], [0], [0], [1], [0, 0, 1, 1], [], []>} : vector<16x640xbf16>, vector<640x256xbf16>, vector<16x256xf32> -> vector<16x256xf32>
    %7 = arith.addf %3, %6 : vector<16x256xf32>
    %c0_6 = arith.constant 0 : index
    %c0_7 = arith.constant 0 : index
    %8 = vector.load %arg6[%c0_6, %c0_7] : memref<16x256xf32, #tpu.memory_space<vmem>>, vector<16x256xf32>
    tpu.vector_store %arg6[%c0_6, %c0_7], %7 {strides = array<i32>} : memref<16x256xf32, #tpu.memory_space<vmem>>, vector<16x256xf32>,
    %c0_8 = arith.constant 0 : index
    %c0_9 = arith.constant 0 : index
    %9 = vector.load %arg6[%c0_8, %c0_9] : memref<16x256xf32, #tpu.memory_space<vmem>>, vector<16x256xf32>
    %c0_10 = arith.constant 0 : index
    %c0_11 = arith.constant 0 : index
    %10 = vector.load %arg4[%c0_10, %c0_11] : memref<1x256xf32, #tpu.memory_space<vmem>>, vector<1x256xf32>
    %11 = vector.broadcast %10 : vector<1x256xf32> to vector<16x256xf32>
    %12 = arith.addf %9, %11 : vector<16x256xf32>
    %c0_12 = arith.constant 0 : index
    %c0_13 = arith.constant 0 : index
    %13 = vector.load %arg5[%c0_12, %c0_13] : memref<16x256xf32, #tpu.memory_space<vmem>>, vector<16x256xf32>
    tpu.vector_store %arg5[%c0_12, %c0_13], %12 {strides = array<i32>} : memref<16x256xf32, #tpu.memory_space<vmem>>, vector<16x256xf32>,
    return
  }
  func.func @transform_0(%arg0: i32, %arg1: i32) -> (i32, i32) {
    %c0_i32 = arith.constant 0 : i32
    return %arg0, %arg1 : i32, i32
  }
  func.func @transform_1(%arg0: i32, %arg1: i32) -> (i32, i32) {
    %c0_i32 = arith.constant 0 : i32
    %c0_i32_0 = arith.constant 0 : i32
    return %arg1, %c0_i32 : i32, i32
  }
  func.func @transform_2(%arg0: i32, %arg1: i32) -> (i32, i32) {
    %c0_i32 = arith.constant 0 : i32
    %c0_i32_0 = arith.constant 0 : i32
    %c0_i32_1 = arith.constant 0 : i32
    return %c0_i32, %c0_i32_0 : i32, i32
  }
  func.func @transform_3(%arg0: i32, %arg1: i32) -> (i32, i32) {
    %c0_i32 = arith.constant 0 : i32
    %c0_i32_0 = arith.constant 0 : i32
    return %arg0, %c0_i32 : i32, i32
  }
}

module attributes {stable_mosaic.version = 11 : i64} {
  func.func @_convlstm_step_kernel(%arg0: i32, %arg1: memref<1x2x1024xf32, #tpu.memory_space<vmem>>, %arg2: memref<256x1024xbf16, #tpu.memory_space<vmem>>, %arg3: memref<1x2x256xf32, #tpu.memory_space<vmem>>, %arg4: memref<2x256xf32, #tpu.memory_space<vmem>>, %arg5: memref<2x256xf32, #tpu.memory_space<vmem>>) attributes {dimension_semantics = [#tpu.dimension_semantics<arbitrary>], iteration_bounds = array<i64: 2>, scalar_prefetch = 0 : i64, scratch_operands = 2 : i64, tpu.core_type = #tpu.core_type<tc>, window_params = [{transform_indices = @transform_0, window_bounds = array<i64: 1, 2, 1024>}, {pipeline_mode = #tpu.pipeline_mode<synchronous>, transform_indices = @transform_1, window_bounds = array<i64: 256, 1024>}, {transform_indices = @transform_2, window_bounds = array<i64: 1, 2, 256>}]} {
    %c0_i32 = arith.constant 0 : i32
    %0 = arith.cmpi eq, %arg0, %c0_i32 : i32
    %1 = arith.extui %0 : i1 to i32
    %c0_i32_0 = arith.constant 0 : i32
    %2 = arith.cmpi ne, %1, %c0_i32_0 : i32
    scf.if %2 {
      %cst_25 = arith.constant 0.000000e+00 : f32
      %47 = vector.broadcast %cst_25 : f32 to vector<2x256xf32>
      %c0_26 = arith.constant 0 : index
      %c0_27 = arith.constant 0 : index
      %48 = vector.load %arg4[%c0_26, %c0_27] : memref<2x256xf32, #tpu.memory_space<vmem>>, vector<2x256xf32>
      tpu.vector_store %arg4[%c0_26, %c0_27], %47 {strides = array<i32>} : memref<2x256xf32, #tpu.memory_space<vmem>>, vector<2x256xf32>,
      %cst_28 = arith.constant 0.000000e+00 : f32
      %49 = vector.broadcast %cst_28 : f32 to vector<2x256xf32>
      %c0_29 = arith.constant 0 : index
      %c0_30 = arith.constant 0 : index
      %50 = vector.load %arg5[%c0_29, %c0_30] : memref<2x256xf32, #tpu.memory_space<vmem>>, vector<2x256xf32>
      tpu.vector_store %arg5[%c0_29, %c0_30], %49 {strides = array<i32>} : memref<2x256xf32, #tpu.memory_space<vmem>>, vector<2x256xf32>,
    } else {
    }
    %c0 = arith.constant 0 : index
    %c0_1 = arith.constant 0 : index
    %c0_2 = arith.constant 0 : index
    %3 = vector.load %arg1[%c0, %c0_1, %c0_2] : memref<1x2x1024xf32, #tpu.memory_space<vmem>>, vector<1x2x1024xf32>
    %4 = vector.shape_cast %3 : vector<1x2x1024xf32> to vector<2x1024xf32>
    %c0_3 = arith.constant 0 : index
    %c0_4 = arith.constant 0 : index
    %5 = vector.load %arg4[%c0_3, %c0_4] : memref<2x256xf32, #tpu.memory_space<vmem>>, vector<2x256xf32>
    %6 = arith.truncf %5 : vector<2x256xf32> to vector<2x256xbf16>
    %c0_5 = arith.constant 0 : index
    %c0_6 = arith.constant 0 : index
    %7 = vector.load %arg2[%c0_5, %c0_6] : memref<256x1024xbf16, #tpu.memory_space<vmem>>, vector<256x1024xbf16>
    %cst = arith.constant dense<0.000000e+00> : vector<2x1024xf32>
    %8 = tpu.matmul %6, %7, %cst {dimension_numbers = #tpu.dot_dimension_numbers<[1], [0], [0], [1], [0, 0, 1, 1], [], []>} : vector<2x256xbf16>, vector<256x1024xbf16>, vector<2x1024xf32> -> vector<2x1024xf32>
    %9 = arith.addf %4, %8 : vector<2x1024xf32>
    %c0_7 = arith.constant 0 : index
    %c0_8 = arith.constant 0 : index
    %10 = vector.load %arg5[%c0_7, %c0_8] : memref<2x256xf32, #tpu.memory_space<vmem>>, vector<2x256xf32>
    %11 = vector.extract_strided_slice %9 {offsets = [0, 0], sizes = [2, 256], strides = [1, 1]} : vector<2x1024xf32> to vector<2x256xf32>
    %cst_9 = arith.constant 0.000000e+00 : f32
    %12 = vector.broadcast %cst_9 : f32 to vector<2x256xf32>
    %13 = arith.subf %12, %11 : vector<2x256xf32>
    %14 = math.exp %13 : vector<2x256xf32>
    %cst_10 = arith.constant 1.000000e+00 : f32
    %15 = vector.broadcast %cst_10 : f32 to vector<2x256xf32>
    %16 = arith.addf %15, %14 : vector<2x256xf32>
    %cst_11 = arith.constant 1.000000e+00 : f32
    %17 = vector.broadcast %cst_11 : f32 to vector<2x256xf32>
    %18 = arith.divf %17, %16 : vector<2x256xf32>
    %19 = vector.extract_strided_slice %9 {offsets = [0, 256], sizes = [2, 256], strides = [1, 1]} : vector<2x1024xf32> to vector<2x256xf32>
    %cst_12 = arith.constant 0.000000e+00 : f32
    %20 = vector.broadcast %cst_12 : f32 to vector<2x256xf32>
    %21 = arith.subf %20, %19 : vector<2x256xf32>
    %22 = math.exp %21 : vector<2x256xf32>
    %cst_13 = arith.constant 1.000000e+00 : f32
    %23 = vector.broadcast %cst_13 : f32 to vector<2x256xf32>
    %24 = arith.addf %23, %22 : vector<2x256xf32>
    %cst_14 = arith.constant 1.000000e+00 : f32
    %25 = vector.broadcast %cst_14 : f32 to vector<2x256xf32>
    %26 = arith.divf %25, %24 : vector<2x256xf32>
    %27 = vector.extract_strided_slice %9 {offsets = [0, 512], sizes = [2, 256], strides = [1, 1]} : vector<2x1024xf32> to vector<2x256xf32>
    %cst_15 = arith.constant 0.000000e+00 : f32
    %28 = vector.broadcast %cst_15 : f32 to vector<2x256xf32>
    %29 = arith.subf %28, %27 : vector<2x256xf32>
    %30 = math.exp %29 : vector<2x256xf32>
    %cst_16 = arith.constant 1.000000e+00 : f32
    %31 = vector.broadcast %cst_16 : f32 to vector<2x256xf32>
    %32 = arith.addf %31, %30 : vector<2x256xf32>
    %cst_17 = arith.constant 1.000000e+00 : f32
    %33 = vector.broadcast %cst_17 : f32 to vector<2x256xf32>
    %34 = arith.divf %33, %32 : vector<2x256xf32>
    %35 = vector.extract_strided_slice %9 {offsets = [0, 768], sizes = [2, 256], strides = [1, 1]} : vector<2x1024xf32> to vector<2x256xf32>
    %36 = math.tanh %35 : vector<2x256xf32>
    %37 = arith.mulf %26, %10 : vector<2x256xf32>
    %38 = arith.mulf %18, %36 : vector<2x256xf32>
    %39 = arith.addf %37, %38 : vector<2x256xf32>
    %40 = math.tanh %39 : vector<2x256xf32>
    %41 = arith.mulf %34, %40 : vector<2x256xf32>
    %c0_18 = arith.constant 0 : index
    %c0_19 = arith.constant 0 : index
    %42 = vector.load %arg4[%c0_18, %c0_19] : memref<2x256xf32, #tpu.memory_space<vmem>>, vector<2x256xf32>
    tpu.vector_store %arg4[%c0_18, %c0_19], %41 {strides = array<i32>} : memref<2x256xf32, #tpu.memory_space<vmem>>, vector<2x256xf32>,
    %c0_20 = arith.constant 0 : index
    %c0_21 = arith.constant 0 : index
    %43 = vector.load %arg5[%c0_20, %c0_21] : memref<2x256xf32, #tpu.memory_space<vmem>>, vector<2x256xf32>
    tpu.vector_store %arg5[%c0_20, %c0_21], %39 {strides = array<i32>} : memref<2x256xf32, #tpu.memory_space<vmem>>, vector<2x256xf32>,
    %c0_22 = arith.constant 0 : index
    %c0_23 = arith.constant 0 : index
    %c0_24 = arith.constant 0 : index
    %44 = vector.load %arg3[%c0_22, %c0_23, %c0_24] : memref<1x2x256xf32, #tpu.memory_space<vmem>>, vector<1x2x256xf32>
    %45 = vector.shape_cast %44 : vector<1x2x256xf32> to vector<2x256xf32>
    %46 = vector.shape_cast %41 : vector<2x256xf32> to vector<1x2x256xf32>
    tpu.vector_store %arg3[%c0_22, %c0_23, %c0_24], %46 {strides = array<i32>} : memref<1x2x256xf32, #tpu.memory_space<vmem>>, vector<1x2x256xf32>,
    return
  }
  func.func @transform_0(%arg0: i32) -> (i32, i32, i32) {
    %c0_i32 = arith.constant 0 : i32
    %c0_i32_0 = arith.constant 0 : i32
    %c0_i32_1 = arith.constant 0 : i32
    return %arg0, %c0_i32, %c0_i32_0 : i32, i32, i32
  }
  func.func @transform_1(%arg0: i32) -> (i32, i32) {
    %c0_i32 = arith.constant 0 : i32
    %c0_i32_0 = arith.constant 0 : i32
    %c0_i32_1 = arith.constant 0 : i32
    return %c0_i32, %c0_i32_0 : i32, i32
  }
  func.func @transform_2(%arg0: i32) -> (i32, i32, i32) {
    %c0_i32 = arith.constant 0 : i32
    %c0_i32_0 = arith.constant 0 : i32
    %c0_i32_1 = arith.constant 0 : i32
    return %arg0, %c0_i32, %c0_i32_0 : i32, i32, i32
  }
}

module attributes {stable_mosaic.version = 11 : i64} {
  func.func @_mm_kernel(%arg0: i32, %arg1: i32, %arg2: memref<16x640xbf16, #tpu.memory_space<vmem>>, %arg3: memref<640x128xbf16, #tpu.memory_space<vmem>>, %arg4: memref<1x128xf32, #tpu.memory_space<vmem>>, %arg5: memref<16x128xf32, #tpu.memory_space<vmem>>, %arg6: memref<16x128xf32, #tpu.memory_space<vmem>>) attributes {dimension_semantics = [#tpu.dimension_semantics<parallel>, #tpu.dimension_semantics<arbitrary>], iteration_bounds = array<i64: 1, 1>, scalar_prefetch = 0 : i64, scratch_operands = 1 : i64, tpu.core_type = #tpu.core_type<tc>, window_params = [{transform_indices = @transform_0, window_bounds = array<i64: 16, 640>}, {transform_indices = @transform_1, window_bounds = array<i64: 640, 128>}, {pipeline_mode = #tpu.pipeline_mode<synchronous>, transform_indices = @transform_2, window_bounds = array<i64: 1, 128>}, {transform_indices = @transform_3, window_bounds = array<i64: 16, 128>}]} {
    %c0_i32 = arith.constant 0 : i32
    %0 = arith.cmpi eq, %arg1, %c0_i32 : i32
    %1 = arith.extui %0 : i1 to i32
    %c0_i32_0 = arith.constant 0 : i32
    %2 = arith.cmpi ne, %1, %c0_i32_0 : i32
    scf.if %2 {
      %cst_14 = arith.constant 0.000000e+00 : f32
      %14 = vector.broadcast %cst_14 : f32 to vector<16x128xf32>
      %c0_15 = arith.constant 0 : index
      %c0_16 = arith.constant 0 : index
      %15 = vector.load %arg6[%c0_15, %c0_16] : memref<16x128xf32, #tpu.memory_space<vmem>>, vector<16x128xf32>
      tpu.vector_store %arg6[%c0_15, %c0_16], %14 {strides = array<i32>} : memref<16x128xf32, #tpu.memory_space<vmem>>, vector<16x128xf32>,
    } else {
    }
    %c0 = arith.constant 0 : index
    %c0_1 = arith.constant 0 : index
    %3 = vector.load %arg6[%c0, %c0_1] : memref<16x128xf32, #tpu.memory_space<vmem>>, vector<16x128xf32>
    %c0_2 = arith.constant 0 : index
    %c0_3 = arith.constant 0 : index
    %4 = vector.load %arg2[%c0_2, %c0_3] : memref<16x640xbf16, #tpu.memory_space<vmem>>, vector<16x640xbf16>
    %c0_4 = arith.constant 0 : index
    %c0_5 = arith.constant 0 : index
    %5 = vector.load %arg3[%c0_4, %c0_5] : memref<640x128xbf16, #tpu.memory_space<vmem>>, vector<640x128xbf16>
    %cst = arith.constant dense<0.000000e+00> : vector<16x128xf32>
    %6 = tpu.matmul %4, %5, %cst {dimension_numbers = #tpu.dot_dimension_numbers<[1], [0], [0], [1], [0, 0, 1, 1], [], []>} : vector<16x640xbf16>, vector<640x128xbf16>, vector<16x128xf32> -> vector<16x128xf32>
    %7 = arith.addf %3, %6 : vector<16x128xf32>
    %c0_6 = arith.constant 0 : index
    %c0_7 = arith.constant 0 : index
    %8 = vector.load %arg6[%c0_6, %c0_7] : memref<16x128xf32, #tpu.memory_space<vmem>>, vector<16x128xf32>
    tpu.vector_store %arg6[%c0_6, %c0_7], %7 {strides = array<i32>} : memref<16x128xf32, #tpu.memory_space<vmem>>, vector<16x128xf32>,
    %c0_8 = arith.constant 0 : index
    %c0_9 = arith.constant 0 : index
    %9 = vector.load %arg6[%c0_8, %c0_9] : memref<16x128xf32, #tpu.memory_space<vmem>>, vector<16x128xf32>
    %c0_10 = arith.constant 0 : index
    %c0_11 = arith.constant 0 : index
    %10 = vector.load %arg4[%c0_10, %c0_11] : memref<1x128xf32, #tpu.memory_space<vmem>>, vector<1x128xf32>
    %11 = vector.broadcast %10 : vector<1x128xf32> to vector<16x128xf32>
    %12 = arith.addf %9, %11 : vector<16x128xf32>
    %c0_12 = arith.constant 0 : index
    %c0_13 = arith.constant 0 : index
    %13 = vector.load %arg5[%c0_12, %c0_13] : memref<16x128xf32, #tpu.memory_space<vmem>>, vector<16x128xf32>
    tpu.vector_store %arg5[%c0_12, %c0_13], %12 {strides = array<i32>} : memref<16x128xf32, #tpu.memory_space<vmem>>, vector<16x128xf32>,
    return
  }
  func.func @transform_0(%arg0: i32, %arg1: i32) -> (i32, i32) {
    %c0_i32 = arith.constant 0 : i32
    return %arg0, %arg1 : i32, i32
  }
  func.func @transform_1(%arg0: i32, %arg1: i32) -> (i32, i32) {
    %c0_i32 = arith.constant 0 : i32
    %c0_i32_0 = arith.constant 0 : i32
    return %arg1, %c0_i32 : i32, i32
  }
  func.func @transform_2(%arg0: i32, %arg1: i32) -> (i32, i32) {
    %c0_i32 = arith.constant 0 : i32
    %c0_i32_0 = arith.constant 0 : i32
    %c0_i32_1 = arith.constant 0 : i32
    return %c0_i32, %c0_i32_0 : i32, i32
  }
  func.func @transform_3(%arg0: i32, %arg1: i32) -> (i32, i32) {
    %c0_i32 = arith.constant 0 : i32
    %c0_i32_0 = arith.constant 0 : i32
    return %arg0, %c0_i32 : i32, i32
  }
}

module attributes {stable_mosaic.version = 11 : i64} {
  func.func @_convlstm_step_kernel(%arg0: i32, %arg1: memref<1x2x512xf32, #tpu.memory_space<vmem>>, %arg2: memref<128x512xbf16, #tpu.memory_space<vmem>>, %arg3: memref<1x2x128xf32, #tpu.memory_space<vmem>>, %arg4: memref<2x128xf32, #tpu.memory_space<vmem>>, %arg5: memref<2x128xf32, #tpu.memory_space<vmem>>) attributes {dimension_semantics = [#tpu.dimension_semantics<arbitrary>], iteration_bounds = array<i64: 2>, scalar_prefetch = 0 : i64, scratch_operands = 2 : i64, tpu.core_type = #tpu.core_type<tc>, window_params = [{transform_indices = @transform_0, window_bounds = array<i64: 1, 2, 512>}, {pipeline_mode = #tpu.pipeline_mode<synchronous>, transform_indices = @transform_1, window_bounds = array<i64: 128, 512>}, {transform_indices = @transform_2, window_bounds = array<i64: 1, 2, 128>}]} {
    %c0_i32 = arith.constant 0 : i32
    %0 = arith.cmpi eq, %arg0, %c0_i32 : i32
    %1 = arith.extui %0 : i1 to i32
    %c0_i32_0 = arith.constant 0 : i32
    %2 = arith.cmpi ne, %1, %c0_i32_0 : i32
    scf.if %2 {
      %cst_25 = arith.constant 0.000000e+00 : f32
      %47 = vector.broadcast %cst_25 : f32 to vector<2x128xf32>
      %c0_26 = arith.constant 0 : index
      %c0_27 = arith.constant 0 : index
      %48 = vector.load %arg4[%c0_26, %c0_27] : memref<2x128xf32, #tpu.memory_space<vmem>>, vector<2x128xf32>
      tpu.vector_store %arg4[%c0_26, %c0_27], %47 {strides = array<i32>} : memref<2x128xf32, #tpu.memory_space<vmem>>, vector<2x128xf32>,
      %cst_28 = arith.constant 0.000000e+00 : f32
      %49 = vector.broadcast %cst_28 : f32 to vector<2x128xf32>
      %c0_29 = arith.constant 0 : index
      %c0_30 = arith.constant 0 : index
      %50 = vector.load %arg5[%c0_29, %c0_30] : memref<2x128xf32, #tpu.memory_space<vmem>>, vector<2x128xf32>
      tpu.vector_store %arg5[%c0_29, %c0_30], %49 {strides = array<i32>} : memref<2x128xf32, #tpu.memory_space<vmem>>, vector<2x128xf32>,
    } else {
    }
    %c0 = arith.constant 0 : index
    %c0_1 = arith.constant 0 : index
    %c0_2 = arith.constant 0 : index
    %3 = vector.load %arg1[%c0, %c0_1, %c0_2] : memref<1x2x512xf32, #tpu.memory_space<vmem>>, vector<1x2x512xf32>
    %4 = vector.shape_cast %3 : vector<1x2x512xf32> to vector<2x512xf32>
    %c0_3 = arith.constant 0 : index
    %c0_4 = arith.constant 0 : index
    %5 = vector.load %arg4[%c0_3, %c0_4] : memref<2x128xf32, #tpu.memory_space<vmem>>, vector<2x128xf32>
    %6 = arith.truncf %5 : vector<2x128xf32> to vector<2x128xbf16>
    %c0_5 = arith.constant 0 : index
    %c0_6 = arith.constant 0 : index
    %7 = vector.load %arg2[%c0_5, %c0_6] : memref<128x512xbf16, #tpu.memory_space<vmem>>, vector<128x512xbf16>
    %cst = arith.constant dense<0.000000e+00> : vector<2x512xf32>
    %8 = tpu.matmul %6, %7, %cst {dimension_numbers = #tpu.dot_dimension_numbers<[1], [0], [0], [1], [0, 0, 1, 1], [], []>} : vector<2x128xbf16>, vector<128x512xbf16>, vector<2x512xf32> -> vector<2x512xf32>
    %9 = arith.addf %4, %8 : vector<2x512xf32>
    %c0_7 = arith.constant 0 : index
    %c0_8 = arith.constant 0 : index
    %10 = vector.load %arg5[%c0_7, %c0_8] : memref<2x128xf32, #tpu.memory_space<vmem>>, vector<2x128xf32>
    %11 = vector.extract_strided_slice %9 {offsets = [0, 0], sizes = [2, 128], strides = [1, 1]} : vector<2x512xf32> to vector<2x128xf32>
    %cst_9 = arith.constant 0.000000e+00 : f32
    %12 = vector.broadcast %cst_9 : f32 to vector<2x128xf32>
    %13 = arith.subf %12, %11 : vector<2x128xf32>
    %14 = math.exp %13 : vector<2x128xf32>
    %cst_10 = arith.constant 1.000000e+00 : f32
    %15 = vector.broadcast %cst_10 : f32 to vector<2x128xf32>
    %16 = arith.addf %15, %14 : vector<2x128xf32>
    %cst_11 = arith.constant 1.000000e+00 : f32
    %17 = vector.broadcast %cst_11 : f32 to vector<2x128xf32>
    %18 = arith.divf %17, %16 : vector<2x128xf32>
    %19 = vector.extract_strided_slice %9 {offsets = [0, 128], sizes = [2, 128], strides = [1, 1]} : vector<2x512xf32> to vector<2x128xf32>
    %cst_12 = arith.constant 0.000000e+00 : f32
    %20 = vector.broadcast %cst_12 : f32 to vector<2x128xf32>
    %21 = arith.subf %20, %19 : vector<2x128xf32>
    %22 = math.exp %21 : vector<2x128xf32>
    %cst_13 = arith.constant 1.000000e+00 : f32
    %23 = vector.broadcast %cst_13 : f32 to vector<2x128xf32>
    %24 = arith.addf %23, %22 : vector<2x128xf32>
    %cst_14 = arith.constant 1.000000e+00 : f32
    %25 = vector.broadcast %cst_14 : f32 to vector<2x128xf32>
    %26 = arith.divf %25, %24 : vector<2x128xf32>
    %27 = vector.extract_strided_slice %9 {offsets = [0, 256], sizes = [2, 128], strides = [1, 1]} : vector<2x512xf32> to vector<2x128xf32>
    %cst_15 = arith.constant 0.000000e+00 : f32
    %28 = vector.broadcast %cst_15 : f32 to vector<2x128xf32>
    %29 = arith.subf %28, %27 : vector<2x128xf32>
    %30 = math.exp %29 : vector<2x128xf32>
    %cst_16 = arith.constant 1.000000e+00 : f32
    %31 = vector.broadcast %cst_16 : f32 to vector<2x128xf32>
    %32 = arith.addf %31, %30 : vector<2x128xf32>
    %cst_17 = arith.constant 1.000000e+00 : f32
    %33 = vector.broadcast %cst_17 : f32 to vector<2x128xf32>
    %34 = arith.divf %33, %32 : vector<2x128xf32>
    %35 = vector.extract_strided_slice %9 {offsets = [0, 384], sizes = [2, 128], strides = [1, 1]} : vector<2x512xf32> to vector<2x128xf32>
    %36 = math.tanh %35 : vector<2x128xf32>
    %37 = arith.mulf %26, %10 : vector<2x128xf32>
    %38 = arith.mulf %18, %36 : vector<2x128xf32>
    %39 = arith.addf %37, %38 : vector<2x128xf32>
    %40 = math.tanh %39 : vector<2x128xf32>
    %41 = arith.mulf %34, %40 : vector<2x128xf32>
    %c0_18 = arith.constant 0 : index
    %c0_19 = arith.constant 0 : index
    %42 = vector.load %arg4[%c0_18, %c0_19] : memref<2x128xf32, #tpu.memory_space<vmem>>, vector<2x128xf32>
    tpu.vector_store %arg4[%c0_18, %c0_19], %41 {strides = array<i32>} : memref<2x128xf32, #tpu.memory_space<vmem>>, vector<2x128xf32>,
    %c0_20 = arith.constant 0 : index
    %c0_21 = arith.constant 0 : index
    %43 = vector.load %arg5[%c0_20, %c0_21] : memref<2x128xf32, #tpu.memory_space<vmem>>, vector<2x128xf32>
    tpu.vector_store %arg5[%c0_20, %c0_21], %39 {strides = array<i32>} : memref<2x128xf32, #tpu.memory_space<vmem>>, vector<2x128xf32>,
    %c0_22 = arith.constant 0 : index
    %c0_23 = arith.constant 0 : index
    %c0_24 = arith.constant 0 : index
    %44 = vector.load %arg3[%c0_22, %c0_23, %c0_24] : memref<1x2x128xf32, #tpu.memory_space<vmem>>, vector<1x2x128xf32>
    %45 = vector.shape_cast %44 : vector<1x2x128xf32> to vector<2x128xf32>
    %46 = vector.shape_cast %41 : vector<2x128xf32> to vector<1x2x128xf32>
    tpu.vector_store %arg3[%c0_22, %c0_23, %c0_24], %46 {strides = array<i32>} : memref<1x2x128xf32, #tpu.memory_space<vmem>>, vector<1x2x128xf32>,
    return
  }
  func.func @transform_0(%arg0: i32) -> (i32, i32, i32) {
    %c0_i32 = arith.constant 0 : i32
    %c0_i32_0 = arith.constant 0 : i32
    %c0_i32_1 = arith.constant 0 : i32
    return %arg0, %c0_i32, %c0_i32_0 : i32, i32, i32
  }
  func.func @transform_1(%arg0: i32) -> (i32, i32) {
    %c0_i32 = arith.constant 0 : i32
    %c0_i32_0 = arith.constant 0 : i32
    %c0_i32_1 = arith.constant 0 : i32
    return %c0_i32, %c0_i32_0 : i32, i32
  }
  func.func @transform_2(%arg0: i32) -> (i32, i32, i32) {
    %c0_i32 = arith.constant 0 : i32
    %c0_i32_0 = arith.constant 0 : i32
    %c0_i32_1 = arith.constant 0 : i32
    return %arg0, %c0_i32, %c0_i32_0 : i32, i32, i32
  }
}

module attributes {stable_mosaic.version = 11 : i64} {
  func.func @_mm_kernel(%arg0: i32, %arg1: i32, %arg2: memref<16x384xbf16, #tpu.memory_space<vmem>>, %arg3: memref<384x256xbf16, #tpu.memory_space<vmem>>, %arg4: memref<1x256xf32, #tpu.memory_space<vmem>>, %arg5: memref<16x256xf32, #tpu.memory_space<vmem>>, %arg6: memref<16x256xf32, #tpu.memory_space<vmem>>) attributes {dimension_semantics = [#tpu.dimension_semantics<parallel>, #tpu.dimension_semantics<arbitrary>], iteration_bounds = array<i64: 1, 1>, scalar_prefetch = 0 : i64, scratch_operands = 1 : i64, tpu.core_type = #tpu.core_type<tc>, window_params = [{transform_indices = @transform_0, window_bounds = array<i64: 16, 384>}, {transform_indices = @transform_1, window_bounds = array<i64: 384, 256>}, {pipeline_mode = #tpu.pipeline_mode<synchronous>, transform_indices = @transform_2, window_bounds = array<i64: 1, 256>}, {transform_indices = @transform_3, window_bounds = array<i64: 16, 256>}]} {
    %c0_i32 = arith.constant 0 : i32
    %0 = arith.cmpi eq, %arg1, %c0_i32 : i32
    %1 = arith.extui %0 : i1 to i32
    %c0_i32_0 = arith.constant 0 : i32
    %2 = arith.cmpi ne, %1, %c0_i32_0 : i32
    scf.if %2 {
      %cst_14 = arith.constant 0.000000e+00 : f32
      %14 = vector.broadcast %cst_14 : f32 to vector<16x256xf32>
      %c0_15 = arith.constant 0 : index
      %c0_16 = arith.constant 0 : index
      %15 = vector.load %arg6[%c0_15, %c0_16] : memref<16x256xf32, #tpu.memory_space<vmem>>, vector<16x256xf32>
      tpu.vector_store %arg6[%c0_15, %c0_16], %14 {strides = array<i32>} : memref<16x256xf32, #tpu.memory_space<vmem>>, vector<16x256xf32>,
    } else {
    }
    %c0 = arith.constant 0 : index
    %c0_1 = arith.constant 0 : index
    %3 = vector.load %arg6[%c0, %c0_1] : memref<16x256xf32, #tpu.memory_space<vmem>>, vector<16x256xf32>
    %c0_2 = arith.constant 0 : index
    %c0_3 = arith.constant 0 : index
    %4 = vector.load %arg2[%c0_2, %c0_3] : memref<16x384xbf16, #tpu.memory_space<vmem>>, vector<16x384xbf16>
    %c0_4 = arith.constant 0 : index
    %c0_5 = arith.constant 0 : index
    %5 = vector.load %arg3[%c0_4, %c0_5] : memref<384x256xbf16, #tpu.memory_space<vmem>>, vector<384x256xbf16>
    %cst = arith.constant dense<0.000000e+00> : vector<16x256xf32>
    %6 = tpu.matmul %4, %5, %cst {dimension_numbers = #tpu.dot_dimension_numbers<[1], [0], [0], [1], [0, 0, 1, 1], [], []>} : vector<16x384xbf16>, vector<384x256xbf16>, vector<16x256xf32> -> vector<16x256xf32>
    %7 = arith.addf %3, %6 : vector<16x256xf32>
    %c0_6 = arith.constant 0 : index
    %c0_7 = arith.constant 0 : index
    %8 = vector.load %arg6[%c0_6, %c0_7] : memref<16x256xf32, #tpu.memory_space<vmem>>, vector<16x256xf32>
    tpu.vector_store %arg6[%c0_6, %c0_7], %7 {strides = array<i32>} : memref<16x256xf32, #tpu.memory_space<vmem>>, vector<16x256xf32>,
    %c0_8 = arith.constant 0 : index
    %c0_9 = arith.constant 0 : index
    %9 = vector.load %arg6[%c0_8, %c0_9] : memref<16x256xf32, #tpu.memory_space<vmem>>, vector<16x256xf32>
    %c0_10 = arith.constant 0 : index
    %c0_11 = arith.constant 0 : index
    %10 = vector.load %arg4[%c0_10, %c0_11] : memref<1x256xf32, #tpu.memory_space<vmem>>, vector<1x256xf32>
    %11 = vector.broadcast %10 : vector<1x256xf32> to vector<16x256xf32>
    %12 = arith.addf %9, %11 : vector<16x256xf32>
    %c0_12 = arith.constant 0 : index
    %c0_13 = arith.constant 0 : index
    %13 = vector.load %arg5[%c0_12, %c0_13] : memref<16x256xf32, #tpu.memory_space<vmem>>, vector<16x256xf32>
    tpu.vector_store %arg5[%c0_12, %c0_13], %12 {strides = array<i32>} : memref<16x256xf32, #tpu.memory_space<vmem>>, vector<16x256xf32>,
    return
  }
  func.func @transform_0(%arg0: i32, %arg1: i32) -> (i32, i32) {
    %c0_i32 = arith.constant 0 : i32
    return %arg0, %arg1 : i32, i32
  }
  func.func @transform_1(%arg0: i32, %arg1: i32) -> (i32, i32) {
    %c0_i32 = arith.constant 0 : i32
    %c0_i32_0 = arith.constant 0 : i32
    return %arg1, %c0_i32 : i32, i32
  }
  func.func @transform_2(%arg0: i32, %arg1: i32) -> (i32, i32) {
    %c0_i32 = arith.constant 0 : i32
    %c0_i32_0 = arith.constant 0 : i32
    %c0_i32_1 = arith.constant 0 : i32
    return %c0_i32, %c0_i32_0 : i32, i32
  }
  func.func @transform_3(%arg0: i32, %arg1: i32) -> (i32, i32) {
    %c0_i32 = arith.constant 0 : i32
    %c0_i32_0 = arith.constant 0 : i32
    return %arg0, %c0_i32 : i32, i32
  }
}

module attributes {stable_mosaic.version = 11 : i64} {
  func.func @_mm_kernel(%arg0: i32, %arg1: i32, %arg2: memref<16x128xbf16, #tpu.memory_space<vmem>>, %arg3: memref<128x3200xbf16, #tpu.memory_space<vmem>>, %arg4: memref<1x3200xf32, #tpu.memory_space<vmem>>, %arg5: memref<16x3200xf32, #tpu.memory_space<vmem>>, %arg6: memref<16x3200xf32, #tpu.memory_space<vmem>>) attributes {dimension_semantics = [#tpu.dimension_semantics<parallel>, #tpu.dimension_semantics<arbitrary>], iteration_bounds = array<i64: 1, 1>, scalar_prefetch = 0 : i64, scratch_operands = 1 : i64, tpu.core_type = #tpu.core_type<tc>, window_params = [{transform_indices = @transform_0, window_bounds = array<i64: 16, 128>}, {transform_indices = @transform_1, window_bounds = array<i64: 128, 3200>}, {pipeline_mode = #tpu.pipeline_mode<synchronous>, transform_indices = @transform_2, window_bounds = array<i64: 1, 3200>}, {transform_indices = @transform_3, window_bounds = array<i64: 16, 3200>}]} {
    %c0_i32 = arith.constant 0 : i32
    %0 = arith.cmpi eq, %arg1, %c0_i32 : i32
    %1 = arith.extui %0 : i1 to i32
    %c0_i32_0 = arith.constant 0 : i32
    %2 = arith.cmpi ne, %1, %c0_i32_0 : i32
    scf.if %2 {
      %cst_14 = arith.constant 0.000000e+00 : f32
      %14 = vector.broadcast %cst_14 : f32 to vector<16x3200xf32>
      %c0_15 = arith.constant 0 : index
      %c0_16 = arith.constant 0 : index
      %15 = vector.load %arg6[%c0_15, %c0_16] : memref<16x3200xf32, #tpu.memory_space<vmem>>, vector<16x3200xf32>
      tpu.vector_store %arg6[%c0_15, %c0_16], %14 {strides = array<i32>} : memref<16x3200xf32, #tpu.memory_space<vmem>>, vector<16x3200xf32>,
    } else {
    }
    %c0 = arith.constant 0 : index
    %c0_1 = arith.constant 0 : index
    %3 = vector.load %arg6[%c0, %c0_1] : memref<16x3200xf32, #tpu.memory_space<vmem>>, vector<16x3200xf32>
    %c0_2 = arith.constant 0 : index
    %c0_3 = arith.constant 0 : index
    %4 = vector.load %arg2[%c0_2, %c0_3] : memref<16x128xbf16, #tpu.memory_space<vmem>>, vector<16x128xbf16>
    %c0_4 = arith.constant 0 : index
    %c0_5 = arith.constant 0 : index
    %5 = vector.load %arg3[%c0_4, %c0_5] : memref<128x3200xbf16, #tpu.memory_space<vmem>>, vector<128x3200xbf16>
    %cst = arith.constant dense<0.000000e+00> : vector<16x3200xf32>
    %6 = tpu.matmul %4, %5, %cst {dimension_numbers = #tpu.dot_dimension_numbers<[1], [0], [0], [1], [0, 0, 1, 1], [], []>} : vector<16x128xbf16>, vector<128x3200xbf16>, vector<16x3200xf32> -> vector<16x3200xf32>
    %7 = arith.addf %3, %6 : vector<16x3200xf32>
    %c0_6 = arith.constant 0 : index
    %c0_7 = arith.constant 0 : index
    %8 = vector.load %arg6[%c0_6, %c0_7] : memref<16x3200xf32, #tpu.memory_space<vmem>>, vector<16x3200xf32>
    tpu.vector_store %arg6[%c0_6, %c0_7], %7 {strides = array<i32>} : memref<16x3200xf32, #tpu.memory_space<vmem>>, vector<16x3200xf32>,
    %c0_8 = arith.constant 0 : index
    %c0_9 = arith.constant 0 : index
    %9 = vector.load %arg6[%c0_8, %c0_9] : memref<16x3200xf32, #tpu.memory_space<vmem>>, vector<16x3200xf32>
    %c0_10 = arith.constant 0 : index
    %c0_11 = arith.constant 0 : index
    %10 = vector.load %arg4[%c0_10, %c0_11] : memref<1x3200xf32, #tpu.memory_space<vmem>>, vector<1x3200xf32>
    %11 = vector.broadcast %10 : vector<1x3200xf32> to vector<16x3200xf32>
    %12 = arith.addf %9, %11 : vector<16x3200xf32>
    %c0_12 = arith.constant 0 : index
    %c0_13 = arith.constant 0 : index
    %13 = vector.load %arg5[%c0_12, %c0_13] : memref<16x3200xf32, #tpu.memory_space<vmem>>, vector<16x3200xf32>
    tpu.vector_store %arg5[%c0_12, %c0_13], %12 {strides = array<i32>} : memref<16x3200xf32, #tpu.memory_space<vmem>>, vector<16x3200xf32>,
    return
  }
  func.func @transform_0(%arg0: i32, %arg1: i32) -> (i32, i32) {
    %c0_i32 = arith.constant 0 : i32
    return %arg0, %arg1 : i32, i32
  }
  func.func @transform_1(%arg0: i32, %arg1: i32) -> (i32, i32) {
    %c0_i32 = arith.constant 0 : i32
    %c0_i32_0 = arith.constant 0 : i32
    return %arg1, %c0_i32 : i32, i32
  }
  func.func @transform_2(%arg0: i32, %arg1: i32) -> (i32, i32) {
    %c0_i32 = arith.constant 0 : i32
    %c0_i32_0 = arith.constant 0 : i32
    %c0_i32_1 = arith.constant 0 : i32
    return %c0_i32, %c0_i32_0 : i32, i32
  }
  func.func @transform_3(%arg0: i32, %arg1: i32) -> (i32, i32) {
    %c0_i32 = arith.constant 0 : i32
    %c0_i32_0 = arith.constant 0 : i32
    return %arg0, %c0_i32 : i32, i32
  }
}

module attributes {stable_mosaic.version = 11 : i64} {
  func.func @_mm_kernel(%arg0: i32, %arg1: i32, %arg2: memref<200x128xbf16, #tpu.memory_space<vmem>>, %arg3: memref<128x128xbf16, #tpu.memory_space<vmem>>, %arg4: memref<1x128xf32, #tpu.memory_space<vmem>>, %arg5: memref<200x128xf32, #tpu.memory_space<vmem>>, %arg6: memref<200x128xf32, #tpu.memory_space<vmem>>) attributes {dimension_semantics = [#tpu.dimension_semantics<parallel>, #tpu.dimension_semantics<arbitrary>], iteration_bounds = array<i64: 1, 1>, scalar_prefetch = 0 : i64, scratch_operands = 1 : i64, tpu.core_type = #tpu.core_type<tc>, window_params = [{transform_indices = @transform_0, window_bounds = array<i64: 200, 128>}, {transform_indices = @transform_1, window_bounds = array<i64: 128, 128>}, {pipeline_mode = #tpu.pipeline_mode<synchronous>, transform_indices = @transform_2, window_bounds = array<i64: 1, 128>}, {transform_indices = @transform_3, window_bounds = array<i64: 200, 128>}]} {
    %c0_i32 = arith.constant 0 : i32
    %0 = arith.cmpi eq, %arg1, %c0_i32 : i32
    %1 = arith.extui %0 : i1 to i32
    %c0_i32_0 = arith.constant 0 : i32
    %2 = arith.cmpi ne, %1, %c0_i32_0 : i32
    scf.if %2 {
      %cst_14 = arith.constant 0.000000e+00 : f32
      %14 = vector.broadcast %cst_14 : f32 to vector<200x128xf32>
      %c0_15 = arith.constant 0 : index
      %c0_16 = arith.constant 0 : index
      %15 = vector.load %arg6[%c0_15, %c0_16] : memref<200x128xf32, #tpu.memory_space<vmem>>, vector<200x128xf32>
      tpu.vector_store %arg6[%c0_15, %c0_16], %14 {strides = array<i32>} : memref<200x128xf32, #tpu.memory_space<vmem>>, vector<200x128xf32>,
    } else {
    }
    %c0 = arith.constant 0 : index
    %c0_1 = arith.constant 0 : index
    %3 = vector.load %arg6[%c0, %c0_1] : memref<200x128xf32, #tpu.memory_space<vmem>>, vector<200x128xf32>
    %c0_2 = arith.constant 0 : index
    %c0_3 = arith.constant 0 : index
    %4 = vector.load %arg2[%c0_2, %c0_3] : memref<200x128xbf16, #tpu.memory_space<vmem>>, vector<200x128xbf16>
    %c0_4 = arith.constant 0 : index
    %c0_5 = arith.constant 0 : index
    %5 = vector.load %arg3[%c0_4, %c0_5] : memref<128x128xbf16, #tpu.memory_space<vmem>>, vector<128x128xbf16>
    %cst = arith.constant dense<0.000000e+00> : vector<200x128xf32>
    %6 = tpu.matmul %4, %5, %cst {dimension_numbers = #tpu.dot_dimension_numbers<[1], [0], [0], [1], [0, 0, 1, 1], [], []>} : vector<200x128xbf16>, vector<128x128xbf16>, vector<200x128xf32> -> vector<200x128xf32>
    %7 = arith.addf %3, %6 : vector<200x128xf32>
    %c0_6 = arith.constant 0 : index
    %c0_7 = arith.constant 0 : index
    %8 = vector.load %arg6[%c0_6, %c0_7] : memref<200x128xf32, #tpu.memory_space<vmem>>, vector<200x128xf32>
    tpu.vector_store %arg6[%c0_6, %c0_7], %7 {strides = array<i32>} : memref<200x128xf32, #tpu.memory_space<vmem>>, vector<200x128xf32>,
    %c0_8 = arith.constant 0 : index
    %c0_9 = arith.constant 0 : index
    %9 = vector.load %arg6[%c0_8, %c0_9] : memref<200x128xf32, #tpu.memory_space<vmem>>, vector<200x128xf32>
    %c0_10 = arith.constant 0 : index
    %c0_11 = arith.constant 0 : index
    %10 = vector.load %arg4[%c0_10, %c0_11] : memref<1x128xf32, #tpu.memory_space<vmem>>, vector<1x128xf32>
    %11 = vector.broadcast %10 : vector<1x128xf32> to vector<200x128xf32>
    %12 = arith.addf %9, %11 : vector<200x128xf32>
    %c0_12 = arith.constant 0 : index
    %c0_13 = arith.constant 0 : index
    %13 = vector.load %arg5[%c0_12, %c0_13] : memref<200x128xf32, #tpu.memory_space<vmem>>, vector<200x128xf32>
    tpu.vector_store %arg5[%c0_12, %c0_13], %12 {strides = array<i32>} : memref<200x128xf32, #tpu.memory_space<vmem>>, vector<200x128xf32>,
    return
  }
  func.func @transform_0(%arg0: i32, %arg1: i32) -> (i32, i32) {
    %c0_i32 = arith.constant 0 : i32
    return %arg0, %arg1 : i32, i32
  }
  func.func @transform_1(%arg0: i32, %arg1: i32) -> (i32, i32) {
    %c0_i32 = arith.constant 0 : i32
    %c0_i32_0 = arith.constant 0 : i32
    return %arg1, %c0_i32 : i32, i32
  }
  func.func @transform_2(%arg0: i32, %arg1: i32) -> (i32, i32) {
    %c0_i32 = arith.constant 0 : i32
    %c0_i32_0 = arith.constant 0 : i32
    %c0_i32_1 = arith.constant 0 : i32
    return %c0_i32, %c0_i32_0 : i32, i32
  }
  func.func @transform_3(%arg0: i32, %arg1: i32) -> (i32, i32) {
    %c0_i32 = arith.constant 0 : i32
    %c0_i32_0 = arith.constant 0 : i32
    return %arg0, %c0_i32 : i32, i32
  }
}

</mosaic_0001>

<llo_original>
// kernel: video_autoencoder_lstm.10
$region0: #{video_autoencoder_lstm.10}
  #allocation0 [shape = 'u32[]', space=smem, size = 0x4, offset = 0x4, fixed_abs, tag = 'smem constant byte address 0x4 - core index']
  #allocation1 [shape = 'u32[72,128]{1,0:T(1,128)}', space=vmem, size = 0x9000, scoped, tag = 'internal scratch']
  #allocation2 [shape = 'f32[200,128]{1,0:T(8,128)}', space=vmem, size = 0x19000, scoped, tag = 'scratch operand']
  %s0 = inlined_call_operand.vmem [shape: bf16[200,128], index: 0, kind: input, shape index: {}]
  %s1 = inlined_call_operand.vmem [shape: bf16[128,128], index: 1, kind: input, shape index: {}]
  %s2 = inlined_call_operand.vmem [shape: f32[1,128], index: 2, kind: input, shape index: {}]
  %s3 = inlined_call_operand.vmem [shape: f32[200,128], index: 3, kind: output, shape index: {}]
  %s4 = sld [smem:[#allocation0]]
  $region26: #{video_autoencoder_lstm.10} parent=0
    _
  %s6 = ssub.s32 1, %s4
  %s7 = scalar_select 0, %s6, %s4
  // Predicated region
  $region2: #{video_autoencoder_lstm.10} parent=0 // pred_check
    _
  $region3: #{video_autoencoder_lstm.10} parent=0 // pred_check_branch
    %9 = sbr.rel (0) target = $region5
  $region4: #{video_autoencoder_lstm.10} parent=0 // pred_region
    _
  $region5: #{video_autoencoder_lstm.10} parent=0 // pred_fallthru
    _
  // Predicated region
  $region6: #{video_autoencoder_lstm.10} parent=0 // pred_check
    _
  $region7: #{video_autoencoder_lstm.10} parent=0 // pred_check_branch
    %11 = sbr.rel (0) target = $region9
  $region8: #{video_autoencoder_lstm.10} parent=0 // pred_region
    _
  $region9: #{video_autoencoder_lstm.10} parent=0 // pred_fallthru
    _
  // Predicated region
  $region10: #{video_autoencoder_lstm.10} parent=0 // pred_check
    _
  $region11: #{video_autoencoder_lstm.10} parent=0 // pred_check_branch
    %13 = sbr.rel (0) target = $region13
  $region12: #{video_autoencoder_lstm.10} parent=0 // pred_region
    _
  $region13: #{video_autoencoder_lstm.10} parent=0 // pred_fallthru
    _
  %p14 = scmp.eq.s32.totalorder 0, 0
  // Predicated region
  $region14: #{video_autoencoder_lstm.10} parent=0 // pred_check
    %p15 = pneg %p14
  $region15: #{video_autoencoder_lstm.10} parent=0 // pred_check_branch
    %17 = sbr.rel (%p15) target = $region17
  $region16: #{video_autoencoder_lstm.10} parent=0 // pred_region
    %18 = vst [vmem:[#allocation2] sm:$0xff] 0.0
    %19 = vst [vmem:[#allocation2 + $0x8] sm:$0xff] 0.0
    %20 = vst [vmem:[#allocation2 + $0x10] sm:$0xff] 0.0
    %21 = vst [vmem:[#allocation2 + $0x18] sm:$0xff] 0.0
    %22 = vst [vmem:[#allocation2 + $0x20] sm:$0xff] 0.0
    %23 = vst [vmem:[#allocation2 + $0x28] sm:$0xff] 0.0
    %24 = vst [vmem:[#allocation2 + $0x30] sm:$0xff] 0.0
    %25 = vst [vmem:[#allocation2 + $0x38] sm:$0xff] 0.0
    %26 = vst [vmem:[#allocation2 + $0x40] sm:$0xff] 0.0
    %27 = vst [vmem:[#allocation2 + $0x48] sm:$0xff] 0.0
    %28 = vst [vmem:[#allocation2 + $0x50] sm:$0xff] 0.0
    %29 = vst [vmem:[#allocation2 + $0x58] sm:$0xff] 0.0
    %30 = vst [vmem:[#allocation2 + $0x60] sm:$0xff] 0.0
    %31 = vst [vmem:[#allocation2 + $0x68] sm:$0xff] 0.0
    %32 = vst [vmem:[#allocation2 + $0x70] sm:$0xff] 0.0
    %33 = vst [vmem:[#allocation2 + $0x78] sm:$0xff] 0.0
    %34 = vst [vmem:[#allocation2 + $0x80] sm:$0xff] 0.0
    %35 = vst [vmem:[#allocation2 + $0x88] sm:$0xff] 0.0
    %36 = vst [vmem:[#allocation2 + $0x90] sm:$0xff] 0.0
    %37 = vst [vmem:[#allocation2 + $0x98] sm:$0xff] 0.0
    %38 = vst [vmem:[#allocation2 + $0xa0] sm:$0xff] 0.0
    %39 = vst [vmem:[#allocation2 + $0xa8] sm:$0xff] 0.0
    %40 = vst [vmem:[#allocation2 + $0xb0] sm:$0xff] 0.0
    %41 = vst [vmem:[#allocation2 + $0xb8] sm:$0xff] 0.0
    %42 = vst [vmem:[#allocation2 + $0xc0] sm:$0xff] 0.0
  $region17: #{video_autoencoder_lstm.10} parent=0 // pred_fallthru
    _
  %v43 = vld [vmem:[#allocation2] sm:$0xff]
  %v44 = vld [vmem:[#allocation2 + $0x8] sm:$0xff]
  %v45 = vld [vmem:[#allocation2 + $0x10] sm:$0xff]
  %v46 = vld [vmem:[#allocation2 + $0x18] sm:$0xff]
  %v47 = vld [vmem:[#allocation2 + $0x20] sm:$0xff]
  %v48 = vld [vmem:[#allocation2 + $0x28] sm:$0xff]
  %v49 = vld [vmem:[#allocation2 + $0x30] sm:$0xff]
  %v50 = vld [vmem:[#allocation2 + $0x38] sm:$0xff]
  %v51 = vld [vmem:[#allocation2 + $0x40] sm:$0xff]
  %v52 = vld [vmem:[#allocation2 + $0x48] sm:$0xff]
  %v53 = vld [vmem:[#allocation2 + $0x50] sm:$0xff]
  %v54 = vld [vmem:[#allocation2 + $0x58] sm:$0xff]
  %v55 = vld [vmem:[#allocation2 + $0x60] sm:$0xff]
  %v56 = vld [vmem:[#allocation2 + $0x68] sm:$0xff]
  %v57 = vld [vmem:[#allocation2 + $0x70] sm:$0xff]
  %v58 = vld [vmem:[#allocation2 + $0x78] sm:$0xff]
  %v59 = vld [vmem:[#allocation2 + $0x80] sm:$0xff]
  %v60 = vld [vmem:[#allocation2 + $0x88] sm:$0xff]
  %v61 = vld [vmem:[#allocation2 + $0x90] sm:$0xff]
  %v62 = vld [vmem:[#allocation2 + $0x98] sm:$0xff]
  %v63 = vld [vmem:[#allocation2 + $0xa0] sm:$0xff]
  %v64 = vld [vmem:[#allocation2 + $0xa8] sm:$0xff]
  %v65 = vld [vmem:[#allocation2 + $0xb0] sm:$0xff]
  %v66 = vld [vmem:[#allocation2 + $0xb8] sm:$0xff]
  %v67 = vld [vmem:[#allocation2 + $0xc0] sm:$0xff]
  %v68 = vld [vmem:[%s0] sm:$0xf]
  %v69 = vld [vmem:[%s0 + $0x4] sm:$0xf]
  %v70 = vld [vmem:[%s0 + $0x8] sm:$0xf]
  %v71 = vld [vmem:[%s0 + $0xc] sm:$0xf]
  %v72 = vld [vmem:[%s0 + $0x10] sm:$0xf]
  %v73 = vld [vmem:[%s0 + $0x14] sm:$0xf]
  %v74 = vld [vmem:[%s0 + $0x18] sm:$0xf]
  %v75 = vld [vmem:[%s0 + $0x1c] sm:$0xf]
  %v76 = vld [vmem:[%s0 + $0x20] sm:$0xf]
  %v77 = vld [vmem:[%s0 + $0x24] sm:$0xf]
  %v78 = vld [vmem:[%s0 + $0x28] sm:$0xf]
  %v79 = vld [vmem:[%s0 + $0x2c] sm:$0xf]
  %v80 = vld [vmem:[%s0 + $0x30] sm:$0xf]
  %v81 = vld [vmem:[%s0 + $0x34] sm:$0xf]
  %v82 = vld [vmem:[%s0 + $0x38] sm:$0xf]
  %v83 = vld [vmem:[%s0 + $0x3c] sm:$0xf]
  %v84 = vld [vmem:[%s0 + $0x40] sm:$0xf]
  %v85 = vld [vmem:[%s0 + $0x44] sm:$0xf]
  %v86 = vld [vmem:[%s0 + $0x48] sm:$0xf]
  %v87 = vld [vmem:[%s0 + $0x4c] sm:$0xf]
  %v88 = vld [vmem:[%s0 + $0x50] sm:$0xf]
  %v89 = vld [vmem:[%s0 + $0x54] sm:$0xf]
  %v90 = vld [vmem:[%s0 + $0x58] sm:$0xf]
  %v91 = vld [vmem:[%s0 + $0x5c] sm:$0xf]
  %v92 = vld [vmem:[%s0 + $0x60] sm:$0xf]
  %v93 = vld [vmem:[%s1] sm:$0xf]
  %v94 = vld [vmem:[%s1 + $0x4] sm:$0xf]
  %v95 = vld [vmem:[%s1 + $0x8] sm:$0xf]
  %v96 = vld [vmem:[%s1 + $0xc] sm:$0xf]
  %v97 = vld [vmem:[%s1 + $0x10] sm:$0xf]
  %v98 = vld [vmem:[%s1 + $0x14] sm:$0xf]
  %v99 = vld [vmem:[%s1 + $0x18] sm:$0xf]
  %v100 = vld [vmem:[%s1 + $0x1c] sm:$0xf]
  %v101 = vld [vmem:[%s1 + $0x20] sm:$0xf]
  %v102 = vld [vmem:[%s1 + $0x24] sm:$0xf]
  %v103 = vld [vmem:[%s1 + $0x28] sm:$0xf]
  %v104 = vld [vmem:[%s1 + $0x2c] sm:$0xf]
  %v105 = vld [vmem:[%s1 + $0x30] sm:$0xf]
  %v106 = vld [vmem:[%s1 + $0x34] sm:$0xf]
  %v107 = vld [vmem:[%s1 + $0x38] sm:$0xf]
  %v108 = vld [vmem:[%s1 + $0x3c] sm:$0xf]
  %v134 = vunpack.c.l.b16 %v68
  %v135 = vunpack.c.l.b16 %v69
  %v136 = vunpack.c.l.b16 %v70
  %v137 = vunpack.c.l.b16 %v71
  %v138 = vunpack.c.l.b16 %v72
  %v139 = vunpack.c.l.b16 %v73
  %v140 = vunpack.c.l.b16 %v74
  %v141 = vunpack.c.l.b16 %v75
  %v142 = vunpack.c.l.b16 %v76
  %v143 = vunpack.c.l.b16 %v77
  %v144 = vunpack.c.l.b16 %v78
  %v145 = vunpack.c.l.b16 %v79
  %v146 = vunpack.c.l.b16 %v80
  %v147 = vunpack.c.l.b16 %v81
  %v148 = vunpack.c.l.b16 %v82
  %v149 = vunpack.c.l.b16 %v83
  %v150 = vunpack.c.l.b16 %v84
  %v151 = vunpack.c.l.b16 %v85
  %v152 = vunpack.c.l.b16 %v86
  %v153 = vunpack.c.l.b16 %v87
  %v154 = vunpack.c.l.b16 %v88
  %v155 = vunpack.c.l.b16 %v89
  %v156 = vunpack.c.l.b16 %v90
  %v157 = vunpack.c.l.b16 %v91
  %v158 = vunpack.c.l.b16 %v92
  %v159 = vpack.c.b16 %v135, %v134
  %v160 = vpack.c.b16 %v137, %v136
  %v161 = vpack.c.b16 %v139, %v138
  %v162 = vpack.c.b16 %v141, %v140
  %v163 = vpack.c.b16 %v143, %v142
  %v164 = vpack.c.b16 %v145, %v144
  %v165 = vpack.c.b16 %v147, %v146
  %v166 = vpack.c.b16 %v149, %v148
  %v167 = vpack.c.b16 %v151, %v150
  %v168 = vpack.c.b16 %v153, %v152
  %v169 = vpack.c.b16 %v155, %v154
  %v170 = vpack.c.b16 %v157, %v156
  %v171 = vpack.c.b16 %v158, %v158
  %v201 = vunpack.c.l.b16 %v93
  %v202 = vunpack.c.l.b16 %v94
  %v203 = vunpack.c.l.b16 %v95
  %v204 = vunpack.c.l.b16 %v96
  %v205 = vunpack.c.l.b16 %v97
  %v206 = vunpack.c.l.b16 %v98
  %v207 = vunpack.c.l.b16 %v99
  %v208 = vunpack.c.l.b16 %v100
  %v209 = vunpack.c.l.b16 %v101
  %v210 = vunpack.c.l.b16 %v102
  %v211 = vunpack.c.l.b16 %v103
  %v212 = vunpack.c.l.b16 %v104
  %v213 = vunpack.c.l.b16 %v105
  %v214 = vunpack.c.l.b16 %v106
  %v215 = vunpack.c.l.b16 %v107
  %v216 = vunpack.c.l.b16 %v108
  %v217 = vpack.c.b16 %v202, %v201
  %v218 = vpack.c.b16 %v204, %v203
  %v219 = vpack.c.b16 %v206, %v205
  %v220 = vpack.c.b16 %v208, %v207
  %v221 = vpack.c.b16 %v210, %v209
  %v222 = vpack.c.b16 %v212, %v211
  %v223 = vpack.c.b16 %v214, %v213
  %v224 = vpack.c.b16 %v216, %v215
  %233 = vmatpush.bf16.msra.mxu0 %v224
  %234 = vmatpush.bf16.msra.mxu0 %v223
  %235 = vmatpush.bf16.msra.mxu0 %v222
  %236 = vmatpush.bf16.msra.mxu0 %v221
  %237 = vmatpush.bf16.msra.mxu0 %v220
  %238 = vmatpush.bf16.msra.mxu0 %v219
  %239 = vmatpush.bf16.msra.mxu0 %v218
  %240 = vmatpush.bf16.msra.mxu0 %v217
  %241 = vmatmul.bf16.gmra.mxu0 %v159
  %v242 = vpop.f32.mrf.mxu0
  %v243 = vadd.f32 0.0, %v242
  %v244 = vpop.f32.mrf.mxu0
  %v245 = vadd.f32 0.0, %v244
  %246 = vmatmul.bf16.gmra.mxu0 %v160
  %v247 = vpop.f32.mrf.mxu0
  %v248 = vadd.f32 0.0, %v247
  %v249 = vpop.f32.mrf.mxu0
  %v250 = vadd.f32 0.0, %v249
  %251 = vmatmul.bf16.gmra.mxu0 %v161
  %v252 = vpop.f32.mrf.mxu0
  %v253 = vadd.f32 0.0, %v252
  %v254 = vpop.f32.mrf.mxu0
  %v255 = vadd.f32 0.0, %v254
  %256 = vmatmul.bf16.gmra.mxu0 %v162
  %v257 = vpop.f32.mrf.mxu0
  %v258 = vadd.f32 0.0, %v257
  %v259 = vpop.f32.mrf.mxu0
  %v260 = vadd.f32 0.0, %v259
  %261 = vmatmul.bf16.gmra.mxu0 %v163
  %v262 = vpop.f32.mrf.mxu0
  %v263 = vadd.f32 0.0, %v262
  %v264 = vpop.f32.mrf.mxu0
  %v265 = vadd.f32 0.0, %v264
  %266 = vmatmul.bf16.gmra.mxu0 %v164
  %v267 = vpop.f32.mrf.mxu0
  %v268 = vadd.f32 0.0, %v267
  %v269 = vpop.f32.mrf.mxu0
  %v270 = vadd.f32 0.0, %v269
  %271 = vmatmul.bf16.gmra.mxu0 %v165
  %v272 = vpop.f32.mrf.mxu0
  %v273 = vadd.f32 0.0, %v272
  %v274 = vpop.f32.mrf.mxu0
  %v275 = vadd.f32 0.0, %v274
  %276 = vmatmul.bf16.gmra.mxu0 %v166
  %v277 = vpop.f32.mrf.mxu0
  %v278 = vadd.f32 0.0, %v277
  %v279 = vpop.f32.mrf.mxu0
  %v280 = vadd.f32 0.0, %v279
  %281 = vmatmul.bf16.gmra.mxu0 %v167
  %v282 = vpop.f32.mrf.mxu0
  %v283 = vadd.f32 0.0, %v282
  %v284 = vpop.f32.mrf.mxu0
  %v285 = vadd.f32 0.0, %v284
  %286 = vmatmul.bf16.gmra.mxu0 %v168
  %v287 = vpop.f32.mrf.mxu0
  %v288 = vadd.f32 0.0, %v287
  %v289 = vpop.f32.mrf.mxu0
  %v290 = vadd.f32 0.0, %v289
  %291 = vmatmul.bf16.gmra.mxu0 %v169
  %v292 = vpop.f32.mrf.mxu0
  %v293 = vadd.f32 0.0, %v292
  %v294 = vpop.f32.mrf.mxu0
  %v295 = vadd.f32 0.0, %v294
  %296 = vmatmul.bf16.gmra.mxu0 %v170
  %v297 = vpop.f32.mrf.mxu0
  %v298 = vadd.f32 0.0, %v297
  %v299 = vpop.f32.mrf.mxu0
  %v300 = vadd.f32 0.0, %v299
  %301 = vmatmul.bf16.gmra.mxu0 %v171
  %v302 = vpop.f32.mrf.mxu0
  %v303 = vadd.f32 0.0, %v302
  %v304 = vpop.f32.mrf.mxu0
  %305 = vdwg.mxu0
  %v306 = vadd.f32 %v43, %v243
  %v307 = vadd.f32 %v44, %v245
  %v308 = vadd.f32 %v45, %v248
  %v309 = vadd.f32 %v46, %v250
  %v310 = vadd.f32 %v47, %v253
  %v311 = vadd.f32 %v48, %v255
  %v312 = vadd.f32 %v49, %v258
  %v313 = vadd.f32 %v50, %v260
  %v314 = vadd.f32 %v51, %v263
  %v315 = vadd.f32 %v52, %v265
  %v316 = vadd.f32 %v53, %v268
  %v317 = vadd.f32 %v54, %v270
  %v318 = vadd.f32 %v55, %v273
  %v319 = vadd.f32 %v56, %v275
  %v320 = vadd.f32 %v57, %v278
  %v321 = vadd.f32 %v58, %v280
  %v322 = vadd.f32 %v59, %v283
  %v323 = vadd.f32 %v60, %v285
  %v324 = vadd.f32 %v61, %v288
  %v325 = vadd.f32 %v62, %v290
  %v326 = vadd.f32 %v63, %v293
  %v327 = vadd.f32 %v64, %v295
  %v328 = vadd.f32 %v65, %v298
  %v329 = vadd.f32 %v66, %v300
  %v330 = vadd.f32 %v67, %v303
  %331 = vst [vmem:[#allocation2] sm:$0xff] %v306
  %332 = vst [vmem:[#allocation2 + $0x8] sm:$0xff] %v307
  %333 = vst [vmem:[#allocation2 + $0x10] sm:$0xff] %v308
  %334 = vst [vmem:[#allocation2 + $0x18] sm:$0xff] %v309
  %335 = vst [vmem:[#allocation2 + $0x20] sm:$0xff] %v310
  %336 = vst [vmem:[#allocation2 + $0x28] sm:$0xff] %v311
  %337 = vst [vmem:[#allocation2 + $0x30] sm:$0xff] %v312
  %338 = vst [vmem:[#allocation2 + $0x38] sm:$0xff] %v313
  %339 = vst [vmem:[#allocation2 + $0x40] sm:$0xff] %v314
  %340 = vst [vmem:[#allocation2 + $0x48] sm:$0xff] %v315
  %341 = vst [vmem:[#allocation2 + $0x50] sm:$0xff] %v316
  %342 = vst [vmem:[#allocation2 + $0x58] sm:$0xff] %v317
  %343 = vst [vmem:[#allocation2 + $0x60] sm:$0xff] %v318
  %344 = vst [vmem:[#allocation2 + $0x68] sm:$0xff] %v319
  %345 = vst [vmem:[#allocation2 + $0x70] sm:$0xff] %v320
  %346 = vst [vmem:[#allocation2 + $0x78] sm:$0xff] %v321
  %347 = vst [vmem:[#allocation2 + $0x80] sm:$0xff] %v322
  %348 = vst [vmem:[#allocation2 + $0x88] sm:$0xff] %v323
  %349 = vst [vmem:[#allocation2 + $0x90] sm:$0xff] %v324
  %350 = vst [vmem:[#allocation2 + $0x98] sm:$0xff] %v325
  %351 = vst [vmem:[#allocation2 + $0xa0] sm:$0xff] %v326
  %352 = vst [vmem:[#allocation2 + $0xa8] sm:$0xff] %v327
  %353 = vst [vmem:[#allocation2 + $0xb0] sm:$0xff] %v328
  %354 = vst [vmem:[#allocation2 + $0xb8] sm:$0xff] %v329
  %355 = vst [vmem:[#allocation2 + $0xc0] sm:$0xff] %v330
  %v356 = vld [vmem:[#allocation2] sm:$0xff]
  %v357 = vld [vmem:[#allocation2 + $0x8] sm:$0xff]
  %v358 = vld [vmem:[#allocation2 + $0x10] sm:$0xff]
  %v359 = vld [vmem:[#allocation2 + $0x18] sm:$0xff]
  %v360 = vld [vmem:[#allocation2 + $0x20] sm:$0xff]
  %v361 = vld [vmem:[#allocation2 + $0x28] sm:$0xff]
  %v362 = vld [vmem:[#allocation2 + $0x30] sm:$0xff]
  %v363 = vld [vmem:[#allocation2 + $0x38] sm:$0xff]
  %v364 = vld [vmem:[#allocation2 + $0x40] sm:$0xff]
  %v365 = vld [vmem:[#allocation2 + $0x48] sm:$0xff]
  %v366 = vld [vmem:[#allocation2 + $0x50] sm:$0xff]
  %v367 = vld [vmem:[#allocation2 + $0x58] sm:$0xff]
  %v368 = vld [vmem:[#allocation2 + $0x60] sm:$0xff]
  %v369 = vld [vmem:[#allocation2 + $0x68] sm:$0xff]
  %v370 = vld [vmem:[#allocation2 + $0x70] sm:$0xff]
  %v371 = vld [vmem:[#allocation2 + $0x78] sm:$0xff]
  %v372 = vld [vmem:[#allocation2 + $0x80] sm:$0xff]
  %v373 = vld [vmem:[#allocation2 + $0x88] sm:$0xff]
  %v374 = vld [vmem:[#allocation2 + $0x90] sm:$0xff]
  %v375 = vld [vmem:[#allocation2 + $0x98] sm:$0xff]
  %v376 = vld [vmem:[#allocation2 + $0xa0] sm:$0xff]
  %v377 = vld [vmem:[#allocation2 + $0xa8] sm:$0xff]
  %v378 = vld [vmem:[#allocation2 + $0xb0] sm:$0xff]
  %v379 = vld [vmem:[#allocation2 + $0xb8] sm:$0xff]
  %v380 = vld [vmem:[#allocation2 + $0xc0] sm:$0xff]
  %v381 = vld [vmem:[%s2] sm:$0x1]
  %v383 = vperm.slane %v381, 0
  %v385 = vadd.f32 %v356, %v383
  %v386 = vadd.f32 %v357, %v383
  %v387 = vadd.f32 %v358, %v383
  %v388 = vadd.f32 %v359, %v383
  %v389 = vadd.f32 %v360, %v383
  %v390 = vadd.f32 %v361, %v383
  %v391 = vadd.f32 %v362, %v383
  %v392 = vadd.f32 %v363, %v383
  %v393 = vadd.f32 %v364, %v383
  %v394 = vadd.f32 %v365, %v383
  %v395 = vadd.f32 %v366, %v383
  %v396 = vadd.f32 %v367, %v383
  %v397 = vadd.f32 %v368, %v383
  %v398 = vadd.f32 %v369, %v383
  %v399 = vadd.f32 %v370, %v383
  %v400 = vadd.f32 %v371, %v383
  %v401 = vadd.f32 %v372, %v383
  %v402 = vadd.f32 %v373, %v383
  %v403 = vadd.f32 %v374, %v383
  %v404 = vadd.f32 %v375, %v383
  %v405 = vadd.f32 %v376, %v383
  %v406 = vadd.f32 %v377, %v383
  %v407 = vadd.f32 %v378, %v383
  %v408 = vadd.f32 %v379, %v383
  %v409 = vadd.f32 %v380, %v383
  %v410 = vtanh.pop %v385
  %v411 = vtanh.pop %v386
  %v412 = vtanh.pop %v387
  %v413 = vtanh.pop %v388
  %v414 = vtanh.pop %v389
  %v415 = vtanh.pop %v390
  %v416 = vtanh.pop %v391
  %v417 = vtanh.pop %v392
  %v418 = vtanh.pop %v393
  %v419 = vtanh.pop %v394
  %v420 = vtanh.pop %v395
  %v421 = vtanh.pop %v396
  %v422 = vtanh.pop %v397
  %v423 = vtanh.pop %v398
  %v424 = vtanh.pop %v399
  %v425 = vtanh.pop %v400
  %v426 = vtanh.pop %v401
  %v427 = vtanh.pop %v402
  %v428 = vtanh.pop %v403
  %v429 = vtanh.pop %v404
  %v430 = vtanh.pop %v405
  %v431 = vtanh.pop %v406
  %v432 = vtanh.pop %v407
  %v433 = vtanh.pop %v408
  %v434 = vtanh.pop %v409
  %435 = vst [vmem:[%s3] sm:$0xff] %v410
  %436 = vst [vmem:[%s3 + $0x8] sm:$0xff] %v411
  %437 = vst [vmem:[%s3 + $0x10] sm:$0xff] %v412
  %438 = vst [vmem:[%s3 + $0x18] sm:$0xff] %v413
  %439 = vst [vmem:[%s3 + $0x20] sm:$0xff] %v414
  %440 = vst [vmem:[%s3 + $0x28] sm:$0xff] %v415
  %441 = vst [vmem:[%s3 + $0x30] sm:$0xff] %v416
  %442 = vst [vmem:[%s3 + $0x38] sm:$0xff] %v417
  %443 = vst [vmem:[%s3 + $0x40] sm:$0xff] %v418
  %444 = vst [vmem:[%s3 + $0x48] sm:$0xff] %v419
  %445 = vst [vmem:[%s3 + $0x50] sm:$0xff] %v420
  %446 = vst [vmem:[%s3 + $0x58] sm:$0xff] %v421
  %447 = vst [vmem:[%s3 + $0x60] sm:$0xff] %v422
  %448 = vst [vmem:[%s3 + $0x68] sm:$0xff] %v423
  %449 = vst [vmem:[%s3 + $0x70] sm:$0xff] %v424
  %450 = vst [vmem:[%s3 + $0x78] sm:$0xff] %v425
  %451 = vst [vmem:[%s3 + $0x80] sm:$0xff] %v426
  %452 = vst [vmem:[%s3 + $0x88] sm:$0xff] %v427
  %453 = vst [vmem:[%s3 + $0x90] sm:$0xff] %v428
  %454 = vst [vmem:[%s3 + $0x98] sm:$0xff] %v429
  %455 = vst [vmem:[%s3 + $0xa0] sm:$0xff] %v430
  %456 = vst [vmem:[%s3 + $0xa8] sm:$0xff] %v431
  %457 = vst [vmem:[%s3 + $0xb0] sm:$0xff] %v432
  %458 = vst [vmem:[%s3 + $0xb8] sm:$0xff] %v433
  %459 = vst [vmem:[%s3 + $0xc0] sm:$0xff] %v434
  // Predicated region
  $region18: #{video_autoencoder_lstm.10} parent=0 // pred_check
    _
  $region19: #{video_autoencoder_lstm.10} parent=0 // pred_check_branch
    %461 = sbr.rel (0) target = $region21
  $region20: #{video_autoencoder_lstm.10} parent=0 // pred_region
    _
  $region21: #{video_autoencoder_lstm.10} parent=0 // pred_fallthru
    _
  // Predicated region
  $region22: #{video_autoencoder_lstm.10} parent=0 // pred_check
    _
  $region23: #{video_autoencoder_lstm.10} parent=0 // pred_check_branch
    %463 = sbr.rel (0) target = $region25
  $region24: #{video_autoencoder_lstm.10} parent=0 // pred_region
    _
  $region25: #{video_autoencoder_lstm.10} parent=0 // pred_fallthru
    _

// kernel: video_autoencoder_lstm.12
$region0: #{video_autoencoder_lstm.12}
  #allocation0 [shape = 'u32[]', space=smem, size = 0x4, offset = 0x4, fixed_abs, tag = 'smem constant byte address 0x4 - core index']
  #allocation1 [shape = 'u32[72,128]{1,0:T(1,128)}', space=vmem, size = 0x9000, scoped, tag = 'internal scratch']
  #allocation2 [shape = 'f32[16,256]{1,0:T(8,128)}', space=vmem, size = 0x4000, scoped, tag = 'scratch operand']
  %s0 = inlined_call_operand.vmem [shape: bf16[16,640], index: 0, kind: input, shape index: {}]
  %s1 = inlined_call_operand.vmem [shape: bf16[640,256], index: 1, kind: input, shape index: {}]
  %s2 = inlined_call_operand.vmem [shape: f32[1,256], index: 2, kind: input, shape index: {}]
  %s3 = inlined_call_operand.vmem [shape: f32[16,256], index: 3, kind: output, shape index: {}]
  %s4 = sld [smem:[#allocation0]]
  $region26: #{video_autoencoder_lstm.12} parent=0
    _
  %s6 = ssub.s32 1, %s4
  %s7 = scalar_select 0, %s6, %s4
  // Predicated region
  $region2: #{video_autoencoder_lstm.12} parent=0 // pred_check
    _
  $region3: #{video_autoencoder_lstm.12} parent=0 // pred_check_branch
    %9 = sbr.rel (0) target = $region5
  $region4: #{video_autoencoder_lstm.12} parent=0 // pred_region
    _
  $region5: #{video_autoencoder_lstm.12} parent=0 // pred_fallthru
    _
  // Predicated region
  $region6: #{video_autoencoder_lstm.12} parent=0 // pred_check
    _
  $region7: #{video_autoencoder_lstm.12} parent=0 // pred_check_branch
    %11 = sbr.rel (0) target = $region9
  $region8: #{video_autoencoder_lstm.12} parent=0 // pred_region
    _
  $region9: #{video_autoencoder_lstm.12} parent=0 // pred_fallthru
    _
  // Predicated region
  $region10: #{video_autoencoder_lstm.12} parent=0 // pred_check
    _
  $region11: #{video_autoencoder_lstm.12} parent=0 // pred_check_branch
    %13 = sbr.rel (0) target = $region13
  $region12: #{video_autoencoder_lstm.12} parent=0 // pred_region
    _
  $region13: #{video_autoencoder_lstm.12} parent=0 // pred_fallthru
    _
  %p14 = scmp.eq.s32.totalorder 0, 0
  // Predicated region
  $region14: #{video_autoencoder_lstm.12} parent=0 // pred_check
    %p15 = pneg %p14
  $region15: #{video_autoencoder_lstm.12} parent=0 // pred_check_branch
    %17 = sbr.rel (%p15) target = $region17
  $region16: #{video_autoencoder_lstm.12} parent=0 // pred_region
    %18 = vst [vmem:[#allocation2] sm:$0xff] 0.0
    %19 = vst [vmem:[#allocation2 + $0x8] sm:$0xff] 0.0
    %20 = vst [vmem:[#allocation2 + $0x10] sm:$0xff] 0.0
    %21 = vst [vmem:[#allocation2 + $0x18] sm:$0xff] 0.0
  $region17: #{video_autoencoder_lstm.12} parent=0 // pred_fallthru
    _
  %v22 = vld [vmem:[#allocation2] sm:$0xff]
  %v23 = vld [vmem:[#allocation2 + $0x8] sm:$0xff]
  %v24 = vld [vmem:[#allocation2 + $0x10] sm:$0xff]
  %v25 = vld [vmem:[#allocation2 + $0x18] sm:$0xff]
  %v26 = vld [vmem:[%s0] sm:$0xff]
  %v27 = vld [vmem:[%s0 + $0x8] sm:$0xff]
  %v28 = vld [vmem:[%s0 + $0x10] sm:$0xf]
  %v29 = vld [vmem:[%s0 + $0x14] sm:$0xff]
  %v30 = vld [vmem:[%s0 + $0x1c] sm:$0xff]
  %v31 = vld [vmem:[%s0 + $0x24] sm:$0xf]
  %v32 = vld [vmem:[%s1] sm:$0xff]
  %v33 = vld [vmem:[%s1 + $0x8] sm:$0xff]
  %v34 = vld [vmem:[%s1 + $0x10] sm:$0xff]
  %v35 = vld [vmem:[%s1 + $0x18] sm:$0xff]
  %v36 = vld [vmem:[%s1 + $0x20] sm:$0xff]
  %v37 = vld [vmem:[%s1 + $0x28] sm:$0xff]
  %v38 = vld [vmem:[%s1 + $0x30] sm:$0xff]
  %v39 = vld [vmem:[%s1 + $0x38] sm:$0xff]
  %v40 = vld [vmem:[%s1 + $0x40] sm:$0xff]
  %v41 = vld [vmem:[%s1 + $0x48] sm:$0xff]
  %v42 = vld [vmem:[%s1 + $0x50] sm:$0xff]
  %v43 = vld [vmem:[%s1 + $0x58] sm:$0xff]
  %v44 = vld [vmem:[%s1 + $0x60] sm:$0xff]
  %v45 = vld [vmem:[%s1 + $0x68] sm:$0xff]
  %v46 = vld [vmem:[%s1 + $0x70] sm:$0xff]
  %v47 = vld [vmem:[%s1 + $0x78] sm:$0xff]
  %v48 = vld [vmem:[%s1 + $0x80] sm:$0xff]
  %v49 = vld [vmem:[%s1 + $0x88] sm:$0xff]
  %v50 = vld [vmem:[%s1 + $0x90] sm:$0xff]
  %v51 = vld [vmem:[%s1 + $0x98] sm:$0xff]
  %v52 = vld [vmem:[%s1 + $0xa0] sm:$0xff]
  %v53 = vld [vmem:[%s1 + $0xa8] sm:$0xff]
  %v54 = vld [vmem:[%s1 + $0xb0] sm:$0xff]
  %v55 = vld [vmem:[%s1 + $0xb8] sm:$0xff]
  %v56 = vld [vmem:[%s1 + $0xc0] sm:$0xff]
  %v57 = vld [vmem:[%s1 + $0xc8] sm:$0xff]
  %v58 = vld [vmem:[%s1 + $0xd0] sm:$0xff]
  %v59 = vld [vmem:[%s1 + $0xd8] sm:$0xff]
  %v60 = vld [vmem:[%s1 + $0xe0] sm:$0xff]
  %v61 = vld [vmem:[%s1 + $0xe8] sm:$0xff]
  %v62 = vld [vmem:[%s1 + $0xf0] sm:$0xff]
  %v63 = vld [vmem:[%s1 + $0xf8] sm:$0xff]
  %v64 = vld [vmem:[%s1 + $0x100] sm:$0xff]
  %v65 = vld [vmem:[%s1 + $0x108] sm:$0xff]
  %v66 = vld [vmem:[%s1 + $0x110] sm:$0xff]
  %v67 = vld [vmem:[%s1 + $0x118] sm:$0xff]
  %v68 = vld [vmem:[%s1 + $0x120] sm:$0xff]
  %v69 = vld [vmem:[%s1 + $0x128] sm:$0xff]
  %v70 = vld [vmem:[%s1 + $0x130] sm:$0xff]
  %v71 = vld [vmem:[%s1 + $0x138] sm:$0xff]
  %v72 = vld [vmem:[%s1 + $0x140] sm:$0xff]
  %v73 = vld [vmem:[%s1 + $0x148] sm:$0xff]
  %v74 = vld [vmem:[%s1 + $0x150] sm:$0xff]
  %v75 = vld [vmem:[%s1 + $0x158] sm:$0xff]
  %v76 = vld [vmem:[%s1 + $0x160] sm:$0xff]
  %v77 = vld [vmem:[%s1 + $0x168] sm:$0xff]
  %v78 = vld [vmem:[%s1 + $0x170] sm:$0xff]
  %v79 = vld [vmem:[%s1 + $0x178] sm:$0xff]
  %v80 = vld [vmem:[%s1 + $0x180] sm:$0xff]
  %v81 = vld [vmem:[%s1 + $0x188] sm:$0xff]
  %v82 = vld [vmem:[%s1 + $0x190] sm:$0xff]
  %v83 = vld [vmem:[%s1 + $0x198] sm:$0xff]
  %v84 = vld [vmem:[%s1 + $0x1a0] sm:$0xff]
  %v85 = vld [vmem:[%s1 + $0x1a8] sm:$0xff]
  %v86 = vld [vmem:[%s1 + $0x1b0] sm:$0xff]
  %v87 = vld [vmem:[%s1 + $0x1b8] sm:$0xff]
  %v88 = vld [vmem:[%s1 + $0x1c0] sm:$0xff]
  %v89 = vld [vmem:[%s1 + $0x1c8] sm:$0xff]
  %v90 = vld [vmem:[%s1 + $0x1d0] sm:$0xff]
  %v91 = vld [vmem:[%s1 + $0x1d8] sm:$0xff]
  %v92 = vld [vmem:[%s1 + $0x1e0] sm:$0xff]
  %v93 = vld [vmem:[%s1 + $0x1e8] sm:$0xff]
  %v94 = vld [vmem:[%s1 + $0x1f0] sm:$0xff]
  %v95 = vld [vmem:[%s1 + $0x1f8] sm:$0xff]
  %v96 = vld [vmem:[%s1 + $0x200] sm:$0xff]
  %v97 = vld [vmem:[%s1 + $0x208] sm:$0xff]
  %v98 = vld [vmem:[%s1 + $0x210] sm:$0xff]
  %v99 = vld [vmem:[%s1 + $0x218] sm:$0xff]
  %v100 = vld [vmem:[%s1 + $0x220] sm:$0xff]
  %v101 = vld [vmem:[%s1 + $0x228] sm:$0xff]
  %v102 = vld [vmem:[%s1 + $0x230] sm:$0xff]
  %v103 = vld [vmem:[%s1 + $0x238] sm:$0xff]
  %v104 = vld [vmem:[%s1 + $0x240] sm:$0xff]
  %v105 = vld [vmem:[%s1 + $0x248] sm:$0xff]
  %v106 = vld [vmem:[%s1 + $0x250] sm:$0xff]
  %v107 = vld [vmem:[%s1 + $0x258] sm:$0xff]
  %v108 = vld [vmem:[%s1 + $0x260] sm:$0xff]
  %v109 = vld [vmem:[%s1 + $0x268] sm:$0xff]
  %v110 = vld [vmem:[%s1 + $0x270] sm:$0xff]
  %v111 = vld [vmem:[%s1 + $0x278] sm:$0xff]
  %v118 = vunpack.c.l.b16 %v26
  %v119 = vunpack.c.h.b16 %v26
  %v120 = vunpack.c.l.b16 %v27
  %v121 = vunpack.c.h.b16 %v27
  %v122 = vunpack.c.l.b16 %v28
  %v123 = vunpack.c.l.b16 %v29
  %v124 = vunpack.c.h.b16 %v29
  %v125 = vunpack.c.l.b16 %v30
  %v126 = vunpack.c.h.b16 %v30
  %v127 = vunpack.c.l.b16 %v31
  %v128 = vpack.c.b16 %v123, %v118
  %v129 = vpack.c.b16 %v124, %v119
  %v130 = vpack.c.b16 %v125, %v120
  %v131 = vpack.c.b16 %v126, %v121
  %v132 = vpack.c.b16 %v127, %v122
  %v218 = vunpack.c.l.b16 %v32
  %v219 = vunpack.c.h.b16 %v32
  %v220 = vunpack.c.l.b16 %v33
  %v221 = vunpack.c.h.b16 %v33
  %v222 = vunpack.c.l.b16 %v34
  %v223 = vunpack.c.h.b16 %v34
  %v224 = vunpack.c.l.b16 %v35
  %v225 = vunpack.c.h.b16 %v35
  %v226 = vunpack.c.l.b16 %v36
  %v227 = vunpack.c.h.b16 %v36
  %v228 = vunpack.c.l.b16 %v37
  %v229 = vunpack.c.h.b16 %v37
  %v230 = vunpack.c.l.b16 %v38
  %v231 = vunpack.c.h.b16 %v38
  %v232 = vunpack.c.l.b16 %v39
  %v233 = vunpack.c.h.b16 %v39
  %v234 = vunpack.c.l.b16 %v40
  %v235 = vunpack.c.h.b16 %v40
  %v236 = vunpack.c.l.b16 %v41
  %v237 = vunpack.c.h.b16 %v41
  %v238 = vunpack.c.l.b16 %v42
  %v239 = vunpack.c.h.b16 %v42
  %v240 = vunpack.c.l.b16 %v43
  %v241 = vunpack.c.h.b16 %v43
  %v242 = vunpack.c.l.b16 %v44
  %v243 = vunpack.c.h.b16 %v44
  %v244 = vunpack.c.l.b16 %v45
  %v245 = vunpack.c.h.b16 %v45
  %v246 = vunpack.c.l.b16 %v46
  %v247 = vunpack.c.h.b16 %v46
  %v248 = vunpack.c.l.b16 %v47
  %v249 = vunpack.c.h.b16 %v47
  %v250 = vunpack.c.l.b16 %v48
  %v251 = vunpack.c.h.b16 %v48
  %v252 = vunpack.c.l.b16 %v49
  %v253 = vunpack.c.h.b16 %v49
  %v254 = vunpack.c.l.b16 %v50
  %v255 = vunpack.c.h.b16 %v50
  %v256 = vunpack.c.l.b16 %v51
  %v257 = vunpack.c.h.b16 %v51
  %v258 = vunpack.c.l.b16 %v52
  %v259 = vunpack.c.h.b16 %v52
  %v260 = vunpack.c.l.b16 %v53
  %v261 = vunpack.c.h.b16 %v53
  %v262 = vunpack.c.l.b16 %v54
  %v263 = vunpack.c.h.b16 %v54
  %v264 = vunpack.c.l.b16 %v55
  %v265 = vunpack.c.h.b16 %v55
  %v266 = vunpack.c.l.b16 %v56
  %v267 = vunpack.c.h.b16 %v56
  %v268 = vunpack.c.l.b16 %v57
  %v269 = vunpack.c.h.b16 %v57
  %v270 = vunpack.c.l.b16 %v58
  %v271 = vunpack.c.h.b16 %v58
  %v272 = vunpack.c.l.b16 %v59
  %v273 = vunpack.c.h.b16 %v59
  %v274 = vunpack.c.l.b16 %v60
  %v275 = vunpack.c.h.b16 %v60
  %v276 = vunpack.c.l.b16 %v61
  %v277 = vunpack.c.h.b16 %v61
  %v278 = vunpack.c.l.b16 %v62
  %v279 = vunpack.c.h.b16 %v62
  %v280 = vunpack.c.l.b16 %v63
  %v281 = vunpack.c.h.b16 %v63
  %v282 = vunpack.c.l.b16 %v64
  %v283 = vunpack.c.h.b16 %v64
  %v284 = vunpack.c.l.b16 %v65
  %v285 = vunpack.c.h.b16 %v65
  %v286 = vunpack.c.l.b16 %v66
  %v287 = vunpack.c.h.b16 %v66
  %v288 = vunpack.c.l.b16 %v67
  %v289 = vunpack.c.h.b16 %v67
  %v290 = vunpack.c.l.b16 %v68
  %v291 = vunpack.c.h.b16 %v68
  %v292 = vunpack.c.l.b16 %v69
  %v293 = vunpack.c.h.b16 %v69
  %v294 = vunpack.c.l.b16 %v70
  %v295 = vunpack.c.h.b16 %v70
  %v296 = vunpack.c.l.b16 %v71
  %v297 = vunpack.c.h.b16 %v71
  %v298 = vunpack.c.l.b16 %v72
  %v299 = vunpack.c.h.b16 %v72
  %v300 = vunpack.c.l.b16 %v73
  %v301 = vunpack.c.h.b16 %v73
  %v302 = vunpack.c.l.b16 %v74
  %v303 = vunpack.c.h.b16 %v74
  %v304 = vunpack.c.l.b16 %v75
  %v305 = vunpack.c.h.b16 %v75
  %v306 = vunpack.c.l.b16 %v76
  %v307 = vunpack.c.h.b16 %v76
  %v308 = vunpack.c.l.b16 %v77
  %v309 = vunpack.c.h.b16 %v77
  %v310 = vunpack.c.l.b16 %v78
  %v311 = vunpack.c.h.b16 %v78
  %v312 = vunpack.c.l.b16 %v79
  %v313 = vunpack.c.h.b16 %v79
  %v314 = vunpack.c.l.b16 %v80
  %v315 = vunpack.c.h.b16 %v80
  %v316 = vunpack.c.l.b16 %v81
  %v317 = vunpack.c.h.b16 %v81
  %v318 = vunpack.c.l.b16 %v82
  %v319 = vunpack.c.h.b16 %v82
  %v320 = vunpack.c.l.b16 %v83
  %v321 = vunpack.c.h.b16 %v83
  %v322 = vunpack.c.l.b16 %v84
  %v323 = vunpack.c.h.b16 %v84
  %v324 = vunpack.c.l.b16 %v85
  %v325 = vunpack.c.h.b16 %v85
  %v326 = vunpack.c.l.b16 %v86
  %v327 = vunpack.c.h.b16 %v86
  %v328 = vunpack.c.l.b16 %v87
  %v329 = vunpack.c.h.b16 %v87
  %v330 = vunpack.c.l.b16 %v88
  %v331 = vunpack.c.h.b16 %v88
  %v332 = vunpack.c.l.b16 %v89
  %v333 = vunpack.c.h.b16 %v89
  %v334 = vunpack.c.l.b16 %v90
  %v335 = vunpack.c.h.b16 %v90
  %v336 = vunpack.c.l.b16 %v91
  %v337 = vunpack.c.h.b16 %v91
  %v338 = vunpack.c.l.b16 %v92
  %v339 = vunpack.c.h.b16 %v92
  %v340 = vunpack.c.l.b16 %v93
  %v341 = vunpack.c.h.b16 %v93
  %v342 = vunpack.c.l.b16 %v94
  %v343 = vunpack.c.h.b16 %v94
  %v344 = vunpack.c.l.b16 %v95
  %v345 = vunpack.c.h.b16 %v95
  %v346 = vunpack.c.l.b16 %v96
  %v347 = vunpack.c.h.b16 %v96
  %v348 = vunpack.c.l.b16 %v97
  %v349 = vunpack.c.h.b16 %v97
  %v350 = vunpack.c.l.b16 %v98
  %v351 = vunpack.c.h.b16 %v98
  %v352 = vunpack.c.l.b16 %v99
  %v353 = vunpack.c.h.b16 %v99
  %v354 = vunpack.c.l.b16 %v100
  %v355 = vunpack.c.h.b16 %v100
  %v356 = vunpack.c.l.b16 %v101
  %v357 = vunpack.c.h.b16 %v101
  %v358 = vunpack.c.l.b16 %v102
  %v359 = vunpack.c.h.b16 %v102
  %v360 = vunpack.c.l.b16 %v103
  %v361 = vunpack.c.h.b16 %v103
  %v362 = vunpack.c.l.b16 %v104
  %v363 = vunpack.c.h.b16 %v104
  %v364 = vunpack.c.l.b16 %v105
  %v365 = vunpack.c.h.b16 %v105
  %v366 = vunpack.c.l.b16 %v106
  %v367 = vunpack.c.h.b16 %v106
  %v368 = vunpack.c.l.b16 %v107
  %v369 = vunpack.c.h.b16 %v107
  %v370 = vunpack.c.l.b16 %v108
  %v371 = vunpack.c.h.b16 %v108
  %v372 = vunpack.c.l.b16 %v109
  %v373 = vunpack.c.h.b16 %v109
  %v374 = vunpack.c.l.b16 %v110
  %v375 = vunpack.c.h.b16 %v110
  %v376 = vunpack.c.l.b16 %v111
  %v377 = vunpack.c.h.b16 %v111
  %v378 = vpack.c.b16 %v220, %v218
  %v379 = vpack.c.b16 %v221, %v219
  %v380 = vpack.c.b16 %v224, %v222
  %v381 = vpack.c.b16 %v225, %v223
  %v382 = vpack.c.b16 %v228, %v226
  %v383 = vpack.c.b16 %v229, %v227
  %v384 = vpack.c.b16 %v232, %v230
  %v385 = vpack.c.b16 %v233, %v231
  %v386 = vpack.c.b16 %v236, %v234
  %v387 = vpack.c.b16 %v237, %v235
  %v388 = vpack.c.b16 %v240, %v238
  %v389 = vpack.c.b16 %v241, %v239
  %v390 = vpack.c.b16 %v244, %v242
  %v391 = vpack.c.b16 %v245, %v243
  %v392 = vpack.c.b16 %v248, %v246
  %v393 = vpack.c.b16 %v249, %v247
  %v394 = vpack.c.b16 %v252, %v250
  %v395 = vpack.c.b16 %v253, %v251
  %v396 = vpack.c.b16 %v256, %v254
  %v397 = vpack.c.b16 %v257, %v255
  %v398 = vpack.c.b16 %v260, %v258
  %v399 = vpack.c.b16 %v261, %v259
  %v400 = vpack.c.b16 %v264, %v262
  %v401 = vpack.c.b16 %v265, %v263
  %v402 = vpack.c.b16 %v268, %v266
  %v403 = vpack.c.b16 %v269, %v267
  %v404 = vpack.c.b16 %v272, %v270
  %v405 = vpack.c.b16 %v273, %v271
  %v406 = vpack.c.b16 %v276, %v274
  %v407 = vpack.c.b16 %v277, %v275
  %v408 = vpack.c.b16 %v280, %v278
  %v409 = vpack.c.b16 %v281, %v279
  %v410 = vpack.c.b16 %v284, %v282
  %v411 = vpack.c.b16 %v285, %v283
  %v412 = vpack.c.b16 %v288, %v286
  %v413 = vpack.c.b16 %v289, %v287
  %v414 = vpack.c.b16 %v292, %v290
  %v415 = vpack.c.b16 %v293, %v291
  %v416 = vpack.c.b16 %v296, %v294
  %v417 = vpack.c.b16 %v297, %v295
  %v418 = vpack.c.b16 %v300, %v298
  %v419 = vpack.c.b16 %v301, %v299
  %v420 = vpack.c.b16 %v304, %v302
  %v421 = vpack.c.b16 %v305, %v303
  %v422 = vpack.c.b16 %v308, %v306
  %v423 = vpack.c.b16 %v309, %v307
  %v424 = vpack.c.b16 %v312, %v310
  %v425 = vpack.c.b16 %v313, %v311
  %v426 = vpack.c.b16 %v316, %v314
  %v427 = vpack.c.b16 %v317, %v315
  %v428 = vpack.c.b16 %v320, %v318
  %v429 = vpack.c.b16 %v321, %v319
  %v430 = vpack.c.b16 %v324, %v322
  %v431 = vpack.c.b16 %v325, %v323
  %v432 = vpack.c.b16 %v328, %v326
  %v433 = vpack.c.b16 %v329, %v327
  %v434 = vpack.c.b16 %v332, %v330
  %v435 = vpack.c.b16 %v333, %v331
  %v436 = vpack.c.b16 %v336, %v334
  %v437 = vpack.c.b16 %v337, %v335
  %v438 = vpack.c.b16 %v340, %v338
  %v439 = vpack.c.b16 %v341, %v339
  %v440 = vpack.c.b16 %v344, %v342
  %v441 = vpack.c.b16 %v345, %v343
  %v442 = vpack.c.b16 %v348, %v346
  %v443 = vpack.c.b16 %v349, %v347
  %v444 = vpack.c.b16 %v352, %v350
  %v445 = vpack.c.b16 %v353, %v351
  %v446 = vpack.c.b16 %v356, %v354
  %v447 = vpack.c.b16 %v357, %v355
  %v448 = vpack.c.b16 %v360, %v358
  %v449 = vpack.c.b16 %v361, %v359
  %v450 = vpack.c.b16 %v364, %v362
  %v451 = vpack.c.b16 %v365, %v363
  %v452 = vpack.c.b16 %v368, %v366
  %v453 = vpack.c.b16 %v369, %v367
  %v454 = vpack.c.b16 %v372, %v370
  %v455 = vpack.c.b16 %v373, %v371
  %v456 = vpack.c.b16 %v376, %v374
  %v457 = vpack.c.b16 %v377, %v375
  %538 = vmatpush.bf16.msra.mxu0 %v392
  %539 = vmatpush.bf16.msra.mxu0 %v390
  %540 = vmatpush.bf16.msra.mxu0 %v388
  %541 = vmatpush.bf16.msra.mxu0 %v386
  %542 = vmatpush.bf16.msra.mxu0 %v384
  %543 = vmatpush.bf16.msra.mxu0 %v382
  %544 = vmatpush.bf16.msra.mxu0 %v380
  %545 = vmatpush.bf16.msra.mxu0 %v378
  %546 = vmatmul.bf16.gmra.mxu0 %v128
  %v547 = vpop.f32.mrf.mxu0
  %v548 = vadd.f32 0.0, %v547
  %v549 = vpop.f32.mrf.mxu0
  %v550 = vadd.f32 0.0, %v549
  %551 = vdwg.mxu0
  %552 = vmatpush.bf16.msra.mxu0 %v408
  %553 = vmatpush.bf16.msra.mxu0 %v406
  %554 = vmatpush.bf16.msra.mxu0 %v404
  %555 = vmatpush.bf16.msra.mxu0 %v402
  %556 = vmatpush.bf16.msra.mxu0 %v400
  %557 = vmatpush.bf16.msra.mxu0 %v398
  %558 = vmatpush.bf16.msra.mxu0 %v396
  %559 = vmatpush.bf16.msra.mxu0 %v394
  %560 = vmatmul.bf16.gmra.mxu0 %v129
  %v561 = vpop.f32.mrf.mxu0
  %v562 = vadd.f32 %v548, %v561
  %v563 = vpop.f32.mrf.mxu0
  %v564 = vadd.f32 %v550, %v563
  %565 = vdwg.mxu0
  %566 = vmatpush.bf16.msra.mxu0 %v424
  %567 = vmatpush.bf16.msra.mxu0 %v422
  %568 = vmatpush.bf16.msra.mxu0 %v420
  %569 = vmatpush.bf16.msra.mxu0 %v418
  %570 = vmatpush.bf16.msra.mxu0 %v416
  %571 = vmatpush.bf16.msra.mxu0 %v414
  %572 = vmatpush.bf16.msra.mxu0 %v412
  %573 = vmatpush.bf16.msra.mxu0 %v410
  %574 = vmatmul.bf16.gmra.mxu0 %v130
  %v575 = vpop.f32.mrf.mxu0
  %v576 = vadd.f32 %v562, %v575
  %v577 = vpop.f32.mrf.mxu0
  %v578 = vadd.f32 %v564, %v577
  %579 = vdwg.mxu0
  %580 = vmatpush.bf16.msra.mxu0 %v440
  %581 = vmatpush.bf16.msra.mxu0 %v438
  %582 = vmatpush.bf16.msra.mxu0 %v436
  %583 = vmatpush.bf16.msra.mxu0 %v434
  %584 = vmatpush.bf16.msra.mxu0 %v432
  %585 = vmatpush.bf16.msra.mxu0 %v430
  %586 = vmatpush.bf16.msra.mxu0 %v428
  %587 = vmatpush.bf16.msra.mxu0 %v426
  %588 = vmatmul.bf16.gmra.mxu0 %v131
  %v589 = vpop.f32.mrf.mxu0
  %v590 = vadd.f32 %v576, %v589
  %v591 = vpop.f32.mrf.mxu0
  %v592 = vadd.f32 %v578, %v591
  %593 = vdwg.mxu0
  %594 = vmatpush.bf16.msra.mxu0 %v456
  %595 = vmatpush.bf16.msra.mxu0 %v454
  %596 = vmatpush.bf16.msra.mxu0 %v452
  %597 = vmatpush.bf16.msra.mxu0 %v450
  %598 = vmatpush.bf16.msra.mxu0 %v448
  %599 = vmatpush.bf16.msra.mxu0 %v446
  %600 = vmatpush.bf16.msra.mxu0 %v444
  %601 = vmatpush.bf16.msra.mxu0 %v442
  %602 = vmatmul.bf16.gmra.mxu0 %v132
  %v603 = vpop.f32.mrf.mxu0
  %v604 = vadd.f32 %v590, %v603
  %v605 = vpop.f32.mrf.mxu0
  %v606 = vadd.f32 %v592, %v605
  %607 = vdwg.mxu0
  %608 = vmatpush.bf16.msra.mxu0 %v393
  %609 = vmatpush.bf16.msra.mxu0 %v391
  %610 = vmatpush.bf16.msra.mxu0 %v389
  %611 = vmatpush.bf16.msra.mxu0 %v387
  %612 = vmatpush.bf16.msra.mxu0 %v385
  %613 = vmatpush.bf16.msra.mxu0 %v383
  %614 = vmatpush.bf16.msra.mxu0 %v381
  %615 = vmatpush.bf16.msra.mxu0 %v379
  %616 = vmatmul.bf16.gmra.mxu0 %v128
  %v617 = vpop.f32.mrf.mxu0
  %v618 = vadd.f32 0.0, %v617
  %v619 = vpop.f32.mrf.mxu0
  %v620 = vadd.f32 0.0, %v619
  %621 = vdwg.mxu0
  %622 = vmatpush.bf16.msra.mxu0 %v409
  %623 = vmatpush.bf16.msra.mxu0 %v407
  %624 = vmatpush.bf16.msra.mxu0 %v405
  %625 = vmatpush.bf16.msra.mxu0 %v403
  %626 = vmatpush.bf16.msra.mxu0 %v401
  %627 = vmatpush.bf16.msra.mxu0 %v399
  %628 = vmatpush.bf16.msra.mxu0 %v397
  %629 = vmatpush.bf16.msra.mxu0 %v395
  %630 = vmatmul.bf16.gmra.mxu0 %v129
  %v631 = vpop.f32.mrf.mxu0
  %v632 = vadd.f32 %v618, %v631
  %v633 = vpop.f32.mrf.mxu0
  %v634 = vadd.f32 %v620, %v633
  %635 = vdwg.mxu0
  %636 = vmatpush.bf16.msra.mxu0 %v425
  %637 = vmatpush.bf16.msra.mxu0 %v423
  %638 = vmatpush.bf16.msra.mxu0 %v421
  %639 = vmatpush.bf16.msra.mxu0 %v419
  %640 = vmatpush.bf16.msra.mxu0 %v417
  %641 = vmatpush.bf16.msra.mxu0 %v415
  %642 = vmatpush.bf16.msra.mxu0 %v413
  %643 = vmatpush.bf16.msra.mxu0 %v411
  %644 = vmatmul.bf16.gmra.mxu0 %v130
  %v645 = vpop.f32.mrf.mxu0
  %v646 = vadd.f32 %v632, %v645
  %v647 = vpop.f32.mrf.mxu0
  %v648 = vadd.f32 %v634, %v647
  %649 = vdwg.mxu0
  %650 = vmatpush.bf16.msra.mxu0 %v441
  %651 = vmatpush.bf16.msra.mxu0 %v439
  %652 = vmatpush.bf16.msra.mxu0 %v437
  %653 = vmatpush.bf16.msra.mxu0 %v435
  %654 = vmatpush.bf16.msra.mxu0 %v433
  %655 = vmatpush.bf16.msra.mxu0 %v431
  %656 = vmatpush.bf16.msra.mxu0 %v429
  %657 = vmatpush.bf16.msra.mxu0 %v427
  %658 = vmatmul.bf16.gmra.mxu0 %v131
  %v659 = vpop.f32.mrf.mxu0
  %v660 = vadd.f32 %v646, %v659
  %v661 = vpop.f32.mrf.mxu0
  %v662 = vadd.f32 %v648, %v661
  %663 = vdwg.mxu0
  %664 = vmatpush.bf16.msra.mxu0 %v457
  %665 = vmatpush.bf16.msra.mxu0 %v455
  %666 = vmatpush.bf16.msra.mxu0 %v453
  %667 = vmatpush.bf16.msra.mxu0 %v451
  %668 = vmatpush.bf16.msra.mxu0 %v449
  %669 = vmatpush.bf16.msra.mxu0 %v447
  %670 = vmatpush.bf16.msra.mxu0 %v445
  %671 = vmatpush.bf16.msra.mxu0 %v443
  %672 = vmatmul.bf16.gmra.mxu0 %v132
  %v673 = vpop.f32.mrf.mxu0
  %v674 = vadd.f32 %v660, %v673
  %v675 = vpop.f32.mrf.mxu0
  %v676 = vadd.f32 %v662, %v675
  %677 = vdwg.mxu0
  %v678 = vadd.f32 %v22, %v604
  %v679 = vadd.f32 %v23, %v674
  %v680 = vadd.f32 %v24, %v606
  %v681 = vadd.f32 %v25, %v676
  %682 = vst [vmem:[#allocation2] sm:$0xff] %v678
  %683 = vst [vmem:[#allocation2 + $0x8] sm:$0xff] %v679
  %684 = vst [vmem:[#allocation2 + $0x10] sm:$0xff] %v680
  %685 = vst [vmem:[#allocation2 + $0x18] sm:$0xff] %v681
  %v686 = vld [vmem:[#allocation2] sm:$0xff]
  %v687 = vld [vmem:[#allocation2 + $0x8] sm:$0xff]
  %v688 = vld [vmem:[#allocation2 + $0x10] sm:$0xff]
  %v689 = vld [vmem:[#allocation2 + $0x18] sm:$0xff]
  %v690 = vld [vmem:[%s2] sm:$0x3]
  %v692 = vperm.slane %v690, 0
  %v693 = vperm.slane %v690, 1
  %v696 = vadd.f32 %v686, %v692
  %v697 = vadd.f32 %v687, %v693
  %v698 = vadd.f32 %v688, %v692
  %v699 = vadd.f32 %v689, %v693
  %700 = vst [vmem:[%s3] sm:$0xff] %v696
  %701 = vst [vmem:[%s3 + $0x8] sm:$0xff] %v697
  %702 = vst [vmem:[%s3 + $0x10] sm:$0xff] %v698
  %703 = vst [vmem:[%s3 + $0x18] sm:$0xff] %v699
  // Predicated region
  $region18: #{video_autoencoder_lstm.12} parent=0 // pred_check
    _
  $region19: #{video_autoencoder_lstm.12} parent=0 // pred_check_branch
    %705 = sbr.rel (0) target = $region21
  $region20: #{video_autoencoder_lstm.12} parent=0 // pred_region
    _
  $region21: #{video_autoencoder_lstm.12} parent=0 // pred_fallthru
    _
  // Predicated region
  $region22: #{video_autoencoder_lstm.12} parent=0 // pred_check
    _
  $region23: #{video_autoencoder_lstm.12} parent=0 // pred_check_branch
    %707 = sbr.rel (0) target = $region25
  $region24: #{video_autoencoder_lstm.12} parent=0 // pred_region
    _
  $region25: #{video_autoencoder_lstm.12} parent=0 // pred_fallthru
    _

// kernel: video_autoencoder_lstm.11
$region0: #{video_autoencoder_lstm.11}
  #allocation0 [shape = 'u32[]', space=smem, size = 0x4, offset = 0x4, fixed_abs, tag = 'smem constant byte address 0x4 - core index']
  #allocation1 [shape = 'u32[72,128]{1,0:T(1,128)}', space=vmem, size = 0x9000, scoped, tag = 'internal scratch']
  #allocation2 [shape = 'f32[16,128]{1,0:T(8,128)}', space=vmem, size = 0x2000, scoped, tag = 'scratch operand']
  %s0 = inlined_call_operand.vmem [shape: bf16[16,3200], index: 0, kind: input, shape index: {}]
  %s1 = inlined_call_operand.vmem [shape: bf16[3200,128], index: 1, kind: input, shape index: {}]
  %s2 = inlined_call_operand.vmem [shape: f32[1,128], index: 2, kind: input, shape index: {}]
  %s3 = inlined_call_operand.vmem [shape: f32[16,128], index: 3, kind: output, shape index: {}]
  %s4 = sld [smem:[#allocation0]]
  $region26: #{video_autoencoder_lstm.11} parent=0
    _
  %s6 = ssub.s32 1, %s4
  %s7 = scalar_select 0, %s6, %s4
  // Predicated region
  $region2: #{video_autoencoder_lstm.11} parent=0 // pred_check
    _
  $region3: #{video_autoencoder_lstm.11} parent=0 // pred_check_branch
    %9 = sbr.rel (0) target = $region5
  $region4: #{video_autoencoder_lstm.11} parent=0 // pred_region
    _
  $region5: #{video_autoencoder_lstm.11} parent=0 // pred_fallthru
    _
  // Predicated region
  $region6: #{video_autoencoder_lstm.11} parent=0 // pred_check
    _
  $region7: #{video_autoencoder_lstm.11} parent=0 // pred_check_branch
    %11 = sbr.rel (0) target = $region9
  $region8: #{video_autoencoder_lstm.11} parent=0 // pred_region
    _
  $region9: #{video_autoencoder_lstm.11} parent=0 // pred_fallthru
    _
  // Predicated region
  $region10: #{video_autoencoder_lstm.11} parent=0 // pred_check
    _
  $region11: #{video_autoencoder_lstm.11} parent=0 // pred_check_branch
    %13 = sbr.rel (0) target = $region13
  $region12: #{video_autoencoder_lstm.11} parent=0 // pred_region
    _
  $region13: #{video_autoencoder_lstm.11} parent=0 // pred_fallthru
    _
  %p14 = scmp.eq.s32.totalorder 0, 0
  // Predicated region
  $region14: #{video_autoencoder_lstm.11} parent=0 // pred_check
    %p15 = pneg %p14
  $region15: #{video_autoencoder_lstm.11} parent=0 // pred_check_branch
    %17 = sbr.rel (%p15) target = $region17
  $region16: #{video_autoencoder_lstm.11} parent=0 // pred_region
    %18 = vst [vmem:[#allocation2] sm:$0xff] 0.0
    %19 = vst [vmem:[#allocation2 + $0x8] sm:$0xff] 0.0
  $region17: #{video_autoencoder_lstm.11} parent=0 // pred_fallthru
    _
  %v20 = vld [vmem:[#allocation2] sm:$0xff]
  %v21 = vld [vmem:[#allocation2 + $0x8] sm:$0xff]
  %v22 = vld [vmem:[%s0] sm:$0xff]
  %v23 = vld [vmem:[%s0 + $0x8] sm:$0xff]
  %v24 = vld [vmem:[%s0 + $0x10] sm:$0xff]
  %v25 = vld [vmem:[%s0 + $0x18] sm:$0xff]
  %v26 = vld [vmem:[%s0 + $0x20] sm:$0xff]
  %v27 = vld [vmem:[%s0 + $0x28] sm:$0xff]
  %v28 = vld [vmem:[%s0 + $0x30] sm:$0xff]
  %v29 = vld [vmem:[%s0 + $0x38] sm:$0xff]
  %v30 = vld [vmem:[%s0 + $0x40] sm:$0xff]
  %v31 = vld [vmem:[%s0 + $0x48] sm:$0xff]
  %v32 = vld [vmem:[%s0 + $0x50] sm:$0xff]
  %v33 = vld [vmem:[%s0 + $0x58] sm:$0xff]
  %v34 = vld [vmem:[%s0 + $0x60] sm:$0xf]
  %v35 = vld [vmem:[%s0 + $0x64] sm:$0xff]
  %v36 = vld [vmem:[%s0 + $0x6c] sm:$0xff]
  %v37 = vld [vmem:[%s0 + $0x74] sm:$0xff]
  %v38 = vld [vmem:[%s0 + $0x7c] sm:$0xff]
  %v39 = vld [vmem:[%s0 + $0x84] sm:$0xff]
  %v40 = vld [vmem:[%s0 + $0x8c] sm:$0xff]
  %v41 = vld [vmem:[%s0 + $0x94] sm:$0xff]
  %v42 = vld [vmem:[%s0 + $0x9c] sm:$0xff]
  %v43 = vld [vmem:[%s0 + $0xa4] sm:$0xff]
  %v44 = vld [vmem:[%s0 + $0xac] sm:$0xff]
  %v45 = vld [vmem:[%s0 + $0xb4] sm:$0xff]
  %v46 = vld [vmem:[%s0 + $0xbc] sm:$0xff]
  %v47 = vld [vmem:[%s0 + $0xc4] sm:$0xf]
  %v48 = vld [vmem:[%s1] sm:$0xf]
  %v49 = vld [vmem:[%s1 + $0x4] sm:$0xf]
  %v50 = vld [vmem:[%s1 + $0x8] sm:$0xf]
  %v51 = vld [vmem:[%s1 + $0xc] sm:$0xf]
  %v52 = vld [vmem:[%s1 + $0x10] sm:$0xf]
  %v53 = vld [vmem:[%s1 + $0x14] sm:$0xf]
  %v54 = vld [vmem:[%s1 + $0x18] sm:$0xf]
  %v55 = vld [vmem:[%s1 + $0x1c] sm:$0xf]
  %v56 = vld [vmem:[%s1 + $0x20] sm:$0xf]
  %v57 = vld [vmem:[%s1 + $0x24] sm:$0xf]
  %v58 = vld [vmem:[%s1 + $0x28] sm:$0xf]
  %v59 = vld [vmem:[%s1 + $0x2c] sm:$0xf]
  %v60 = vld [vmem:[%s1 + $0x30] sm:$0xf]
  %v61 = vld [vmem:[%s1 + $0x34] sm:$0xf]
  %v62 = vld [vmem:[%s1 + $0x38] sm:$0xf]
  %v63 = vld [vmem:[%s1 + $0x3c] sm:$0xf]
  %v64 = vld [vmem:[%s1 + $0x40] sm:$0xf]
  %v65 = vld [vmem:[%s1 + $0x44] sm:$0xf]
  %v66 = vld [vmem:[%s1 + $0x48] sm:$0xf]
  %v67 = vld [vmem:[%s1 + $0x4c] sm:$0xf]
  %v68 = vld [vmem:[%s1 + $0x50] sm:$0xf]
  %v69 = vld [vmem:[%s1 + $0x54] sm:$0xf]
  %v70 = vld [vmem:[%s1 + $0x58] sm:$0xf]
  %v71 = vld [vmem:[%s1 + $0x5c] sm:$0xf]
  %v72 = vld [vmem:[%s1 + $0x60] sm:$0xf]
  %v73 = vld [vmem:[%s1 + $0x64] sm:$0xf]
  %v74 = vld [vmem:[%s1 + $0x68] sm:$0xf]
  %v75 = vld [vmem:[%s1 + $0x6c] sm:$0xf]
  %v76 = vld [vmem:[%s1 + $0x70] sm:$0xf]
  %v77 = vld [vmem:[%s1 + $0x74] sm:$0xf]
  %v78 = vld [vmem:[%s1 + $0x78] sm:$0xf]
  %v79 = vld [vmem:[%s1 + $0x7c] sm:$0xf]
  %v80 = vld [vmem:[%s1 + $0x80] sm:$0xf]
  %v81 = vld [vmem:[%s1 + $0x84] sm:$0xf]
  %v82 = vld [vmem:[%s1 + $0x88] sm:$0xf]
  %v83 = vld [vmem:[%s1 + $0x8c] sm:$0xf]
  %v84 = vld [vmem:[%s1 + $0x90] sm:$0xf]
  %v85 = vld [vmem:[%s1 + $0x94] sm:$0xf]
  %v86 = vld [vmem:[%s1 + $0x98] sm:$0xf]
  %v87 = vld [vmem:[%s1 + $0x9c] sm:$0xf]
  %v88 = vld [vmem:[%s1 + $0xa0] sm:$0xf]
  %v89 = vld [vmem:[%s1 + $0xa4] sm:$0xf]
  %v90 = vld [vmem:[%s1 + $0xa8] sm:$0xf]
  %v91 = vld [vmem:[%s1 + $0xac] sm:$0xf]
  %v92 = vld [vmem:[%s1 + $0xb0] sm:$0xf]
  %v93 = vld [vmem:[%s1 + $0xb4] sm:$0xf]
  %v94 = vld [vmem:[%s1 + $0xb8] sm:$0xf]
  %v95 = vld [vmem:[%s1 + $0xbc] sm:$0xf]
  %v96 = vld [vmem:[%s1 + $0xc0] sm:$0xf]
  %v97 = vld [vmem:[%s1 + $0xc4] sm:$0xf]
  %v98 = vld [vmem:[%s1 + $0xc8] sm:$0xf]
  %v99 = vld [vmem:[%s1 + $0xcc] sm:$0xf]
  %v100 = vld [vmem:[%s1 + $0xd0] sm:$0xf]
  %v101 = vld [vmem:[%s1 + $0xd4] sm:$0xf]
  %v102 = vld [vmem:[%s1 + $0xd8] sm:$0xf]
  %v103 = vld [vmem:[%s1 + $0xdc] sm:$0xf]
  %v104 = vld [vmem:[%s1 + $0xe0] sm:$0xf]
  %v105 = vld [vmem:[%s1 + $0xe4] sm:$0xf]
  %v106 = vld [vmem:[%s1 + $0xe8] sm:$0xf]
  %v107 = vld [vmem:[%s1 + $0xec] sm:$0xf]
  %v108 = vld [vmem:[%s1 + $0xf0] sm:$0xf]
  %v109 = vld [vmem:[%s1 + $0xf4] sm:$0xf]
  %v110 = vld [vmem:[%s1 + $0xf8] sm:$0xf]
  %v111 = vld [vmem:[%s1 + $0xfc] sm:$0xf]
  %v112 = vld [vmem:[%s1 + $0x100] sm:$0xf]
  %v113 = vld [vmem:[%s1 + $0x104] sm:$0xf]
  %v114 = vld [vmem:[%s1 + $0x108] sm:$0xf]
  %v115 = vld [vmem:[%s1 + $0x10c] sm:$0xf]
  %v116 = vld [vmem:[%s1 + $0x110] sm:$0xf]
  %v117 = vld [vmem:[%s1 + $0x114] sm:$0xf]
  %v118 = vld [vmem:[%s1 + $0x118] sm:$0xf]
  %v119 = vld [vmem:[%s1 + $0x11c] sm:$0xf]
  %v120 = vld [vmem:[%s1 + $0x120] sm:$0xf]
  %v121 = vld [vmem:[%s1 + $0x124] sm:$0xf]
  %v122 = vld [vmem:[%s1 + $0x128] sm:$0xf]
  %v123 = vld [vmem:[%s1 + $0x12c] sm:$0xf]
  %v124 = vld [vmem:[%s1 + $0x130] sm:$0xf]
  %v125 = vld [vmem:[%s1 + $0x134] sm:$0xf]
  %v126 = vld [vmem:[%s1 + $0x138] sm:$0xf]
  %v127 = vld [vmem:[%s1 + $0x13c] sm:$0xf]
  %v128 = vld [vmem:[%s1 + $0x140] sm:$0xf]
  %v129 = vld [vmem:[%s1 + $0x144] sm:$0xf]
  %v130 = vld [vmem:[%s1 + $0x148] sm:$0xf]
  %v131 = vld [vmem:[%s1 + $0x14c] sm:$0xf]
  %v132 = vld [vmem:[%s1 + $0x150] sm:$0xf]
  %v133 = vld [vmem:[%s1 + $0x154] sm:$0xf]
  %v134 = vld [vmem:[%s1 + $0x158] sm:$0xf]
  %v135 = vld [vmem:[%s1 + $0x15c] sm:$0xf]
  %v136 = vld [vmem:[%s1 + $0x160] sm:$0xf]
  %v137 = vld [vmem:[%s1 + $0x164] sm:$0xf]
  %v138 = vld [vmem:[%s1 + $0x168] sm:$0xf]
  %v139 = vld [vmem:[%s1 + $0x16c] sm:$0xf]
  %v140 = vld [vmem:[%s1 + $0x170] sm:$0xf]
  %v141 = vld [vmem:[%s1 + $0x174] sm:$0xf]
  %v142 = vld [vmem:[%s1 + $0x178] sm:$0xf]
  %v143 = vld [vmem:[%s1 + $0x17c] sm:$0xf]
  %v144 = vld [vmem:[%s1 + $0x180] sm:$0xf]
  %v145 = vld [vmem:[%s1 + $0x184] sm:$0xf]
  %v146 = vld [vmem:[%s1 + $0x188] sm:$0xf]
  %v147 = vld [vmem:[%s1 + $0x18c] sm:$0xf]
  %v148 = vld [vmem:[%s1 + $0x190] sm:$0xf]
  %v149 = vld [vmem:[%s1 + $0x194] sm:$0xf]
  %v150 = vld [vmem:[%s1 + $0x198] sm:$0xf]
  %v151 = vld [vmem:[%s1 + $0x19c] sm:$0xf]
  %v152 = vld [vmem:[%s1 + $0x1a0] sm:$0xf]
  %v153 = vld [vmem:[%s1 + $0x1a4] sm:$0xf]
  %v154 = vld [vmem:[%s1 + $0x1a8] sm:$0xf]
  %v155 = vld [vmem:[%s1 + $0x1ac] sm:$0xf]
  %v156 = vld [vmem:[%s1 + $0x1b0] sm:$0xf]
  %v157 = vld [vmem:[%s1 + $0x1b4] sm:$0xf]
  %v158 = vld [vmem:[%s1 + $0x1b8] sm:$0xf]
  %v159 = vld [vmem:[%s1 + $0x1bc] sm:$0xf]
  %v160 = vld [vmem:[%s1 + $0x1c0] sm:$0xf]
  %v161 = vld [vmem:[%s1 + $0x1c4] sm:$0xf]
  %v162 = vld [vmem:[%s1 + $0x1c8] sm:$0xf]
  %v163 = vld [vmem:[%s1 + $0x1cc] sm:$0xf]
  %v164 = vld [vmem:[%s1 + $0x1d0] sm:$0xf]
  %v165 = vld [vmem:[%s1 + $0x1d4] sm:$0xf]
  %v166 = vld [vmem:[%s1 + $0x1d8] sm:$0xf]
  %v167 = vld [vmem:[%s1 + $0x1dc] sm:$0xf]
  %v168 = vld [vmem:[%s1 + $0x1e0] sm:$0xf]
  %v169 = vld [vmem:[%s1 + $0x1e4] sm:$0xf]
  %v170 = vld [vmem:[%s1 + $0x1e8] sm:$0xf]
  %v171 = vld [vmem:[%s1 + $0x1ec] sm:$0xf]
  %v172 = vld [vmem:[%s1 + $0x1f0] sm:$0xf]
  %v173 = vld [vmem:[%s1 + $0x1f4] sm:$0xf]
  %v174 = vld [vmem:[%s1 + $0x1f8] sm:$0xf]
  %v175 = vld [vmem:[%s1 + $0x1fc] sm:$0xf]
  %v176 = vld [vmem:[%s1 + $0x200] sm:$0xf]
  %v177 = vld [vmem:[%s1 + $0x204] sm:$0xf]
  %v178 = vld [vmem:[%s1 + $0x208] sm:$0xf]
  %v179 = vld [vmem:[%s1 + $0x20c] sm:$0xf]
  %v180 = vld [vmem:[%s1 + $0x210] sm:$0xf]
  %v181 = vld [vmem:[%s1 + $0x214] sm:$0xf]
  %v182 = vld [vmem:[%s1 + $0x218] sm:$0xf]
  %v183 = vld [vmem:[%s1 + $0x21c] sm:$0xf]
  %v184 = vld [vmem:[%s1 + $0x220] sm:$0xf]
  %v185 = vld [vmem:[%s1 + $0x224] sm:$0xf]
  %v186 = vld [vmem:[%s1 + $0x228] sm:$0xf]
  %v187 = vld [vmem:[%s1 + $0x22c] sm:$0xf]
  %v188 = vld [vmem:[%s1 + $0x230] sm:$0xf]
  %v189 = vld [vmem:[%s1 + $0x234] sm:$0xf]
  %v190 = vld [vmem:[%s1 + $0x238] sm:$0xf]
  %v191 = vld [vmem:[%s1 + $0x23c] sm:$0xf]
  %v192 = vld [vmem:[%s1 + $0x240] sm:$0xf]
  %v193 = vld [vmem:[%s1 + $0x244] sm:$0xf]
  %v194 = vld [vmem:[%s1 + $0x248] sm:$0xf]
  %v195 = vld [vmem:[%s1 + $0x24c] sm:$0xf]
  %v196 = vld [vmem:[%s1 + $0x250] sm:$0xf]
  %v197 = vld [vmem:[%s1 + $0x254] sm:$0xf]
  %v198 = vld [vmem:[%s1 + $0x258] sm:$0xf]
  %v199 = vld [vmem:[%s1 + $0x25c] sm:$0xf]
  %v200 = vld [vmem:[%s1 + $0x260] sm:$0xf]
  %v201 = vld [vmem:[%s1 + $0x264] sm:$0xf]
  %v202 = vld [vmem:[%s1 + $0x268] sm:$0xf]
  %v203 = vld [vmem:[%s1 + $0x26c] sm:$0xf]
  %v204 = vld [vmem:[%s1 + $0x270] sm:$0xf]
  %v205 = vld [vmem:[%s1 + $0x274] sm:$0xf]
  %v206 = vld [vmem:[%s1 + $0x278] sm:$0xf]
  %v207 = vld [vmem:[%s1 + $0x27c] sm:$0xf]
  %v208 = vld [vmem:[%s1 + $0x280] sm:$0xf]
  %v209 = vld [vmem:[%s1 + $0x284] sm:$0xf]
  %v210 = vld [vmem:[%s1 + $0x288] sm:$0xf]
  %v211 = vld [vmem:[%s1 + $0x28c] sm:$0xf]
  %v212 = vld [vmem:[%s1 + $0x290] sm:$0xf]
  %v213 = vld [vmem:[%s1 + $0x294] sm:$0xf]
  %v214 = vld [vmem:[%s1 + $0x298] sm:$0xf]
  %v215 = vld [vmem:[%s1 + $0x29c] sm:$0xf]
  %v216 = vld [vmem:[%s1 + $0x2a0] sm:$0xf]
  %v217 = vld [vmem:[%s1 + $0x2a4] sm:$0xf]
  %v218 = vld [vmem:[%s1 + $0x2a8] sm:$0xf]
  %v219 = vld [vmem:[%s1 + $0x2ac] sm:$0xf]
  %v220 = vld [vmem:[%s1 + $0x2b0] sm:$0xf]
  %v221 = vld [vmem:[%s1 + $0x2b4] sm:$0xf]
  %v222 = vld [vmem:[%s1 + $0x2b8] sm:$0xf]
  %v223 = vld [vmem:[%s1 + $0x2bc] sm:$0xf]
  %v224 = vld [vmem:[%s1 + $0x2c0] sm:$0xf]
  %v225 = vld [vmem:[%s1 + $0x2c4] sm:$0xf]
  %v226 = vld [vmem:[%s1 + $0x2c8] sm:$0xf]
  %v227 = vld [vmem:[%s1 + $0x2cc] sm:$0xf]
  %v228 = vld [vmem:[%s1 + $0x2d0] sm:$0xf]
  %v229 = vld [vmem:[%s1 + $0x2d4] sm:$0xf]
  %v230 = vld [vmem:[%s1 + $0x2d8] sm:$0xf]
  %v231 = vld [vmem:[%s1 + $0x2dc] sm:$0xf]
  %v232 = vld [vmem:[%s1 + $0x2e0] sm:$0xf]
  %v233 = vld [vmem:[%s1 + $0x2e4] sm:$0xf]
  %v234 = vld [vmem:[%s1 + $0x2e8] sm:$0xf]
  %v235 = vld [vmem:[%s1 + $0x2ec] sm:$0xf]
  %v236 = vld [vmem:[%s1 + $0x2f0] sm:$0xf]
  %v237 = vld [vmem:[%s1 + $0x2f4] sm:$0xf]
  %v238 = vld [vmem:[%s1 + $0x2f8] sm:$0xf]
  %v239 = vld [vmem:[%s1 + $0x2fc] sm:$0xf]
  %v240 = vld [vmem:[%s1 + $0x300] sm:$0xf]
  %v241 = vld [vmem:[%s1 + $0x304] sm:$0xf]
  %v242 = vld [vmem:[%s1 + $0x308] sm:$0xf]
  %v243 = vld [vmem:[%s1 + $0x30c] sm:$0xf]
  %v244 = vld [vmem:[%s1 + $0x310] sm:$0xf]
  %v245 = vld [vmem:[%s1 + $0x314] sm:$0xf]
  %v246 = vld [vmem:[%s1 + $0x318] sm:$0xf]
  %v247 = vld [vmem:[%s1 + $0x31c] sm:$0xf]
  %v248 = vld [vmem:[%s1 + $0x320] sm:$0xf]
  %v249 = vld [vmem:[%s1 + $0x324] sm:$0xf]
  %v250 = vld [vmem:[%s1 + $0x328] sm:$0xf]
  %v251 = vld [vmem:[%s1 + $0x32c] sm:$0xf]
  %v252 = vld [vmem:[%s1 + $0x330] sm:$0xf]
  %v253 = vld [vmem:[%s1 + $0x334] sm:$0xf]
  %v254 = vld [vmem:[%s1 + $0x338] sm:$0xf]
  %v255 = vld [vmem:[%s1 + $0x33c] sm:$0xf]
  %v256 = vld [vmem:[%s1 + $0x340] sm:$0xf]
  %v257 = vld [vmem:[%s1 + $0x344] sm:$0xf]
  %v258 = vld [vmem:[%s1 + $0x348] sm:$0xf]
  %v259 = vld [vmem:[%s1 + $0x34c] sm:$0xf]
  %v260 = vld [vmem:[%s1 + $0x350] sm:$0xf]
  %v261 = vld [vmem:[%s1 + $0x354] sm:$0xf]
  %v262 = vld [vmem:[%s1 + $0x358] sm:$0xf]
  %v263 = vld [vmem:[%s1 + $0x35c] sm:$0xf]
  %v264 = vld [vmem:[%s1 + $0x360] sm:$0xf]
  %v265 = vld [vmem:[%s1 + $0x364] sm:$0xf]
  %v266 = vld [vmem:[%s1 + $0x368] sm:$0xf]
  %v267 = vld [vmem:[%s1 + $0x36c] sm:$0xf]
  %v268 = vld [vmem:[%s1 + $0x370] sm:$0xf]
  %v269 = vld [vmem:[%s1 + $0x374] sm:$0xf]
  %v270 = vld [vmem:[%s1 + $0x378] sm:$0xf]
  %v271 = vld [vmem:[%s1 + $0x37c] sm:$0xf]
  %v272 = vld [vmem:[%s1 + $0x380] sm:$0xf]
  %v273 = vld [vmem:[%s1 + $0x384] sm:$0xf]
  %v274 = vld [vmem:[%s1 + $0x388] sm:$0xf]
  %v275 = vld [vmem:[%s1 + $0x38c] sm:$0xf]
  %v276 = vld [vmem:[%s1 + $0x390] sm:$0xf]
  %v277 = vld [vmem:[%s1 + $0x394] sm:$0xf]
  %v278 = vld [vmem:[%s1 + $0x398] sm:$0xf]
  %v279 = vld [vmem:[%s1 + $0x39c] sm:$0xf]
  %v280 = vld [vmem:[%s1 + $0x3a0] sm:$0xf]
  %v281 = vld [vmem:[%s1 + $0x3a4] sm:$0xf]
  %v282 = vld [vmem:[%s1 + $0x3a8] sm:$0xf]
  %v283 = vld [vmem:[%s1 + $0x3ac] sm:$0xf]
  %v284 = vld [vmem:[%s1 + $0x3b0] sm:$0xf]
  %v285 = vld [vmem:[%s1 + $0x3b4] sm:$0xf]
  %v286 = vld [vmem:[%s1 + $0x3b8] sm:$0xf]
  %v287 = vld [vmem:[%s1 + $0x3bc] sm:$0xf]
  %v288 = vld [vmem:[%s1 + $0x3c0] sm:$0xf]
  %v289 = vld [vmem:[%s1 + $0x3c4] sm:$0xf]
  %v290 = vld [vmem:[%s1 + $0x3c8] sm:$0xf]
  %v291 = vld [vmem:[%s1 + $0x3cc] sm:$0xf]
  %v292 = vld [vmem:[%s1 + $0x3d0] sm:$0xf]
  %v293 = vld [vmem:[%s1 + $0x3d4] sm:$0xf]
  %v294 = vld [vmem:[%s1 + $0x3d8] sm:$0xf]
  %v295 = vld [vmem:[%s1 + $0x3dc] sm:$0xf]
  %v296 = vld [vmem:[%s1 + $0x3e0] sm:$0xf]
  %v297 = vld [vmem:[%s1 + $0x3e4] sm:$0xf]
  %v298 = vld [vmem:[%s1 + $0x3e8] sm:$0xf]
  %v299 = vld [vmem:[%s1 + $0x3ec] sm:$0xf]
  %v300 = vld [vmem:[%s1 + $0x3f0] sm:$0xf]
  %v301 = vld [vmem:[%s1 + $0x3f4] sm:$0xf]
  %v302 = vld [vmem:[%s1 + $0x3f8] sm:$0xf]
  %v303 = vld [vmem:[%s1 + $0x3fc] sm:$0xf]
  %v304 = vld [vmem:[%s1 + $0x400] sm:$0xf]
  %v305 = vld [vmem:[%s1 + $0x404] sm:$0xf]
  %v306 = vld [vmem:[%s1 + $0x408] sm:$0xf]
  %v307 = vld [vmem:[%s1 + $0x40c] sm:$0xf]
  %v308 = vld [vmem:[%s1 + $0x410] sm:$0xf]
  %v309 = vld [vmem:[%s1 + $0x414] sm:$0xf]
  %v310 = vld [vmem:[%s1 + $0x418] sm:$0xf]
  %v311 = vld [vmem:[%s1 + $0x41c] sm:$0xf]
  %v312 = vld [vmem:[%s1 + $0x420] sm:$0xf]
  %v313 = vld [vmem:[%s1 + $0x424] sm:$0xf]
  %v314 = vld [vmem:[%s1 + $0x428] sm:$0xf]
  %v315 = vld [vmem:[%s1 + $0x42c] sm:$0xf]
  %v316 = vld [vmem:[%s1 + $0x430] sm:$0xf]
  %v317 = vld [vmem:[%s1 + $0x434] sm:$0xf]
  %v318 = vld [vmem:[%s1 + $0x438] sm:$0xf]
  %v319 = vld [vmem:[%s1 + $0x43c] sm:$0xf]
  %v320 = vld [vmem:[%s1 + $0x440] sm:$0xf]
  %v321 = vld [vmem:[%s1 + $0x444] sm:$0xf]
  %v322 = vld [vmem:[%s1 + $0x448] sm:$0xf]
  %v323 = vld [vmem:[%s1 + $0x44c] sm:$0xf]
  %v324 = vld [vmem:[%s1 + $0x450] sm:$0xf]
  %v325 = vld [vmem:[%s1 + $0x454] sm:$0xf]
  %v326 = vld [vmem:[%s1 + $0x458] sm:$0xf]
  %v327 = vld [vmem:[%s1 + $0x45c] sm:$0xf]
  %v328 = vld [vmem:[%s1 + $0x460] sm:$0xf]
  %v329 = vld [vmem:[%s1 + $0x464] sm:$0xf]
  %v330 = vld [vmem:[%s1 + $0x468] sm:$0xf]
  %v331 = vld [vmem:[%s1 + $0x46c] sm:$0xf]
  %v332 = vld [vmem:[%s1 + $0x470] sm:$0xf]
  %v333 = vld [vmem:[%s1 + $0x474] sm:$0xf]
  %v334 = vld [vmem:[%s1 + $0x478] sm:$0xf]
  %v335 = vld [vmem:[%s1 + $0x47c] sm:$0xf]
  %v336 = vld [vmem:[%s1 + $0x480] sm:$0xf]
  %v337 = vld [vmem:[%s1 + $0x484] sm:$0xf]
  %v338 = vld [vmem:[%s1 + $0x488] sm:$0xf]
  %v339 = vld [vmem:[%s1 + $0x48c] sm:$0xf]
  %v340 = vld [vmem:[%s1 + $0x490] sm:$0xf]
  %v341 = vld [vmem:[%s1 + $0x494] sm:$0xf]
  %v342 = vld [vmem:[%s1 + $0x498] sm:$0xf]
  %v343 = vld [vmem:[%s1 + $0x49c] sm:$0xf]
  %v344 = vld [vmem:[%s1 + $0x4a0] sm:$0xf]
  %v345 = vld [vmem:[%s1 + $0x4a4] sm:$0xf]
  %v346 = vld [vmem:[%s1 + $0x4a8] sm:$0xf]
  %v347 = vld [vmem:[%s1 + $0x4ac] sm:$0xf]
  %v348 = vld [vmem:[%s1 + $0x4b0] sm:$0xf]
  %v349 = vld [vmem:[%s1 + $0x4b4] sm:$0xf]
  %v350 = vld [vmem:[%s1 + $0x4b8] sm:$0xf]
  %v351 = vld [vmem:[%s1 + $0x4bc] sm:$0xf]
  %v352 = vld [vmem:[%s1 + $0x4c0] sm:$0xf]
  %v353 = vld [vmem:[%s1 + $0x4c4] sm:$0xf]
  %v354 = vld [vmem:[%s1 + $0x4c8] sm:$0xf]
  %v355 = vld [vmem:[%s1 + $0x4cc] sm:$0xf]
  %v356 = vld [vmem:[%s1 + $0x4d0] sm:$0xf]
  %v357 = vld [vmem:[%s1 + $0x4d4] sm:$0xf]
  %v358 = vld [vmem:[%s1 + $0x4d8] sm:$0xf]
  %v359 = vld [vmem:[%s1 + $0x4dc] sm:$0xf]
  %v360 = vld [vmem:[%s1 + $0x4e0] sm:$0xf]
  %v361 = vld [vmem:[%s1 + $0x4e4] sm:$0xf]
  %v362 = vld [vmem:[%s1 + $0x4e8] sm:$0xf]
  %v363 = vld [vmem:[%s1 + $0x4ec] sm:$0xf]
  %v364 = vld [vmem:[%s1 + $0x4f0] sm:$0xf]
  %v365 = vld [vmem:[%s1 + $0x4f4] sm:$0xf]
  %v366 = vld [vmem:[%s1 + $0x4f8] sm:$0xf]
  %v367 = vld [vmem:[%s1 + $0x4fc] sm:$0xf]
  %v368 = vld [vmem:[%s1 + $0x500] sm:$0xf]
  %v369 = vld [vmem:[%s1 + $0x504] sm:$0xf]
  %v370 = vld [vmem:[%s1 + $0x508] sm:$0xf]
  %v371 = vld [vmem:[%s1 + $0x50c] sm:$0xf]
  %v372 = vld [vmem:[%s1 + $0x510] sm:$0xf]
  %v373 = vld [vmem:[%s1 + $0x514] sm:$0xf]
  %v374 = vld [vmem:[%s1 + $0x518] sm:$0xf]
  %v375 = vld [vmem:[%s1 + $0x51c] sm:$0xf]
  %v376 = vld [vmem:[%s1 + $0x520] sm:$0xf]
  %v377 = vld [vmem:[%s1 + $0x524] sm:$0xf]
  %v378 = vld [vmem:[%s1 + $0x528] sm:$0xf]
  %v379 = vld [vmem:[%s1 + $0x52c] sm:$0xf]
  %v380 = vld [vmem:[%s1 + $0x530] sm:$0xf]
  %v381 = vld [vmem:[%s1 + $0x534] sm:$0xf]
  %v382 = vld [vmem:[%s1 + $0x538] sm:$0xf]
  %v383 = vld [vmem:[%s1 + $0x53c] sm:$0xf]
  %v384 = vld [vmem:[%s1 + $0x540] sm:$0xf]
  %v385 = vld [vmem:[%s1 + $0x544] sm:$0xf]
  %v386 = vld [vmem:[%s1 + $0x548] sm:$0xf]
  %v387 = vld [vmem:[%s1 + $0x54c] sm:$0xf]
  %v388 = vld [vmem:[%s1 + $0x550] sm:$0xf]
  %v389 = vld [vmem:[%s1 + $0x554] sm:$0xf]
  %v390 = vld [vmem:[%s1 + $0x558] sm:$0xf]
  %v391 = vld [vmem:[%s1 + $0x55c] sm:$0xf]
  %v392 = vld [vmem:[%s1 + $0x560] sm:$0xf]
  %v393 = vld [vmem:[%s1 + $0x564] sm:$0xf]
  %v394 = vld [vmem:[%s1 + $0x568] sm:$0xf]
  %v395 = vld [vmem:[%s1 + $0x56c] sm:$0xf]
  %v396 = vld [vmem:[%s1 + $0x570] sm:$0xf]
  %v397 = vld [vmem:[%s1 + $0x574] sm:$0xf]
  %v398 = vld [vmem:[%s1 + $0x578] sm:$0xf]
  %v399 = vld [vmem:[%s1 + $0x57c] sm:$0xf]
  %v400 = vld [vmem:[%s1 + $0x580] sm:$0xf]
  %v401 = vld [vmem:[%s1 + $0x584] sm:$0xf]
  %v402 = vld [vmem:[%s1 + $0x588] sm:$0xf]
  %v403 = vld [vmem:[%s1 + $0x58c] sm:$0xf]
  %v404 = vld [vmem:[%s1 + $0x590] sm:$0xf]
  %v405 = vld [vmem:[%s1 + $0x594] sm:$0xf]
  %v406 = vld [vmem:[%s1 + $0x598] sm:$0xf]
  %v407 = vld [vmem:[%s1 + $0x59c] sm:$0xf]
  %v408 = vld [vmem:[%s1 + $0x5a0] sm:$0xf]
  %v409 = vld [vmem:[%s1 + $0x5a4] sm:$0xf]
  %v410 = vld [vmem:[%s1 + $0x5a8] sm:$0xf]
  %v411 = vld [vmem:[%s1 + $0x5ac] sm:$0xf]
  %v412 = vld [vmem:[%s1 + $0x5b0] sm:$0xf]
  %v413 = vld [vmem:[%s1 + $0x5b4] sm:$0xf]
  %v414 = vld [vmem:[%s1 + $0x5b8] sm:$0xf]
  %v415 = vld [vmem:[%s1 + $0x5bc] sm:$0xf]
  %v416 = vld [vmem:[%s1 + $0x5c0] sm:$0xf]
  %v417 = vld [vmem:[%s1 + $0x5c4] sm:$0xf]
  %v418 = vld [vmem:[%s1 + $0x5c8] sm:$0xf]
  %v419 = vld [vmem:[%s1 + $0x5cc] sm:$0xf]
  %v420 = vld [vmem:[%s1 + $0x5d0] sm:$0xf]
  %v421 = vld [vmem:[%s1 + $0x5d4] sm:$0xf]
  %v422 = vld [vmem:[%s1 + $0x5d8] sm:$0xf]
  %v423 = vld [vmem:[%s1 + $0x5dc] sm:$0xf]
  %v424 = vld [vmem:[%s1 + $0x5e0] sm:$0xf]
  %v425 = vld [vmem:[%s1 + $0x5e4] sm:$0xf]
  %v426 = vld [vmem:[%s1 + $0x5e8] sm:$0xf]
  %v427 = vld [vmem:[%s1 + $0x5ec] sm:$0xf]
  %v428 = vld [vmem:[%s1 + $0x5f0] sm:$0xf]
  %v429 = vld [vmem:[%s1 + $0x5f4] sm:$0xf]
  %v430 = vld [vmem:[%s1 + $0x5f8] sm:$0xf]
  %v431 = vld [vmem:[%s1 + $0x5fc] sm:$0xf]
  %v432 = vld [vmem:[%s1 + $0x600] sm:$0xf]
  %v433 = vld [vmem:[%s1 + $0x604] sm:$0xf]
  %v434 = vld [vmem:[%s1 + $0x608] sm:$0xf]
  %v435 = vld [vmem:[%s1 + $0x60c] sm:$0xf]
  %v436 = vld [vmem:[%s1 + $0x610] sm:$0xf]
  %v437 = vld [vmem:[%s1 + $0x614] sm:$0xf]
  %v438 = vld [vmem:[%s1 + $0x618] sm:$0xf]
  %v439 = vld [vmem:[%s1 + $0x61c] sm:$0xf]
  %v440 = vld [vmem:[%s1 + $0x620] sm:$0xf]
  %v441 = vld [vmem:[%s1 + $0x624] sm:$0xf]
  %v442 = vld [vmem:[%s1 + $0x628] sm:$0xf]
  %v443 = vld [vmem:[%s1 + $0x62c] sm:$0xf]
  %v444 = vld [vmem:[%s1 + $0x630] sm:$0xf]
  %v445 = vld [vmem:[%s1 + $0x634] sm:$0xf]
  %v446 = vld [vmem:[%s1 + $0x638] sm:$0xf]
  %v447 = vld [vmem:[%s1 + $0x63c] sm:$0xf]
  %v474 = vunpack.c.l.b16 %v22
  %v475 = vunpack.c.h.b16 %v22
  %v476 = vunpack.c.l.b16 %v23
  %v477 = vunpack.c.h.b16 %v23
  %v478 = vunpack.c.l.b16 %v24
  %v479 = vunpack.c.h.b16 %v24
  %v480 = vunpack.c.l.b16 %v25
  %v481 = vunpack.c.h.b16 %v25
  %v482 = vunpack.c.l.b16 %v26
  %v483 = vunpack.c.h.b16 %v26
  %v484 = vunpack.c.l.b16 %v27
  %v485 = vunpack.c.h.b16 %v27
  %v486 = vunpack.c.l.b16 %v28
  %v487 = vunpack.c.h.b16 %v28
  %v488 = vunpack.c.l.b16 %v29
  %v489 = vunpack.c.h.b16 %v29
  %v490 = vunpack.c.l.b16 %v30
  %v491 = vunpack.c.h.b16 %v30
  %v492 = vunpack.c.l.b16 %v31
  %v493 = vunpack.c.h.b16 %v31
  %v494 = vunpack.c.l.b16 %v32
  %v495 = vunpack.c.h.b16 %v32
  %v496 = vunpack.c.l.b16 %v33
  %v497 = vunpack.c.h.b16 %v33
  %v498 = vunpack.c.l.b16 %v34
  %v499 = vunpack.c.l.b16 %v35
  %v500 = vunpack.c.h.b16 %v35
  %v501 = vunpack.c.l.b16 %v36
  %v502 = vunpack.c.h.b16 %v36
  %v503 = vunpack.c.l.b16 %v37
  %v504 = vunpack.c.h.b16 %v37
  %v505 = vunpack.c.l.b16 %v38
  %v506 = vunpack.c.h.b16 %v38
  %v507 = vunpack.c.l.b16 %v39
  %v508 = vunpack.c.h.b16 %v39
  %v509 = vunpack.c.l.b16 %v40
  %v510 = vunpack.c.h.b16 %v40
  %v511 = vunpack.c.l.b16 %v41
  %v512 = vunpack.c.h.b16 %v41
  %v513 = vunpack.c.l.b16 %v42
  %v514 = vunpack.c.h.b16 %v42
  %v515 = vunpack.c.l.b16 %v43
  %v516 = vunpack.c.h.b16 %v43
  %v517 = vunpack.c.l.b16 %v44
  %v518 = vunpack.c.h.b16 %v44
  %v519 = vunpack.c.l.b16 %v45
  %v520 = vunpack.c.h.b16 %v45
  %v521 = vunpack.c.l.b16 %v46
  %v522 = vunpack.c.h.b16 %v46
  %v523 = vunpack.c.l.b16 %v47
  %v524 = vpack.c.b16 %v499, %v474
  %v525 = vpack.c.b16 %v500, %v475
  %v526 = vpack.c.b16 %v501, %v476
  %v527 = vpack.c.b16 %v502, %v477
  %v528 = vpack.c.b16 %v503, %v478
  %v529 = vpack.c.b16 %v504, %v479
  %v530 = vpack.c.b16 %v505, %v480
  %v531 = vpack.c.b16 %v506, %v481
  %v532 = vpack.c.b16 %v507, %v482
  %v533 = vpack.c.b16 %v508, %v483
  %v534 = vpack.c.b16 %v509, %v484
  %v535 = vpack.c.b16 %v510, %v485
  %v536 = vpack.c.b16 %v511, %v486
  %v537 = vpack.c.b16 %v512, %v487
  %v538 = vpack.c.b16 %v513, %v488
  %v539 = vpack.c.b16 %v514, %v489
  %v540 = vpack.c.b16 %v515, %v490
  %v541 = vpack.c.b16 %v516, %v491
  %v542 = vpack.c.b16 %v517, %v492
  %v543 = vpack.c.b16 %v518, %v493
  %v544 = vpack.c.b16 %v519, %v494
  %v545 = vpack.c.b16 %v520, %v495
  %v546 = vpack.c.b16 %v521, %v496
  %v547 = vpack.c.b16 %v522, %v497
  %v548 = vpack.c.b16 %v523, %v498
  %v974 = vunpack.c.l.b16 %v48
  %v975 = vunpack.c.l.b16 %v49
  %v976 = vunpack.c.l.b16 %v50
  %v977 = vunpack.c.l.b16 %v51
  %v978 = vunpack.c.l.b16 %v52
  %v979 = vunpack.c.l.b16 %v53
  %v980 = vunpack.c.l.b16 %v54
  %v981 = vunpack.c.l.b16 %v55
  %v982 = vunpack.c.l.b16 %v56
  %v983 = vunpack.c.l.b16 %v57
  %v984 = vunpack.c.l.b16 %v58
  %v985 = vunpack.c.l.b16 %v59
  %v986 = vunpack.c.l.b16 %v60
  %v987 = vunpack.c.l.b16 %v61
  %v988 = vunpack.c.l.b16 %v62
  %v989 = vunpack.c.l.b16 %v63
  %v990 = vunpack.c.l.b16 %v64
  %v991 = vunpack.c.l.b16 %v65
  %v992 = vunpack.c.l.b16 %v66
  %v993 = vunpack.c.l.b16 %v67
  %v994 = vunpack.c.l.b16 %v68
  %v995 = vunpack.c.l.b16 %v69
  %v996 = vunpack.c.l.b16 %v70
  %v997 = vunpack.c.l.b16 %v71
  %v998 = vunpack.c.l.b16 %v72
  %v999 = vunpack.c.l.b16 %v73
  %v1000 = vunpack.c.l.b16 %v74
  %v1001 = vunpack.c.l.b16 %v75
  %v1002 = vunpack.c.l.b16 %v76
  %v1003 = vunpack.c.l.b16 %v77
  %v1004 = vunpack.c.l.b16 %v78
  %v1005 = vunpack.c.l.b16 %v79
  %v1006 = vunpack.c.l.b16 %v80
  %v1007 = vunpack.c.l.b16 %v81
  %v1008 = vunpack.c.l.b16 %v82
  %v1009 = vunpack.c.l.b16 %v83
  %v1010 = vunpack.c.l.b16 %v84
  %v1011 = vunpack.c.l.b16 %v85
  %v1012 = vunpack.c.l.b16 %v86
  %v1013 = vunpack.c.l.b16 %v87
  %v1014 = vunpack.c.l.b16 %v88
  %v1015 = vunpack.c.l.b16 %v89
  %v1016 = vunpack.c.l.b16 %v90
  %v1017 = vunpack.c.l.b16 %v91
  %v1018 = vunpack.c.l.b16 %v92
  %v1019 = vunpack.c.l.b16 %v93
  %v1020 = vunpack.c.l.b16 %v94
  %v1021 = vunpack.c.l.b16 %v95
  %v1022 = vunpack.c.l.b16 %v96
  %v1023 = vunpack.c.l.b16 %v97
  %v1024 = vunpack.c.l.b16 %v98
  %v1025 = vunpack.c.l.b16 %v99
  %v1026 = vunpack.c.l.b16 %v100
  %v1027 = vunpack.c.l.b16 %v101
  %v1028 = vunpack.c.l.b16 %v102
  %v1029 = vunpack.c.l.b16 %v103
  %v1030 = vunpack.c.l.b16 %v104
  %v1031 = vunpack.c.l.b16 %v105
  %v1032 = vunpack.c.l.b16 %v106
  %v1033 = vunpack.c.l.b16 %v107
  %v1034 = vunpack.c.l.b16 %v108
  %v1035 = vunpack.c.l.b16 %v109
  %v1036 = vunpack.c.l.b16 %v110
  %v1037 = vunpack.c.l.b16 %v111
  %v1038 = vunpack.c.l.b16 %v112
  %v1039 = vunpack.c.l.b16 %v113
  %v1040 = vunpack.c.l.b16 %v114
  %v1041 = vunpack.c.l.b16 %v115
  %v1042 = vunpack.c.l.b16 %v116
  %v1043 = vunpack.c.l.b16 %v117
  %v1044 = vunpack.c.l.b16 %v118
  %v1045 = vunpack.c.l.b16 %v119
  %v1046 = vunpack.c.l.b16 %v120
  %v1047 = vunpack.c.l.b16 %v121
  %v1048 = vunpack.c.l.b16 %v122
  %v1049 = vunpack.c.l.b16 %v123
  %v1050 = vunpack.c.l.b16 %v124
  %v1051 = vunpack.c.l.b16 %v125
  %v1052 = vunpack.c.l.b16 %v126
  %v1053 = vunpack.c.l.b16 %v127
  %v1054 = vunpack.c.l.b16 %v128
  %v1055 = vunpack.c.l.b16 %v129
  %v1056 = vunpack.c.l.b16 %v130
  %v1057 = vunpack.c.l.b16 %v131
  %v1058 = vunpack.c.l.b16 %v132
  %v1059 = vunpack.c.l.b16 %v133
  %v1060 = vunpack.c.l.b16 %v134
  %v1061 = vunpack.c.l.b16 %v135
  %v1062 = vunpack.c.l.b16 %v136
  %v1063 = vunpack.c.l.b16 %v137
  %v1064 = vunpack.c.l.b16 %v138
  %v1065 = vunpack.c.l.b16 %v139
  %v1066 = vunpack.c.l.b16 %v140
  %v1067 = vunpack.c.l.b16 %v141
  %v1068 = vunpack.c.l.b16 %v142
  %v1069 = vunpack.c.l.b16 %v143
  %v1070 = vunpack.c.l.b16 %v144
  %v1071 = vunpack.c.l.b16 %v145
  %v1072 = vunpack.c.l.b16 %v146
  %v1073 = vunpack.c.l.b16 %v147
  %v1074 = vunpack.c.l.b16 %v148
  %v1075 = vunpack.c.l.b16 %v149
  %v1076 = vunpack.c.l.b16 %v150
  %v1077 = vunpack.c.l.b16 %v151
  %v1078 = vunpack.c.l.b16 %v152
  %v1079 = vunpack.c.l.b16 %v153
  %v1080 = vunpack.c.l.b16 %v154
  %v1081 = vunpack.c.l.b16 %v155
  %v1082 = vunpack.c.l.b16 %v156
  %v1083 = vunpack.c.l.b16 %v157
  %v1084 = vunpack.c.l.b16 %v158
  %v1085 = vunpack.c.l.b16 %v159
  %v1086 = vunpack.c.l.b16 %v160
  %v1087 = vunpack.c.l.b16 %v161
  %v1088 = vunpack.c.l.b16 %v162
  %v1089 = vunpack.c.l.b16 %v163
  %v1090 = vunpack.c.l.b16 %v164
  %v1091 = vunpack.c.l.b16 %v165
  %v1092 = vunpack.c.l.b16 %v166
  %v1093 = vunpack.c.l.b16 %v167
  %v1094 = vunpack.c.l.b16 %v168
  %v1095 = vunpack.c.l.b16 %v169
  %v1096 = vunpack.c.l.b16 %v170
  %v1097 = vunpack.c.l.b16 %v171
  %v1098 = vunpack.c.l.b16 %v172
  %v1099 = vunpack.c.l.b16 %v173
  %v1100 = vunpack.c.l.b16 %v174
  %v1101 = vunpack.c.l.b16 %v175
  %v1102 = vunpack.c.l.b16 %v176
  %v1103 = vunpack.c.l.b16 %v177
  %v1104 = vunpack.c.l.b16 %v178
  %v1105 = vunpack.c.l.b16 %v179
  %v1106 = vunpack.c.l.b16 %v180
  %v1107 = vunpack.c.l.b16 %v181
  %v1108 = vunpack.c.l.b16 %v182
  %v1109 = vunpack.c.l.b16 %v183
  %v1110 = vunpack.c.l.b16 %v184
  %v1111 = vunpack.c.l.b16 %v185
  %v1112 = vunpack.c.l.b16 %v186
  %v1113 = vunpack.c.l.b16 %v187
  %v1114 = vunpack.c.l.b16 %v188
  %v1115 = vunpack.c.l.b16 %v189
  %v1116 = vunpack.c.l.b16 %v190
  %v1117 = vunpack.c.l.b16 %v191
  %v1118 = vunpack.c.l.b16 %v192
  %v1119 = vunpack.c.l.b16 %v193
  %v1120 = vunpack.c.l.b16 %v194
  %v1121 = vunpack.c.l.b16 %v195
  %v1122 = vunpack.c.l.b16 %v196
  %v1123 = vunpack.c.l.b16 %v197
  %v1124 = vunpack.c.l.b16 %v198
  %v1125 = vunpack.c.l.b16 %v199
  %v1126 = vunpack.c.l.b16 %v200
  %v1127 = vunpack.c.l.b16 %v201
  %v1128 = vunpack.c.l.b16 %v202
  %v1129 = vunpack.c.l.b16 %v203
  %v1130 = vunpack.c.l.b16 %v204
  %v1131 = vunpack.c.l.b16 %v205
  %v1132 = vunpack.c.l.b16 %v206
  %v1133 = vunpack.c.l.b16 %v207
  %v1134 = vunpack.c.l.b16 %v208
  %v1135 = vunpack.c.l.b16 %v209
  %v1136 = vunpack.c.l.b16 %v210
  %v1137 = vunpack.c.l.b16 %v211
  %v1138 = vunpack.c.l.b16 %v212
  %v1139 = vunpack.c.l.b16 %v213
  %v1140 = vunpack.c.l.b16 %v214
  %v1141 = vunpack.c.l.b16 %v215
  %v1142 = vunpack.c.l.b16 %v216
  %v1143 = vunpack.c.l.b16 %v217
  %v1144 = vunpack.c.l.b16 %v218
  %v1145 = vunpack.c.l.b16 %v219
  %v1146 = vunpack.c.l.b16 %v220
  %v1147 = vunpack.c.l.b16 %v221
  %v1148 = vunpack.c.l.b16 %v222
  %v1149 = vunpack.c.l.b16 %v223
  %v1150 = vunpack.c.l.b16 %v224
  %v1151 = vunpack.c.l.b16 %v225
  %v1152 = vunpack.c.l.b16 %v226
  %v1153 = vunpack.c.l.b16 %v227
  %v1154 = vunpack.c.l.b16 %v228
  %v1155 = vunpack.c.l.b16 %v229
  %v1156 = vunpack.c.l.b16 %v230
  %v1157 = vunpack.c.l.b16 %v231
  %v1158 = vunpack.c.l.b16 %v232
  %v1159 = vunpack.c.l.b16 %v233
  %v1160 = vunpack.c.l.b16 %v234
  %v1161 = vunpack.c.l.b16 %v235
  %v1162 = vunpack.c.l.b16 %v236
  %v1163 = vunpack.c.l.b16 %v237
  %v1164 = vunpack.c.l.b16 %v238
  %v1165 = vunpack.c.l.b16 %v239
  %v1166 = vunpack.c.l.b16 %v240
  %v1167 = vunpack.c.l.b16 %v241
  %v1168 = vunpack.c.l.b16 %v242
  %v1169 = vunpack.c.l.b16 %v243
  %v1170 = vunpack.c.l.b16 %v244
  %v1171 = vunpack.c.l.b16 %v245
  %v1172 = vunpack.c.l.b16 %v246
  %v1173 = vunpack.c.l.b16 %v247
  %v1174 = vunpack.c.l.b16 %v248
  %v1175 = vunpack.c.l.b16 %v249
  %v1176 = vunpack.c.l.b16 %v250
  %v1177 = vunpack.c.l.b16 %v251
  %v1178 = vunpack.c.l.b16 %v252
  %v1179 = vunpack.c.l.b16 %v253
  %v1180 = vunpack.c.l.b16 %v254
  %v1181 = vunpack.c.l.b16 %v255
  %v1182 = vunpack.c.l.b16 %v256
  %v1183 = vunpack.c.l.b16 %v257
  %v1184 = vunpack.c.l.b16 %v258
  %v1185 = vunpack.c.l.b16 %v259
  %v1186 = vunpack.c.l.b16 %v260
  %v1187 = vunpack.c.l.b16 %v261
  %v1188 = vunpack.c.l.b16 %v262
  %v1189 = vunpack.c.l.b16 %v263
  %v1190 = vunpack.c.l.b16 %v264
  %v1191 = vunpack.c.l.b16 %v265
  %v1192 = vunpack.c.l.b16 %v266
  %v1193 = vunpack.c.l.b16 %v267
  %v1194 = vunpack.c.l.b16 %v268
  %v1195 = vunpack.c.l.b16 %v269
  %v1196 = vunpack.c.l.b16 %v270
  %v1197 = vunpack.c.l.b16 %v271
  %v1198 = vunpack.c.l.b16 %v272
  %v1199 = vunpack.c.l.b16 %v273
  %v1200 = vunpack.c.l.b16 %v274
  %v1201 = vunpack.c.l.b16 %v275
  %v1202 = vunpack.c.l.b16 %v276
  %v1203 = vunpack.c.l.b16 %v277
  %v1204 = vunpack.c.l.b16 %v278
  %v1205 = vunpack.c.l.b16 %v279
  %v1206 = vunpack.c.l.b16 %v280
  %v1207 = vunpack.c.l.b16 %v281
  %v1208 = vunpack.c.l.b16 %v282
  %v1209 = vunpack.c.l.b16 %v283
  %v1210 = vunpack.c.l.b16 %v284
  %v1211 = vunpack.c.l.b16 %v285
  %v1212 = vunpack.c.l.b16 %v286
  %v1213 = vunpack.c.l.b16 %v287
  %v1214 = vunpack.c.l.b16 %v288
  %v1215 = vunpack.c.l.b16 %v289
  %v1216 = vunpack.c.l.b16 %v290
  %v1217 = vunpack.c.l.b16 %v291
  %v1218 = vunpack.c.l.b16 %v292
  %v1219 = vunpack.c.l.b16 %v293
  %v1220 = vunpack.c.l.b16 %v294
  %v1221 = vunpack.c.l.b16 %v295
  %v1222 = vunpack.c.l.b16 %v296
  %v1223 = vunpack.c.l.b16 %v297
  %v1224 = vunpack.c.l.b16 %v298
  %v1225 = vunpack.c.l.b16 %v299
  %v1226 = vunpack.c.l.b16 %v300
  %v1227 = vunpack.c.l.b16 %v301
  %v1228 = vunpack.c.l.b16 %v302
  %v1229 = vunpack.c.l.b16 %v303
  %v1230 = vunpack.c.l.b16 %v304
  %v1231 = vunpack.c.l.b16 %v305
  %v1232 = vunpack.c.l.b16 %v306
  %v1233 = vunpack.c.l.b16 %v307
  %v1234 = vunpack.c.l.b16 %v308
  %v1235 = vunpack.c.l.b16 %v309
  %v1236 = vunpack.c.l.b16 %v310
  %v1237 = vunpack.c.l.b16 %v311
  %v1238 = vunpack.c.l.b16 %v312
  %v1239 = vunpack.c.l.b16 %v313
  %v1240 = vunpack.c.l.b16 %v314
  %v1241 = vunpack.c.l.b16 %v315
  %v1242 = vunpack.c.l.b16 %v316
  %v1243 = vunpack.c.l.b16 %v317
  %v1244 = vunpack.c.l.b16 %v318
  %v1245 = vunpack.c.l.b16 %v319
  %v1246 = vunpack.c.l.b16 %v320
  %v1247 = vunpack.c.l.b16 %v321
  %v1248 = vunpack.c.l.b16 %v322
  %v1249 = vunpack.c.l.b16 %v323
  %v1250 = vunpack.c.l.b16 %v324
  %v1251 = vunpack.c.l.b16 %v325
  %v1252 = vunpack.c.l.b16 %v326
  %v1253 = vunpack.c.l.b16 %v327
  %v1254 = vunpack.c.l.b16 %v328
  %v1255 = vunpack.c.l.b16 %v329
  %v1256 = vunpack.c.l.b16 %v330
  %v1257 = vunpack.c.l.b16 %v331
  %v1258 = vunpack.c.l.b16 %v332
  %v1259 = vunpack.c.l.b16 %v333
  %v1260 = vunpack.c.l.b16 %v334
  %v1261 = vunpack.c.l.b16 %v335
  %v1262 = vunpack.c.l.b16 %v336
  %v1263 = vunpack.c.l.b16 %v337
  %v1264 = vunpack.c.l.b16 %v338
  %v1265 = vunpack.c.l.b16 %v339
  %v1266 = vunpack.c.l.b16 %v340
  %v1267 = vunpack.c.l.b16 %v341
  %v1268 = vunpack.c.l.b16 %v342
  %v1269 = vunpack.c.l.b16 %v343
  %v1270 = vunpack.c.l.b16 %v344
  %v1271 = vunpack.c.l.b16 %v345
  %v1272 = vunpack.c.l.b16 %v346
  %v1273 = vunpack.c.l.b16 %v347
  %v1274 = vunpack.c.l.b16 %v348
  %v1275 = vunpack.c.l.b16 %v349
  %v1276 = vunpack.c.l.b16 %v350
  %v1277 = vunpack.c.l.b16 %v351
  %v1278 = vunpack.c.l.b16 %v352
  %v1279 = vunpack.c.l.b16 %v353
  %v1280 = vunpack.c.l.b16 %v354
  %v1281 = vunpack.c.l.b16 %v355
  %v1282 = vunpack.c.l.b16 %v356
  %v1283 = vunpack.c.l.b16 %v357
  %v1284 = vunpack.c.l.b16 %v358
  %v1285 = vunpack.c.l.b16 %v359
  %v1286 = vunpack.c.l.b16 %v360
  %v1287 = vunpack.c.l.b16 %v361
  %v1288 = vunpack.c.l.b16 %v362
  %v1289 = vunpack.c.l.b16 %v363
  %v1290 = vunpack.c.l.b16 %v364
  %v1291 = vunpack.c.l.b16 %v365
  %v1292 = vunpack.c.l.b16 %v366
  %v1293 = vunpack.c.l.b16 %v367
  %v1294 = vunpack.c.l.b16 %v368
  %v1295 = vunpack.c.l.b16 %v369
  %v1296 = vunpack.c.l.b16 %v370
  %v1297 = vunpack.c.l.b16 %v371
  %v1298 = vunpack.c.l.b16 %v372
  %v1299 = vunpack.c.l.b16 %v373
  %v1300 = vunpack.c.l.b16 %v374
  %v1301 = vunpack.c.l.b16 %v375
  %v1302 = vunpack.c.l.b16 %v376
  %v1303 = vunpack.c.l.b16 %v377
  %v1304 = vunpack.c.l.b16 %v378
  %v1305 = vunpack.c.l.b16 %v379
  %v1306 = vunpack.c.l.b16 %v380
  %v1307 = vunpack.c.l.b16 %v381
  %v1308 = vunpack.c.l.b16 %v382
  %v1309 = vunpack.c.l.b16 %v383
  %v1310 = vunpack.c.l.b16 %v384
  %v1311 = vunpack.c.l.b16 %v385
  %v1312 = vunpack.c.l.b16 %v386
  %v1313 = vunpack.c.l.b16 %v387
  %v1314 = vunpack.c.l.b16 %v388
  %v1315 = vunpack.c.l.b16 %v389
  %v1316 = vunpack.c.l.b16 %v390
  %v1317 = vunpack.c.l.b16 %v391
  %v1318 = vunpack.c.l.b16 %v392
  %v1319 = vunpack.c.l.b16 %v393
  %v1320 = vunpack.c.l.b16 %v394
  %v1321 = vunpack.c.l.b16 %v395
  %v1322 = vunpack.c.l.b16 %v396
  %v1323 = vunpack.c.l.b16 %v397
  %v1324 = vunpack.c.l.b16 %v398
  %v1325 = vunpack.c.l.b16 %v399
  %v1326 = vunpack.c.l.b16 %v400
  %v1327 = vunpack.c.l.b16 %v401
  %v1328 = vunpack.c.l.b16 %v402
  %v1329 = vunpack.c.l.b16 %v403
  %v1330 = vunpack.c.l.b16 %v404
  %v1331 = vunpack.c.l.b16 %v405
  %v1332 = vunpack.c.l.b16 %v406
  %v1333 = vunpack.c.l.b16 %v407
  %v1334 = vunpack.c.l.b16 %v408
  %v1335 = vunpack.c.l.b16 %v409
  %v1336 = vunpack.c.l.b16 %v410
  %v1337 = vunpack.c.l.b16 %v411
  %v1338 = vunpack.c.l.b16 %v412
  %v1339 = vunpack.c.l.b16 %v413
  %v1340 = vunpack.c.l.b16 %v414
  %v1341 = vunpack.c.l.b16 %v415
  %v1342 = vunpack.c.l.b16 %v416
  %v1343 = vunpack.c.l.b16 %v417
  %v1344 = vunpack.c.l.b16 %v418
  %v1345 = vunpack.c.l.b16 %v419
  %v1346 = vunpack.c.l.b16 %v420
  %v1347 = vunpack.c.l.b16 %v421
  %v1348 = vunpack.c.l.b16 %v422
  %v1349 = vunpack.c.l.b16 %v423
  %v1350 = vunpack.c.l.b16 %v424
  %v1351 = vunpack.c.l.b16 %v425
  %v1352 = vunpack.c.l.b16 %v426
  %v1353 = vunpack.c.l.b16 %v427
  %v1354 = vunpack.c.l.b16 %v428
  %v1355 = vunpack.c.l.b16 %v429
  %v1356 = vunpack.c.l.b16 %v430
  %v1357 = vunpack.c.l.b16 %v431
  %v1358 = vunpack.c.l.b16 %v432
  %v1359 = vunpack.c.l.b16 %v433
  %v1360 = vunpack.c.l.b16 %v434
  %v1361 = vunpack.c.l.b16 %v435
  %v1362 = vunpack.c.l.b16 %v436
  %v1363 = vunpack.c.l.b16 %v437
  %v1364 = vunpack.c.l.b16 %v438
  %v1365 = vunpack.c.l.b16 %v439
  %v1366 = vunpack.c.l.b16 %v440
  %v1367 = vunpack.c.l.b16 %v441
  %v1368 = vunpack.c.l.b16 %v442
  %v1369 = vunpack.c.l.b16 %v443
  %v1370 = vunpack.c.l.b16 %v444
  %v1371 = vunpack.c.l.b16 %v445
  %v1372 = vunpack.c.l.b16 %v446
  %v1373 = vunpack.c.l.b16 %v447
  %v1374 = vpack.c.b16 %v975, %v974
  %v1375 = vpack.c.b16 %v977, %v976
  %v1376 = vpack.c.b16 %v979, %v978
  %v1377 = vpack.c.b16 %v981, %v980
  %v1378 = vpack.c.b16 %v983, %v982
  %v1379 = vpack.c.b16 %v985, %v984
  %v1380 = vpack.c.b16 %v987, %v986
  %v1381 = vpack.c.b16 %v989, %v988
  %v1382 = vpack.c.b16 %v991, %v990
  %v1383 = vpack.c.b16 %v993, %v992
  %v1384 = vpack.c.b16 %v995, %v994
  %v1385 = vpack.c.b16 %v997, %v996
  %v1386 = vpack.c.b16 %v999, %v998
  %v1387 = vpack.c.b16 %v1001, %v1000
  %v1388 = vpack.c.b16 %v1003, %v1002
  %v1389 = vpack.c.b16 %v1005, %v1004
  %v1390 = vpack.c.b16 %v1007, %v1006
  %v1391 = vpack.c.b16 %v1009, %v1008
  %v1392 = vpack.c.b16 %v1011, %v1010
  %v1393 = vpack.c.b16 %v1013, %v1012
  %v1394 = vpack.c.b16 %v1015, %v1014
  %v1395 = vpack.c.b16 %v1017, %v1016
  %v1396 = vpack.c.b16 %v1019, %v1018
  %v1397 = vpack.c.b16 %v1021, %v1020
  %v1398 = vpack.c.b16 %v1023, %v1022
  %v1399 = vpack.c.b16 %v1025, %v1024
  %v1400 = vpack.c.b16 %v1027, %v1026
  %v1401 = vpack.c.b16 %v1029, %v1028
  %v1402 = vpack.c.b16 %v1031, %v1030
  %v1403 = vpack.c.b16 %v1033, %v1032
  %v1404 = vpack.c.b16 %v1035, %v1034
  %v1405 = vpack.c.b16 %v1037, %v1036
  %v1406 = vpack.c.b16 %v1039, %v1038
  %v1407 = vpack.c.b16 %v1041, %v1040
  %v1408 = vpack.c.b16 %v1043, %v1042
  %v1409 = vpack.c.b16 %v1045, %v1044
  %v1410 = vpack.c.b16 %v1047, %v1046
  %v1411 = vpack.c.b16 %v1049, %v1048
  %v1412 = vpack.c.b16 %v1051, %v1050
  %v1413 = vpack.c.b16 %v1053, %v1052
  %v1414 = vpack.c.b16 %v1055, %v1054
  %v1415 = vpack.c.b16 %v1057, %v1056
  %v1416 = vpack.c.b16 %v1059, %v1058
  %v1417 = vpack.c.b16 %v1061, %v1060
  %v1418 = vpack.c.b16 %v1063, %v1062
  %v1419 = vpack.c.b16 %v1065, %v1064
  %v1420 = vpack.c.b16 %v1067, %v1066
  %v1421 = vpack.c.b16 %v1069, %v1068
  %v1422 = vpack.c.b16 %v1071, %v1070
  %v1423 = vpack.c.b16 %v1073, %v1072
  %v1424 = vpack.c.b16 %v1075, %v1074
  %v1425 = vpack.c.b16 %v1077, %v1076
  %v1426 = vpack.c.b16 %v1079, %v1078
  %v1427 = vpack.c.b16 %v1081, %v1080
  %v1428 = vpack.c.b16 %v1083, %v1082
  %v1429 = vpack.c.b16 %v1085, %v1084
  %v1430 = vpack.c.b16 %v1087, %v1086
  %v1431 = vpack.c.b16 %v1089, %v1088
  %v1432 = vpack.c.b16 %v1091, %v1090
  %v1433 = vpack.c.b16 %v1093, %v1092
  %v1434 = vpack.c.b16 %v1095, %v1094
  %v1435 = vpack.c.b16 %v1097, %v1096
  %v1436 = vpack.c.b16 %v1099, %v1098
  %v1437 = vpack.c.b16 %v1101, %v1100
  %v1438 = vpack.c.b16 %v1103, %v1102
  %v1439 = vpack.c.b16 %v1105, %v1104
  %v1440 = vpack.c.b16 %v1107, %v1106
  %v1441 = vpack.c.b16 %v1109, %v1108
  %v1442 = vpack.c.b16 %v1111, %v1110
  %v1443 = vpack.c.b16 %v1113, %v1112
  %v1444 = vpack.c.b16 %v1115, %v1114
  %v1445 = vpack.c.b16 %v1117, %v1116
  %v1446 = vpack.c.b16 %v1119, %v1118
  %v1447 = vpack.c.b16 %v1121, %v1120
  %v1448 = vpack.c.b16 %v1123, %v1122
  %v1449 = vpack.c.b16 %v1125, %v1124
  %v1450 = vpack.c.b16 %v1127, %v1126
  %v1451 = vpack.c.b16 %v1129, %v1128
  %v1452 = vpack.c.b16 %v1131, %v1130
  %v1453 = vpack.c.b16 %v1133, %v1132
  %v1454 = vpack.c.b16 %v1135, %v1134
  %v1455 = vpack.c.b16 %v1137, %v1136
  %v1456 = vpack.c.b16 %v1139, %v1138
  %v1457 = vpack.c.b16 %v1141, %v1140
  %v1458 = vpack.c.b16 %v1143, %v1142
  %v1459 = vpack.c.b16 %v1145, %v1144
  %v1460 = vpack.c.b16 %v1147, %v1146
  %v1461 = vpack.c.b16 %v1149, %v1148
  %v1462 = vpack.c.b16 %v1151, %v1150
  %v1463 = vpack.c.b16 %v1153, %v1152
  %v1464 = vpack.c.b16 %v1155, %v1154
  %v1465 = vpack.c.b16 %v1157, %v1156
  %v1466 = vpack.c.b16 %v1159, %v1158
  %v1467 = vpack.c.b16 %v1161, %v1160
  %v1468 = vpack.c.b16 %v1163, %v1162
  %v1469 = vpack.c.b16 %v1165, %v1164
  %v1470 = vpack.c.b16 %v1167, %v1166
  %v1471 = vpack.c.b16 %v1169, %v1168
  %v1472 = vpack.c.b16 %v1171, %v1170
  %v1473 = vpack.c.b16 %v1173, %v1172
  %v1474 = vpack.c.b16 %v1175, %v1174
  %v1475 = vpack.c.b16 %v1177, %v1176
  %v1476 = vpack.c.b16 %v1179, %v1178
  %v1477 = vpack.c.b16 %v1181, %v1180
  %v1478 = vpack.c.b16 %v1183, %v1182
  %v1479 = vpack.c.b16 %v1185, %v1184
  %v1480 = vpack.c.b16 %v1187, %v1186
  %v1481 = vpack.c.b16 %v1189, %v1188
  %v1482 = vpack.c.b16 %v1191, %v1190
  %v1483 = vpack.c.b16 %v1193, %v1192
  %v1484 = vpack.c.b16 %v1195, %v1194
  %v1485 = vpack.c.b16 %v1197, %v1196
  %v1486 = vpack.c.b16 %v1199, %v1198
  %v1487 = vpack.c.b16 %v1201, %v1200
  %v1488 = vpack.c.b16 %v1203, %v1202
  %v1489 = vpack.c.b16 %v1205, %v1204
  %v1490 = vpack.c.b16 %v1207, %v1206
  %v1491 = vpack.c.b16 %v1209, %v1208
  %v1492 = vpack.c.b16 %v1211, %v1210
  %v1493 = vpack.c.b16 %v1213, %v1212
  %v1494 = vpack.c.b16 %v1215, %v1214
  %v1495 = vpack.c.b16 %v1217, %v1216
  %v1496 = vpack.c.b16 %v1219, %v1218
  %v1497 = vpack.c.b16 %v1221, %v1220
  %v1498 = vpack.c.b16 %v1223, %v1222
  %v1499 = vpack.c.b16 %v1225, %v1224
  %v1500 = vpack.c.b16 %v1227, %v1226
  %v1501 = vpack.c.b16 %v1229, %v1228
  %v1502 = vpack.c.b16 %v1231, %v1230
  %v1503 = vpack.c.b16 %v1233, %v1232
  %v1504 = vpack.c.b16 %v1235, %v1234
  %v1505 = vpack.c.b16 %v1237, %v1236
  %v1506 = vpack.c.b16 %v1239, %v1238
  %v1507 = vpack.c.b16 %v1241, %v1240
  %v1508 = vpack.c.b16 %v1243, %v1242
  %v1509 = vpack.c.b16 %v1245, %v1244
  %v1510 = vpack.c.b16 %v1247, %v1246
  %v1511 = vpack.c.b16 %v1249, %v1248
  %v1512 = vpack.c.b16 %v1251, %v1250
  %v1513 = vpack.c.b16 %v1253, %v1252
  %v1514 = vpack.c.b16 %v1255, %v1254
  %v1515 = vpack.c.b16 %v1257, %v1256
  %v1516 = vpack.c.b16 %v1259, %v1258
  %v1517 = vpack.c.b16 %v1261, %v1260
  %v1518 = vpack.c.b16 %v1263, %v1262
  %v1519 = vpack.c.b16 %v1265, %v1264
  %v1520 = vpack.c.b16 %v1267, %v1266
  %v1521 = vpack.c.b16 %v1269, %v1268
  %v1522 = vpack.c.b16 %v1271, %v1270
  %v1523 = vpack.c.b16 %v1273, %v1272
  %v1524 = vpack.c.b16 %v1275, %v1274
  %v1525 = vpack.c.b16 %v1277, %v1276
  %v1526 = vpack.c.b16 %v1279, %v1278
  %v1527 = vpack.c.b16 %v1281, %v1280
  %v1528 = vpack.c.b16 %v1283, %v1282
  %v1529 = vpack.c.b16 %v1285, %v1284
  %v1530 = vpack.c.b16 %v1287, %v1286
  %v1531 = vpack.c.b16 %v1289, %v1288
  %v1532 = vpack.c.b16 %v1291, %v1290
  %v1533 = vpack.c.b16 %v1293, %v1292
  %v1534 = vpack.c.b16 %v1295, %v1294
  %v1535 = vpack.c.b16 %v1297, %v1296
  %v1536 = vpack.c.b16 %v1299, %v1298
  %v1537 = vpack.c.b16 %v1301, %v1300
  %v1538 = vpack.c.b16 %v1303, %v1302
  %v1539 = vpack.c.b16 %v1305, %v1304
  %v1540 = vpack.c.b16 %v1307, %v1306
  %v1541 = vpack.c.b16 %v1309, %v1308
  %v1542 = vpack.c.b16 %v1311, %v1310
  %v1543 = vpack.c.b16 %v1313, %v1312
  %v1544 = vpack.c.b16 %v1315, %v1314
  %v1545 = vpack.c.b16 %v1317, %v1316
  %v1546 = vpack.c.b16 %v1319, %v1318
  %v1547 = vpack.c.b16 %v1321, %v1320
  %v1548 = vpack.c.b16 %v1323, %v1322
  %v1549 = vpack.c.b16 %v1325, %v1324
  %v1550 = vpack.c.b16 %v1327, %v1326
  %v1551 = vpack.c.b16 %v1329, %v1328
  %v1552 = vpack.c.b16 %v1331, %v1330
  %v1553 = vpack.c.b16 %v1333, %v1332
  %v1554 = vpack.c.b16 %v1335, %v1334
  %v1555 = vpack.c.b16 %v1337, %v1336
  %v1556 = vpack.c.b16 %v1339, %v1338
  %v1557 = vpack.c.b16 %v1341, %v1340
  %v1558 = vpack.c.b16 %v1343, %v1342
  %v1559 = vpack.c.b16 %v1345, %v1344
  %v1560 = vpack.c.b16 %v1347, %v1346
  %v1561 = vpack.c.b16 %v1349, %v1348
  %v1562 = vpack.c.b16 %v1351, %v1350
  %v1563 = vpack.c.b16 %v1353, %v1352
  %v1564 = vpack.c.b16 %v1355, %v1354
  %v1565 = vpack.c.b16 %v1357, %v1356
  %v1566 = vpack.c.b16 %v1359, %v1358
  %v1567 = vpack.c.b16 %v1361, %v1360
  %v1568 = vpack.c.b16 %v1363, %v1362
  %v1569 = vpack.c.b16 %v1365, %v1364
  %v1570 = vpack.c.b16 %v1367, %v1366
  %v1571 = vpack.c.b16 %v1369, %v1368
  %v1572 = vpack.c.b16 %v1371, %v1370
  %v1573 = vpack.c.b16 %v1373, %v1372
  %1774 = vmatpush.bf16.msra.mxu0 %v1381
  %1775 = vmatpush.bf16.msra.mxu0 %v1380
  %1776 = vmatpush.bf16.msra.mxu0 %v1379
  %1777 = vmatpush.bf16.msra.mxu0 %v1378
  %1778 = vmatpush.bf16.msra.mxu0 %v1377
  %1779 = vmatpush.bf16.msra.mxu0 %v1376
  %1780 = vmatpush.bf16.msra.mxu0 %v1375
  %1781 = vmatpush.bf16.msra.mxu0 %v1374
  %1782 = vmatmul.bf16.gmra.mxu0 %v524
  %v1783 = vpop.f32.mrf.mxu0
  %v1784 = vadd.f32 0.0, %v1783
  %v1785 = vpop.f32.mrf.mxu0
  %v1786 = vadd.f32 0.0, %v1785
  %1787 = vdwg.mxu0
  %1788 = vmatpush.bf16.msra.mxu0 %v1389
  %1789 = vmatpush.bf16.msra.mxu0 %v1388
  %1790 = vmatpush.bf16.msra.mxu0 %v1387
  %1791 = vmatpush.bf16.msra.mxu0 %v1386
  %1792 = vmatpush.bf16.msra.mxu0 %v1385
  %1793 = vmatpush.bf16.msra.mxu0 %v1384
  %1794 = vmatpush.bf16.msra.mxu0 %v1383
  %1795 = vmatpush.bf16.msra.mxu0 %v1382
  %1796 = vmatmul.bf16.gmra.mxu0 %v525
  %v1797 = vpop.f32.mrf.mxu0
  %v1798 = vadd.f32 %v1784, %v1797
  %v1799 = vpop.f32.mrf.mxu0
  %v1800 = vadd.f32 %v1786, %v1799
  %1801 = vdwg.mxu0
  %1802 = vmatpush.bf16.msra.mxu0 %v1397
  %1803 = vmatpush.bf16.msra.mxu0 %v1396
  %1804 = vmatpush.bf16.msra.mxu0 %v1395
  %1805 = vmatpush.bf16.msra.mxu0 %v1394
  %1806 = vmatpush.bf16.msra.mxu0 %v1393
  %1807 = vmatpush.bf16.msra.mxu0 %v1392
  %1808 = vmatpush.bf16.msra.mxu0 %v1391
  %1809 = vmatpush.bf16.msra.mxu0 %v1390
  %1810 = vmatmul.bf16.gmra.mxu0 %v526
  %v1811 = vpop.f32.mrf.mxu0
  %v1812 = vadd.f32 %v1798, %v1811
  %v1813 = vpop.f32.mrf.mxu0
  %v1814 = vadd.f32 %v1800, %v1813
  %1815 = vdwg.mxu0
  %1816 = vmatpush.bf16.msra.mxu0 %v1405
  %1817 = vmatpush.bf16.msra.mxu0 %v1404
  %1818 = vmatpush.bf16.msra.mxu0 %v1403
  %1819 = vmatpush.bf16.msra.mxu0 %v1402
  %1820 = vmatpush.bf16.msra.mxu0 %v1401
  %1821 = vmatpush.bf16.msra.mxu0 %v1400
  %1822 = vmatpush.bf16.msra.mxu0 %v1399
  %1823 = vmatpush.bf16.msra.mxu0 %v1398
  %1824 = vmatmul.bf16.gmra.mxu0 %v527
  %v1825 = vpop.f32.mrf.mxu0
  %v1826 = vadd.f32 %v1812, %v1825
  %v1827 = vpop.f32.mrf.mxu0
  %v1828 = vadd.f32 %v1814, %v1827
  %1829 = vdwg.mxu0
  %1830 = vmatpush.bf16.msra.mxu0 %v1413
  %1831 = vmatpush.bf16.msra.mxu0 %v1412
  %1832 = vmatpush.bf16.msra.mxu0 %v1411
  %1833 = vmatpush.bf16.msra.mxu0 %v1410
  %1834 = vmatpush.bf16.msra.mxu0 %v1409
  %1835 = vmatpush.bf16.msra.mxu0 %v1408
  %1836 = vmatpush.bf16.msra.mxu0 %v1407
  %1837 = vmatpush.bf16.msra.mxu0 %v1406
  %1838 = vmatmul.bf16.gmra.mxu0 %v528
  %v1839 = vpop.f32.mrf.mxu0
  %v1840 = vadd.f32 %v1826, %v1839
  %v1841 = vpop.f32.mrf.mxu0
  %v1842 = vadd.f32 %v1828, %v1841
  %1843 = vdwg.mxu0
  %1844 = vmatpush.bf16.msra.mxu0 %v1421
  %1845 = vmatpush.bf16.msra.mxu0 %v1420
  %1846 = vmatpush.bf16.msra.mxu0 %v1419
  %1847 = vmatpush.bf16.msra.mxu0 %v1418
  %1848 = vmatpush.bf16.msra.mxu0 %v1417
  %1849 = vmatpush.bf16.msra.mxu0 %v1416
  %1850 = vmatpush.bf16.msra.mxu0 %v1415
  %1851 = vmatpush.bf16.msra.mxu0 %v1414
  %1852 = vmatmul.bf16.gmra.mxu0 %v529
  %v1853 = vpop.f32.mrf.mxu0
  %v1854 = vadd.f32 %v1840, %v1853
  %v1855 = vpop.f32.mrf.mxu0
  %v1856 = vadd.f32 %v1842, %v1855
  %1857 = vdwg.mxu0
  %1858 = vmatpush.bf16.msra.mxu0 %v1429
  %1859 = vmatpush.bf16.msra.mxu0 %v1428
  %1860 = vmatpush.bf16.msra.mxu0 %v1427
  %1861 = vmatpush.bf16.msra.mxu0 %v1426
  %1862 = vmatpush.bf16.msra.mxu0 %v1425
  %1863 = vmatpush.bf16.msra.mxu0 %v1424
  %1864 = vmatpush.bf16.msra.mxu0 %v1423
  %1865 = vmatpush.bf16.msra.mxu0 %v1422
  %1866 = vmatmul.bf16.gmra.mxu0 %v530
  %v1867 = vpop.f32.mrf.mxu0
  %v1868 = vadd.f32 %v1854, %v1867
  %v1869 = vpop.f32.mrf.mxu0
  %v1870 = vadd.f32 %v1856, %v1869
  %1871 = vdwg.mxu0
  %1872 = vmatpush.bf16.msra.mxu0 %v1437
  %1873 = vmatpush.bf16.msra.mxu0 %v1436
  %1874 = vmatpush.bf16.msra.mxu0 %v1435
  %1875 = vmatpush.bf16.msra.mxu0 %v1434
  %1876 = vmatpush.bf16.msra.mxu0 %v1433
  %1877 = vmatpush.bf16.msra.mxu0 %v1432
  %1878 = vmatpush.bf16.msra.mxu0 %v1431
  %1879 = vmatpush.bf16.msra.mxu0 %v1430
  %1880 = vmatmul.bf16.gmra.mxu0 %v531
  %v1881 = vpop.f32.mrf.mxu0
  %v1882 = vadd.f32 %v1868, %v1881
  %v1883 = vpop.f32.mrf.mxu0
  %v1884 = vadd.f32 %v1870, %v1883
  %1885 = vdwg.mxu0
  %1886 = vmatpush.bf16.msra.mxu0 %v1445
  %1887 = vmatpush.bf16.msra.mxu0 %v1444
  %1888 = vmatpush.bf16.msra.mxu0 %v1443
  %1889 = vmatpush.bf16.msra.mxu0 %v1442
  %1890 = vmatpush.bf16.msra.mxu0 %v1441
  %1891 = vmatpush.bf16.msra.mxu0 %v1440
  %1892 = vmatpush.bf16.msra.mxu0 %v1439
  %1893 = vmatpush.bf16.msra.mxu0 %v1438
  %1894 = vmatmul.bf16.gmra.mxu0 %v532
  %v1895 = vpop.f32.mrf.mxu0
  %v1896 = vadd.f32 %v1882, %v1895
  %v1897 = vpop.f32.mrf.mxu0
  %v1898 = vadd.f32 %v1884, %v1897
  %1899 = vdwg.mxu0
  %1900 = vmatpush.bf16.msra.mxu0 %v1453
  %1901 = vmatpush.bf16.msra.mxu0 %v1452
  %1902 = vmatpush.bf16.msra.mxu0 %v1451
  %1903 = vmatpush.bf16.msra.mxu0 %v1450
  %1904 = vmatpush.bf16.msra.mxu0 %v1449
  %1905 = vmatpush.bf16.msra.mxu0 %v1448
  %1906 = vmatpush.bf16.msra.mxu0 %v1447
  %1907 = vmatpush.bf16.msra.mxu0 %v1446
  %1908 = vmatmul.bf16.gmra.mxu0 %v533
  %v1909 = vpop.f32.mrf.mxu0
  %v1910 = vadd.f32 %v1896, %v1909
  %v1911 = vpop.f32.mrf.mxu0
  %v1912 = vadd.f32 %v1898, %v1911
  %1913 = vdwg.mxu0
  %1914 = vmatpush.bf16.msra.mxu0 %v1461
  %1915 = vmatpush.bf16.msra.mxu0 %v1460
  %1916 = vmatpush.bf16.msra.mxu0 %v1459
  %1917 = vmatpush.bf16.msra.mxu0 %v1458
  %1918 = vmatpush.bf16.msra.mxu0 %v1457
  %1919 = vmatpush.bf16.msra.mxu0 %v1456
  %1920 = vmatpush.bf16.msra.mxu0 %v1455
  %1921 = vmatpush.bf16.msra.mxu0 %v1454
  %1922 = vmatmul.bf16.gmra.mxu0 %v534
  %v1923 = vpop.f32.mrf.mxu0
  %v1924 = vadd.f32 %v1910, %v1923
  %v1925 = vpop.f32.mrf.mxu0
  %v1926 = vadd.f32 %v1912, %v1925
  %1927 = vdwg.mxu0
  %1928 = vmatpush.bf16.msra.mxu0 %v1469
  %1929 = vmatpush.bf16.msra.mxu0 %v1468
  %1930 = vmatpush.bf16.msra.mxu0 %v1467
  %1931 = vmatpush.bf16.msra.mxu0 %v1466
  %1932 = vmatpush.bf16.msra.mxu0 %v1465
  %1933 = vmatpush.bf16.msra.mxu0 %v1464
  %1934 = vmatpush.bf16.msra.mxu0 %v1463
  %1935 = vmatpush.bf16.msra.mxu0 %v1462
  %1936 = vmatmul.bf16.gmra.mxu0 %v535
  %v1937 = vpop.f32.mrf.mxu0
  %v1938 = vadd.f32 %v1924, %v1937
  %v1939 = vpop.f32.mrf.mxu0
  %v1940 = vadd.f32 %v1926, %v1939
  %1941 = vdwg.mxu0
  %1942 = vmatpush.bf16.msra.mxu0 %v1477
  %1943 = vmatpush.bf16.msra.mxu0 %v1476
  %1944 = vmatpush.bf16.msra.mxu0 %v1475
  %1945 = vmatpush.bf16.msra.mxu0 %v1474
  %1946 = vmatpush.bf16.msra.mxu0 %v1473
  %1947 = vmatpush.bf16.msra.mxu0 %v1472
  %1948 = vmatpush.bf16.msra.mxu0 %v1471
  %1949 = vmatpush.bf16.msra.mxu0 %v1470
  %1950 = vmatmul.bf16.gmra.mxu0 %v536
  %v1951 = vpop.f32.mrf.mxu0
  %v1952 = vadd.f32 %v1938, %v1951
  %v1953 = vpop.f32.mrf.mxu0
  %v1954 = vadd.f32 %v1940, %v1953
  %1955 = vdwg.mxu0
  %1956 = vmatpush.bf16.msra.mxu0 %v1485
  %1957 = vmatpush.bf16.msra.mxu0 %v1484
  %1958 = vmatpush.bf16.msra.mxu0 %v1483
  %1959 = vmatpush.bf16.msra.mxu0 %v1482
  %1960 = vmatpush.bf16.msra.mxu0 %v1481
  %1961 = vmatpush.bf16.msra.mxu0 %v1480
  %1962 = vmatpush.bf16.msra.mxu0 %v1479
  %1963 = vmatpush.bf16.msra.mxu0 %v1478
  %1964 = vmatmul.bf16.gmra.mxu0 %v537
  %v1965 = vpop.f32.mrf.mxu0
  %v1966 = vadd.f32 %v1952, %v1965
  %v1967 = vpop.f32.mrf.mxu0
  %v1968 = vadd.f32 %v1954, %v1967
  %1969 = vdwg.mxu0
  %1970 = vmatpush.bf16.msra.mxu0 %v1493
  %1971 = vmatpush.bf16.msra.mxu0 %v1492
  %1972 = vmatpush.bf16.msra.mxu0 %v1491
  %1973 = vmatpush.bf16.msra.mxu0 %v1490
  %1974 = vmatpush.bf16.msra.mxu0 %v1489
  %1975 = vmatpush.bf16.msra.mxu0 %v1488
  %1976 = vmatpush.bf16.msra.mxu0 %v1487
  %1977 = vmatpush.bf16.msra.mxu0 %v1486
  %1978 = vmatmul.bf16.gmra.mxu0 %v538
  %v1979 = vpop.f32.mrf.mxu0
  %v1980 = vadd.f32 %v1966, %v1979
  %v1981 = vpop.f32.mrf.mxu0
  %v1982 = vadd.f32 %v1968, %v1981
  %1983 = vdwg.mxu0
  %1984 = vmatpush.bf16.msra.mxu0 %v1501
  %1985 = vmatpush.bf16.msra.mxu0 %v1500
  %1986 = vmatpush.bf16.msra.mxu0 %v1499
  %1987 = vmatpush.bf16.msra.mxu0 %v1498
  %1988 = vmatpush.bf16.msra.mxu0 %v1497
  %1989 = vmatpush.bf16.msra.mxu0 %v1496
  %1990 = vmatpush.bf16.msra.mxu0 %v1495
  %1991 = vmatpush.bf16.msra.mxu0 %v1494
  %1992 = vmatmul.bf16.gmra.mxu0 %v539
  %v1993 = vpop.f32.mrf.mxu0
  %v1994 = vadd.f32 %v1980, %v1993
  %v1995 = vpop.f32.mrf.mxu0
  %v1996 = vadd.f32 %v1982, %v1995
  %1997 = vdwg.mxu0
  %1998 = vmatpush.bf16.msra.mxu0 %v1509
  %1999 = vmatpush.bf16.msra.mxu0 %v1508
  %2000 = vmatpush.bf16.msra.mxu0 %v1507
  %2001 = vmatpush.bf16.msra.mxu0 %v1506
  %2002 = vmatpush.bf16.msra.mxu0 %v1505
  %2003 = vmatpush.bf16.msra.mxu0 %v1504
  %2004 = vmatpush.bf16.msra.mxu0 %v1503
  %2005 = vmatpush.bf16.msra.mxu0 %v1502
  %2006 = vmatmul.bf16.gmra.mxu0 %v540
  %v2007 = vpop.f32.mrf.mxu0
  %v2008 = vadd.f32 %v1994, %v2007
  %v2009 = vpop.f32.mrf.mxu0
  %v2010 = vadd.f32 %v1996, %v2009
  %2011 = vdwg.mxu0
  %2012 = vmatpush.bf16.msra.mxu0 %v1517
  %2013 = vmatpush.bf16.msra.mxu0 %v1516
  %2014 = vmatpush.bf16.msra.mxu0 %v1515
  %2015 = vmatpush.bf16.msra.mxu0 %v1514
  %2016 = vmatpush.bf16.msra.mxu0 %v1513
  %2017 = vmatpush.bf16.msra.mxu0 %v1512
  %2018 = vmatpush.bf16.msra.mxu0 %v1511
  %2019 = vmatpush.bf16.msra.mxu0 %v1510
  %2020 = vmatmul.bf16.gmra.mxu0 %v541
  %v2021 = vpop.f32.mrf.mxu0
  %v2022 = vadd.f32 %v2008, %v2021
  %v2023 = vpop.f32.mrf.mxu0
  %v2024 = vadd.f32 %v2010, %v2023
  %2025 = vdwg.mxu0
  %2026 = vmatpush.bf16.msra.mxu0 %v1525
  %2027 = vmatpush.bf16.msra.mxu0 %v1524
  %2028 = vmatpush.bf16.msra.mxu0 %v1523
  %2029 = vmatpush.bf16.msra.mxu0 %v1522
  %2030 = vmatpush.bf16.msra.mxu0 %v1521
  %2031 = vmatpush.bf16.msra.mxu0 %v1520
  %2032 = vmatpush.bf16.msra.mxu0 %v1519
  %2033 = vmatpush.bf16.msra.mxu0 %v1518
  %2034 = vmatmul.bf16.gmra.mxu0 %v542
  %v2035 = vpop.f32.mrf.mxu0
  %v2036 = vadd.f32 %v2022, %v2035
  %v2037 = vpop.f32.mrf.mxu0
  %v2038 = vadd.f32 %v2024, %v2037
  %2039 = vdwg.mxu0
  %2040 = vmatpush.bf16.msra.mxu0 %v1533
  %2041 = vmatpush.bf16.msra.mxu0 %v1532
  %2042 = vmatpush.bf16.msra.mxu0 %v1531
  %2043 = vmatpush.bf16.msra.mxu0 %v1530
  %2044 = vmatpush.bf16.msra.mxu0 %v1529
  %2045 = vmatpush.bf16.msra.mxu0 %v1528
  %2046 = vmatpush.bf16.msra.mxu0 %v1527
  %2047 = vmatpush.bf16.msra.mxu0 %v1526
  %2048 = vmatmul.bf16.gmra.mxu0 %v543
  %v2049 = vpop.f32.mrf.mxu0
  %v2050 = vadd.f32 %v2036, %v2049
  %v2051 = vpop.f32.mrf.mxu0
  %v2052 = vadd.f32 %v2038, %v2051
  %2053 = vdwg.mxu0
  %2054 = vmatpush.bf16.msra.mxu0 %v1541
  %2055 = vmatpush.bf16.msra.mxu0 %v1540
  %2056 = vmatpush.bf16.msra.mxu0 %v1539
  %2057 = vmatpush.bf16.msra.mxu0 %v1538
  %2058 = vmatpush.bf16.msra.mxu0 %v1537
  %2059 = vmatpush.bf16.msra.mxu0 %v1536
  %2060 = vmatpush.bf16.msra.mxu0 %v1535
  %2061 = vmatpush.bf16.msra.mxu0 %v1534
  %2062 = vmatmul.bf16.gmra.mxu0 %v544
  %v2063 = vpop.f32.mrf.mxu0
  %v2064 = vadd.f32 %v2050, %v2063
  %v2065 = vpop.f32.mrf.mxu0
  %v2066 = vadd.f32 %v2052, %v2065
  %2067 = vdwg.mxu0
  %2068 = vmatpush.bf16.msra.mxu0 %v1549
  %2069 = vmatpush.bf16.msra.mxu0 %v1548
  %2070 = vmatpush.bf16.msra.mxu0 %v1547
  %2071 = vmatpush.bf16.msra.mxu0 %v1546
  %2072 = vmatpush.bf16.msra.mxu0 %v1545
  %2073 = vmatpush.bf16.msra.mxu0 %v1544
  %2074 = vmatpush.bf16.msra.mxu0 %v1543
  %2075 = vmatpush.bf16.msra.mxu0 %v1542
  %2076 = vmatmul.bf16.gmra.mxu0 %v545
  %v2077 = vpop.f32.mrf.mxu0
  %v2078 = vadd.f32 %v2064, %v2077
  %v2079 = vpop.f32.mrf.mxu0
  %v2080 = vadd.f32 %v2066, %v2079
  %2081 = vdwg.mxu0
  %2082 = vmatpush.bf16.msra.mxu0 %v1557
  %2083 = vmatpush.bf16.msra.mxu0 %v1556
  %2084 = vmatpush.bf16.msra.mxu0 %v1555
  %2085 = vmatpush.bf16.msra.mxu0 %v1554
  %2086 = vmatpush.bf16.msra.mxu0 %v1553
  %2087 = vmatpush.bf16.msra.mxu0 %v1552
  %2088 = vmatpush.bf16.msra.mxu0 %v1551
  %2089 = vmatpush.bf16.msra.mxu0 %v1550
  %2090 = vmatmul.bf16.gmra.mxu0 %v546
  %v2091 = vpop.f32.mrf.mxu0
  %v2092 = vadd.f32 %v2078, %v2091
  %v2093 = vpop.f32.mrf.mxu0
  %v2094 = vadd.f32 %v2080, %v2093
  %2095 = vdwg.mxu0
  %2096 = vmatpush.bf16.msra.mxu0 %v1565
  %2097 = vmatpush.bf16.msra.mxu0 %v1564
  %2098 = vmatpush.bf16.msra.mxu0 %v1563
  %2099 = vmatpush.bf16.msra.mxu0 %v1562
  %2100 = vmatpush.bf16.msra.mxu0 %v1561
  %2101 = vmatpush.bf16.msra.mxu0 %v1560
  %2102 = vmatpush.bf16.msra.mxu0 %v1559
  %2103 = vmatpush.bf16.msra.mxu0 %v1558
  %2104 = vmatmul.bf16.gmra.mxu0 %v547
  %v2105 = vpop.f32.mrf.mxu0
  %v2106 = vadd.f32 %v2092, %v2105
  %v2107 = vpop.f32.mrf.mxu0
  %v2108 = vadd.f32 %v2094, %v2107
  %2109 = vdwg.mxu0
  %2110 = vmatpush.bf16.msra.mxu0 %v1573
  %2111 = vmatpush.bf16.msra.mxu0 %v1572
  %2112 = vmatpush.bf16.msra.mxu0 %v1571
  %2113 = vmatpush.bf16.msra.mxu0 %v1570
  %2114 = vmatpush.bf16.msra.mxu0 %v1569
  %2115 = vmatpush.bf16.msra.mxu0 %v1568
  %2116 = vmatpush.bf16.msra.mxu0 %v1567
  %2117 = vmatpush.bf16.msra.mxu0 %v1566
  %2118 = vmatmul.bf16.gmra.mxu0 %v548
  %v2119 = vpop.f32.mrf.mxu0
  %v2120 = vadd.f32 %v2106, %v2119
  %v2121 = vpop.f32.mrf.mxu0
  %v2122 = vadd.f32 %v2108, %v2121
  %2123 = vdwg.mxu0
  %v2124 = vadd.f32 %v20, %v2120
  %v2125 = vadd.f32 %v21, %v2122
  %2126 = vst [vmem:[#allocation2] sm:$0xff] %v2124
  %2127 = vst [vmem:[#allocation2 + $0x8] sm:$0xff] %v2125
  %v2128 = vld [vmem:[#allocation2] sm:$0xff]
  %v2129 = vld [vmem:[#allocation2 + $0x8] sm:$0xff]
  %v2130 = vld [vmem:[%s2] sm:$0x1]
  %v2132 = vperm.slane %v2130, 0
  %v2134 = vadd.f32 %v2128, %v2132
  %v2135 = vadd.f32 %v2129, %v2132
  %2136 = vst [vmem:[%s3] sm:$0xff] %v2134
  %2137 = vst [vmem:[%s3 + $0x8] sm:$0xff] %v2135
  // Predicated region
  $region18: #{video_autoencoder_lstm.11} parent=0 // pred_check
    _
  $region19: #{video_autoencoder_lstm.11} parent=0 // pred_check_branch
    %2139 = sbr.rel (0) target = $region21
  $region20: #{video_autoencoder_lstm.11} parent=0 // pred_region
    _
  $region21: #{video_autoencoder_lstm.11} parent=0 // pred_fallthru
    _
  // Predicated region
  $region22: #{video_autoencoder_lstm.11} parent=0 // pred_check
    _
  $region23: #{video_autoencoder_lstm.11} parent=0 // pred_check_branch
    %2141 = sbr.rel (0) target = $region25
  $region24: #{video_autoencoder_lstm.11} parent=0 // pred_region
    _
  $region25: #{video_autoencoder_lstm.11} parent=0 // pred_fallthru
    _

// kernel: video_autoencoder_lstm.13
$region0: #{video_autoencoder_lstm.13}
  #allocation0 [shape = 'u32[]', space=smem, size = 0x4, offset = 0x4, fixed_abs, tag = 'smem constant byte address 0x4 - core index']
  #allocation1 [shape = 'u32[72,128]{1,0:T(1,128)}', space=vmem, size = 0x9000, scoped, tag = 'internal scratch']
  #allocation2 [shape = 'f32[2,256]{1,0:T(2,128)}', space=vmem, size = 0x800, scoped, tag = 'scratch operand']
  #allocation3 [shape = 'f32[2,256]{1,0:T(2,128)}', space=vmem, size = 0x800, scoped, tag = 'scratch operand']
  %s0 = inlined_call_operand.vmem [shape: f32[2,2,1024], index: 0, kind: input, shape index: {}]
  %s1 = inlined_call_operand.vmem [shape: bf16[256,1024], index: 1, kind: input, shape index: {}]
  %s2 = inlined_call_operand.vmem [shape: f32[2,2,256], index: 2, kind: output, shape index: {}]
  %s3 = sld [smem:[#allocation0]]
  $region45: #{video_autoencoder_lstm.13} parent=0
    _
  %s5 = ssub.s32 1, %s3
  %s6 = scalar_select 0, %s5, %s3
  loop: start=0, step=1, limit=4
  $region2: #{video_autoencoder_lstm.13} parent=0 // loop_pre_header
    _
  $region3: #{video_autoencoder_lstm.13} parent=0 // loop_header
    %s8 = sphi 0, %s12
    %p9 = scmp.ge.s32.totalorder %s8, 4
    %s18 = sphi 0, %s20
    %s21 = sphi 0, %s18
    %s22 = sphi 0, %s21
    %s38 = sphi 0, %s22
    %s42 = sphi 0, %s42
    %s44 = sphi 0, %s42
    %s45 = sphi 0, %s44
    %s59 = sphi 0, %s45
    %s65 = sphi 0, %s67
    %s68 = sphi 0, %s65
    %s69 = sphi 0, %s68
    %s85 = sphi 0, %s69
  $region4: #{video_autoencoder_lstm.13} parent=0 // loop_header_branch
    %11 = sbr.rel (%p9) target = $region8
  $region5: #{video_autoencoder_lstm.13} parent=0 // loop_body
    %s13 = ssub.s32 %s8, 1
    %s14 = ssub.s32 %s8, 2
    %s15 = sadd.s32 %s8, 1
    %s16 = ssub.s32 %s8, %s15
    %p17 = scmp.eq.s32.totalorder %s16, 0
    %s19 = sadd.s32 %s18, 1
    %s20 = scalar_select %p17, %s18, %s19
    %p23 = pneg %p17
    %p24 = scmp.eq.s32.totalorder %s8, 1
    %p25 = por %p23, %p24
    %p26 = scmp.ne.s32.totalorder %s18, %s21
    %p27 = scmp.eq.s32.totalorder %s8, 0
    %p28 = por %p26, %p27
    %p29 = scmp.ne.s32.totalorder %s18, %s21
    %p30 = scmp.eq.s32.totalorder %s13, 1
    %p31 = por %p29, %p30
    %p32 = scmp.ne.s32.totalorder %s21, %s22
    %p33 = scmp.eq.s32.totalorder %s13, 0
    %p34 = por %p32, %p33
    %p35 = scmp.ne.s32.totalorder %s21, %s22
    %p36 = scmp.eq.s32.totalorder %s14, 1
    %p37 = por %p35, %p36
    %p39 = scmp.ne.s32.totalorder %s22, %s38
    %p40 = scmp.eq.s32.totalorder %s14, 0
    %p41 = por %p39, %p40
    %s43 = sadd.s32 %s42, 1
    %p46 = scmp.eq.s32.totalorder %s8, 1
    %p47 = scmp.ne.s32.totalorder %s42, %s44
    %p48 = scmp.eq.s32.totalorder %s8, 0
    %p49 = por %p47, %p48
    %p50 = scmp.ne.s32.totalorder %s42, %s44
    %p51 = scmp.eq.s32.totalorder %s13, 1
    %p52 = por %p50, %p51
    %p53 = scmp.ne.s32.totalorder %s44, %s45
    %p54 = scmp.eq.s32.totalorder %s13, 0
    %p55 = por %p53, %p54
    %p56 = scmp.ne.s32.totalorder %s44, %s45
    %p57 = scmp.eq.s32.totalorder %s14, 1
    %p58 = por %p56, %p57
    %p60 = scmp.ne.s32.totalorder %s45, %s59
    %p61 = scmp.eq.s32.totalorder %s14, 0
    %p62 = por %p60, %p61
    %s63 = ssub.s32 %s8, %s15
    %p64 = scmp.eq.s32.totalorder %s63, 0
    %s66 = sadd.s32 %s65, 1
    %s67 = scalar_select %p64, %s65, %s66
    %p70 = pneg %p64
    %p71 = scmp.eq.s32.totalorder %s8, 1
    %p72 = por %p70, %p71
    %p73 = scmp.ne.s32.totalorder %s65, %s68
    %p74 = scmp.eq.s32.totalorder %s8, 0
    %p75 = por %p73, %p74
    %p76 = scmp.ne.s32.totalorder %s65, %s68
    %p77 = scmp.eq.s32.totalorder %s13, 1
    %p78 = por %p76, %p77
    %p79 = scmp.ne.s32.totalorder %s68, %s69
    %p80 = scmp.eq.s32.totalorder %s13, 0
    %p81 = por %p79, %p80
    %p82 = scmp.ne.s32.totalorder %s68, %s69
    %p83 = scmp.eq.s32.totalorder %s14, 1
    %p84 = por %p82, %p83
    %p86 = scmp.ne.s32.totalorder %s69, %s85
    %p87 = scmp.eq.s32.totalorder %s14, 0
    %p88 = por %p86, %p87
    %p89 = scmp.le.s32.totalorder 1, %s8
    %p90 = scmp.lt.s32.totalorder %s8, 3
    %p91 = pnand %p89, %p90
    %p92 = pneg %p91
    // Predicated region
    $region9: #{video_autoencoder_lstm.13} parent=5 // pred_check
      _
    $region10: #{video_autoencoder_lstm.13} parent=5 // pred_check_branch
      %94 = sbr.rel (%p91) target = $region12
    $region11: #{video_autoencoder_lstm.13} parent=5 // pred_region
      %s95 = ssub.s32 %s8, 1
      // Predicated region
      $region13: #{video_autoencoder_lstm.13} parent=11 // pred_check
        %p96 = pneg %p55
      $region14: #{video_autoencoder_lstm.13} parent=11 // pred_check_branch
        %98 = sbr.rel (%p96) target = $region16
      $region15: #{video_autoencoder_lstm.13} parent=11 // pred_region
        _
      $region16: #{video_autoencoder_lstm.13} parent=11 // pred_fallthru
        _
    $region12: #{video_autoencoder_lstm.13} parent=5 // pred_fallthru
      _
    %p99 = scmp.lt.s32.totalorder %s8, 2
    // Predicated region
    $region17: #{video_autoencoder_lstm.13} parent=5 // pred_check
      %p100 = pneg %p99
    $region18: #{video_autoencoder_lstm.13} parent=5 // pred_check_branch
      %102 = sbr.rel (%p100) target = $region20
    $region19: #{video_autoencoder_lstm.13} parent=5 // pred_region
      // Predicated region
      $region21: #{video_autoencoder_lstm.13} parent=19 // pred_check
        %p103 = pneg %p28
      $region22: #{video_autoencoder_lstm.13} parent=19 // pred_check_branch
        %105 = sbr.rel (%p103) target = $region24
      $region23: #{video_autoencoder_lstm.13} parent=19 // pred_region
        %p106 = scmp.lt.s32.totalorder %s8, 1
        %s107 = scalar_select %p106, %s8, 1
        %s108 = smul.addr %s107, 8
        %s109 = smul.addr %s108, 2
        %s110 = scalar_lea.vmem %s0, %s109
      $region24: #{video_autoencoder_lstm.13} parent=19 // pred_fallthru
        _
    $region20: #{video_autoencoder_lstm.13} parent=5 // pred_fallthru
      _
    %p111 = scmp.le.s32.totalorder 1, %s8
    %p112 = scmp.lt.s32.totalorder %s8, 3
    %p113 = pnand %p111, %p112
    %p114 = pneg %p113
    // Predicated region
    $region25: #{video_autoencoder_lstm.13} parent=5 // pred_check
      _
    $region26: #{video_autoencoder_lstm.13} parent=5 // pred_check_branch
      %116 = sbr.rel (%p113) target = $region28
    $region27: #{video_autoencoder_lstm.13} parent=5 // pred_region
      %s117 = ssub.s32 %s8, 1
      %p118 = scmp.lt.s32.totalorder %s13, 1
      %s119 = scalar_select %p118, %s13, 1
      %s120 = smul.addr %s119, 8
      %s121 = smul.addr %s120, 2
      %s122 = scalar_lea.vmem %s0, %s121
      %p123 = pneg %p34
      %p124 = pneg %p31
      %p125 = pneg %p55
      %p126 = pneg %p52
      %p127 = pneg %p81
      %p128 = pneg %p78
      %p129 = scmp.lt.s32.totalorder %s13, 1
      %s130 = scalar_select %p129, %s13, 1
      %s131 = smul.addr %s130, 2
      %s132 = smul.addr %s131, 2
      %s133 = scalar_lea.vmem %s2, %s132
      %p134 = scmp.lt.s32.totalorder %s13, 1
      %s135 = scalar_select %p134, %s13, 1
      %s136 = smul.addr %s135, 8
      %s137 = smul.addr %s136, 2
      %s138 = scalar_lea.vmem %s0, %s137
      %p139 = scmp.lt.s32.totalorder %s13, 1
      %s140 = scalar_select %p139, %s13, 1
      %s141 = smul.addr %s140, 2
      %s142 = smul.addr %s141, 2
      %s143 = scalar_lea.vmem %s2, %s142
      %p144 = scmp.eq.s32.totalorder %s13, 0
      // Predicated region
      $region29: #{video_autoencoder_lstm.13} parent=27 // pred_check
        %p145 = pneg %p144
      $region30: #{video_autoencoder_lstm.13} parent=27 // pred_check_branch
        %147 = sbr.rel (%p145) target = $region32
      $region31: #{video_autoencoder_lstm.13} parent=27 // pred_region
        %148 = vst [vmem:[#allocation2] sm:$0xf] 0.0
        %149 = vst [vmem:[#allocation3] sm:$0xf] 0.0
      $region32: #{video_autoencoder_lstm.13} parent=27 // pred_fallthru
        _
      %v150 = vld [vmem:[%s138] sm:$0xff]
      %v151 = vld [vmem:[%s138 + $0x8] sm:$0xff]
      %v152 = vld [vmem:[#allocation2] sm:$0xf]
      %154 = vst [vmem:[#allocation1] ss:$4 sm:$0xff] %v152
      %v155 = vld.sshfl [vmem:[#allocation1] sm:$0xff pattern:$0x73625140]
      %v156 = vld.sshfl [vmem:[#allocation1 + $0x8] sm:$0xff pattern:$0x73625140]
      %v159 = vpack.c.bf16 %v155, %v155
      %v160 = vpack.c.bf16 %v156, %v156
      %v161 = vld [vmem:[%s1] sm:$0xff]
      %v162 = vld [vmem:[%s1 + $0x8] sm:$0xff]
      %v163 = vld [vmem:[%s1 + $0x10] sm:$0xff]
      %v164 = vld [vmem:[%s1 + $0x18] sm:$0xff]
      %v165 = vld [vmem:[%s1 + $0x20] sm:$0xff]
      %v166 = vld [vmem:[%s1 + $0x28] sm:$0xff]
      %v167 = vld [vmem:[%s1 + $0x30] sm:$0xff]
      %v168 = vld [vmem:[%s1 + $0x38] sm:$0xff]
      %v169 = vld [vmem:[%s1 + $0x40] sm:$0xff]
      %v170 = vld [vmem:[%s1 + $0x48] sm:$0xff]
      %v171 = vld [vmem:[%s1 + $0x50] sm:$0xff]
      %v172 = vld [vmem:[%s1 + $0x58] sm:$0xff]
      %v173 = vld [vmem:[%s1 + $0x60] sm:$0xff]
      %v174 = vld [vmem:[%s1 + $0x68] sm:$0xff]
      %v175 = vld [vmem:[%s1 + $0x70] sm:$0xff]
      %v176 = vld [vmem:[%s1 + $0x78] sm:$0xff]
      %v177 = vld [vmem:[%s1 + $0x80] sm:$0xff]
      %v178 = vld [vmem:[%s1 + $0x88] sm:$0xff]
      %v179 = vld [vmem:[%s1 + $0x90] sm:$0xff]
      %v180 = vld [vmem:[%s1 + $0x98] sm:$0xff]
      %v181 = vld [vmem:[%s1 + $0xa0] sm:$0xff]
      %v182 = vld [vmem:[%s1 + $0xa8] sm:$0xff]
      %v183 = vld [vmem:[%s1 + $0xb0] sm:$0xff]
      %v184 = vld [vmem:[%s1 + $0xb8] sm:$0xff]
      %v185 = vld [vmem:[%s1 + $0xc0] sm:$0xff]
      %v186 = vld [vmem:[%s1 + $0xc8] sm:$0xff]
      %v187 = vld [vmem:[%s1 + $0xd0] sm:$0xff]
      %v188 = vld [vmem:[%s1 + $0xd8] sm:$0xff]
      %v189 = vld [vmem:[%s1 + $0xe0] sm:$0xff]
      %v190 = vld [vmem:[%s1 + $0xe8] sm:$0xff]
      %v191 = vld [vmem:[%s1 + $0xf0] sm:$0xff]
      %v192 = vld [vmem:[%s1 + $0xf8] sm:$0xff]
      %v193 = vld [vmem:[%s1 + $0x100] sm:$0xff]
      %v194 = vld [vmem:[%s1 + $0x108] sm:$0xff]
      %v195 = vld [vmem:[%s1 + $0x110] sm:$0xff]
      %v196 = vld [vmem:[%s1 + $0x118] sm:$0xff]
      %v197 = vld [vmem:[%s1 + $0x120] sm:$0xff]
      %v198 = vld [vmem:[%s1 + $0x128] sm:$0xff]
      %v199 = vld [vmem:[%s1 + $0x130] sm:$0xff]
      %v200 = vld [vmem:[%s1 + $0x138] sm:$0xff]
      %v201 = vld [vmem:[%s1 + $0x140] sm:$0xff]
      %v202 = vld [vmem:[%s1 + $0x148] sm:$0xff]
      %v203 = vld [vmem:[%s1 + $0x150] sm:$0xff]
      %v204 = vld [vmem:[%s1 + $0x158] sm:$0xff]
      %v205 = vld [vmem:[%s1 + $0x160] sm:$0xff]
      %v206 = vld [vmem:[%s1 + $0x168] sm:$0xff]
      %v207 = vld [vmem:[%s1 + $0x170] sm:$0xff]
      %v208 = vld [vmem:[%s1 + $0x178] sm:$0xff]
      %v209 = vld [vmem:[%s1 + $0x180] sm:$0xff]
      %v210 = vld [vmem:[%s1 + $0x188] sm:$0xff]
      %v211 = vld [vmem:[%s1 + $0x190] sm:$0xff]
      %v212 = vld [vmem:[%s1 + $0x198] sm:$0xff]
      %v213 = vld [vmem:[%s1 + $0x1a0] sm:$0xff]
      %v214 = vld [vmem:[%s1 + $0x1a8] sm:$0xff]
      %v215 = vld [vmem:[%s1 + $0x1b0] sm:$0xff]
      %v216 = vld [vmem:[%s1 + $0x1b8] sm:$0xff]
      %v217 = vld [vmem:[%s1 + $0x1c0] sm:$0xff]
      %v218 = vld [vmem:[%s1 + $0x1c8] sm:$0xff]
      %v219 = vld [vmem:[%s1 + $0x1d0] sm:$0xff]
      %v220 = vld [vmem:[%s1 + $0x1d8] sm:$0xff]
      %v221 = vld [vmem:[%s1 + $0x1e0] sm:$0xff]
      %v222 = vld [vmem:[%s1 + $0x1e8] sm:$0xff]
      %v223 = vld [vmem:[%s1 + $0x1f0] sm:$0xff]
      %v224 = vld [vmem:[%s1 + $0x1f8] sm:$0xff]
      %v225 = vld [vmem:[%s1 + $0x200] sm:$0xff]
      %v226 = vld [vmem:[%s1 + $0x208] sm:$0xff]
      %v227 = vld [vmem:[%s1 + $0x210] sm:$0xff]
      %v228 = vld [vmem:[%s1 + $0x218] sm:$0xff]
      %v229 = vld [vmem:[%s1 + $0x220] sm:$0xff]
      %v230 = vld [vmem:[%s1 + $0x228] sm:$0xff]
      %v231 = vld [vmem:[%s1 + $0x230] sm:$0xff]
      %v232 = vld [vmem:[%s1 + $0x238] sm:$0xff]
      %v233 = vld [vmem:[%s1 + $0x240] sm:$0xff]
      %v234 = vld [vmem:[%s1 + $0x248] sm:$0xff]
      %v235 = vld [vmem:[%s1 + $0x250] sm:$0xff]
      %v236 = vld [vmem:[%s1 + $0x258] sm:$0xff]
      %v237 = vld [vmem:[%s1 + $0x260] sm:$0xff]
      %v238 = vld [vmem:[%s1 + $0x268] sm:$0xff]
      %v239 = vld [vmem:[%s1 + $0x270] sm:$0xff]
      %v240 = vld [vmem:[%s1 + $0x278] sm:$0xff]
      %v241 = vld [vmem:[%s1 + $0x280] sm:$0xff]
      %v242 = vld [vmem:[%s1 + $0x288] sm:$0xff]
      %v243 = vld [vmem:[%s1 + $0x290] sm:$0xff]
      %v244 = vld [vmem:[%s1 + $0x298] sm:$0xff]
      %v245 = vld [vmem:[%s1 + $0x2a0] sm:$0xff]
      %v246 = vld [vmem:[%s1 + $0x2a8] sm:$0xff]
      %v247 = vld [vmem:[%s1 + $0x2b0] sm:$0xff]
      %v248 = vld [vmem:[%s1 + $0x2b8] sm:$0xff]
      %v249 = vld [vmem:[%s1 + $0x2c0] sm:$0xff]
      %v250 = vld [vmem:[%s1 + $0x2c8] sm:$0xff]
      %v251 = vld [vmem:[%s1 + $0x2d0] sm:$0xff]
      %v252 = vld [vmem:[%s1 + $0x2d8] sm:$0xff]
      %v253 = vld [vmem:[%s1 + $0x2e0] sm:$0xff]
      %v254 = vld [vmem:[%s1 + $0x2e8] sm:$0xff]
      %v255 = vld [vmem:[%s1 + $0x2f0] sm:$0xff]
      %v256 = vld [vmem:[%s1 + $0x2f8] sm:$0xff]
      %v257 = vld [vmem:[%s1 + $0x300] sm:$0xff]
      %v258 = vld [vmem:[%s1 + $0x308] sm:$0xff]
      %v259 = vld [vmem:[%s1 + $0x310] sm:$0xff]
      %v260 = vld [vmem:[%s1 + $0x318] sm:$0xff]
      %v261 = vld [vmem:[%s1 + $0x320] sm:$0xff]
      %v262 = vld [vmem:[%s1 + $0x328] sm:$0xff]
      %v263 = vld [vmem:[%s1 + $0x330] sm:$0xff]
      %v264 = vld [vmem:[%s1 + $0x338] sm:$0xff]
      %v265 = vld [vmem:[%s1 + $0x340] sm:$0xff]
      %v266 = vld [vmem:[%s1 + $0x348] sm:$0xff]
      %v267 = vld [vmem:[%s1 + $0x350] sm:$0xff]
      %v268 = vld [vmem:[%s1 + $0x358] sm:$0xff]
      %v269 = vld [vmem:[%s1 + $0x360] sm:$0xff]
      %v270 = vld [vmem:[%s1 + $0x368] sm:$0xff]
      %v271 = vld [vmem:[%s1 + $0x370] sm:$0xff]
      %v272 = vld [vmem:[%s1 + $0x378] sm:$0xff]
      %v273 = vld [vmem:[%s1 + $0x380] sm:$0xff]
      %v274 = vld [vmem:[%s1 + $0x388] sm:$0xff]
      %v275 = vld [vmem:[%s1 + $0x390] sm:$0xff]
      %v276 = vld [vmem:[%s1 + $0x398] sm:$0xff]
      %v277 = vld [vmem:[%s1 + $0x3a0] sm:$0xff]
      %v278 = vld [vmem:[%s1 + $0x3a8] sm:$0xff]
      %v279 = vld [vmem:[%s1 + $0x3b0] sm:$0xff]
      %v280 = vld [vmem:[%s1 + $0x3b8] sm:$0xff]
      %v281 = vld [vmem:[%s1 + $0x3c0] sm:$0xff]
      %v282 = vld [vmem:[%s1 + $0x3c8] sm:$0xff]
      %v283 = vld [vmem:[%s1 + $0x3d0] sm:$0xff]
      %v284 = vld [vmem:[%s1 + $0x3d8] sm:$0xff]
      %v285 = vld [vmem:[%s1 + $0x3e0] sm:$0xff]
      %v286 = vld [vmem:[%s1 + $0x3e8] sm:$0xff]
      %v287 = vld [vmem:[%s1 + $0x3f0] sm:$0xff]
      %v288 = vld [vmem:[%s1 + $0x3f8] sm:$0xff]
      %v417 = vunpack.c.l.b16 %v161
      %v418 = vunpack.c.h.b16 %v161
      %v419 = vunpack.c.l.b16 %v162
      %v420 = vunpack.c.h.b16 %v162
      %v421 = vunpack.c.l.b16 %v163
      %v422 = vunpack.c.h.b16 %v163
      %v423 = vunpack.c.l.b16 %v164
      %v424 = vunpack.c.h.b16 %v164
      %v425 = vunpack.c.l.b16 %v165
      %v426 = vunpack.c.h.b16 %v165
      %v427 = vunpack.c.l.b16 %v166
      %v428 = vunpack.c.h.b16 %v166
      %v429 = vunpack.c.l.b16 %v167
      %v430 = vunpack.c.h.b16 %v167
      %v431 = vunpack.c.l.b16 %v168
      %v432 = vunpack.c.h.b16 %v168
      %v433 = vunpack.c.l.b16 %v169
      %v434 = vunpack.c.h.b16 %v169
      %v435 = vunpack.c.l.b16 %v170
      %v436 = vunpack.c.h.b16 %v170
      %v437 = vunpack.c.l.b16 %v171
      %v438 = vunpack.c.h.b16 %v171
      %v439 = vunpack.c.l.b16 %v172
      %v440 = vunpack.c.h.b16 %v172
      %v441 = vunpack.c.l.b16 %v173
      %v442 = vunpack.c.h.b16 %v173
      %v443 = vunpack.c.l.b16 %v174
      %v444 = vunpack.c.h.b16 %v174
      %v445 = vunpack.c.l.b16 %v175
      %v446 = vunpack.c.h.b16 %v175
      %v447 = vunpack.c.l.b16 %v176
      %v448 = vunpack.c.h.b16 %v176
      %v449 = vunpack.c.l.b16 %v177
      %v450 = vunpack.c.h.b16 %v177
      %v451 = vunpack.c.l.b16 %v178
      %v452 = vunpack.c.h.b16 %v178
      %v453 = vunpack.c.l.b16 %v179
      %v454 = vunpack.c.h.b16 %v179
      %v455 = vunpack.c.l.b16 %v180
      %v456 = vunpack.c.h.b16 %v180
      %v457 = vunpack.c.l.b16 %v181
      %v458 = vunpack.c.h.b16 %v181
      %v459 = vunpack.c.l.b16 %v182
      %v460 = vunpack.c.h.b16 %v182
      %v461 = vunpack.c.l.b16 %v183
      %v462 = vunpack.c.h.b16 %v183
      %v463 = vunpack.c.l.b16 %v184
      %v464 = vunpack.c.h.b16 %v184
      %v465 = vunpack.c.l.b16 %v185
      %v466 = vunpack.c.h.b16 %v185
      %v467 = vunpack.c.l.b16 %v186
      %v468 = vunpack.c.h.b16 %v186
      %v469 = vunpack.c.l.b16 %v187
      %v470 = vunpack.c.h.b16 %v187
      %v471 = vunpack.c.l.b16 %v188
      %v472 = vunpack.c.h.b16 %v188
      %v473 = vunpack.c.l.b16 %v189
      %v474 = vunpack.c.h.b16 %v189
      %v475 = vunpack.c.l.b16 %v190
      %v476 = vunpack.c.h.b16 %v190
      %v477 = vunpack.c.l.b16 %v191
      %v478 = vunpack.c.h.b16 %v191
      %v479 = vunpack.c.l.b16 %v192
      %v480 = vunpack.c.h.b16 %v192
      %v481 = vunpack.c.l.b16 %v193
      %v482 = vunpack.c.h.b16 %v193
      %v483 = vunpack.c.l.b16 %v194
      %v484 = vunpack.c.h.b16 %v194
      %v485 = vunpack.c.l.b16 %v195
      %v486 = vunpack.c.h.b16 %v195
      %v487 = vunpack.c.l.b16 %v196
      %v488 = vunpack.c.h.b16 %v196
      %v489 = vunpack.c.l.b16 %v197
      %v490 = vunpack.c.h.b16 %v197
      %v491 = vunpack.c.l.b16 %v198
      %v492 = vunpack.c.h.b16 %v198
      %v493 = vunpack.c.l.b16 %v199
      %v494 = vunpack.c.h.b16 %v199
      %v495 = vunpack.c.l.b16 %v200
      %v496 = vunpack.c.h.b16 %v200
      %v497 = vunpack.c.l.b16 %v201
      %v498 = vunpack.c.h.b16 %v201
      %v499 = vunpack.c.l.b16 %v202
      %v500 = vunpack.c.h.b16 %v202
      %v501 = vunpack.c.l.b16 %v203
      %v502 = vunpack.c.h.b16 %v203
      %v503 = vunpack.c.l.b16 %v204
      %v504 = vunpack.c.h.b16 %v204
      %v505 = vunpack.c.l.b16 %v205
      %v506 = vunpack.c.h.b16 %v205
      %v507 = vunpack.c.l.b16 %v206
      %v508 = vunpack.c.h.b16 %v206
      %v509 = vunpack.c.l.b16 %v207
      %v510 = vunpack.c.h.b16 %v207
      %v511 = vunpack.c.l.b16 %v208
      %v512 = vunpack.c.h.b16 %v208
      %v513 = vunpack.c.l.b16 %v209
      %v514 = vunpack.c.h.b16 %v209
      %v515 = vunpack.c.l.b16 %v210
      %v516 = vunpack.c.h.b16 %v210
      %v517 = vunpack.c.l.b16 %v211
      %v518 = vunpack.c.h.b16 %v211
      %v519 = vunpack.c.l.b16 %v212
      %v520 = vunpack.c.h.b16 %v212
      %v521 = vunpack.c.l.b16 %v213
      %v522 = vunpack.c.h.b16 %v213
      %v523 = vunpack.c.l.b16 %v214
      %v524 = vunpack.c.h.b16 %v214
      %v525 = vunpack.c.l.b16 %v215
      %v526 = vunpack.c.h.b16 %v215
      %v527 = vunpack.c.l.b16 %v216
      %v528 = vunpack.c.h.b16 %v216
      %v529 = vunpack.c.l.b16 %v217
      %v530 = vunpack.c.h.b16 %v217
      %v531 = vunpack.c.l.b16 %v218
      %v532 = vunpack.c.h.b16 %v218
      %v533 = vunpack.c.l.b16 %v219
      %v534 = vunpack.c.h.b16 %v219
      %v535 = vunpack.c.l.b16 %v220
      %v536 = vunpack.c.h.b16 %v220
      %v537 = vunpack.c.l.b16 %v221
      %v538 = vunpack.c.h.b16 %v221
      %v539 = vunpack.c.l.b16 %v222
      %v540 = vunpack.c.h.b16 %v222
      %v541 = vunpack.c.l.b16 %v223
      %v542 = vunpack.c.h.b16 %v223
      %v543 = vunpack.c.l.b16 %v224
      %v544 = vunpack.c.h.b16 %v224
      %v545 = vunpack.c.l.b16 %v225
      %v546 = vunpack.c.h.b16 %v225
      %v547 = vunpack.c.l.b16 %v226
      %v548 = vunpack.c.h.b16 %v226
      %v549 = vunpack.c.l.b16 %v227
      %v550 = vunpack.c.h.b16 %v227
      %v551 = vunpack.c.l.b16 %v228
      %v552 = vunpack.c.h.b16 %v228
      %v553 = vunpack.c.l.b16 %v229
      %v554 = vunpack.c.h.b16 %v229
      %v555 = vunpack.c.l.b16 %v230
      %v556 = vunpack.c.h.b16 %v230
      %v557 = vunpack.c.l.b16 %v231
      %v558 = vunpack.c.h.b16 %v231
      %v559 = vunpack.c.l.b16 %v232
      %v560 = vunpack.c.h.b16 %v232
      %v561 = vunpack.c.l.b16 %v233
      %v562 = vunpack.c.h.b16 %v233
      %v563 = vunpack.c.l.b16 %v234
      %v564 = vunpack.c.h.b16 %v234
      %v565 = vunpack.c.l.b16 %v235
      %v566 = vunpack.c.h.b16 %v235
      %v567 = vunpack.c.l.b16 %v236
      %v568 = vunpack.c.h.b16 %v236
      %v569 = vunpack.c.l.b16 %v237
      %v570 = vunpack.c.h.b16 %v237
      %v571 = vunpack.c.l.b16 %v238
      %v572 = vunpack.c.h.b16 %v238
      %v573 = vunpack.c.l.b16 %v239
      %v574 = vunpack.c.h.b16 %v239
      %v575 = vunpack.c.l.b16 %v240
      %v576 = vunpack.c.h.b16 %v240
      %v577 = vunpack.c.l.b16 %v241
      %v578 = vunpack.c.h.b16 %v241
      %v579 = vunpack.c.l.b16 %v242
      %v580 = vunpack.c.h.b16 %v242
      %v581 = vunpack.c.l.b16 %v243
      %v582 = vunpack.c.h.b16 %v243
      %v583 = vunpack.c.l.b16 %v244
      %v584 = vunpack.c.h.b16 %v244
      %v585 = vunpack.c.l.b16 %v245
      %v586 = vunpack.c.h.b16 %v245
      %v587 = vunpack.c.l.b16 %v246
      %v588 = vunpack.c.h.b16 %v246
      %v589 = vunpack.c.l.b16 %v247
      %v590 = vunpack.c.h.b16 %v247
      %v591 = vunpack.c.l.b16 %v248
      %v592 = vunpack.c.h.b16 %v248
      %v593 = vunpack.c.l.b16 %v249
      %v594 = vunpack.c.h.b16 %v249
      %v595 = vunpack.c.l.b16 %v250
      %v596 = vunpack.c.h.b16 %v250
      %v597 = vunpack.c.l.b16 %v251
      %v598 = vunpack.c.h.b16 %v251
      %v599 = vunpack.c.l.b16 %v252
      %v600 = vunpack.c.h.b16 %v252
      %v601 = vunpack.c.l.b16 %v253
      %v602 = vunpack.c.h.b16 %v253
      %v603 = vunpack.c.l.b16 %v254
      %v604 = vunpack.c.h.b16 %v254
      %v605 = vunpack.c.l.b16 %v255
      %v606 = vunpack.c.h.b16 %v255
      %v607 = vunpack.c.l.b16 %v256
      %v608 = vunpack.c.h.b16 %v256
      %v609 = vunpack.c.l.b16 %v257
      %v610 = vunpack.c.h.b16 %v257
      %v611 = vunpack.c.l.b16 %v258
      %v612 = vunpack.c.h.b16 %v258
      %v613 = vunpack.c.l.b16 %v259
      %v614 = vunpack.c.h.b16 %v259
      %v615 = vunpack.c.l.b16 %v260
      %v616 = vunpack.c.h.b16 %v260
      %v617 = vunpack.c.l.b16 %v261
      %v618 = vunpack.c.h.b16 %v261
      %v619 = vunpack.c.l.b16 %v262
      %v620 = vunpack.c.h.b16 %v262
      %v621 = vunpack.c.l.b16 %v263
      %v622 = vunpack.c.h.b16 %v263
      %v623 = vunpack.c.l.b16 %v264
      %v624 = vunpack.c.h.b16 %v264
      %v625 = vunpack.c.l.b16 %v265
      %v626 = vunpack.c.h.b16 %v265
      %v627 = vunpack.c.l.b16 %v266
      %v628 = vunpack.c.h.b16 %v266
      %v629 = vunpack.c.l.b16 %v267
      %v630 = vunpack.c.h.b16 %v267
      %v631 = vunpack.c.l.b16 %v268
      %v632 = vunpack.c.h.b16 %v268
      %v633 = vunpack.c.l.b16 %v269
      %v634 = vunpack.c.h.b16 %v269
      %v635 = vunpack.c.l.b16 %v270
      %v636 = vunpack.c.h.b16 %v270
      %v637 = vunpack.c.l.b16 %v271
      %v638 = vunpack.c.h.b16 %v271
      %v639 = vunpack.c.l.b16 %v272
      %v640 = vunpack.c.h.b16 %v272
      %v641 = vunpack.c.l.b16 %v273
      %v642 = vunpack.c.h.b16 %v273
      %v643 = vunpack.c.l.b16 %v274
      %v644 = vunpack.c.h.b16 %v274
      %v645 = vunpack.c.l.b16 %v275
      %v646 = vunpack.c.h.b16 %v275
      %v647 = vunpack.c.l.b16 %v276
      %v648 = vunpack.c.h.b16 %v276
      %v649 = vunpack.c.l.b16 %v277
      %v650 = vunpack.c.h.b16 %v277
      %v651 = vunpack.c.l.b16 %v278
      %v652 = vunpack.c.h.b16 %v278
      %v653 = vunpack.c.l.b16 %v279
      %v654 = vunpack.c.h.b16 %v279
      %v655 = vunpack.c.l.b16 %v280
      %v656 = vunpack.c.h.b16 %v280
      %v657 = vunpack.c.l.b16 %v281
      %v658 = vunpack.c.h.b16 %v281
      %v659 = vunpack.c.l.b16 %v282
      %v660 = vunpack.c.h.b16 %v282
      %v661 = vunpack.c.l.b16 %v283
      %v662 = vunpack.c.h.b16 %v283
      %v663 = vunpack.c.l.b16 %v284
      %v664 = vunpack.c.h.b16 %v284
      %v665 = vunpack.c.l.b16 %v285
      %v666 = vunpack.c.h.b16 %v285
      %v667 = vunpack.c.l.b16 %v286
      %v668 = vunpack.c.h.b16 %v286
      %v669 = vunpack.c.l.b16 %v287
      %v670 = vunpack.c.h.b16 %v287
      %v671 = vunpack.c.l.b16 %v288
      %v672 = vunpack.c.h.b16 %v288
      %v673 = vpack.c.b16 %v425, %v417
      %v674 = vpack.c.b16 %v426, %v418
      %v675 = vpack.c.b16 %v427, %v419
      %v676 = vpack.c.b16 %v428, %v420
      %v677 = vpack.c.b16 %v429, %v421
      %v678 = vpack.c.b16 %v430, %v422
      %v679 = vpack.c.b16 %v431, %v423
      %v680 = vpack.c.b16 %v432, %v424
      %v681 = vpack.c.b16 %v441, %v433
      %v682 = vpack.c.b16 %v442, %v434
      %v683 = vpack.c.b16 %v443, %v435
      %v684 = vpack.c.b16 %v444, %v436
      %v685 = vpack.c.b16 %v445, %v437
      %v686 = vpack.c.b16 %v446, %v438
      %v687 = vpack.c.b16 %v447, %v439
      %v688 = vpack.c.b16 %v448, %v440
      %v689 = vpack.c.b16 %v457, %v449
      %v690 = vpack.c.b16 %v458, %v450
      %v691 = vpack.c.b16 %v459, %v451
      %v692 = vpack.c.b16 %v460, %v452
      %v693 = vpack.c.b16 %v461, %v453
      %v694 = vpack.c.b16 %v462, %v454
      %v695 = vpack.c.b16 %v463, %v455
      %v696 = vpack.c.b16 %v464, %v456
      %v697 = vpack.c.b16 %v473, %v465
      %v698 = vpack.c.b16 %v474, %v466
      %v699 = vpack.c.b16 %v475, %v467
      %v700 = vpack.c.b16 %v476, %v468
      %v701 = vpack.c.b16 %v477, %v469
      %v702 = vpack.c.b16 %v478, %v470
      %v703 = vpack.c.b16 %v479, %v471
      %v704 = vpack.c.b16 %v480, %v472
      %v705 = vpack.c.b16 %v489, %v481
      %v706 = vpack.c.b16 %v490, %v482
      %v707 = vpack.c.b16 %v491, %v483
      %v708 = vpack.c.b16 %v492, %v484
      %v709 = vpack.c.b16 %v493, %v485
      %v710 = vpack.c.b16 %v494, %v486
      %v711 = vpack.c.b16 %v495, %v487
      %v712 = vpack.c.b16 %v496, %v488
      %v713 = vpack.c.b16 %v505, %v497
      %v714 = vpack.c.b16 %v506, %v498
      %v715 = vpack.c.b16 %v507, %v499
      %v716 = vpack.c.b16 %v508, %v500
      %v717 = vpack.c.b16 %v509, %v501
      %v718 = vpack.c.b16 %v510, %v502
      %v719 = vpack.c.b16 %v511, %v503
      %v720 = vpack.c.b16 %v512, %v504
      %v721 = vpack.c.b16 %v521, %v513
      %v722 = vpack.c.b16 %v522, %v514
      %v723 = vpack.c.b16 %v523, %v515
      %v724 = vpack.c.b16 %v524, %v516
      %v725 = vpack.c.b16 %v525, %v517
      %v726 = vpack.c.b16 %v526, %v518
      %v727 = vpack.c.b16 %v527, %v519
      %v728 = vpack.c.b16 %v528, %v520
      %v729 = vpack.c.b16 %v537, %v529
      %v730 = vpack.c.b16 %v538, %v530
      %v731 = vpack.c.b16 %v539, %v531
      %v732 = vpack.c.b16 %v540, %v532
      %v733 = vpack.c.b16 %v541, %v533
      %v734 = vpack.c.b16 %v542, %v534
      %v735 = vpack.c.b16 %v543, %v535
      %v736 = vpack.c.b16 %v544, %v536
      %v737 = vpack.c.b16 %v553, %v545
      %v738 = vpack.c.b16 %v554, %v546
      %v739 = vpack.c.b16 %v555, %v547
      %v740 = vpack.c.b16 %v556, %v548
      %v741 = vpack.c.b16 %v557, %v549
      %v742 = vpack.c.b16 %v558, %v550
      %v743 = vpack.c.b16 %v559, %v551
      %v744 = vpack.c.b16 %v560, %v552
      %v745 = vpack.c.b16 %v569, %v561
      %v746 = vpack.c.b16 %v570, %v562
      %v747 = vpack.c.b16 %v571, %v563
      %v748 = vpack.c.b16 %v572, %v564
      %v749 = vpack.c.b16 %v573, %v565
      %v750 = vpack.c.b16 %v574, %v566
      %v751 = vpack.c.b16 %v575, %v567
      %v752 = vpack.c.b16 %v576, %v568
      %v753 = vpack.c.b16 %v585, %v577
      %v754 = vpack.c.b16 %v586, %v578
      %v755 = vpack.c.b16 %v587, %v579
      %v756 = vpack.c.b16 %v588, %v580
      %v757 = vpack.c.b16 %v589, %v581
      %v758 = vpack.c.b16 %v590, %v582
      %v759 = vpack.c.b16 %v591, %v583
      %v760 = vpack.c.b16 %v592, %v584
      %v761 = vpack.c.b16 %v601, %v593
      %v762 = vpack.c.b16 %v602, %v594
      %v763 = vpack.c.b16 %v603, %v595
      %v764 = vpack.c.b16 %v604, %v596
      %v765 = vpack.c.b16 %v605, %v597
      %v766 = vpack.c.b16 %v606, %v598
      %v767 = vpack.c.b16 %v607, %v599
      %v768 = vpack.c.b16 %v608, %v600
      %v769 = vpack.c.b16 %v617, %v609
      %v770 = vpack.c.b16 %v618, %v610
      %v771 = vpack.c.b16 %v619, %v611
      %v772 = vpack.c.b16 %v620, %v612
      %v773 = vpack.c.b16 %v621, %v613
      %v774 = vpack.c.b16 %v622, %v614
      %v775 = vpack.c.b16 %v623, %v615
      %v776 = vpack.c.b16 %v624, %v616
      %v777 = vpack.c.b16 %v633, %v625
      %v778 = vpack.c.b16 %v634, %v626
      %v779 = vpack.c.b16 %v635, %v627
      %v780 = vpack.c.b16 %v636, %v628
      %v781 = vpack.c.b16 %v637, %v629
      %v782 = vpack.c.b16 %v638, %v630
      %v783 = vpack.c.b16 %v639, %v631
      %v784 = vpack.c.b16 %v640, %v632
      %v785 = vpack.c.b16 %v649, %v641
      %v786 = vpack.c.b16 %v650, %v642
      %v787 = vpack.c.b16 %v651, %v643
      %v788 = vpack.c.b16 %v652, %v644
      %v789 = vpack.c.b16 %v653, %v645
      %v790 = vpack.c.b16 %v654, %v646
      %v791 = vpack.c.b16 %v655, %v647
      %v792 = vpack.c.b16 %v656, %v648
      %v793 = vpack.c.b16 %v665, %v657
      %v794 = vpack.c.b16 %v666, %v658
      %v795 = vpack.c.b16 %v667, %v659
      %v796 = vpack.c.b16 %v668, %v660
      %v797 = vpack.c.b16 %v669, %v661
      %v798 = vpack.c.b16 %v670, %v662
      %v799 = vpack.c.b16 %v671, %v663
      %v800 = vpack.c.b16 %v672, %v664
      %929 = vmatpush.bf16.msra.mxu0 %v729
      %930 = vmatpush.bf16.msra.mxu0 %v721
      %931 = vmatpush.bf16.msra.mxu0 %v713
      %932 = vmatpush.bf16.msra.mxu0 %v705
      %933 = vmatpush.bf16.msra.mxu0 %v697
      %934 = vmatpush.bf16.msra.mxu0 %v689
      %935 = vmatpush.bf16.msra.mxu0 %v681
      %936 = vmatpush.bf16.msra.mxu0 %v673
      %937 = vmatmul.bf16.gmra.mxu0 %v159
      %v938 = vpop.f32.mrf.mxu0
      %v939 = vadd.f32 0.0, %v938
      %v940 = vpop.f32.mrf.mxu0
      %941 = vdwg.mxu0
      %942 = vmatpush.bf16.msra.mxu0 %v793
      %943 = vmatpush.bf16.msra.mxu0 %v785
      %944 = vmatpush.bf16.msra.mxu0 %v777
      %945 = vmatpush.bf16.msra.mxu0 %v769
      %946 = vmatpush.bf16.msra.mxu0 %v761
      %947 = vmatpush.bf16.msra.mxu0 %v753
      %948 = vmatpush.bf16.msra.mxu0 %v745
      %949 = vmatpush.bf16.msra.mxu0 %v737
      %950 = vmatmul.bf16.gmra.mxu0 %v160
      %v951 = vpop.f32.mrf.mxu0
      %v952 = vadd.f32 %v939, %v951
      %v953 = vpop.f32.mrf.mxu0
      %954 = vdwg.mxu0
      %955 = vmatpush.bf16.msra.mxu0 %v730
      %956 = vmatpush.bf16.msra.mxu0 %v722
      %957 = vmatpush.bf16.msra.mxu0 %v714
      %958 = vmatpush.bf16.msra.mxu0 %v706
      %959 = vmatpush.bf16.msra.mxu0 %v698
      %960 = vmatpush.bf16.msra.mxu0 %v690
      %961 = vmatpush.bf16.msra.mxu0 %v682
      %962 = vmatpush.bf16.msra.mxu0 %v674
      %963 = vmatmul.bf16.gmra.mxu0 %v159
      %v964 = vpop.f32.mrf.mxu0
      %v965 = vadd.f32 0.0, %v964
      %v966 = vpop.f32.mrf.mxu0
      %967 = vdwg.mxu0
      %968 = vmatpush.bf16.msra.mxu0 %v794
      %969 = vmatpush.bf16.msra.mxu0 %v786
      %970 = vmatpush.bf16.msra.mxu0 %v778
      %971 = vmatpush.bf16.msra.mxu0 %v770
      %972 = vmatpush.bf16.msra.mxu0 %v762
      %973 = vmatpush.bf16.msra.mxu0 %v754
      %974 = vmatpush.bf16.msra.mxu0 %v746
      %975 = vmatpush.bf16.msra.mxu0 %v738
      %976 = vmatmul.bf16.gmra.mxu0 %v160
      %v977 = vpop.f32.mrf.mxu0
      %v978 = vadd.f32 %v965, %v977
      %v979 = vpop.f32.mrf.mxu0
      %980 = vdwg.mxu0
      %981 = vmatpush.bf16.msra.mxu0 %v731
      %982 = vmatpush.bf16.msra.mxu0 %v723
      %983 = vmatpush.bf16.msra.mxu0 %v715
      %984 = vmatpush.bf16.msra.mxu0 %v707
      %985 = vmatpush.bf16.msra.mxu0 %v699
      %986 = vmatpush.bf16.msra.mxu0 %v691
      %987 = vmatpush.bf16.msra.mxu0 %v683
      %988 = vmatpush.bf16.msra.mxu0 %v675
      %989 = vmatmul.bf16.gmra.mxu0 %v159
      %v990 = vpop.f32.mrf.mxu0
      %v991 = vadd.f32 0.0, %v990
      %v992 = vpop.f32.mrf.mxu0
      %993 = vdwg.mxu0
      %994 = vmatpush.bf16.msra.mxu0 %v795
      %995 = vmatpush.bf16.msra.mxu0 %v787
      %996 = vmatpush.bf16.msra.mxu0 %v779
      %997 = vmatpush.bf16.msra.mxu0 %v771
      %998 = vmatpush.bf16.msra.mxu0 %v763
      %999 = vmatpush.bf16.msra.mxu0 %v755
      %1000 = vmatpush.bf16.msra.mxu0 %v747
      %1001 = vmatpush.bf16.msra.mxu0 %v739
      %1002 = vmatmul.bf16.gmra.mxu0 %v160
      %v1003 = vpop.f32.mrf.mxu0
      %v1004 = vadd.f32 %v991, %v1003
      %v1005 = vpop.f32.mrf.mxu0
      %1006 = vdwg.mxu0
      %1007 = vmatpush.bf16.msra.mxu0 %v732
      %1008 = vmatpush.bf16.msra.mxu0 %v724
      %1009 = vmatpush.bf16.msra.mxu0 %v716
      %1010 = vmatpush.bf16.msra.mxu0 %v708
      %1011 = vmatpush.bf16.msra.mxu0 %v700
      %1012 = vmatpush.bf16.msra.mxu0 %v692
      %1013 = vmatpush.bf16.msra.mxu0 %v684
      %1014 = vmatpush.bf16.msra.mxu0 %v676
      %1015 = vmatmul.bf16.gmra.mxu0 %v159
      %v1016 = vpop.f32.mrf.mxu0
      %v1017 = vadd.f32 0.0, %v1016
      %v1018 = vpop.f32.mrf.mxu0
      %1019 = vdwg.mxu0
      %1020 = vmatpush.bf16.msra.mxu0 %v796
      %1021 = vmatpush.bf16.msra.mxu0 %v788
      %1022 = vmatpush.bf16.msra.mxu0 %v780
      %1023 = vmatpush.bf16.msra.mxu0 %v772
      %1024 = vmatpush.bf16.msra.mxu0 %v764
      %1025 = vmatpush.bf16.msra.mxu0 %v756
      %1026 = vmatpush.bf16.msra.mxu0 %v748
      %1027 = vmatpush.bf16.msra.mxu0 %v740
      %1028 = vmatmul.bf16.gmra.mxu0 %v160
      %v1029 = vpop.f32.mrf.mxu0
      %v1030 = vadd.f32 %v1017, %v1029
      %v1031 = vpop.f32.mrf.mxu0
      %1032 = vdwg.mxu0
      %1033 = vmatpush.bf16.msra.mxu0 %v733
      %1034 = vmatpush.bf16.msra.mxu0 %v725
      %1035 = vmatpush.bf16.msra.mxu0 %v717
      %1036 = vmatpush.bf16.msra.mxu0 %v709
      %1037 = vmatpush.bf16.msra.mxu0 %v701
      %1038 = vmatpush.bf16.msra.mxu0 %v693
      %1039 = vmatpush.bf16.msra.mxu0 %v685
      %1040 = vmatpush.bf16.msra.mxu0 %v677
      %1041 = vmatmul.bf16.gmra.mxu0 %v159
      %v1042 = vpop.f32.mrf.mxu0
      %v1043 = vadd.f32 0.0, %v1042
      %v1044 = vpop.f32.mrf.mxu0
      %1045 = vdwg.mxu0
      %1046 = vmatpush.bf16.msra.mxu0 %v797
      %1047 = vmatpush.bf16.msra.mxu0 %v789
      %1048 = vmatpush.bf16.msra.mxu0 %v781
      %1049 = vmatpush.bf16.msra.mxu0 %v773
      %1050 = vmatpush.bf16.msra.mxu0 %v765
      %1051 = vmatpush.bf16.msra.mxu0 %v757
      %1052 = vmatpush.bf16.msra.mxu0 %v749
      %1053 = vmatpush.bf16.msra.mxu0 %v741
      %1054 = vmatmul.bf16.gmra.mxu0 %v160
      %v1055 = vpop.f32.mrf.mxu0
      %v1056 = vadd.f32 %v1043, %v1055
      %v1057 = vpop.f32.mrf.mxu0
      %1058 = vdwg.mxu0
      %1059 = vmatpush.bf16.msra.mxu0 %v734
      %1060 = vmatpush.bf16.msra.mxu0 %v726
      %1061 = vmatpush.bf16.msra.mxu0 %v718
      %1062 = vmatpush.bf16.msra.mxu0 %v710
      %1063 = vmatpush.bf16.msra.mxu0 %v702
      %1064 = vmatpush.bf16.msra.mxu0 %v694
      %1065 = vmatpush.bf16.msra.mxu0 %v686
      %1066 = vmatpush.bf16.msra.mxu0 %v678
      %1067 = vmatmul.bf16.gmra.mxu0 %v159
      %v1068 = vpop.f32.mrf.mxu0
      %v1069 = vadd.f32 0.0, %v1068
      %v1070 = vpop.f32.mrf.mxu0
      %1071 = vdwg.mxu0
      %1072 = vmatpush.bf16.msra.mxu0 %v798
      %1073 = vmatpush.bf16.msra.mxu0 %v790
      %1074 = vmatpush.bf16.msra.mxu0 %v782
      %1075 = vmatpush.bf16.msra.mxu0 %v774
      %1076 = vmatpush.bf16.msra.mxu0 %v766
      %1077 = vmatpush.bf16.msra.mxu0 %v758
      %1078 = vmatpush.bf16.msra.mxu0 %v750
      %1079 = vmatpush.bf16.msra.mxu0 %v742
      %1080 = vmatmul.bf16.gmra.mxu0 %v160
      %v1081 = vpop.f32.mrf.mxu0
      %v1082 = vadd.f32 %v1069, %v1081
      %v1083 = vpop.f32.mrf.mxu0
      %1084 = vdwg.mxu0
      %1085 = vmatpush.bf16.msra.mxu0 %v735
      %1086 = vmatpush.bf16.msra.mxu0 %v727
      %1087 = vmatpush.bf16.msra.mxu0 %v719
      %1088 = vmatpush.bf16.msra.mxu0 %v711
      %1089 = vmatpush.bf16.msra.mxu0 %v703
      %1090 = vmatpush.bf16.msra.mxu0 %v695
      %1091 = vmatpush.bf16.msra.mxu0 %v687
      %1092 = vmatpush.bf16.msra.mxu0 %v679
      %1093 = vmatmul.bf16.gmra.mxu0 %v159
      %v1094 = vpop.f32.mrf.mxu0
      %v1095 = vadd.f32 0.0, %v1094
      %v1096 = vpop.f32.mrf.mxu0
      %1097 = vdwg.mxu0
      %1098 = vmatpush.bf16.msra.mxu0 %v799
      %1099 = vmatpush.bf16.msra.mxu0 %v791
      %1100 = vmatpush.bf16.msra.mxu0 %v783
      %1101 = vmatpush.bf16.msra.mxu0 %v775
      %1102 = vmatpush.bf16.msra.mxu0 %v767
      %1103 = vmatpush.bf16.msra.mxu0 %v759
      %1104 = vmatpush.bf16.msra.mxu0 %v751
      %1105 = vmatpush.bf16.msra.mxu0 %v743
      %1106 = vmatmul.bf16.gmra.mxu0 %v160
      %v1107 = vpop.f32.mrf.mxu0
      %v1108 = vadd.f32 %v1095, %v1107
      %v1109 = vpop.f32.mrf.mxu0
      %1110 = vdwg.mxu0
      %1111 = vmatpush.bf16.msra.mxu0 %v736
      %1112 = vmatpush.bf16.msra.mxu0 %v728
      %1113 = vmatpush.bf16.msra.mxu0 %v720
      %1114 = vmatpush.bf16.msra.mxu0 %v712
      %1115 = vmatpush.bf16.msra.mxu0 %v704
      %1116 = vmatpush.bf16.msra.mxu0 %v696
      %1117 = vmatpush.bf16.msra.mxu0 %v688
      %1118 = vmatpush.bf16.msra.mxu0 %v680
      %1119 = vmatmul.bf16.gmra.mxu0 %v159
      %v1120 = vpop.f32.mrf.mxu0
      %v1121 = vadd.f32 0.0, %v1120
      %v1122 = vpop.f32.mrf.mxu0
      %1123 = vdwg.mxu0
      %1124 = vmatpush.bf16.msra.mxu0 %v800
      %1125 = vmatpush.bf16.msra.mxu0 %v792
      %1126 = vmatpush.bf16.msra.mxu0 %v784
      %1127 = vmatpush.bf16.msra.mxu0 %v776
      %1128 = vmatpush.bf16.msra.mxu0 %v768
      %1129 = vmatpush.bf16.msra.mxu0 %v760
      %1130 = vmatpush.bf16.msra.mxu0 %v752
      %1131 = vmatpush.bf16.msra.mxu0 %v744
      %1132 = vmatmul.bf16.gmra.mxu0 %v160
      %v1133 = vpop.f32.mrf.mxu0
      %v1134 = vadd.f32 %v1121, %v1133
      %v1135 = vpop.f32.mrf.mxu0
      %1136 = vdwg.mxu0
      %v1145 = vrot.slane %v978, 6
      %v1146 = vrot.slane %v1004, 4
      %v1147 = vrot.slane %v1030, 2
      %v1148 = vrot.slane %v1082, 6
      %v1149 = vrot.slane %v1108, 4
      %v1150 = vrot.slane %v1134, 2
      %vm1151 = vcmask 1041408
      %v1152 = vsel %vm1151, %v952, %v1145
      %vm1153 = vcmask 1045508
      %v1154 = vsel %vm1153, %v1146, %v1147
      %vm1155 = vcmask 1043456
      %v1156 = vsel %vm1155, %v1152, %v1154
      %v1157 = vsel %vm1151, %v1056, %v1148
      %v1158 = vsel %vm1153, %v1149, %v1150
      %v1159 = vsel %vm1155, %v1157, %v1158
      %v1162 = vadd.f32 %v150, %v1156
      %v1163 = vadd.f32 %v151, %v1159
      %v1164 = vld [vmem:[#allocation3] sm:$0xf]
      %v1165 = vsub.f32 0.0, %v1162
      %v1166 = vmul.f32 %v1165, 1.442695
      %v1167 = vpow.pop %v1166
      %v1168 = vadd.f32 %v1167, 1.0
      %v1169 = vrcp.pop %v1168
      %v1170 = vmul.f32 %v1168, %v1169
      %v1171 = vsub.f32 1.0, %v1170
      %v1172 = vmul.f32 %v1169, %v1171
      %v1173 = vadd.f32 %v1169, %v1172
      %vm1174 = vweird.f32 %v1168
      %vm1175 = vweird.f32 %v1169
      %vm1176 = vmor %vm1174, %vm1175
      %v1177 = vsel %vm1176, %v1169, %v1173
      %v1178 = vand.u32 2147483647, %v1168
      %vm1179 = vcmp.eq.f32.partialorder %v1178, 8.507059e+37
      %v1180 = vand.u32 %v1168, 2147483648
      %v1181 = vor.u32 1.1754944e-38, %v1180
      %v1182 = vsel %vm1179, %v1181, %v1177
      %v1183 = vmul.f32 1.0, %v1182
      %v1185 = vrot.slane %v1162, 4
      %v1187 = vsub.f32 0.0, %v1185
      %v1188 = vmul.f32 %v1187, 1.442695
      %v1189 = vpow.pop %v1188
      %v1190 = vadd.f32 %v1189, 1.0
      %v1191 = vrcp.pop %v1190
      %v1192 = vmul.f32 %v1190, %v1191
      %v1193 = vsub.f32 1.0, %v1192
      %v1194 = vmul.f32 %v1191, %v1193
      %v1195 = vadd.f32 %v1191, %v1194
      %vm1196 = vweird.f32 %v1190
      %vm1197 = vweird.f32 %v1191
      %vm1198 = vmor %vm1196, %vm1197
      %v1199 = vsel %vm1198, %v1191, %v1195
      %v1200 = vand.u32 2147483647, %v1190
      %vm1201 = vcmp.eq.f32.partialorder %v1200, 8.507059e+37
      %v1202 = vand.u32 %v1190, 2147483648
      %v1203 = vor.u32 1.1754944e-38, %v1202
      %v1204 = vsel %vm1201, %v1203, %v1199
      %v1205 = vmul.f32 1.0, %v1204
      %v1206 = vsub.f32 0.0, %v1163
      %v1207 = vmul.f32 %v1206, 1.442695
      %v1208 = vpow.pop %v1207
      %v1209 = vadd.f32 %v1208, 1.0
      %v1210 = vrcp.pop %v1209
      %v1211 = vmul.f32 %v1209, %v1210
      %v1212 = vsub.f32 1.0, %v1211
      %v1213 = vmul.f32 %v1210, %v1212
      %v1214 = vadd.f32 %v1210, %v1213
      %vm1215 = vweird.f32 %v1209
      %vm1216 = vweird.f32 %v1210
      %vm1217 = vmor %vm1215, %vm1216
      %v1218 = vsel %vm1217, %v1210, %v1214
      %v1219 = vand.u32 2147483647, %v1209
      %vm1220 = vcmp.eq.f32.partialorder %v1219, 8.507059e+37
      %v1221 = vand.u32 %v1209, 2147483648
      %v1222 = vor.u32 1.1754944e-38, %v1221
      %v1223 = vsel %vm1220, %v1222, %v1218
      %v1224 = vmul.f32 1.0, %v1223
      %v1226 = vrot.slane %v1163, 4
      %v1228 = vtanh.pop %v1226
      %v1229 = vmul.f32 %v1205, %v1164
      %v1230 = vmul.f32 %v1183, %v1228
      %v1231 = vadd.f32 %v1229, %v1230
      %v1232 = vtanh.pop %v1231
      %v1233 = vmul.f32 %v1224, %v1232
      %1234 = vst [vmem:[#allocation2] sm:$0xf] %v1233
      %1235 = vst [vmem:[#allocation3] sm:$0xf] %v1231
      %1236 = vst [vmem:[%s143] sm:$0xf] %v1233
      %p1237 = scmp.lt.s32.totalorder %s13, 1
      %s1238 = scalar_select %p1237, %s13, 1
      %s1239 = smul.addr %s1238, 2
      %s1240 = smul.addr %s1239, 2
      %s1241 = scalar_lea.vmem %s2, %s1240
      // Predicated region
      $region33: #{video_autoencoder_lstm.13} parent=27 // pred_check
        %p1242 = pneg %p78
      $region34: #{video_autoencoder_lstm.13} parent=27 // pred_check_branch
        %1244 = sbr.rel (%p1242) target = $region36
      $region35: #{video_autoencoder_lstm.13} parent=27 // pred_region
        _
      $region36: #{video_autoencoder_lstm.13} parent=27 // pred_fallthru
        _
    $region28: #{video_autoencoder_lstm.13} parent=5 // pred_fallthru
      _
    %p1245 = scmp.le.s32.totalorder 2, %s8
    // Predicated region
    $region37: #{video_autoencoder_lstm.13} parent=5 // pred_check
      %p1246 = pneg %p1245
    $region38: #{video_autoencoder_lstm.13} parent=5 // pred_check_branch
      %1248 = sbr.rel (%p1246) target = $region40
    $region39: #{video_autoencoder_lstm.13} parent=5 // pred_region
      %s1249 = ssub.s32 %s8, 2
      // Predicated region
      $region41: #{video_autoencoder_lstm.13} parent=39 // pred_check
        %p1250 = pneg %p84
      $region42: #{video_autoencoder_lstm.13} parent=39 // pred_check_branch
        %1252 = sbr.rel (%p1250) target = $region44
      $region43: #{video_autoencoder_lstm.13} parent=39 // pred_region
        %p1253 = scmp.lt.s32.totalorder %s14, 1
        %s1254 = scalar_select %p1253, %s14, 1
        %s1255 = smul.addr %s1254, 2
        %s1256 = smul.addr %s1255, 2
        %s1257 = scalar_lea.vmem %s2, %s1256
      $region44: #{video_autoencoder_lstm.13} parent=39 // pred_fallthru
        _
    $region40: #{video_autoencoder_lstm.13} parent=5 // pred_fallthru
      _
  $region6: #{video_autoencoder_lstm.13} parent=0 // loop_footer
    %s12 = sadd.s32 1, %s8
  $region7: #{video_autoencoder_lstm.13} parent=0 // loop_footer_branch
    %7 = sbr.rel target = $region3
  $region8: #{video_autoencoder_lstm.13} parent=0 // loop_exit
    _

// kernel: video_autoencoder_lstm.14
$region0: #{video_autoencoder_lstm.14}
  #allocation0 [shape = 'u32[]', space=smem, size = 0x4, offset = 0x4, fixed_abs, tag = 'smem constant byte address 0x4 - core index']
  #allocation1 [shape = 'u32[72,128]{1,0:T(1,128)}', space=vmem, size = 0x9000, scoped, tag = 'internal scratch']
  #allocation2 [shape = 'f32[16,128]{1,0:T(8,128)}', space=vmem, size = 0x2000, scoped, tag = 'scratch operand']
  %s0 = inlined_call_operand.vmem [shape: bf16[16,640], index: 0, kind: input, shape index: {}]
  %s1 = inlined_call_operand.vmem [shape: bf16[640,128], index: 1, kind: input, shape index: {}]
  %s2 = inlined_call_operand.vmem [shape: f32[1,128], index: 2, kind: input, shape index: {}]
  %s3 = inlined_call_operand.vmem [shape: f32[16,128], index: 3, kind: output, shape index: {}]
  %s4 = sld [smem:[#allocation0]]
  $region26: #{video_autoencoder_lstm.14} parent=0
    _
  %s6 = ssub.s32 1, %s4
  %s7 = scalar_select 0, %s6, %s4
  // Predicated region
  $region2: #{video_autoencoder_lstm.14} parent=0 // pred_check
    _
  $region3: #{video_autoencoder_lstm.14} parent=0 // pred_check_branch
    %9 = sbr.rel (0) target = $region5
  $region4: #{video_autoencoder_lstm.14} parent=0 // pred_region
    _
  $region5: #{video_autoencoder_lstm.14} parent=0 // pred_fallthru
    _
  // Predicated region
  $region6: #{video_autoencoder_lstm.14} parent=0 // pred_check
    _
  $region7: #{video_autoencoder_lstm.14} parent=0 // pred_check_branch
    %11 = sbr.rel (0) target = $region9
  $region8: #{video_autoencoder_lstm.14} parent=0 // pred_region
    _
  $region9: #{video_autoencoder_lstm.14} parent=0 // pred_fallthru
    _
  // Predicated region
  $region10: #{video_autoencoder_lstm.14} parent=0 // pred_check
    _
  $region11: #{video_autoencoder_lstm.14} parent=0 // pred_check_branch
    %13 = sbr.rel (0) target = $region13
  $region12: #{video_autoencoder_lstm.14} parent=0 // pred_region
    _
  $region13: #{video_autoencoder_lstm.14} parent=0 // pred_fallthru
    _
  %p14 = scmp.eq.s32.totalorder 0, 0
  // Predicated region
  $region14: #{video_autoencoder_lstm.14} parent=0 // pred_check
    %p15 = pneg %p14
  $region15: #{video_autoencoder_lstm.14} parent=0 // pred_check_branch
    %17 = sbr.rel (%p15) target = $region17
  $region16: #{video_autoencoder_lstm.14} parent=0 // pred_region
    %18 = vst [vmem:[#allocation2] sm:$0xff] 0.0
    %19 = vst [vmem:[#allocation2 + $0x8] sm:$0xff] 0.0
  $region17: #{video_autoencoder_lstm.14} parent=0 // pred_fallthru
    _
  %v20 = vld [vmem:[#allocation2] sm:$0xff]
  %v21 = vld [vmem:[#allocation2 + $0x8] sm:$0xff]
  %v22 = vld [vmem:[%s0] sm:$0xff]
  %v23 = vld [vmem:[%s0 + $0x8] sm:$0xff]
  %v24 = vld [vmem:[%s0 + $0x10] sm:$0xf]
  %v25 = vld [vmem:[%s0 + $0x14] sm:$0xff]
  %v26 = vld [vmem:[%s0 + $0x1c] sm:$0xff]
  %v27 = vld [vmem:[%s0 + $0x24] sm:$0xf]
  %v28 = vld [vmem:[%s1] sm:$0xf]
  %v29 = vld [vmem:[%s1 + $0x4] sm:$0xf]
  %v30 = vld [vmem:[%s1 + $0x8] sm:$0xf]
  %v31 = vld [vmem:[%s1 + $0xc] sm:$0xf]
  %v32 = vld [vmem:[%s1 + $0x10] sm:$0xf]
  %v33 = vld [vmem:[%s1 + $0x14] sm:$0xf]
  %v34 = vld [vmem:[%s1 + $0x18] sm:$0xf]
  %v35 = vld [vmem:[%s1 + $0x1c] sm:$0xf]
  %v36 = vld [vmem:[%s1 + $0x20] sm:$0xf]
  %v37 = vld [vmem:[%s1 + $0x24] sm:$0xf]
  %v38 = vld [vmem:[%s1 + $0x28] sm:$0xf]
  %v39 = vld [vmem:[%s1 + $0x2c] sm:$0xf]
  %v40 = vld [vmem:[%s1 + $0x30] sm:$0xf]
  %v41 = vld [vmem:[%s1 + $0x34] sm:$0xf]
  %v42 = vld [vmem:[%s1 + $0x38] sm:$0xf]
  %v43 = vld [vmem:[%s1 + $0x3c] sm:$0xf]
  %v44 = vld [vmem:[%s1 + $0x40] sm:$0xf]
  %v45 = vld [vmem:[%s1 + $0x44] sm:$0xf]
  %v46 = vld [vmem:[%s1 + $0x48] sm:$0xf]
  %v47 = vld [vmem:[%s1 + $0x4c] sm:$0xf]
  %v48 = vld [vmem:[%s1 + $0x50] sm:$0xf]
  %v49 = vld [vmem:[%s1 + $0x54] sm:$0xf]
  %v50 = vld [vmem:[%s1 + $0x58] sm:$0xf]
  %v51 = vld [vmem:[%s1 + $0x5c] sm:$0xf]
  %v52 = vld [vmem:[%s1 + $0x60] sm:$0xf]
  %v53 = vld [vmem:[%s1 + $0x64] sm:$0xf]
  %v54 = vld [vmem:[%s1 + $0x68] sm:$0xf]
  %v55 = vld [vmem:[%s1 + $0x6c] sm:$0xf]
  %v56 = vld [vmem:[%s1 + $0x70] sm:$0xf]
  %v57 = vld [vmem:[%s1 + $0x74] sm:$0xf]
  %v58 = vld [vmem:[%s1 + $0x78] sm:$0xf]
  %v59 = vld [vmem:[%s1 + $0x7c] sm:$0xf]
  %v60 = vld [vmem:[%s1 + $0x80] sm:$0xf]
  %v61 = vld [vmem:[%s1 + $0x84] sm:$0xf]
  %v62 = vld [vmem:[%s1 + $0x88] sm:$0xf]
  %v63 = vld [vmem:[%s1 + $0x8c] sm:$0xf]
  %v64 = vld [vmem:[%s1 + $0x90] sm:$0xf]
  %v65 = vld [vmem:[%s1 + $0x94] sm:$0xf]
  %v66 = vld [vmem:[%s1 + $0x98] sm:$0xf]
  %v67 = vld [vmem:[%s1 + $0x9c] sm:$0xf]
  %v68 = vld [vmem:[%s1 + $0xa0] sm:$0xf]
  %v69 = vld [vmem:[%s1 + $0xa4] sm:$0xf]
  %v70 = vld [vmem:[%s1 + $0xa8] sm:$0xf]
  %v71 = vld [vmem:[%s1 + $0xac] sm:$0xf]
  %v72 = vld [vmem:[%s1 + $0xb0] sm:$0xf]
  %v73 = vld [vmem:[%s1 + $0xb4] sm:$0xf]
  %v74 = vld [vmem:[%s1 + $0xb8] sm:$0xf]
  %v75 = vld [vmem:[%s1 + $0xbc] sm:$0xf]
  %v76 = vld [vmem:[%s1 + $0xc0] sm:$0xf]
  %v77 = vld [vmem:[%s1 + $0xc4] sm:$0xf]
  %v78 = vld [vmem:[%s1 + $0xc8] sm:$0xf]
  %v79 = vld [vmem:[%s1 + $0xcc] sm:$0xf]
  %v80 = vld [vmem:[%s1 + $0xd0] sm:$0xf]
  %v81 = vld [vmem:[%s1 + $0xd4] sm:$0xf]
  %v82 = vld [vmem:[%s1 + $0xd8] sm:$0xf]
  %v83 = vld [vmem:[%s1 + $0xdc] sm:$0xf]
  %v84 = vld [vmem:[%s1 + $0xe0] sm:$0xf]
  %v85 = vld [vmem:[%s1 + $0xe4] sm:$0xf]
  %v86 = vld [vmem:[%s1 + $0xe8] sm:$0xf]
  %v87 = vld [vmem:[%s1 + $0xec] sm:$0xf]
  %v88 = vld [vmem:[%s1 + $0xf0] sm:$0xf]
  %v89 = vld [vmem:[%s1 + $0xf4] sm:$0xf]
  %v90 = vld [vmem:[%s1 + $0xf8] sm:$0xf]
  %v91 = vld [vmem:[%s1 + $0xfc] sm:$0xf]
  %v92 = vld [vmem:[%s1 + $0x100] sm:$0xf]
  %v93 = vld [vmem:[%s1 + $0x104] sm:$0xf]
  %v94 = vld [vmem:[%s1 + $0x108] sm:$0xf]
  %v95 = vld [vmem:[%s1 + $0x10c] sm:$0xf]
  %v96 = vld [vmem:[%s1 + $0x110] sm:$0xf]
  %v97 = vld [vmem:[%s1 + $0x114] sm:$0xf]
  %v98 = vld [vmem:[%s1 + $0x118] sm:$0xf]
  %v99 = vld [vmem:[%s1 + $0x11c] sm:$0xf]
  %v100 = vld [vmem:[%s1 + $0x120] sm:$0xf]
  %v101 = vld [vmem:[%s1 + $0x124] sm:$0xf]
  %v102 = vld [vmem:[%s1 + $0x128] sm:$0xf]
  %v103 = vld [vmem:[%s1 + $0x12c] sm:$0xf]
  %v104 = vld [vmem:[%s1 + $0x130] sm:$0xf]
  %v105 = vld [vmem:[%s1 + $0x134] sm:$0xf]
  %v106 = vld [vmem:[%s1 + $0x138] sm:$0xf]
  %v107 = vld [vmem:[%s1 + $0x13c] sm:$0xf]
  %v114 = vunpack.c.l.b16 %v22
  %v115 = vunpack.c.h.b16 %v22
  %v116 = vunpack.c.l.b16 %v23
  %v117 = vunpack.c.h.b16 %v23
  %v118 = vunpack.c.l.b16 %v24
  %v119 = vunpack.c.l.b16 %v25
  %v120 = vunpack.c.h.b16 %v25
  %v121 = vunpack.c.l.b16 %v26
  %v122 = vunpack.c.h.b16 %v26
  %v123 = vunpack.c.l.b16 %v27
  %v124 = vpack.c.b16 %v119, %v114
  %v125 = vpack.c.b16 %v120, %v115
  %v126 = vpack.c.b16 %v121, %v116
  %v127 = vpack.c.b16 %v122, %v117
  %v128 = vpack.c.b16 %v123, %v118
  %v214 = vunpack.c.l.b16 %v28
  %v215 = vunpack.c.l.b16 %v29
  %v216 = vunpack.c.l.b16 %v30
  %v217 = vunpack.c.l.b16 %v31
  %v218 = vunpack.c.l.b16 %v32
  %v219 = vunpack.c.l.b16 %v33
  %v220 = vunpack.c.l.b16 %v34
  %v221 = vunpack.c.l.b16 %v35
  %v222 = vunpack.c.l.b16 %v36
  %v223 = vunpack.c.l.b16 %v37
  %v224 = vunpack.c.l.b16 %v38
  %v225 = vunpack.c.l.b16 %v39
  %v226 = vunpack.c.l.b16 %v40
  %v227 = vunpack.c.l.b16 %v41
  %v228 = vunpack.c.l.b16 %v42
  %v229 = vunpack.c.l.b16 %v43
  %v230 = vunpack.c.l.b16 %v44
  %v231 = vunpack.c.l.b16 %v45
  %v232 = vunpack.c.l.b16 %v46
  %v233 = vunpack.c.l.b16 %v47
  %v234 = vunpack.c.l.b16 %v48
  %v235 = vunpack.c.l.b16 %v49
  %v236 = vunpack.c.l.b16 %v50
  %v237 = vunpack.c.l.b16 %v51
  %v238 = vunpack.c.l.b16 %v52
  %v239 = vunpack.c.l.b16 %v53
  %v240 = vunpack.c.l.b16 %v54
  %v241 = vunpack.c.l.b16 %v55
  %v242 = vunpack.c.l.b16 %v56
  %v243 = vunpack.c.l.b16 %v57
  %v244 = vunpack.c.l.b16 %v58
  %v245 = vunpack.c.l.b16 %v59
  %v246 = vunpack.c.l.b16 %v60
  %v247 = vunpack.c.l.b16 %v61
  %v248 = vunpack.c.l.b16 %v62
  %v249 = vunpack.c.l.b16 %v63
  %v250 = vunpack.c.l.b16 %v64
  %v251 = vunpack.c.l.b16 %v65
  %v252 = vunpack.c.l.b16 %v66
  %v253 = vunpack.c.l.b16 %v67
  %v254 = vunpack.c.l.b16 %v68
  %v255 = vunpack.c.l.b16 %v69
  %v256 = vunpack.c.l.b16 %v70
  %v257 = vunpack.c.l.b16 %v71
  %v258 = vunpack.c.l.b16 %v72
  %v259 = vunpack.c.l.b16 %v73
  %v260 = vunpack.c.l.b16 %v74
  %v261 = vunpack.c.l.b16 %v75
  %v262 = vunpack.c.l.b16 %v76
  %v263 = vunpack.c.l.b16 %v77
  %v264 = vunpack.c.l.b16 %v78
  %v265 = vunpack.c.l.b16 %v79
  %v266 = vunpack.c.l.b16 %v80
  %v267 = vunpack.c.l.b16 %v81
  %v268 = vunpack.c.l.b16 %v82
  %v269 = vunpack.c.l.b16 %v83
  %v270 = vunpack.c.l.b16 %v84
  %v271 = vunpack.c.l.b16 %v85
  %v272 = vunpack.c.l.b16 %v86
  %v273 = vunpack.c.l.b16 %v87
  %v274 = vunpack.c.l.b16 %v88
  %v275 = vunpack.c.l.b16 %v89
  %v276 = vunpack.c.l.b16 %v90
  %v277 = vunpack.c.l.b16 %v91
  %v278 = vunpack.c.l.b16 %v92
  %v279 = vunpack.c.l.b16 %v93
  %v280 = vunpack.c.l.b16 %v94
  %v281 = vunpack.c.l.b16 %v95
  %v282 = vunpack.c.l.b16 %v96
  %v283 = vunpack.c.l.b16 %v97
  %v284 = vunpack.c.l.b16 %v98
  %v285 = vunpack.c.l.b16 %v99
  %v286 = vunpack.c.l.b16 %v100
  %v287 = vunpack.c.l.b16 %v101
  %v288 = vunpack.c.l.b16 %v102
  %v289 = vunpack.c.l.b16 %v103
  %v290 = vunpack.c.l.b16 %v104
  %v291 = vunpack.c.l.b16 %v105
  %v292 = vunpack.c.l.b16 %v106
  %v293 = vunpack.c.l.b16 %v107
  %v294 = vpack.c.b16 %v215, %v214
  %v295 = vpack.c.b16 %v217, %v216
  %v296 = vpack.c.b16 %v219, %v218
  %v297 = vpack.c.b16 %v221, %v220
  %v298 = vpack.c.b16 %v223, %v222
  %v299 = vpack.c.b16 %v225, %v224
  %v300 = vpack.c.b16 %v227, %v226
  %v301 = vpack.c.b16 %v229, %v228
  %v302 = vpack.c.b16 %v231, %v230
  %v303 = vpack.c.b16 %v233, %v232
  %v304 = vpack.c.b16 %v235, %v234
  %v305 = vpack.c.b16 %v237, %v236
  %v306 = vpack.c.b16 %v239, %v238
  %v307 = vpack.c.b16 %v241, %v240
  %v308 = vpack.c.b16 %v243, %v242
  %v309 = vpack.c.b16 %v245, %v244
  %v310 = vpack.c.b16 %v247, %v246
  %v311 = vpack.c.b16 %v249, %v248
  %v312 = vpack.c.b16 %v251, %v250
  %v313 = vpack.c.b16 %v253, %v252
  %v314 = vpack.c.b16 %v255, %v254
  %v315 = vpack.c.b16 %v257, %v256
  %v316 = vpack.c.b16 %v259, %v258
  %v317 = vpack.c.b16 %v261, %v260
  %v318 = vpack.c.b16 %v263, %v262
  %v319 = vpack.c.b16 %v265, %v264
  %v320 = vpack.c.b16 %v267, %v266
  %v321 = vpack.c.b16 %v269, %v268
  %v322 = vpack.c.b16 %v271, %v270
  %v323 = vpack.c.b16 %v273, %v272
  %v324 = vpack.c.b16 %v275, %v274
  %v325 = vpack.c.b16 %v277, %v276
  %v326 = vpack.c.b16 %v279, %v278
  %v327 = vpack.c.b16 %v281, %v280
  %v328 = vpack.c.b16 %v283, %v282
  %v329 = vpack.c.b16 %v285, %v284
  %v330 = vpack.c.b16 %v287, %v286
  %v331 = vpack.c.b16 %v289, %v288
  %v332 = vpack.c.b16 %v291, %v290
  %v333 = vpack.c.b16 %v293, %v292
  %374 = vmatpush.bf16.msra.mxu0 %v301
  %375 = vmatpush.bf16.msra.mxu0 %v300
  %376 = vmatpush.bf16.msra.mxu0 %v299
  %377 = vmatpush.bf16.msra.mxu0 %v298
  %378 = vmatpush.bf16.msra.mxu0 %v297
  %379 = vmatpush.bf16.msra.mxu0 %v296
  %380 = vmatpush.bf16.msra.mxu0 %v295
  %381 = vmatpush.bf16.msra.mxu0 %v294
  %382 = vmatmul.bf16.gmra.mxu0 %v124
  %v383 = vpop.f32.mrf.mxu0
  %v384 = vadd.f32 0.0, %v383
  %v385 = vpop.f32.mrf.mxu0
  %v386 = vadd.f32 0.0, %v385
  %387 = vdwg.mxu0
  %388 = vmatpush.bf16.msra.mxu0 %v309
  %389 = vmatpush.bf16.msra.mxu0 %v308
  %390 = vmatpush.bf16.msra.mxu0 %v307
  %391 = vmatpush.bf16.msra.mxu0 %v306
  %392 = vmatpush.bf16.msra.mxu0 %v305
  %393 = vmatpush.bf16.msra.mxu0 %v304
  %394 = vmatpush.bf16.msra.mxu0 %v303
  %395 = vmatpush.bf16.msra.mxu0 %v302
  %396 = vmatmul.bf16.gmra.mxu0 %v125
  %v397 = vpop.f32.mrf.mxu0
  %v398 = vadd.f32 %v384, %v397
  %v399 = vpop.f32.mrf.mxu0
  %v400 = vadd.f32 %v386, %v399
  %401 = vdwg.mxu0
  %402 = vmatpush.bf16.msra.mxu0 %v317
  %403 = vmatpush.bf16.msra.mxu0 %v316
  %404 = vmatpush.bf16.msra.mxu0 %v315
  %405 = vmatpush.bf16.msra.mxu0 %v314
  %406 = vmatpush.bf16.msra.mxu0 %v313
  %407 = vmatpush.bf16.msra.mxu0 %v312
  %408 = vmatpush.bf16.msra.mxu0 %v311
  %409 = vmatpush.bf16.msra.mxu0 %v310
  %410 = vmatmul.bf16.gmra.mxu0 %v126
  %v411 = vpop.f32.mrf.mxu0
  %v412 = vadd.f32 %v398, %v411
  %v413 = vpop.f32.mrf.mxu0
  %v414 = vadd.f32 %v400, %v413
  %415 = vdwg.mxu0
  %416 = vmatpush.bf16.msra.mxu0 %v325
  %417 = vmatpush.bf16.msra.mxu0 %v324
  %418 = vmatpush.bf16.msra.mxu0 %v323
  %419 = vmatpush.bf16.msra.mxu0 %v322
  %420 = vmatpush.bf16.msra.mxu0 %v321
  %421 = vmatpush.bf16.msra.mxu0 %v320
  %422 = vmatpush.bf16.msra.mxu0 %v319
  %423 = vmatpush.bf16.msra.mxu0 %v318
  %424 = vmatmul.bf16.gmra.mxu0 %v127
  %v425 = vpop.f32.mrf.mxu0
  %v426 = vadd.f32 %v412, %v425
  %v427 = vpop.f32.mrf.mxu0
  %v428 = vadd.f32 %v414, %v427
  %429 = vdwg.mxu0
  %430 = vmatpush.bf16.msra.mxu0 %v333
  %431 = vmatpush.bf16.msra.mxu0 %v332
  %432 = vmatpush.bf16.msra.mxu0 %v331
  %433 = vmatpush.bf16.msra.mxu0 %v330
  %434 = vmatpush.bf16.msra.mxu0 %v329
  %435 = vmatpush.bf16.msra.mxu0 %v328
  %436 = vmatpush.bf16.msra.mxu0 %v327
  %437 = vmatpush.bf16.msra.mxu0 %v326
  %438 = vmatmul.bf16.gmra.mxu0 %v128
  %v439 = vpop.f32.mrf.mxu0
  %v440 = vadd.f32 %v426, %v439
  %v441 = vpop.f32.mrf.mxu0
  %v442 = vadd.f32 %v428, %v441
  %443 = vdwg.mxu0
  %v444 = vadd.f32 %v20, %v440
  %v445 = vadd.f32 %v21, %v442
  %446 = vst [vmem:[#allocation2] sm:$0xff] %v444
  %447 = vst [vmem:[#allocation2 + $0x8] sm:$0xff] %v445
  %v448 = vld [vmem:[#allocation2] sm:$0xff]
  %v449 = vld [vmem:[#allocation2 + $0x8] sm:$0xff]
  %v450 = vld [vmem:[%s2] sm:$0x1]
  %v452 = vperm.slane %v450, 0
  %v454 = vadd.f32 %v448, %v452
  %v455 = vadd.f32 %v449, %v452
  %456 = vst [vmem:[%s3] sm:$0xff] %v454
  %457 = vst [vmem:[%s3 + $0x8] sm:$0xff] %v455
  // Predicated region
  $region18: #{video_autoencoder_lstm.14} parent=0 // pred_check
    _
  $region19: #{video_autoencoder_lstm.14} parent=0 // pred_check_branch
    %459 = sbr.rel (0) target = $region21
  $region20: #{video_autoencoder_lstm.14} parent=0 // pred_region
    _
  $region21: #{video_autoencoder_lstm.14} parent=0 // pred_fallthru
    _
  // Predicated region
  $region22: #{video_autoencoder_lstm.14} parent=0 // pred_check
    _
  $region23: #{video_autoencoder_lstm.14} parent=0 // pred_check_branch
    %461 = sbr.rel (0) target = $region25
  $region24: #{video_autoencoder_lstm.14} parent=0 // pred_region
    _
  $region25: #{video_autoencoder_lstm.14} parent=0 // pred_fallthru
    _

// kernel: video_autoencoder_lstm.15
$region0: #{video_autoencoder_lstm.15}
  #allocation0 [shape = 'u32[]', space=smem, size = 0x4, offset = 0x4, fixed_abs, tag = 'smem constant byte address 0x4 - core index']
  #allocation1 [shape = 'u32[72,128]{1,0:T(1,128)}', space=vmem, size = 0x9000, scoped, tag = 'internal scratch']
  #allocation2 [shape = 'f32[2,128]{1,0:T(2,128)}', space=vmem, size = 0x400, scoped, tag = 'scratch operand']
  #allocation3 [shape = 'f32[2,128]{1,0:T(2,128)}', space=vmem, size = 0x400, scoped, tag = 'scratch operand']
  %s0 = inlined_call_operand.vmem [shape: f32[2,2,512], index: 0, kind: input, shape index: {}]
  %s1 = inlined_call_operand.vmem [shape: bf16[128,512], index: 1, kind: input, shape index: {}]
  %s2 = inlined_call_operand.vmem [shape: f32[2,2,128], index: 2, kind: output, shape index: {}]
  %s3 = sld [smem:[#allocation0]]
  $region45: #{video_autoencoder_lstm.15} parent=0
    _
  %s5 = ssub.s32 1, %s3
  %s6 = scalar_select 0, %s5, %s3
  loop: start=0, step=1, limit=4
  $region2: #{video_autoencoder_lstm.15} parent=0 // loop_pre_header
    _
  $region3: #{video_autoencoder_lstm.15} parent=0 // loop_header
    %s8 = sphi 0, %s12
    %p9 = scmp.ge.s32.totalorder %s8, 4
    %s18 = sphi 0, %s20
    %s21 = sphi 0, %s18
    %s22 = sphi 0, %s21
    %s38 = sphi 0, %s22
    %s42 = sphi 0, %s42
    %s44 = sphi 0, %s42
    %s45 = sphi 0, %s44
    %s59 = sphi 0, %s45
    %s65 = sphi 0, %s67
    %s68 = sphi 0, %s65
    %s69 = sphi 0, %s68
    %s85 = sphi 0, %s69
  $region4: #{video_autoencoder_lstm.15} parent=0 // loop_header_branch
    %11 = sbr.rel (%p9) target = $region8
  $region5: #{video_autoencoder_lstm.15} parent=0 // loop_body
    %s13 = ssub.s32 %s8, 1
    %s14 = ssub.s32 %s8, 2
    %s15 = sadd.s32 %s8, 1
    %s16 = ssub.s32 %s8, %s15
    %p17 = scmp.eq.s32.totalorder %s16, 0
    %s19 = sadd.s32 %s18, 1
    %s20 = scalar_select %p17, %s18, %s19
    %p23 = pneg %p17
    %p24 = scmp.eq.s32.totalorder %s8, 1
    %p25 = por %p23, %p24
    %p26 = scmp.ne.s32.totalorder %s18, %s21
    %p27 = scmp.eq.s32.totalorder %s8, 0
    %p28 = por %p26, %p27
    %p29 = scmp.ne.s32.totalorder %s18, %s21
    %p30 = scmp.eq.s32.totalorder %s13, 1
    %p31 = por %p29, %p30
    %p32 = scmp.ne.s32.totalorder %s21, %s22
    %p33 = scmp.eq.s32.totalorder %s13, 0
    %p34 = por %p32, %p33
    %p35 = scmp.ne.s32.totalorder %s21, %s22
    %p36 = scmp.eq.s32.totalorder %s14, 1
    %p37 = por %p35, %p36
    %p39 = scmp.ne.s32.totalorder %s22, %s38
    %p40 = scmp.eq.s32.totalorder %s14, 0
    %p41 = por %p39, %p40
    %s43 = sadd.s32 %s42, 1
    %p46 = scmp.eq.s32.totalorder %s8, 1
    %p47 = scmp.ne.s32.totalorder %s42, %s44
    %p48 = scmp.eq.s32.totalorder %s8, 0
    %p49 = por %p47, %p48
    %p50 = scmp.ne.s32.totalorder %s42, %s44
    %p51 = scmp.eq.s32.totalorder %s13, 1
    %p52 = por %p50, %p51
    %p53 = scmp.ne.s32.totalorder %s44, %s45
    %p54 = scmp.eq.s32.totalorder %s13, 0
    %p55 = por %p53, %p54
    %p56 = scmp.ne.s32.totalorder %s44, %s45
    %p57 = scmp.eq.s32.totalorder %s14, 1
    %p58 = por %p56, %p57
    %p60 = scmp.ne.s32.totalorder %s45, %s59
    %p61 = scmp.eq.s32.totalorder %s14, 0
    %p62 = por %p60, %p61
    %s63 = ssub.s32 %s8, %s15
    %p64 = scmp.eq.s32.totalorder %s63, 0
    %s66 = sadd.s32 %s65, 1
    %s67 = scalar_select %p64, %s65, %s66
    %p70 = pneg %p64
    %p71 = scmp.eq.s32.totalorder %s8, 1
    %p72 = por %p70, %p71
    %p73 = scmp.ne.s32.totalorder %s65, %s68
    %p74 = scmp.eq.s32.totalorder %s8, 0
    %p75 = por %p73, %p74
    %p76 = scmp.ne.s32.totalorder %s65, %s68
    %p77 = scmp.eq.s32.totalorder %s13, 1
    %p78 = por %p76, %p77
    %p79 = scmp.ne.s32.totalorder %s68, %s69
    %p80 = scmp.eq.s32.totalorder %s13, 0
    %p81 = por %p79, %p80
    %p82 = scmp.ne.s32.totalorder %s68, %s69
    %p83 = scmp.eq.s32.totalorder %s14, 1
    %p84 = por %p82, %p83
    %p86 = scmp.ne.s32.totalorder %s69, %s85
    %p87 = scmp.eq.s32.totalorder %s14, 0
    %p88 = por %p86, %p87
    %p89 = scmp.le.s32.totalorder 1, %s8
    %p90 = scmp.lt.s32.totalorder %s8, 3
    %p91 = pnand %p89, %p90
    %p92 = pneg %p91
    // Predicated region
    $region9: #{video_autoencoder_lstm.15} parent=5 // pred_check
      _
    $region10: #{video_autoencoder_lstm.15} parent=5 // pred_check_branch
      %94 = sbr.rel (%p91) target = $region12
    $region11: #{video_autoencoder_lstm.15} parent=5 // pred_region
      %s95 = ssub.s32 %s8, 1
      // Predicated region
      $region13: #{video_autoencoder_lstm.15} parent=11 // pred_check
        %p96 = pneg %p55
      $region14: #{video_autoencoder_lstm.15} parent=11 // pred_check_branch
        %98 = sbr.rel (%p96) target = $region16
      $region15: #{video_autoencoder_lstm.15} parent=11 // pred_region
        _
      $region16: #{video_autoencoder_lstm.15} parent=11 // pred_fallthru
        _
    $region12: #{video_autoencoder_lstm.15} parent=5 // pred_fallthru
      _
    %p99 = scmp.lt.s32.totalorder %s8, 2
    // Predicated region
    $region17: #{video_autoencoder_lstm.15} parent=5 // pred_check
      %p100 = pneg %p99
    $region18: #{video_autoencoder_lstm.15} parent=5 // pred_check_branch
      %102 = sbr.rel (%p100) target = $region20
    $region19: #{video_autoencoder_lstm.15} parent=5 // pred_region
      // Predicated region
      $region21: #{video_autoencoder_lstm.15} parent=19 // pred_check
        %p103 = pneg %p28
      $region22: #{video_autoencoder_lstm.15} parent=19 // pred_check_branch
        %105 = sbr.rel (%p103) target = $region24
      $region23: #{video_autoencoder_lstm.15} parent=19 // pred_region
        %p106 = scmp.lt.s32.totalorder %s8, 1
        %s107 = scalar_select %p106, %s8, 1
        %s108 = smul.addr %s107, 4
        %s109 = smul.addr %s108, 2
        %s110 = scalar_lea.vmem %s0, %s109
      $region24: #{video_autoencoder_lstm.15} parent=19 // pred_fallthru
        _
    $region20: #{video_autoencoder_lstm.15} parent=5 // pred_fallthru
      _
    %p111 = scmp.le.s32.totalorder 1, %s8
    %p112 = scmp.lt.s32.totalorder %s8, 3
    %p113 = pnand %p111, %p112
    %p114 = pneg %p113
    // Predicated region
    $region25: #{video_autoencoder_lstm.15} parent=5 // pred_check
      _
    $region26: #{video_autoencoder_lstm.15} parent=5 // pred_check_branch
      %116 = sbr.rel (%p113) target = $region28
    $region27: #{video_autoencoder_lstm.15} parent=5 // pred_region
      %s117 = ssub.s32 %s8, 1
      %p118 = scmp.lt.s32.totalorder %s13, 1
      %s119 = scalar_select %p118, %s13, 1
      %s120 = smul.addr %s119, 4
      %s121 = smul.addr %s120, 2
      %s122 = scalar_lea.vmem %s0, %s121
      %p123 = pneg %p34
      %p124 = pneg %p31
      %p125 = pneg %p55
      %p126 = pneg %p52
      %p127 = pneg %p81
      %p128 = pneg %p78
      %p129 = scmp.lt.s32.totalorder %s13, 1
      %s130 = scalar_select %p129, %s13, 1
      %s131 = smul.addr %s130, 2
      %s132 = scalar_lea.vmem %s2, %s131
      %p133 = scmp.lt.s32.totalorder %s13, 1
      %s134 = scalar_select %p133, %s13, 1
      %s135 = smul.addr %s134, 4
      %s136 = smul.addr %s135, 2
      %s137 = scalar_lea.vmem %s0, %s136
      %p138 = scmp.lt.s32.totalorder %s13, 1
      %s139 = scalar_select %p138, %s13, 1
      %s140 = smul.addr %s139, 2
      %s141 = scalar_lea.vmem %s2, %s140
      %p142 = scmp.eq.s32.totalorder %s13, 0
      // Predicated region
      $region29: #{video_autoencoder_lstm.15} parent=27 // pred_check
        %p143 = pneg %p142
      $region30: #{video_autoencoder_lstm.15} parent=27 // pred_check_branch
        %145 = sbr.rel (%p143) target = $region32
      $region31: #{video_autoencoder_lstm.15} parent=27 // pred_region
        %146 = vst [vmem:[#allocation2] sm:$0x3] 0.0
        %147 = vst [vmem:[#allocation3] sm:$0x3] 0.0
      $region32: #{video_autoencoder_lstm.15} parent=27 // pred_fallthru
        _
      %v148 = vld [vmem:[%s137] sm:$0xff]
      %v149 = vld [vmem:[#allocation2] sm:$0x3]
      %v150 = vpack.c.bf16 %v149, %v149
      %v151 = vld [vmem:[%s1] sm:$0xff]
      %v152 = vld [vmem:[%s1 + $0x8] sm:$0xff]
      %v153 = vld [vmem:[%s1 + $0x10] sm:$0xff]
      %v154 = vld [vmem:[%s1 + $0x18] sm:$0xff]
      %v155 = vld [vmem:[%s1 + $0x20] sm:$0xff]
      %v156 = vld [vmem:[%s1 + $0x28] sm:$0xff]
      %v157 = vld [vmem:[%s1 + $0x30] sm:$0xff]
      %v158 = vld [vmem:[%s1 + $0x38] sm:$0xff]
      %v159 = vld [vmem:[%s1 + $0x40] sm:$0xff]
      %v160 = vld [vmem:[%s1 + $0x48] sm:$0xff]
      %v161 = vld [vmem:[%s1 + $0x50] sm:$0xff]
      %v162 = vld [vmem:[%s1 + $0x58] sm:$0xff]
      %v163 = vld [vmem:[%s1 + $0x60] sm:$0xff]
      %v164 = vld [vmem:[%s1 + $0x68] sm:$0xff]
      %v165 = vld [vmem:[%s1 + $0x70] sm:$0xff]
      %v166 = vld [vmem:[%s1 + $0x78] sm:$0xff]
      %v167 = vld [vmem:[%s1 + $0x80] sm:$0xff]
      %v168 = vld [vmem:[%s1 + $0x88] sm:$0xff]
      %v169 = vld [vmem:[%s1 + $0x90] sm:$0xff]
      %v170 = vld [vmem:[%s1 + $0x98] sm:$0xff]
      %v171 = vld [vmem:[%s1 + $0xa0] sm:$0xff]
      %v172 = vld [vmem:[%s1 + $0xa8] sm:$0xff]
      %v173 = vld [vmem:[%s1 + $0xb0] sm:$0xff]
      %v174 = vld [vmem:[%s1 + $0xb8] sm:$0xff]
      %v175 = vld [vmem:[%s1 + $0xc0] sm:$0xff]
      %v176 = vld [vmem:[%s1 + $0xc8] sm:$0xff]
      %v177 = vld [vmem:[%s1 + $0xd0] sm:$0xff]
      %v178 = vld [vmem:[%s1 + $0xd8] sm:$0xff]
      %v179 = vld [vmem:[%s1 + $0xe0] sm:$0xff]
      %v180 = vld [vmem:[%s1 + $0xe8] sm:$0xff]
      %v181 = vld [vmem:[%s1 + $0xf0] sm:$0xff]
      %v182 = vld [vmem:[%s1 + $0xf8] sm:$0xff]
      %v215 = vunpack.c.l.b16 %v151
      %v216 = vunpack.c.h.b16 %v151
      %v217 = vunpack.c.l.b16 %v152
      %v218 = vunpack.c.h.b16 %v152
      %v219 = vunpack.c.l.b16 %v153
      %v220 = vunpack.c.h.b16 %v153
      %v221 = vunpack.c.l.b16 %v154
      %v222 = vunpack.c.h.b16 %v154
      %v223 = vunpack.c.l.b16 %v155
      %v224 = vunpack.c.h.b16 %v155
      %v225 = vunpack.c.l.b16 %v156
      %v226 = vunpack.c.h.b16 %v156
      %v227 = vunpack.c.l.b16 %v157
      %v228 = vunpack.c.h.b16 %v157
      %v229 = vunpack.c.l.b16 %v158
      %v230 = vunpack.c.h.b16 %v158
      %v231 = vunpack.c.l.b16 %v159
      %v232 = vunpack.c.h.b16 %v159
      %v233 = vunpack.c.l.b16 %v160
      %v234 = vunpack.c.h.b16 %v160
      %v235 = vunpack.c.l.b16 %v161
      %v236 = vunpack.c.h.b16 %v161
      %v237 = vunpack.c.l.b16 %v162
      %v238 = vunpack.c.h.b16 %v162
      %v239 = vunpack.c.l.b16 %v163
      %v240 = vunpack.c.h.b16 %v163
      %v241 = vunpack.c.l.b16 %v164
      %v242 = vunpack.c.h.b16 %v164
      %v243 = vunpack.c.l.b16 %v165
      %v244 = vunpack.c.h.b16 %v165
      %v245 = vunpack.c.l.b16 %v166
      %v246 = vunpack.c.h.b16 %v166
      %v247 = vunpack.c.l.b16 %v167
      %v248 = vunpack.c.h.b16 %v167
      %v249 = vunpack.c.l.b16 %v168
      %v250 = vunpack.c.h.b16 %v168
      %v251 = vunpack.c.l.b16 %v169
      %v252 = vunpack.c.h.b16 %v169
      %v253 = vunpack.c.l.b16 %v170
      %v254 = vunpack.c.h.b16 %v170
      %v255 = vunpack.c.l.b16 %v171
      %v256 = vunpack.c.h.b16 %v171
      %v257 = vunpack.c.l.b16 %v172
      %v258 = vunpack.c.h.b16 %v172
      %v259 = vunpack.c.l.b16 %v173
      %v260 = vunpack.c.h.b16 %v173
      %v261 = vunpack.c.l.b16 %v174
      %v262 = vunpack.c.h.b16 %v174
      %v263 = vunpack.c.l.b16 %v175
      %v264 = vunpack.c.h.b16 %v175
      %v265 = vunpack.c.l.b16 %v176
      %v266 = vunpack.c.h.b16 %v176
      %v267 = vunpack.c.l.b16 %v177
      %v268 = vunpack.c.h.b16 %v177
      %v269 = vunpack.c.l.b16 %v178
      %v270 = vunpack.c.h.b16 %v178
      %v271 = vunpack.c.l.b16 %v179
      %v272 = vunpack.c.h.b16 %v179
      %v273 = vunpack.c.l.b16 %v180
      %v274 = vunpack.c.h.b16 %v180
      %v275 = vunpack.c.l.b16 %v181
      %v276 = vunpack.c.h.b16 %v181
      %v277 = vunpack.c.l.b16 %v182
      %v278 = vunpack.c.h.b16 %v182
      %v279 = vpack.c.b16 %v219, %v215
      %v280 = vpack.c.b16 %v220, %v216
      %v281 = vpack.c.b16 %v221, %v217
      %v282 = vpack.c.b16 %v222, %v218
      %v283 = vpack.c.b16 %v227, %v223
      %v284 = vpack.c.b16 %v228, %v224
      %v285 = vpack.c.b16 %v229, %v225
      %v286 = vpack.c.b16 %v230, %v226
      %v287 = vpack.c.b16 %v235, %v231
      %v288 = vpack.c.b16 %v236, %v232
      %v289 = vpack.c.b16 %v237, %v233
      %v290 = vpack.c.b16 %v238, %v234
      %v291 = vpack.c.b16 %v243, %v239
      %v292 = vpack.c.b16 %v244, %v240
      %v293 = vpack.c.b16 %v245, %v241
      %v294 = vpack.c.b16 %v246, %v242
      %v295 = vpack.c.b16 %v251, %v247
      %v296 = vpack.c.b16 %v252, %v248
      %v297 = vpack.c.b16 %v253, %v249
      %v298 = vpack.c.b16 %v254, %v250
      %v299 = vpack.c.b16 %v259, %v255
      %v300 = vpack.c.b16 %v260, %v256
      %v301 = vpack.c.b16 %v261, %v257
      %v302 = vpack.c.b16 %v262, %v258
      %v303 = vpack.c.b16 %v267, %v263
      %v304 = vpack.c.b16 %v268, %v264
      %v305 = vpack.c.b16 %v269, %v265
      %v306 = vpack.c.b16 %v270, %v266
      %v307 = vpack.c.b16 %v275, %v271
      %v308 = vpack.c.b16 %v276, %v272
      %v309 = vpack.c.b16 %v277, %v273
      %v310 = vpack.c.b16 %v278, %v274
      %343 = vmatpush.bf16.msra.mxu0 %v307
      %344 = vmatpush.bf16.msra.mxu0 %v303
      %345 = vmatpush.bf16.msra.mxu0 %v299
      %346 = vmatpush.bf16.msra.mxu0 %v295
      %347 = vmatpush.bf16.msra.mxu0 %v291
      %348 = vmatpush.bf16.msra.mxu0 %v287
      %349 = vmatpush.bf16.msra.mxu0 %v283
      %350 = vmatpush.bf16.msra.mxu0 %v279
      %351 = vmatmul.bf16.gmra.mxu0 %v150
      %v352 = vpop.f32.mrf.mxu0
      %v353 = vadd.f32 0.0, %v352
      %v354 = vpop.f32.mrf.mxu0
      %355 = vdwg.mxu0
      %356 = vmatpush.bf16.msra.mxu0 %v308
      %357 = vmatpush.bf16.msra.mxu0 %v304
      %358 = vmatpush.bf16.msra.mxu0 %v300
      %359 = vmatpush.bf16.msra.mxu0 %v296
      %360 = vmatpush.bf16.msra.mxu0 %v292
      %361 = vmatpush.bf16.msra.mxu0 %v288
      %362 = vmatpush.bf16.msra.mxu0 %v284
      %363 = vmatpush.bf16.msra.mxu0 %v280
      %364 = vmatmul.bf16.gmra.mxu0 %v150
      %v365 = vpop.f32.mrf.mxu0
      %v366 = vadd.f32 0.0, %v365
      %v367 = vpop.f32.mrf.mxu0
      %368 = vdwg.mxu0
      %369 = vmatpush.bf16.msra.mxu0 %v309
      %370 = vmatpush.bf16.msra.mxu0 %v305
      %371 = vmatpush.bf16.msra.mxu0 %v301
      %372 = vmatpush.bf16.msra.mxu0 %v297
      %373 = vmatpush.bf16.msra.mxu0 %v293
      %374 = vmatpush.bf16.msra.mxu0 %v289
      %375 = vmatpush.bf16.msra.mxu0 %v285
      %376 = vmatpush.bf16.msra.mxu0 %v281
      %377 = vmatmul.bf16.gmra.mxu0 %v150
      %v378 = vpop.f32.mrf.mxu0
      %v379 = vadd.f32 0.0, %v378
      %v380 = vpop.f32.mrf.mxu0
      %381 = vdwg.mxu0
      %382 = vmatpush.bf16.msra.mxu0 %v310
      %383 = vmatpush.bf16.msra.mxu0 %v306
      %384 = vmatpush.bf16.msra.mxu0 %v302
      %385 = vmatpush.bf16.msra.mxu0 %v298
      %386 = vmatpush.bf16.msra.mxu0 %v294
      %387 = vmatpush.bf16.msra.mxu0 %v290
      %388 = vmatpush.bf16.msra.mxu0 %v286
      %389 = vmatpush.bf16.msra.mxu0 %v282
      %390 = vmatmul.bf16.gmra.mxu0 %v150
      %v391 = vpop.f32.mrf.mxu0
      %v392 = vadd.f32 0.0, %v391
      %v393 = vpop.f32.mrf.mxu0
      %394 = vdwg.mxu0
      %v399 = vrot.slane %v366, 6
      %v400 = vrot.slane %v379, 4
      %v401 = vrot.slane %v392, 2
      %vm402 = vcmask 1041408
      %v403 = vsel %vm402, %v353, %v399
      %vm404 = vcmask 1045508
      %v405 = vsel %vm404, %v400, %v401
      %vm406 = vcmask 1043456
      %v407 = vsel %vm406, %v403, %v405
      %v409 = vadd.f32 %v148, %v407
      %v410 = vld [vmem:[#allocation3] sm:$0x3]
      %v411 = vsub.f32 0.0, %v409
      %v412 = vmul.f32 %v411, 1.442695
      %v413 = vpow.pop %v412
      %v414 = vadd.f32 %v413, 1.0
      %v415 = vrcp.pop %v414
      %v416 = vmul.f32 %v414, %v415
      %v417 = vsub.f32 1.0, %v416
      %v418 = vmul.f32 %v415, %v417
      %v419 = vadd.f32 %v415, %v418
      %vm420 = vweird.f32 %v414
      %vm421 = vweird.f32 %v415
      %vm422 = vmor %vm420, %vm421
      %v423 = vsel %vm422, %v415, %v419
      %v424 = vand.u32 2147483647, %v414
      %vm425 = vcmp.eq.f32.partialorder %v424, 8.507059e+37
      %v426 = vand.u32 %v414, 2147483648
      %v427 = vor.u32 1.1754944e-38, %v426
      %v428 = vsel %vm425, %v427, %v423
      %v429 = vmul.f32 1.0, %v428
      %v431 = vrot.slane %v409, 2
      %v433 = vsub.f32 0.0, %v431
      %v434 = vmul.f32 %v433, 1.442695
      %v435 = vpow.pop %v434
      %v436 = vadd.f32 %v435, 1.0
      %v437 = vrcp.pop %v436
      %v438 = vmul.f32 %v436, %v437
      %v439 = vsub.f32 1.0, %v438
      %v440 = vmul.f32 %v437, %v439
      %v441 = vadd.f32 %v437, %v440
      %vm442 = vweird.f32 %v436
      %vm443 = vweird.f32 %v437
      %vm444 = vmor %vm442, %vm443
      %v445 = vsel %vm444, %v437, %v441
      %v446 = vand.u32 2147483647, %v436
      %vm447 = vcmp.eq.f32.partialorder %v446, 8.507059e+37
      %v448 = vand.u32 %v436, 2147483648
      %v449 = vor.u32 1.1754944e-38, %v448
      %v450 = vsel %vm447, %v449, %v445
      %v451 = vmul.f32 1.0, %v450
      %v452 = vrot.slane %v409, 4
      %v454 = vsub.f32 0.0, %v452
      %v455 = vmul.f32 %v454, 1.442695
      %v456 = vpow.pop %v455
      %v457 = vadd.f32 %v456, 1.0
      %v458 = vrcp.pop %v457
      %v459 = vmul.f32 %v457, %v458
      %v460 = vsub.f32 1.0, %v459
      %v461 = vmul.f32 %v458, %v460
      %v462 = vadd.f32 %v458, %v461
      %vm463 = vweird.f32 %v457
      %vm464 = vweird.f32 %v458
      %vm465 = vmor %vm463, %vm464
      %v466 = vsel %vm465, %v458, %v462
      %v467 = vand.u32 2147483647, %v457
      %vm468 = vcmp.eq.f32.partialorder %v467, 8.507059e+37
      %v469 = vand.u32 %v457, 2147483648
      %v470 = vor.u32 1.1754944e-38, %v469
      %v471 = vsel %vm468, %v470, %v466
      %v472 = vmul.f32 1.0, %v471
      %v473 = vrot.slane %v409, 6
      %v475 = vtanh.pop %v473
      %v476 = vmul.f32 %v451, %v410
      %v477 = vmul.f32 %v429, %v475
      %v478 = vadd.f32 %v476, %v477
      %v479 = vtanh.pop %v478
      %v480 = vmul.f32 %v472, %v479
      %481 = vst [vmem:[#allocation2] sm:$0x3] %v480
      %482 = vst [vmem:[#allocation3] sm:$0x3] %v478
      %483 = vst [vmem:[%s141] sm:$0x3] %v480
      %p484 = scmp.lt.s32.totalorder %s13, 1
      %s485 = scalar_select %p484, %s13, 1
      %s486 = smul.addr %s485, 2
      %s487 = scalar_lea.vmem %s2, %s486
      // Predicated region
      $region33: #{video_autoencoder_lstm.15} parent=27 // pred_check
        %p488 = pneg %p78
      $region34: #{video_autoencoder_lstm.15} parent=27 // pred_check_branch
        %490 = sbr.rel (%p488) target = $region36
      $region35: #{video_autoencoder_lstm.15} parent=27 // pred_region
        _
      $region36: #{video_autoencoder_lstm.15} parent=27 // pred_fallthru
        _
    $region28: #{video_autoencoder_lstm.15} parent=5 // pred_fallthru
      _
    %p491 = scmp.le.s32.totalorder 2, %s8
    // Predicated region
    $region37: #{video_autoencoder_lstm.15} parent=5 // pred_check
      %p492 = pneg %p491
    $region38: #{video_autoencoder_lstm.15} parent=5 // pred_check_branch
      %494 = sbr.rel (%p492) target = $region40
    $region39: #{video_autoencoder_lstm.15} parent=5 // pred_region
      %s495 = ssub.s32 %s8, 2
      // Predicated region
      $region41: #{video_autoencoder_lstm.15} parent=39 // pred_check
        %p496 = pneg %p84
      $region42: #{video_autoencoder_lstm.15} parent=39 // pred_check_branch
        %498 = sbr.rel (%p496) target = $region44
      $region43: #{video_autoencoder_lstm.15} parent=39 // pred_region
        %p499 = scmp.lt.s32.totalorder %s14, 1
        %s500 = scalar_select %p499, %s14, 1
        %s501 = smul.addr %s500, 2
        %s502 = scalar_lea.vmem %s2, %s501
      $region44: #{video_autoencoder_lstm.15} parent=39 // pred_fallthru
        _
    $region40: #{video_autoencoder_lstm.15} parent=5 // pred_fallthru
      _
  $region6: #{video_autoencoder_lstm.15} parent=0 // loop_footer
    %s12 = sadd.s32 1, %s8
  $region7: #{video_autoencoder_lstm.15} parent=0 // loop_footer_branch
    %7 = sbr.rel target = $region3
  $region8: #{video_autoencoder_lstm.15} parent=0 // loop_exit
    _

// kernel: video_autoencoder_lstm.16
$region0: #{video_autoencoder_lstm.16}
  #allocation0 [shape = 'u32[]', space=smem, size = 0x4, offset = 0x4, fixed_abs, tag = 'smem constant byte address 0x4 - core index']
  #allocation1 [shape = 'u32[72,128]{1,0:T(1,128)}', space=vmem, size = 0x9000, scoped, tag = 'internal scratch']
  #allocation2 [shape = 'f32[16,256]{1,0:T(8,128)}', space=vmem, size = 0x4000, scoped, tag = 'scratch operand']
  %s0 = inlined_call_operand.vmem [shape: bf16[16,384], index: 0, kind: input, shape index: {}]
  %s1 = inlined_call_operand.vmem [shape: bf16[384,256], index: 1, kind: input, shape index: {}]
  %s2 = inlined_call_operand.vmem [shape: f32[1,256], index: 2, kind: input, shape index: {}]
  %s3 = inlined_call_operand.vmem [shape: f32[16,256], index: 3, kind: output, shape index: {}]
  %s4 = sld [smem:[#allocation0]]
  $region26: #{video_autoencoder_lstm.16} parent=0
    _
  %s6 = ssub.s32 1, %s4
  %s7 = scalar_select 0, %s6, %s4
  // Predicated region
  $region2: #{video_autoencoder_lstm.16} parent=0 // pred_check
    _
  $region3: #{video_autoencoder_lstm.16} parent=0 // pred_check_branch
    %9 = sbr.rel (0) target = $region5
  $region4: #{video_autoencoder_lstm.16} parent=0 // pred_region
    _
  $region5: #{video_autoencoder_lstm.16} parent=0 // pred_fallthru
    _
  // Predicated region
  $region6: #{video_autoencoder_lstm.16} parent=0 // pred_check
    _
  $region7: #{video_autoencoder_lstm.16} parent=0 // pred_check_branch
    %11 = sbr.rel (0) target = $region9
  $region8: #{video_autoencoder_lstm.16} parent=0 // pred_region
    _
  $region9: #{video_autoencoder_lstm.16} parent=0 // pred_fallthru
    _
  // Predicated region
  $region10: #{video_autoencoder_lstm.16} parent=0 // pred_check
    _
  $region11: #{video_autoencoder_lstm.16} parent=0 // pred_check_branch
    %13 = sbr.rel (0) target = $region13
  $region12: #{video_autoencoder_lstm.16} parent=0 // pred_region
    _
  $region13: #{video_autoencoder_lstm.16} parent=0 // pred_fallthru
    _
  %p14 = scmp.eq.s32.totalorder 0, 0
  // Predicated region
  $region14: #{video_autoencoder_lstm.16} parent=0 // pred_check
    %p15 = pneg %p14
  $region15: #{video_autoencoder_lstm.16} parent=0 // pred_check_branch
    %17 = sbr.rel (%p15) target = $region17
  $region16: #{video_autoencoder_lstm.16} parent=0 // pred_region
    %18 = vst [vmem:[#allocation2] sm:$0xff] 0.0
    %19 = vst [vmem:[#allocation2 + $0x8] sm:$0xff] 0.0
    %20 = vst [vmem:[#allocation2 + $0x10] sm:$0xff] 0.0
    %21 = vst [vmem:[#allocation2 + $0x18] sm:$0xff] 0.0
  $region17: #{video_autoencoder_lstm.16} parent=0 // pred_fallthru
    _
  %v22 = vld [vmem:[#allocation2] sm:$0xff]
  %v23 = vld [vmem:[#allocation2 + $0x8] sm:$0xff]
  %v24 = vld [vmem:[#allocation2 + $0x10] sm:$0xff]
  %v25 = vld [vmem:[#allocation2 + $0x18] sm:$0xff]
  %v26 = vld [vmem:[%s0] sm:$0xff]
  %v27 = vld [vmem:[%s0 + $0x8] sm:$0xf]
  %v28 = vld [vmem:[%s0 + $0xc] sm:$0xff]
  %v29 = vld [vmem:[%s0 + $0x14] sm:$0xf]
  %v30 = vld [vmem:[%s1] sm:$0xff]
  %v31 = vld [vmem:[%s1 + $0x8] sm:$0xff]
  %v32 = vld [vmem:[%s1 + $0x10] sm:$0xff]
  %v33 = vld [vmem:[%s1 + $0x18] sm:$0xff]
  %v34 = vld [vmem:[%s1 + $0x20] sm:$0xff]
  %v35 = vld [vmem:[%s1 + $0x28] sm:$0xff]
  %v36 = vld [vmem:[%s1 + $0x30] sm:$0xff]
  %v37 = vld [vmem:[%s1 + $0x38] sm:$0xff]
  %v38 = vld [vmem:[%s1 + $0x40] sm:$0xff]
  %v39 = vld [vmem:[%s1 + $0x48] sm:$0xff]
  %v40 = vld [vmem:[%s1 + $0x50] sm:$0xff]
  %v41 = vld [vmem:[%s1 + $0x58] sm:$0xff]
  %v42 = vld [vmem:[%s1 + $0x60] sm:$0xff]
  %v43 = vld [vmem:[%s1 + $0x68] sm:$0xff]
  %v44 = vld [vmem:[%s1 + $0x70] sm:$0xff]
  %v45 = vld [vmem:[%s1 + $0x78] sm:$0xff]
  %v46 = vld [vmem:[%s1 + $0x80] sm:$0xff]
  %v47 = vld [vmem:[%s1 + $0x88] sm:$0xff]
  %v48 = vld [vmem:[%s1 + $0x90] sm:$0xff]
  %v49 = vld [vmem:[%s1 + $0x98] sm:$0xff]
  %v50 = vld [vmem:[%s1 + $0xa0] sm:$0xff]
  %v51 = vld [vmem:[%s1 + $0xa8] sm:$0xff]
  %v52 = vld [vmem:[%s1 + $0xb0] sm:$0xff]
  %v53 = vld [vmem:[%s1 + $0xb8] sm:$0xff]
  %v54 = vld [vmem:[%s1 + $0xc0] sm:$0xff]
  %v55 = vld [vmem:[%s1 + $0xc8] sm:$0xff]
  %v56 = vld [vmem:[%s1 + $0xd0] sm:$0xff]
  %v57 = vld [vmem:[%s1 + $0xd8] sm:$0xff]
  %v58 = vld [vmem:[%s1 + $0xe0] sm:$0xff]
  %v59 = vld [vmem:[%s1 + $0xe8] sm:$0xff]
  %v60 = vld [vmem:[%s1 + $0xf0] sm:$0xff]
  %v61 = vld [vmem:[%s1 + $0xf8] sm:$0xff]
  %v62 = vld [vmem:[%s1 + $0x100] sm:$0xff]
  %v63 = vld [vmem:[%s1 + $0x108] sm:$0xff]
  %v64 = vld [vmem:[%s1 + $0x110] sm:$0xff]
  %v65 = vld [vmem:[%s1 + $0x118] sm:$0xff]
  %v66 = vld [vmem:[%s1 + $0x120] sm:$0xff]
  %v67 = vld [vmem:[%s1 + $0x128] sm:$0xff]
  %v68 = vld [vmem:[%s1 + $0x130] sm:$0xff]
  %v69 = vld [vmem:[%s1 + $0x138] sm:$0xff]
  %v70 = vld [vmem:[%s1 + $0x140] sm:$0xff]
  %v71 = vld [vmem:[%s1 + $0x148] sm:$0xff]
  %v72 = vld [vmem:[%s1 + $0x150] sm:$0xff]
  %v73 = vld [vmem:[%s1 + $0x158] sm:$0xff]
  %v74 = vld [vmem:[%s1 + $0x160] sm:$0xff]
  %v75 = vld [vmem:[%s1 + $0x168] sm:$0xff]
  %v76 = vld [vmem:[%s1 + $0x170] sm:$0xff]
  %v77 = vld [vmem:[%s1 + $0x178] sm:$0xff]
  %v82 = vunpack.c.l.b16 %v26
  %v83 = vunpack.c.h.b16 %v26
  %v84 = vunpack.c.l.b16 %v27
  %v85 = vunpack.c.l.b16 %v28
  %v86 = vunpack.c.h.b16 %v28
  %v87 = vunpack.c.l.b16 %v29
  %v88 = vpack.c.b16 %v85, %v82
  %v89 = vpack.c.b16 %v86, %v83
  %v90 = vpack.c.b16 %v87, %v84
  %v142 = vunpack.c.l.b16 %v30
  %v143 = vunpack.c.h.b16 %v30
  %v144 = vunpack.c.l.b16 %v31
  %v145 = vunpack.c.h.b16 %v31
  %v146 = vunpack.c.l.b16 %v32
  %v147 = vunpack.c.h.b16 %v32
  %v148 = vunpack.c.l.b16 %v33
  %v149 = vunpack.c.h.b16 %v33
  %v150 = vunpack.c.l.b16 %v34
  %v151 = vunpack.c.h.b16 %v34
  %v152 = vunpack.c.l.b16 %v35
  %v153 = vunpack.c.h.b16 %v35
  %v154 = vunpack.c.l.b16 %v36
  %v155 = vunpack.c.h.b16 %v36
  %v156 = vunpack.c.l.b16 %v37
  %v157 = vunpack.c.h.b16 %v37
  %v158 = vunpack.c.l.b16 %v38
  %v159 = vunpack.c.h.b16 %v38
  %v160 = vunpack.c.l.b16 %v39
  %v161 = vunpack.c.h.b16 %v39
  %v162 = vunpack.c.l.b16 %v40
  %v163 = vunpack.c.h.b16 %v40
  %v164 = vunpack.c.l.b16 %v41
  %v165 = vunpack.c.h.b16 %v41
  %v166 = vunpack.c.l.b16 %v42
  %v167 = vunpack.c.h.b16 %v42
  %v168 = vunpack.c.l.b16 %v43
  %v169 = vunpack.c.h.b16 %v43
  %v170 = vunpack.c.l.b16 %v44
  %v171 = vunpack.c.h.b16 %v44
  %v172 = vunpack.c.l.b16 %v45
  %v173 = vunpack.c.h.b16 %v45
  %v174 = vunpack.c.l.b16 %v46
  %v175 = vunpack.c.h.b16 %v46
  %v176 = vunpack.c.l.b16 %v47
  %v177 = vunpack.c.h.b16 %v47
  %v178 = vunpack.c.l.b16 %v48
  %v179 = vunpack.c.h.b16 %v48
  %v180 = vunpack.c.l.b16 %v49
  %v181 = vunpack.c.h.b16 %v49
  %v182 = vunpack.c.l.b16 %v50
  %v183 = vunpack.c.h.b16 %v50
  %v184 = vunpack.c.l.b16 %v51
  %v185 = vunpack.c.h.b16 %v51
  %v186 = vunpack.c.l.b16 %v52
  %v187 = vunpack.c.h.b16 %v52
  %v188 = vunpack.c.l.b16 %v53
  %v189 = vunpack.c.h.b16 %v53
  %v190 = vunpack.c.l.b16 %v54
  %v191 = vunpack.c.h.b16 %v54
  %v192 = vunpack.c.l.b16 %v55
  %v193 = vunpack.c.h.b16 %v55
  %v194 = vunpack.c.l.b16 %v56
  %v195 = vunpack.c.h.b16 %v56
  %v196 = vunpack.c.l.b16 %v57
  %v197 = vunpack.c.h.b16 %v57
  %v198 = vunpack.c.l.b16 %v58
  %v199 = vunpack.c.h.b16 %v58
  %v200 = vunpack.c.l.b16 %v59
  %v201 = vunpack.c.h.b16 %v59
  %v202 = vunpack.c.l.b16 %v60
  %v203 = vunpack.c.h.b16 %v60
  %v204 = vunpack.c.l.b16 %v61
  %v205 = vunpack.c.h.b16 %v61
  %v206 = vunpack.c.l.b16 %v62
  %v207 = vunpack.c.h.b16 %v62
  %v208 = vunpack.c.l.b16 %v63
  %v209 = vunpack.c.h.b16 %v63
  %v210 = vunpack.c.l.b16 %v64
  %v211 = vunpack.c.h.b16 %v64
  %v212 = vunpack.c.l.b16 %v65
  %v213 = vunpack.c.h.b16 %v65
  %v214 = vunpack.c.l.b16 %v66
  %v215 = vunpack.c.h.b16 %v66
  %v216 = vunpack.c.l.b16 %v67
  %v217 = vunpack.c.h.b16 %v67
  %v218 = vunpack.c.l.b16 %v68
  %v219 = vunpack.c.h.b16 %v68
  %v220 = vunpack.c.l.b16 %v69
  %v221 = vunpack.c.h.b16 %v69
  %v222 = vunpack.c.l.b16 %v70
  %v223 = vunpack.c.h.b16 %v70
  %v224 = vunpack.c.l.b16 %v71
  %v225 = vunpack.c.h.b16 %v71
  %v226 = vunpack.c.l.b16 %v72
  %v227 = vunpack.c.h.b16 %v72
  %v228 = vunpack.c.l.b16 %v73
  %v229 = vunpack.c.h.b16 %v73
  %v230 = vunpack.c.l.b16 %v74
  %v231 = vunpack.c.h.b16 %v74
  %v232 = vunpack.c.l.b16 %v75
  %v233 = vunpack.c.h.b16 %v75
  %v234 = vunpack.c.l.b16 %v76
  %v235 = vunpack.c.h.b16 %v76
  %v236 = vunpack.c.l.b16 %v77
  %v237 = vunpack.c.h.b16 %v77
  %v238 = vpack.c.b16 %v144, %v142
  %v239 = vpack.c.b16 %v145, %v143
  %v240 = vpack.c.b16 %v148, %v146
  %v241 = vpack.c.b16 %v149, %v147
  %v242 = vpack.c.b16 %v152, %v150
  %v243 = vpack.c.b16 %v153, %v151
  %v244 = vpack.c.b16 %v156, %v154
  %v245 = vpack.c.b16 %v157, %v155
  %v246 = vpack.c.b16 %v160, %v158
  %v247 = vpack.c.b16 %v161, %v159
  %v248 = vpack.c.b16 %v164, %v162
  %v249 = vpack.c.b16 %v165, %v163
  %v250 = vpack.c.b16 %v168, %v166
  %v251 = vpack.c.b16 %v169, %v167
  %v252 = vpack.c.b16 %v172, %v170
  %v253 = vpack.c.b16 %v173, %v171
  %v254 = vpack.c.b16 %v176, %v174
  %v255 = vpack.c.b16 %v177, %v175
  %v256 = vpack.c.b16 %v180, %v178
  %v257 = vpack.c.b16 %v181, %v179
  %v258 = vpack.c.b16 %v184, %v182
  %v259 = vpack.c.b16 %v185, %v183
  %v260 = vpack.c.b16 %v188, %v186
  %v261 = vpack.c.b16 %v189, %v187
  %v262 = vpack.c.b16 %v192, %v190
  %v263 = vpack.c.b16 %v193, %v191
  %v264 = vpack.c.b16 %v196, %v194
  %v265 = vpack.c.b16 %v197, %v195
  %v266 = vpack.c.b16 %v200, %v198
  %v267 = vpack.c.b16 %v201, %v199
  %v268 = vpack.c.b16 %v204, %v202
  %v269 = vpack.c.b16 %v205, %v203
  %v270 = vpack.c.b16 %v208, %v206
  %v271 = vpack.c.b16 %v209, %v207
  %v272 = vpack.c.b16 %v212, %v210
  %v273 = vpack.c.b16 %v213, %v211
  %v274 = vpack.c.b16 %v216, %v214
  %v275 = vpack.c.b16 %v217, %v215
  %v276 = vpack.c.b16 %v220, %v218
  %v277 = vpack.c.b16 %v221, %v219
  %v278 = vpack.c.b16 %v224, %v222
  %v279 = vpack.c.b16 %v225, %v223
  %v280 = vpack.c.b16 %v228, %v226
  %v281 = vpack.c.b16 %v229, %v227
  %v282 = vpack.c.b16 %v232, %v230
  %v283 = vpack.c.b16 %v233, %v231
  %v284 = vpack.c.b16 %v236, %v234
  %v285 = vpack.c.b16 %v237, %v235
  %334 = vmatpush.bf16.msra.mxu0 %v252
  %335 = vmatpush.bf16.msra.mxu0 %v250
  %336 = vmatpush.bf16.msra.mxu0 %v248
  %337 = vmatpush.bf16.msra.mxu0 %v246
  %338 = vmatpush.bf16.msra.mxu0 %v244
  %339 = vmatpush.bf16.msra.mxu0 %v242
  %340 = vmatpush.bf16.msra.mxu0 %v240
  %341 = vmatpush.bf16.msra.mxu0 %v238
  %342 = vmatmul.bf16.gmra.mxu0 %v88
  %v343 = vpop.f32.mrf.mxu0
  %v344 = vadd.f32 0.0, %v343
  %v345 = vpop.f32.mrf.mxu0
  %v346 = vadd.f32 0.0, %v345
  %347 = vdwg.mxu0
  %348 = vmatpush.bf16.msra.mxu0 %v268
  %349 = vmatpush.bf16.msra.mxu0 %v266
  %350 = vmatpush.bf16.msra.mxu0 %v264
  %351 = vmatpush.bf16.msra.mxu0 %v262
  %352 = vmatpush.bf16.msra.mxu0 %v260
  %353 = vmatpush.bf16.msra.mxu0 %v258
  %354 = vmatpush.bf16.msra.mxu0 %v256
  %355 = vmatpush.bf16.msra.mxu0 %v254
  %356 = vmatmul.bf16.gmra.mxu0 %v89
  %v357 = vpop.f32.mrf.mxu0
  %v358 = vadd.f32 %v344, %v357
  %v359 = vpop.f32.mrf.mxu0
  %v360 = vadd.f32 %v346, %v359
  %361 = vdwg.mxu0
  %362 = vmatpush.bf16.msra.mxu0 %v284
  %363 = vmatpush.bf16.msra.mxu0 %v282
  %364 = vmatpush.bf16.msra.mxu0 %v280
  %365 = vmatpush.bf16.msra.mxu0 %v278
  %366 = vmatpush.bf16.msra.mxu0 %v276
  %367 = vmatpush.bf16.msra.mxu0 %v274
  %368 = vmatpush.bf16.msra.mxu0 %v272
  %369 = vmatpush.bf16.msra.mxu0 %v270
  %370 = vmatmul.bf16.gmra.mxu0 %v90
  %v371 = vpop.f32.mrf.mxu0
  %v372 = vadd.f32 %v358, %v371
  %v373 = vpop.f32.mrf.mxu0
  %v374 = vadd.f32 %v360, %v373
  %375 = vdwg.mxu0
  %376 = vmatpush.bf16.msra.mxu0 %v253
  %377 = vmatpush.bf16.msra.mxu0 %v251
  %378 = vmatpush.bf16.msra.mxu0 %v249
  %379 = vmatpush.bf16.msra.mxu0 %v247
  %380 = vmatpush.bf16.msra.mxu0 %v245
  %381 = vmatpush.bf16.msra.mxu0 %v243
  %382 = vmatpush.bf16.msra.mxu0 %v241
  %383 = vmatpush.bf16.msra.mxu0 %v239
  %384 = vmatmul.bf16.gmra.mxu0 %v88
  %v385 = vpop.f32.mrf.mxu0
  %v386 = vadd.f32 0.0, %v385
  %v387 = vpop.f32.mrf.mxu0
  %v388 = vadd.f32 0.0, %v387
  %389 = vdwg.mxu0
  %390 = vmatpush.bf16.msra.mxu0 %v269
  %391 = vmatpush.bf16.msra.mxu0 %v267
  %392 = vmatpush.bf16.msra.mxu0 %v265
  %393 = vmatpush.bf16.msra.mxu0 %v263
  %394 = vmatpush.bf16.msra.mxu0 %v261
  %395 = vmatpush.bf16.msra.mxu0 %v259
  %396 = vmatpush.bf16.msra.mxu0 %v257
  %397 = vmatpush.bf16.msra.mxu0 %v255
  %398 = vmatmul.bf16.gmra.mxu0 %v89
  %v399 = vpop.f32.mrf.mxu0
  %v400 = vadd.f32 %v386, %v399
  %v401 = vpop.f32.mrf.mxu0
  %v402 = vadd.f32 %v388, %v401
  %403 = vdwg.mxu0
  %404 = vmatpush.bf16.msra.mxu0 %v285
  %405 = vmatpush.bf16.msra.mxu0 %v283
  %406 = vmatpush.bf16.msra.mxu0 %v281
  %407 = vmatpush.bf16.msra.mxu0 %v279
  %408 = vmatpush.bf16.msra.mxu0 %v277
  %409 = vmatpush.bf16.msra.mxu0 %v275
  %410 = vmatpush.bf16.msra.mxu0 %v273
  %411 = vmatpush.bf16.msra.mxu0 %v271
  %412 = vmatmul.bf16.gmra.mxu0 %v90
  %v413 = vpop.f32.mrf.mxu0
  %v414 = vadd.f32 %v400, %v413
  %v415 = vpop.f32.mrf.mxu0
  %v416 = vadd.f32 %v402, %v415
  %417 = vdwg.mxu0
  %v418 = vadd.f32 %v22, %v372
  %v419 = vadd.f32 %v23, %v414
  %v420 = vadd.f32 %v24, %v374
  %v421 = vadd.f32 %v25, %v416
  %422 = vst [vmem:[#allocation2] sm:$0xff] %v418
  %423 = vst [vmem:[#allocation2 + $0x8] sm:$0xff] %v419
  %424 = vst [vmem:[#allocation2 + $0x10] sm:$0xff] %v420
  %425 = vst [vmem:[#allocation2 + $0x18] sm:$0xff] %v421
  %v426 = vld [vmem:[#allocation2] sm:$0xff]
  %v427 = vld [vmem:[#allocation2 + $0x8] sm:$0xff]
  %v428 = vld [vmem:[#allocation2 + $0x10] sm:$0xff]
  %v429 = vld [vmem:[#allocation2 + $0x18] sm:$0xff]
  %v430 = vld [vmem:[%s2] sm:$0x3]
  %v432 = vperm.slane %v430, 0
  %v433 = vperm.slane %v430, 1
  %v436 = vadd.f32 %v426, %v432
  %v437 = vadd.f32 %v427, %v433
  %v438 = vadd.f32 %v428, %v432
  %v439 = vadd.f32 %v429, %v433
  %440 = vst [vmem:[%s3] sm:$0xff] %v436
  %441 = vst [vmem:[%s3 + $0x8] sm:$0xff] %v437
  %442 = vst [vmem:[%s3 + $0x10] sm:$0xff] %v438
  %443 = vst [vmem:[%s3 + $0x18] sm:$0xff] %v439
  // Predicated region
  $region18: #{video_autoencoder_lstm.16} parent=0 // pred_check
    _
  $region19: #{video_autoencoder_lstm.16} parent=0 // pred_check_branch
    %445 = sbr.rel (0) target = $region21
  $region20: #{video_autoencoder_lstm.16} parent=0 // pred_region
    _
  $region21: #{video_autoencoder_lstm.16} parent=0 // pred_fallthru
    _
  // Predicated region
  $region22: #{video_autoencoder_lstm.16} parent=0 // pred_check
    _
  $region23: #{video_autoencoder_lstm.16} parent=0 // pred_check_branch
    %447 = sbr.rel (0) target = $region25
  $region24: #{video_autoencoder_lstm.16} parent=0 // pred_region
    _
  $region25: #{video_autoencoder_lstm.16} parent=0 // pred_fallthru
    _

// kernel: video_autoencoder_lstm.18
$region0: #{video_autoencoder_lstm.18}
  #allocation0 [shape = 'u32[]', space=smem, size = 0x4, offset = 0x4, fixed_abs, tag = 'smem constant byte address 0x4 - core index']
  #allocation1 [shape = 'u32[72,128]{1,0:T(1,128)}', space=vmem, size = 0x9000, scoped, tag = 'internal scratch']
  #allocation2 [shape = 'f32[16,3200]{1,0:T(8,128)}', space=vmem, size = 0x32000, scoped, tag = 'scratch operand']
  %s0 = inlined_call_operand.vmem [shape: bf16[16,128], index: 0, kind: input, shape index: {}]
  %s1 = inlined_call_operand.vmem [shape: bf16[128,3200], index: 1, kind: input, shape index: {}]
  %s2 = inlined_call_operand.vmem [shape: f32[1,3200], index: 2, kind: input, shape index: {}]
  %s3 = inlined_call_operand.vmem [shape: f32[16,3200], index: 3, kind: output, shape index: {}]
  %s4 = sld [smem:[#allocation0]]
  $region26: #{video_autoencoder_lstm.18} parent=0
    _
  %s6 = ssub.s32 1, %s4
  %s7 = scalar_select 0, %s6, %s4
  // Predicated region
  $region2: #{video_autoencoder_lstm.18} parent=0 // pred_check
    _
  $region3: #{video_autoencoder_lstm.18} parent=0 // pred_check_branch
    %9 = sbr.rel (0) target = $region5
  $region4: #{video_autoencoder_lstm.18} parent=0 // pred_region
    _
  $region5: #{video_autoencoder_lstm.18} parent=0 // pred_fallthru
    _
  // Predicated region
  $region6: #{video_autoencoder_lstm.18} parent=0 // pred_check
    _
  $region7: #{video_autoencoder_lstm.18} parent=0 // pred_check_branch
    %11 = sbr.rel (0) target = $region9
  $region8: #{video_autoencoder_lstm.18} parent=0 // pred_region
    _
  $region9: #{video_autoencoder_lstm.18} parent=0 // pred_fallthru
    _
  // Predicated region
  $region10: #{video_autoencoder_lstm.18} parent=0 // pred_check
    _
  $region11: #{video_autoencoder_lstm.18} parent=0 // pred_check_branch
    %13 = sbr.rel (0) target = $region13
  $region12: #{video_autoencoder_lstm.18} parent=0 // pred_region
    _
  $region13: #{video_autoencoder_lstm.18} parent=0 // pred_fallthru
    _
  %p14 = scmp.eq.s32.totalorder 0, 0
  // Predicated region
  $region14: #{video_autoencoder_lstm.18} parent=0 // pred_check
    %p15 = pneg %p14
  $region15: #{video_autoencoder_lstm.18} parent=0 // pred_check_branch
    %17 = sbr.rel (%p15) target = $region17
  $region16: #{video_autoencoder_lstm.18} parent=0 // pred_region
    %18 = vst [vmem:[#allocation2] sm:$0xff] 0.0
    %19 = vst [vmem:[#allocation2 + $0x8] sm:$0xff] 0.0
    %20 = vst [vmem:[#allocation2 + $0x10] sm:$0xff] 0.0
    %21 = vst [vmem:[#allocation2 + $0x18] sm:$0xff] 0.0
    %22 = vst [vmem:[#allocation2 + $0x20] sm:$0xff] 0.0
    %23 = vst [vmem:[#allocation2 + $0x28] sm:$0xff] 0.0
    %24 = vst [vmem:[#allocation2 + $0x30] sm:$0xff] 0.0
    %25 = vst [vmem:[#allocation2 + $0x38] sm:$0xff] 0.0
    %26 = vst [vmem:[#allocation2 + $0x40] sm:$0xff] 0.0
    %27 = vst [vmem:[#allocation2 + $0x48] sm:$0xff] 0.0
    %28 = vst [vmem:[#allocation2 + $0x50] sm:$0xff] 0.0
    %29 = vst [vmem:[#allocation2 + $0x58] sm:$0xff] 0.0
    %30 = vst [vmem:[#allocation2 + $0x60] sm:$0xff] 0.0
    %31 = vst [vmem:[#allocation2 + $0x68] sm:$0xff] 0.0
    %32 = vst [vmem:[#allocation2 + $0x70] sm:$0xff] 0.0
    %33 = vst [vmem:[#allocation2 + $0x78] sm:$0xff] 0.0
    %34 = vst [vmem:[#allocation2 + $0x80] sm:$0xff] 0.0
    %35 = vst [vmem:[#allocation2 + $0x88] sm:$0xff] 0.0
    %36 = vst [vmem:[#allocation2 + $0x90] sm:$0xff] 0.0
    %37 = vst [vmem:[#allocation2 + $0x98] sm:$0xff] 0.0
    %38 = vst [vmem:[#allocation2 + $0xa0] sm:$0xff] 0.0
    %39 = vst [vmem:[#allocation2 + $0xa8] sm:$0xff] 0.0
    %40 = vst [vmem:[#allocation2 + $0xb0] sm:$0xff] 0.0
    %41 = vst [vmem:[#allocation2 + $0xb8] sm:$0xff] 0.0
    %42 = vst [vmem:[#allocation2 + $0xc0] sm:$0xff] 0.0
    %43 = vst [vmem:[#allocation2 + $0xc8] sm:$0xff] 0.0
    %44 = vst [vmem:[#allocation2 + $0xd0] sm:$0xff] 0.0
    %45 = vst [vmem:[#allocation2 + $0xd8] sm:$0xff] 0.0
    %46 = vst [vmem:[#allocation2 + $0xe0] sm:$0xff] 0.0
    %47 = vst [vmem:[#allocation2 + $0xe8] sm:$0xff] 0.0
    %48 = vst [vmem:[#allocation2 + $0xf0] sm:$0xff] 0.0
    %49 = vst [vmem:[#allocation2 + $0xf8] sm:$0xff] 0.0
    %50 = vst [vmem:[#allocation2 + $0x100] sm:$0xff] 0.0
    %51 = vst [vmem:[#allocation2 + $0x108] sm:$0xff] 0.0
    %52 = vst [vmem:[#allocation2 + $0x110] sm:$0xff] 0.0
    %53 = vst [vmem:[#allocation2 + $0x118] sm:$0xff] 0.0
    %54 = vst [vmem:[#allocation2 + $0x120] sm:$0xff] 0.0
    %55 = vst [vmem:[#allocation2 + $0x128] sm:$0xff] 0.0
    %56 = vst [vmem:[#allocation2 + $0x130] sm:$0xff] 0.0
    %57 = vst [vmem:[#allocation2 + $0x138] sm:$0xff] 0.0
    %58 = vst [vmem:[#allocation2 + $0x140] sm:$0xff] 0.0
    %59 = vst [vmem:[#allocation2 + $0x148] sm:$0xff] 0.0
    %60 = vst [vmem:[#allocation2 + $0x150] sm:$0xff] 0.0
    %61 = vst [vmem:[#allocation2 + $0x158] sm:$0xff] 0.0
    %62 = vst [vmem:[#allocation2 + $0x160] sm:$0xff] 0.0
    %63 = vst [vmem:[#allocation2 + $0x168] sm:$0xff] 0.0
    %64 = vst [vmem:[#allocation2 + $0x170] sm:$0xff] 0.0
    %65 = vst [vmem:[#allocation2 + $0x178] sm:$0xff] 0.0
    %66 = vst [vmem:[#allocation2 + $0x180] sm:$0xff] 0.0
    %67 = vst [vmem:[#allocation2 + $0x188] sm:$0xff] 0.0
  $region17: #{video_autoencoder_lstm.18} parent=0 // pred_fallthru
    _
  %v68 = vld [vmem:[#allocation2] sm:$0xff]
  %v69 = vld [vmem:[#allocation2 + $0x8] sm:$0xff]
  %v70 = vld [vmem:[#allocation2 + $0x10] sm:$0xff]
  %v71 = vld [vmem:[#allocation2 + $0x18] sm:$0xff]
  %v72 = vld [vmem:[#allocation2 + $0x20] sm:$0xff]
  %v73 = vld [vmem:[#allocation2 + $0x28] sm:$0xff]
  %v74 = vld [vmem:[#allocation2 + $0x30] sm:$0xff]
  %v75 = vld [vmem:[#allocation2 + $0x38] sm:$0xff]
  %v76 = vld [vmem:[#allocation2 + $0x40] sm:$0xff]
  %v77 = vld [vmem:[#allocation2 + $0x48] sm:$0xff]
  %v78 = vld [vmem:[#allocation2 + $0x50] sm:$0xff]
  %v79 = vld [vmem:[#allocation2 + $0x58] sm:$0xff]
  %v80 = vld [vmem:[#allocation2 + $0x60] sm:$0xff]
  %v81 = vld [vmem:[#allocation2 + $0x68] sm:$0xff]
  %v82 = vld [vmem:[#allocation2 + $0x70] sm:$0xff]
  %v83 = vld [vmem:[#allocation2 + $0x78] sm:$0xff]
  %v84 = vld [vmem:[#allocation2 + $0x80] sm:$0xff]
  %v85 = vld [vmem:[#allocation2 + $0x88] sm:$0xff]
  %v86 = vld [vmem:[#allocation2 + $0x90] sm:$0xff]
  %v87 = vld [vmem:[#allocation2 + $0x98] sm:$0xff]
  %v88 = vld [vmem:[#allocation2 + $0xa0] sm:$0xff]
  %v89 = vld [vmem:[#allocation2 + $0xa8] sm:$0xff]
  %v90 = vld [vmem:[#allocation2 + $0xb0] sm:$0xff]
  %v91 = vld [vmem:[#allocation2 + $0xb8] sm:$0xff]
  %v92 = vld [vmem:[#allocation2 + $0xc0] sm:$0xff]
  %v93 = vld [vmem:[#allocation2 + $0xc8] sm:$0xff]
  %v94 = vld [vmem:[#allocation2 + $0xd0] sm:$0xff]
  %v95 = vld [vmem:[#allocation2 + $0xd8] sm:$0xff]
  %v96 = vld [vmem:[#allocation2 + $0xe0] sm:$0xff]
  %v97 = vld [vmem:[#allocation2 + $0xe8] sm:$0xff]
  %v98 = vld [vmem:[#allocation2 + $0xf0] sm:$0xff]
  %v99 = vld [vmem:[#allocation2 + $0xf8] sm:$0xff]
  %v100 = vld [vmem:[#allocation2 + $0x100] sm:$0xff]
  %v101 = vld [vmem:[#allocation2 + $0x108] sm:$0xff]
  %v102 = vld [vmem:[#allocation2 + $0x110] sm:$0xff]
  %v103 = vld [vmem:[#allocation2 + $0x118] sm:$0xff]
  %v104 = vld [vmem:[#allocation2 + $0x120] sm:$0xff]
  %v105 = vld [vmem:[#allocation2 + $0x128] sm:$0xff]
  %v106 = vld [vmem:[#allocation2 + $0x130] sm:$0xff]
  %v107 = vld [vmem:[#allocation2 + $0x138] sm:$0xff]
  %v108 = vld [vmem:[#allocation2 + $0x140] sm:$0xff]
  %v109 = vld [vmem:[#allocation2 + $0x148] sm:$0xff]
  %v110 = vld [vmem:[#allocation2 + $0x150] sm:$0xff]
  %v111 = vld [vmem:[#allocation2 + $0x158] sm:$0xff]
  %v112 = vld [vmem:[#allocation2 + $0x160] sm:$0xff]
  %v113 = vld [vmem:[#allocation2 + $0x168] sm:$0xff]
  %v114 = vld [vmem:[#allocation2 + $0x170] sm:$0xff]
  %v115 = vld [vmem:[#allocation2 + $0x178] sm:$0xff]
  %v116 = vld [vmem:[#allocation2 + $0x180] sm:$0xff]
  %v117 = vld [vmem:[#allocation2 + $0x188] sm:$0xff]
  %v118 = vld [vmem:[%s0] sm:$0xf]
  %v119 = vld [vmem:[%s0 + $0x4] sm:$0xf]
  %v120 = vld [vmem:[%s1] sm:$0xff]
  %v121 = vld [vmem:[%s1 + $0x8] sm:$0xff]
  %v122 = vld [vmem:[%s1 + $0x10] sm:$0xff]
  %v123 = vld [vmem:[%s1 + $0x18] sm:$0xff]
  %v124 = vld [vmem:[%s1 + $0x20] sm:$0xff]
  %v125 = vld [vmem:[%s1 + $0x28] sm:$0xff]
  %v126 = vld [vmem:[%s1 + $0x30] sm:$0xff]
  %v127 = vld [vmem:[%s1 + $0x38] sm:$0xff]
  %v128 = vld [vmem:[%s1 + $0x40] sm:$0xff]
  %v129 = vld [vmem:[%s1 + $0x48] sm:$0xff]
  %v130 = vld [vmem:[%s1 + $0x50] sm:$0xff]
  %v131 = vld [vmem:[%s1 + $0x58] sm:$0xff]
  %v132 = vld [vmem:[%s1 + $0x60] sm:$0xf]
  %v133 = vld [vmem:[%s1 + $0x64] sm:$0xff]
  %v134 = vld [vmem:[%s1 + $0x6c] sm:$0xff]
  %v135 = vld [vmem:[%s1 + $0x74] sm:$0xff]
  %v136 = vld [vmem:[%s1 + $0x7c] sm:$0xff]
  %v137 = vld [vmem:[%s1 + $0x84] sm:$0xff]
  %v138 = vld [vmem:[%s1 + $0x8c] sm:$0xff]
  %v139 = vld [vmem:[%s1 + $0x94] sm:$0xff]
  %v140 = vld [vmem:[%s1 + $0x9c] sm:$0xff]
  %v141 = vld [vmem:[%s1 + $0xa4] sm:$0xff]
  %v142 = vld [vmem:[%s1 + $0xac] sm:$0xff]
  %v143 = vld [vmem:[%s1 + $0xb4] sm:$0xff]
  %v144 = vld [vmem:[%s1 + $0xbc] sm:$0xff]
  %v145 = vld [vmem:[%s1 + $0xc4] sm:$0xf]
  %v146 = vld [vmem:[%s1 + $0xc8] sm:$0xff]
  %v147 = vld [vmem:[%s1 + $0xd0] sm:$0xff]
  %v148 = vld [vmem:[%s1 + $0xd8] sm:$0xff]
  %v149 = vld [vmem:[%s1 + $0xe0] sm:$0xff]
  %v150 = vld [vmem:[%s1 + $0xe8] sm:$0xff]
  %v151 = vld [vmem:[%s1 + $0xf0] sm:$0xff]
  %v152 = vld [vmem:[%s1 + $0xf8] sm:$0xff]
  %v153 = vld [vmem:[%s1 + $0x100] sm:$0xff]
  %v154 = vld [vmem:[%s1 + $0x108] sm:$0xff]
  %v155 = vld [vmem:[%s1 + $0x110] sm:$0xff]
  %v156 = vld [vmem:[%s1 + $0x118] sm:$0xff]
  %v157 = vld [vmem:[%s1 + $0x120] sm:$0xff]
  %v158 = vld [vmem:[%s1 + $0x128] sm:$0xf]
  %v159 = vld [vmem:[%s1 + $0x12c] sm:$0xff]
  %v160 = vld [vmem:[%s1 + $0x134] sm:$0xff]
  %v161 = vld [vmem:[%s1 + $0x13c] sm:$0xff]
  %v162 = vld [vmem:[%s1 + $0x144] sm:$0xff]
  %v163 = vld [vmem:[%s1 + $0x14c] sm:$0xff]
  %v164 = vld [vmem:[%s1 + $0x154] sm:$0xff]
  %v165 = vld [vmem:[%s1 + $0x15c] sm:$0xff]
  %v166 = vld [vmem:[%s1 + $0x164] sm:$0xff]
  %v167 = vld [vmem:[%s1 + $0x16c] sm:$0xff]
  %v168 = vld [vmem:[%s1 + $0x174] sm:$0xff]
  %v169 = vld [vmem:[%s1 + $0x17c] sm:$0xff]
  %v170 = vld [vmem:[%s1 + $0x184] sm:$0xff]
  %v171 = vld [vmem:[%s1 + $0x18c] sm:$0xf]
  %v172 = vld [vmem:[%s1 + $0x190] sm:$0xff]
  %v173 = vld [vmem:[%s1 + $0x198] sm:$0xff]
  %v174 = vld [vmem:[%s1 + $0x1a0] sm:$0xff]
  %v175 = vld [vmem:[%s1 + $0x1a8] sm:$0xff]
  %v176 = vld [vmem:[%s1 + $0x1b0] sm:$0xff]
  %v177 = vld [vmem:[%s1 + $0x1b8] sm:$0xff]
  %v178 = vld [vmem:[%s1 + $0x1c0] sm:$0xff]
  %v179 = vld [vmem:[%s1 + $0x1c8] sm:$0xff]
  %v180 = vld [vmem:[%s1 + $0x1d0] sm:$0xff]
  %v181 = vld [vmem:[%s1 + $0x1d8] sm:$0xff]
  %v182 = vld [vmem:[%s1 + $0x1e0] sm:$0xff]
  %v183 = vld [vmem:[%s1 + $0x1e8] sm:$0xff]
  %v184 = vld [vmem:[%s1 + $0x1f0] sm:$0xf]
  %v185 = vld [vmem:[%s1 + $0x1f4] sm:$0xff]
  %v186 = vld [vmem:[%s1 + $0x1fc] sm:$0xff]
  %v187 = vld [vmem:[%s1 + $0x204] sm:$0xff]
  %v188 = vld [vmem:[%s1 + $0x20c] sm:$0xff]
  %v189 = vld [vmem:[%s1 + $0x214] sm:$0xff]
  %v190 = vld [vmem:[%s1 + $0x21c] sm:$0xff]
  %v191 = vld [vmem:[%s1 + $0x224] sm:$0xff]
  %v192 = vld [vmem:[%s1 + $0x22c] sm:$0xff]
  %v193 = vld [vmem:[%s1 + $0x234] sm:$0xff]
  %v194 = vld [vmem:[%s1 + $0x23c] sm:$0xff]
  %v195 = vld [vmem:[%s1 + $0x244] sm:$0xff]
  %v196 = vld [vmem:[%s1 + $0x24c] sm:$0xff]
  %v197 = vld [vmem:[%s1 + $0x254] sm:$0xf]
  %v198 = vld [vmem:[%s1 + $0x258] sm:$0xff]
  %v199 = vld [vmem:[%s1 + $0x260] sm:$0xff]
  %v200 = vld [vmem:[%s1 + $0x268] sm:$0xff]
  %v201 = vld [vmem:[%s1 + $0x270] sm:$0xff]
  %v202 = vld [vmem:[%s1 + $0x278] sm:$0xff]
  %v203 = vld [vmem:[%s1 + $0x280] sm:$0xff]
  %v204 = vld [vmem:[%s1 + $0x288] sm:$0xff]
  %v205 = vld [vmem:[%s1 + $0x290] sm:$0xff]
  %v206 = vld [vmem:[%s1 + $0x298] sm:$0xff]
  %v207 = vld [vmem:[%s1 + $0x2a0] sm:$0xff]
  %v208 = vld [vmem:[%s1 + $0x2a8] sm:$0xff]
  %v209 = vld [vmem:[%s1 + $0x2b0] sm:$0xff]
  %v210 = vld [vmem:[%s1 + $0x2b8] sm:$0xf]
  %v211 = vld [vmem:[%s1 + $0x2bc] sm:$0xff]
  %v212 = vld [vmem:[%s1 + $0x2c4] sm:$0xff]
  %v213 = vld [vmem:[%s1 + $0x2cc] sm:$0xff]
  %v214 = vld [vmem:[%s1 + $0x2d4] sm:$0xff]
  %v215 = vld [vmem:[%s1 + $0x2dc] sm:$0xff]
  %v216 = vld [vmem:[%s1 + $0x2e4] sm:$0xff]
  %v217 = vld [vmem:[%s1 + $0x2ec] sm:$0xff]
  %v218 = vld [vmem:[%s1 + $0x2f4] sm:$0xff]
  %v219 = vld [vmem:[%s1 + $0x2fc] sm:$0xff]
  %v220 = vld [vmem:[%s1 + $0x304] sm:$0xff]
  %v221 = vld [vmem:[%s1 + $0x30c] sm:$0xff]
  %v222 = vld [vmem:[%s1 + $0x314] sm:$0xff]
  %v223 = vld [vmem:[%s1 + $0x31c] sm:$0xf]
  %v224 = vld [vmem:[%s1 + $0x320] sm:$0xff]
  %v225 = vld [vmem:[%s1 + $0x328] sm:$0xff]
  %v226 = vld [vmem:[%s1 + $0x330] sm:$0xff]
  %v227 = vld [vmem:[%s1 + $0x338] sm:$0xff]
  %v228 = vld [vmem:[%s1 + $0x340] sm:$0xff]
  %v229 = vld [vmem:[%s1 + $0x348] sm:$0xff]
  %v230 = vld [vmem:[%s1 + $0x350] sm:$0xff]
  %v231 = vld [vmem:[%s1 + $0x358] sm:$0xff]
  %v232 = vld [vmem:[%s1 + $0x360] sm:$0xff]
  %v233 = vld [vmem:[%s1 + $0x368] sm:$0xff]
  %v234 = vld [vmem:[%s1 + $0x370] sm:$0xff]
  %v235 = vld [vmem:[%s1 + $0x378] sm:$0xff]
  %v236 = vld [vmem:[%s1 + $0x380] sm:$0xf]
  %v237 = vld [vmem:[%s1 + $0x384] sm:$0xff]
  %v238 = vld [vmem:[%s1 + $0x38c] sm:$0xff]
  %v239 = vld [vmem:[%s1 + $0x394] sm:$0xff]
  %v240 = vld [vmem:[%s1 + $0x39c] sm:$0xff]
  %v241 = vld [vmem:[%s1 + $0x3a4] sm:$0xff]
  %v242 = vld [vmem:[%s1 + $0x3ac] sm:$0xff]
  %v243 = vld [vmem:[%s1 + $0x3b4] sm:$0xff]
  %v244 = vld [vmem:[%s1 + $0x3bc] sm:$0xff]
  %v245 = vld [vmem:[%s1 + $0x3c4] sm:$0xff]
  %v246 = vld [vmem:[%s1 + $0x3cc] sm:$0xff]
  %v247 = vld [vmem:[%s1 + $0x3d4] sm:$0xff]
  %v248 = vld [vmem:[%s1 + $0x3dc] sm:$0xff]
  %v249 = vld [vmem:[%s1 + $0x3e4] sm:$0xf]
  %v250 = vld [vmem:[%s1 + $0x3e8] sm:$0xff]
  %v251 = vld [vmem:[%s1 + $0x3f0] sm:$0xff]
  %v252 = vld [vmem:[%s1 + $0x3f8] sm:$0xff]
  %v253 = vld [vmem:[%s1 + $0x400] sm:$0xff]
  %v254 = vld [vmem:[%s1 + $0x408] sm:$0xff]
  %v255 = vld [vmem:[%s1 + $0x410] sm:$0xff]
  %v256 = vld [vmem:[%s1 + $0x418] sm:$0xff]
  %v257 = vld [vmem:[%s1 + $0x420] sm:$0xff]
  %v258 = vld [vmem:[%s1 + $0x428] sm:$0xff]
  %v259 = vld [vmem:[%s1 + $0x430] sm:$0xff]
  %v260 = vld [vmem:[%s1 + $0x438] sm:$0xff]
  %v261 = vld [vmem:[%s1 + $0x440] sm:$0xff]
  %v262 = vld [vmem:[%s1 + $0x448] sm:$0xf]
  %v263 = vld [vmem:[%s1 + $0x44c] sm:$0xff]
  %v264 = vld [vmem:[%s1 + $0x454] sm:$0xff]
  %v265 = vld [vmem:[%s1 + $0x45c] sm:$0xff]
  %v266 = vld [vmem:[%s1 + $0x464] sm:$0xff]
  %v267 = vld [vmem:[%s1 + $0x46c] sm:$0xff]
  %v268 = vld [vmem:[%s1 + $0x474] sm:$0xff]
  %v269 = vld [vmem:[%s1 + $0x47c] sm:$0xff]
  %v270 = vld [vmem:[%s1 + $0x484] sm:$0xff]
  %v271 = vld [vmem:[%s1 + $0x48c] sm:$0xff]
  %v272 = vld [vmem:[%s1 + $0x494] sm:$0xff]
  %v273 = vld [vmem:[%s1 + $0x49c] sm:$0xff]
  %v274 = vld [vmem:[%s1 + $0x4a4] sm:$0xff]
  %v275 = vld [vmem:[%s1 + $0x4ac] sm:$0xf]
  %v276 = vld [vmem:[%s1 + $0x4b0] sm:$0xff]
  %v277 = vld [vmem:[%s1 + $0x4b8] sm:$0xff]
  %v278 = vld [vmem:[%s1 + $0x4c0] sm:$0xff]
  %v279 = vld [vmem:[%s1 + $0x4c8] sm:$0xff]
  %v280 = vld [vmem:[%s1 + $0x4d0] sm:$0xff]
  %v281 = vld [vmem:[%s1 + $0x4d8] sm:$0xff]
  %v282 = vld [vmem:[%s1 + $0x4e0] sm:$0xff]
  %v283 = vld [vmem:[%s1 + $0x4e8] sm:$0xff]
  %v284 = vld [vmem:[%s1 + $0x4f0] sm:$0xff]
  %v285 = vld [vmem:[%s1 + $0x4f8] sm:$0xff]
  %v286 = vld [vmem:[%s1 + $0x500] sm:$0xff]
  %v287 = vld [vmem:[%s1 + $0x508] sm:$0xff]
  %v288 = vld [vmem:[%s1 + $0x510] sm:$0xf]
  %v289 = vld [vmem:[%s1 + $0x514] sm:$0xff]
  %v290 = vld [vmem:[%s1 + $0x51c] sm:$0xff]
  %v291 = vld [vmem:[%s1 + $0x524] sm:$0xff]
  %v292 = vld [vmem:[%s1 + $0x52c] sm:$0xff]
  %v293 = vld [vmem:[%s1 + $0x534] sm:$0xff]
  %v294 = vld [vmem:[%s1 + $0x53c] sm:$0xff]
  %v295 = vld [vmem:[%s1 + $0x544] sm:$0xff]
  %v296 = vld [vmem:[%s1 + $0x54c] sm:$0xff]
  %v297 = vld [vmem:[%s1 + $0x554] sm:$0xff]
  %v298 = vld [vmem:[%s1 + $0x55c] sm:$0xff]
  %v299 = vld [vmem:[%s1 + $0x564] sm:$0xff]
  %v300 = vld [vmem:[%s1 + $0x56c] sm:$0xff]
  %v301 = vld [vmem:[%s1 + $0x574] sm:$0xf]
  %v302 = vld [vmem:[%s1 + $0x578] sm:$0xff]
  %v303 = vld [vmem:[%s1 + $0x580] sm:$0xff]
  %v304 = vld [vmem:[%s1 + $0x588] sm:$0xff]
  %v305 = vld [vmem:[%s1 + $0x590] sm:$0xff]
  %v306 = vld [vmem:[%s1 + $0x598] sm:$0xff]
  %v307 = vld [vmem:[%s1 + $0x5a0] sm:$0xff]
  %v308 = vld [vmem:[%s1 + $0x5a8] sm:$0xff]
  %v309 = vld [vmem:[%s1 + $0x5b0] sm:$0xff]
  %v310 = vld [vmem:[%s1 + $0x5b8] sm:$0xff]
  %v311 = vld [vmem:[%s1 + $0x5c0] sm:$0xff]
  %v312 = vld [vmem:[%s1 + $0x5c8] sm:$0xff]
  %v313 = vld [vmem:[%s1 + $0x5d0] sm:$0xff]
  %v314 = vld [vmem:[%s1 + $0x5d8] sm:$0xf]
  %v315 = vld [vmem:[%s1 + $0x5dc] sm:$0xff]
  %v316 = vld [vmem:[%s1 + $0x5e4] sm:$0xff]
  %v317 = vld [vmem:[%s1 + $0x5ec] sm:$0xff]
  %v318 = vld [vmem:[%s1 + $0x5f4] sm:$0xff]
  %v319 = vld [vmem:[%s1 + $0x5fc] sm:$0xff]
  %v320 = vld [vmem:[%s1 + $0x604] sm:$0xff]
  %v321 = vld [vmem:[%s1 + $0x60c] sm:$0xff]
  %v322 = vld [vmem:[%s1 + $0x614] sm:$0xff]
  %v323 = vld [vmem:[%s1 + $0x61c] sm:$0xff]
  %v324 = vld [vmem:[%s1 + $0x624] sm:$0xff]
  %v325 = vld [vmem:[%s1 + $0x62c] sm:$0xff]
  %v326 = vld [vmem:[%s1 + $0x634] sm:$0xff]
  %v327 = vld [vmem:[%s1 + $0x63c] sm:$0xf]
  %v330 = vunpack.c.l.b16 %v118
  %v331 = vunpack.c.l.b16 %v119
  %v332 = vpack.c.b16 %v331, %v330
  %v542 = vunpack.c.l.b16 %v120
  %v543 = vunpack.c.h.b16 %v120
  %v544 = vunpack.c.l.b16 %v121
  %v545 = vunpack.c.h.b16 %v121
  %v546 = vunpack.c.l.b16 %v122
  %v547 = vunpack.c.h.b16 %v122
  %v548 = vunpack.c.l.b16 %v123
  %v549 = vunpack.c.h.b16 %v123
  %v550 = vunpack.c.l.b16 %v124
  %v551 = vunpack.c.h.b16 %v124
  %v552 = vunpack.c.l.b16 %v125
  %v553 = vunpack.c.h.b16 %v125
  %v554 = vunpack.c.l.b16 %v126
  %v555 = vunpack.c.h.b16 %v126
  %v556 = vunpack.c.l.b16 %v127
  %v557 = vunpack.c.h.b16 %v127
  %v558 = vunpack.c.l.b16 %v128
  %v559 = vunpack.c.h.b16 %v128
  %v560 = vunpack.c.l.b16 %v129
  %v561 = vunpack.c.h.b16 %v129
  %v562 = vunpack.c.l.b16 %v130
  %v563 = vunpack.c.h.b16 %v130
  %v564 = vunpack.c.l.b16 %v131
  %v565 = vunpack.c.h.b16 %v131
  %v566 = vunpack.c.l.b16 %v132
  %v567 = vunpack.c.l.b16 %v133
  %v568 = vunpack.c.h.b16 %v133
  %v569 = vunpack.c.l.b16 %v134
  %v570 = vunpack.c.h.b16 %v134
  %v571 = vunpack.c.l.b16 %v135
  %v572 = vunpack.c.h.b16 %v135
  %v573 = vunpack.c.l.b16 %v136
  %v574 = vunpack.c.h.b16 %v136
  %v575 = vunpack.c.l.b16 %v137
  %v576 = vunpack.c.h.b16 %v137
  %v577 = vunpack.c.l.b16 %v138
  %v578 = vunpack.c.h.b16 %v138
  %v579 = vunpack.c.l.b16 %v139
  %v580 = vunpack.c.h.b16 %v139
  %v581 = vunpack.c.l.b16 %v140
  %v582 = vunpack.c.h.b16 %v140
  %v583 = vunpack.c.l.b16 %v141
  %v584 = vunpack.c.h.b16 %v141
  %v585 = vunpack.c.l.b16 %v142
  %v586 = vunpack.c.h.b16 %v142
  %v587 = vunpack.c.l.b16 %v143
  %v588 = vunpack.c.h.b16 %v143
  %v589 = vunpack.c.l.b16 %v144
  %v590 = vunpack.c.h.b16 %v144
  %v591 = vunpack.c.l.b16 %v145
  %v592 = vunpack.c.l.b16 %v146
  %v593 = vunpack.c.h.b16 %v146
  %v594 = vunpack.c.l.b16 %v147
  %v595 = vunpack.c.h.b16 %v147
  %v596 = vunpack.c.l.b16 %v148
  %v597 = vunpack.c.h.b16 %v148
  %v598 = vunpack.c.l.b16 %v149
  %v599 = vunpack.c.h.b16 %v149
  %v600 = vunpack.c.l.b16 %v150
  %v601 = vunpack.c.h.b16 %v150
  %v602 = vunpack.c.l.b16 %v151
  %v603 = vunpack.c.h.b16 %v151
  %v604 = vunpack.c.l.b16 %v152
  %v605 = vunpack.c.h.b16 %v152
  %v606 = vunpack.c.l.b16 %v153
  %v607 = vunpack.c.h.b16 %v153
  %v608 = vunpack.c.l.b16 %v154
  %v609 = vunpack.c.h.b16 %v154
  %v610 = vunpack.c.l.b16 %v155
  %v611 = vunpack.c.h.b16 %v155
  %v612 = vunpack.c.l.b16 %v156
  %v613 = vunpack.c.h.b16 %v156
  %v614 = vunpack.c.l.b16 %v157
  %v615 = vunpack.c.h.b16 %v157
  %v616 = vunpack.c.l.b16 %v158
  %v617 = vunpack.c.l.b16 %v159
  %v618 = vunpack.c.h.b16 %v159
  %v619 = vunpack.c.l.b16 %v160
  %v620 = vunpack.c.h.b16 %v160
  %v621 = vunpack.c.l.b16 %v161
  %v622 = vunpack.c.h.b16 %v161
  %v623 = vunpack.c.l.b16 %v162
  %v624 = vunpack.c.h.b16 %v162
  %v625 = vunpack.c.l.b16 %v163
  %v626 = vunpack.c.h.b16 %v163
  %v627 = vunpack.c.l.b16 %v164
  %v628 = vunpack.c.h.b16 %v164
  %v629 = vunpack.c.l.b16 %v165
  %v630 = vunpack.c.h.b16 %v165
  %v631 = vunpack.c.l.b16 %v166
  %v632 = vunpack.c.h.b16 %v166
  %v633 = vunpack.c.l.b16 %v167
  %v634 = vunpack.c.h.b16 %v167
  %v635 = vunpack.c.l.b16 %v168
  %v636 = vunpack.c.h.b16 %v168
  %v637 = vunpack.c.l.b16 %v169
  %v638 = vunpack.c.h.b16 %v169
  %v639 = vunpack.c.l.b16 %v170
  %v640 = vunpack.c.h.b16 %v170
  %v641 = vunpack.c.l.b16 %v171
  %v642 = vunpack.c.l.b16 %v172
  %v643 = vunpack.c.h.b16 %v172
  %v644 = vunpack.c.l.b16 %v173
  %v645 = vunpack.c.h.b16 %v173
  %v646 = vunpack.c.l.b16 %v174
  %v647 = vunpack.c.h.b16 %v174
  %v648 = vunpack.c.l.b16 %v175
  %v649 = vunpack.c.h.b16 %v175
  %v650 = vunpack.c.l.b16 %v176
  %v651 = vunpack.c.h.b16 %v176
  %v652 = vunpack.c.l.b16 %v177
  %v653 = vunpack.c.h.b16 %v177
  %v654 = vunpack.c.l.b16 %v178
  %v655 = vunpack.c.h.b16 %v178
  %v656 = vunpack.c.l.b16 %v179
  %v657 = vunpack.c.h.b16 %v179
  %v658 = vunpack.c.l.b16 %v180
  %v659 = vunpack.c.h.b16 %v180
  %v660 = vunpack.c.l.b16 %v181
  %v661 = vunpack.c.h.b16 %v181
  %v662 = vunpack.c.l.b16 %v182
  %v663 = vunpack.c.h.b16 %v182
  %v664 = vunpack.c.l.b16 %v183
  %v665 = vunpack.c.h.b16 %v183
  %v666 = vunpack.c.l.b16 %v184
  %v667 = vunpack.c.l.b16 %v185
  %v668 = vunpack.c.h.b16 %v185
  %v669 = vunpack.c.l.b16 %v186
  %v670 = vunpack.c.h.b16 %v186
  %v671 = vunpack.c.l.b16 %v187
  %v672 = vunpack.c.h.b16 %v187
  %v673 = vunpack.c.l.b16 %v188
  %v674 = vunpack.c.h.b16 %v188
  %v675 = vunpack.c.l.b16 %v189
  %v676 = vunpack.c.h.b16 %v189
  %v677 = vunpack.c.l.b16 %v190
  %v678 = vunpack.c.h.b16 %v190
  %v679 = vunpack.c.l.b16 %v191
  %v680 = vunpack.c.h.b16 %v191
  %v681 = vunpack.c.l.b16 %v192
  %v682 = vunpack.c.h.b16 %v192
  %v683 = vunpack.c.l.b16 %v193
  %v684 = vunpack.c.h.b16 %v193
  %v685 = vunpack.c.l.b16 %v194
  %v686 = vunpack.c.h.b16 %v194
  %v687 = vunpack.c.l.b16 %v195
  %v688 = vunpack.c.h.b16 %v195
  %v689 = vunpack.c.l.b16 %v196
  %v690 = vunpack.c.h.b16 %v196
  %v691 = vunpack.c.l.b16 %v197
  %v692 = vunpack.c.l.b16 %v198
  %v693 = vunpack.c.h.b16 %v198
  %v694 = vunpack.c.l.b16 %v199
  %v695 = vunpack.c.h.b16 %v199
  %v696 = vunpack.c.l.b16 %v200
  %v697 = vunpack.c.h.b16 %v200
  %v698 = vunpack.c.l.b16 %v201
  %v699 = vunpack.c.h.b16 %v201
  %v700 = vunpack.c.l.b16 %v202
  %v701 = vunpack.c.h.b16 %v202
  %v702 = vunpack.c.l.b16 %v203
  %v703 = vunpack.c.h.b16 %v203
  %v704 = vunpack.c.l.b16 %v204
  %v705 = vunpack.c.h.b16 %v204
  %v706 = vunpack.c.l.b16 %v205
  %v707 = vunpack.c.h.b16 %v205
  %v708 = vunpack.c.l.b16 %v206
  %v709 = vunpack.c.h.b16 %v206
  %v710 = vunpack.c.l.b16 %v207
  %v711 = vunpack.c.h.b16 %v207
  %v712 = vunpack.c.l.b16 %v208
  %v713 = vunpack.c.h.b16 %v208
  %v714 = vunpack.c.l.b16 %v209
  %v715 = vunpack.c.h.b16 %v209
  %v716 = vunpack.c.l.b16 %v210
  %v717 = vunpack.c.l.b16 %v211
  %v718 = vunpack.c.h.b16 %v211
  %v719 = vunpack.c.l.b16 %v212
  %v720 = vunpack.c.h.b16 %v212
  %v721 = vunpack.c.l.b16 %v213
  %v722 = vunpack.c.h.b16 %v213
  %v723 = vunpack.c.l.b16 %v214
  %v724 = vunpack.c.h.b16 %v214
  %v725 = vunpack.c.l.b16 %v215
  %v726 = vunpack.c.h.b16 %v215
  %v727 = vunpack.c.l.b16 %v216
  %v728 = vunpack.c.h.b16 %v216
  %v729 = vunpack.c.l.b16 %v217
  %v730 = vunpack.c.h.b16 %v217
  %v731 = vunpack.c.l.b16 %v218
  %v732 = vunpack.c.h.b16 %v218
  %v733 = vunpack.c.l.b16 %v219
  %v734 = vunpack.c.h.b16 %v219
  %v735 = vunpack.c.l.b16 %v220
  %v736 = vunpack.c.h.b16 %v220
  %v737 = vunpack.c.l.b16 %v221
  %v738 = vunpack.c.h.b16 %v221
  %v739 = vunpack.c.l.b16 %v222
  %v740 = vunpack.c.h.b16 %v222
  %v741 = vunpack.c.l.b16 %v223
  %v742 = vunpack.c.l.b16 %v224
  %v743 = vunpack.c.h.b16 %v224
  %v744 = vunpack.c.l.b16 %v225
  %v745 = vunpack.c.h.b16 %v225
  %v746 = vunpack.c.l.b16 %v226
  %v747 = vunpack.c.h.b16 %v226
  %v748 = vunpack.c.l.b16 %v227
  %v749 = vunpack.c.h.b16 %v227
  %v750 = vunpack.c.l.b16 %v228
  %v751 = vunpack.c.h.b16 %v228
  %v752 = vunpack.c.l.b16 %v229
  %v753 = vunpack.c.h.b16 %v229
  %v754 = vunpack.c.l.b16 %v230
  %v755 = vunpack.c.h.b16 %v230
  %v756 = vunpack.c.l.b16 %v231
  %v757 = vunpack.c.h.b16 %v231
  %v758 = vunpack.c.l.b16 %v232
  %v759 = vunpack.c.h.b16 %v232
  %v760 = vunpack.c.l.b16 %v233
  %v761 = vunpack.c.h.b16 %v233
  %v762 = vunpack.c.l.b16 %v234
  %v763 = vunpack.c.h.b16 %v234
  %v764 = vunpack.c.l.b16 %v235
  %v765 = vunpack.c.h.b16 %v235
  %v766 = vunpack.c.l.b16 %v236
  %v767 = vunpack.c.l.b16 %v237
  %v768 = vunpack.c.h.b16 %v237
  %v769 = vunpack.c.l.b16 %v238
  %v770 = vunpack.c.h.b16 %v238
  %v771 = vunpack.c.l.b16 %v239
  %v772 = vunpack.c.h.b16 %v239
  %v773 = vunpack.c.l.b16 %v240
  %v774 = vunpack.c.h.b16 %v240
  %v775 = vunpack.c.l.b16 %v241
  %v776 = vunpack.c.h.b16 %v241
  %v777 = vunpack.c.l.b16 %v242
  %v778 = vunpack.c.h.b16 %v242
  %v779 = vunpack.c.l.b16 %v243
  %v780 = vunpack.c.h.b16 %v243
  %v781 = vunpack.c.l.b16 %v244
  %v782 = vunpack.c.h.b16 %v244
  %v783 = vunpack.c.l.b16 %v245
  %v784 = vunpack.c.h.b16 %v245
  %v785 = vunpack.c.l.b16 %v246
  %v786 = vunpack.c.h.b16 %v246
  %v787 = vunpack.c.l.b16 %v247
  %v788 = vunpack.c.h.b16 %v247
  %v789 = vunpack.c.l.b16 %v248
  %v790 = vunpack.c.h.b16 %v248
  %v791 = vunpack.c.l.b16 %v249
  %v792 = vunpack.c.l.b16 %v250
  %v793 = vunpack.c.h.b16 %v250
  %v794 = vunpack.c.l.b16 %v251
  %v795 = vunpack.c.h.b16 %v251
  %v796 = vunpack.c.l.b16 %v252
  %v797 = vunpack.c.h.b16 %v252
  %v798 = vunpack.c.l.b16 %v253
  %v799 = vunpack.c.h.b16 %v253
  %v800 = vunpack.c.l.b16 %v254
  %v801 = vunpack.c.h.b16 %v254
  %v802 = vunpack.c.l.b16 %v255
  %v803 = vunpack.c.h.b16 %v255
  %v804 = vunpack.c.l.b16 %v256
  %v805 = vunpack.c.h.b16 %v256
  %v806 = vunpack.c.l.b16 %v257
  %v807 = vunpack.c.h.b16 %v257
  %v808 = vunpack.c.l.b16 %v258
  %v809 = vunpack.c.h.b16 %v258
  %v810 = vunpack.c.l.b16 %v259
  %v811 = vunpack.c.h.b16 %v259
  %v812 = vunpack.c.l.b16 %v260
  %v813 = vunpack.c.h.b16 %v260
  %v814 = vunpack.c.l.b16 %v261
  %v815 = vunpack.c.h.b16 %v261
  %v816 = vunpack.c.l.b16 %v262
  %v817 = vunpack.c.l.b16 %v263
  %v818 = vunpack.c.h.b16 %v263
  %v819 = vunpack.c.l.b16 %v264
  %v820 = vunpack.c.h.b16 %v264
  %v821 = vunpack.c.l.b16 %v265
  %v822 = vunpack.c.h.b16 %v265
  %v823 = vunpack.c.l.b16 %v266
  %v824 = vunpack.c.h.b16 %v266
  %v825 = vunpack.c.l.b16 %v267
  %v826 = vunpack.c.h.b16 %v267
  %v827 = vunpack.c.l.b16 %v268
  %v828 = vunpack.c.h.b16 %v268
  %v829 = vunpack.c.l.b16 %v269
  %v830 = vunpack.c.h.b16 %v269
  %v831 = vunpack.c.l.b16 %v270
  %v832 = vunpack.c.h.b16 %v270
  %v833 = vunpack.c.l.b16 %v271
  %v834 = vunpack.c.h.b16 %v271
  %v835 = vunpack.c.l.b16 %v272
  %v836 = vunpack.c.h.b16 %v272
  %v837 = vunpack.c.l.b16 %v273
  %v838 = vunpack.c.h.b16 %v273
  %v839 = vunpack.c.l.b16 %v274
  %v840 = vunpack.c.h.b16 %v274
  %v841 = vunpack.c.l.b16 %v275
  %v842 = vunpack.c.l.b16 %v276
  %v843 = vunpack.c.h.b16 %v276
  %v844 = vunpack.c.l.b16 %v277
  %v845 = vunpack.c.h.b16 %v277
  %v846 = vunpack.c.l.b16 %v278
  %v847 = vunpack.c.h.b16 %v278
  %v848 = vunpack.c.l.b16 %v279
  %v849 = vunpack.c.h.b16 %v279
  %v850 = vunpack.c.l.b16 %v280
  %v851 = vunpack.c.h.b16 %v280
  %v852 = vunpack.c.l.b16 %v281
  %v853 = vunpack.c.h.b16 %v281
  %v854 = vunpack.c.l.b16 %v282
  %v855 = vunpack.c.h.b16 %v282
  %v856 = vunpack.c.l.b16 %v283
  %v857 = vunpack.c.h.b16 %v283
  %v858 = vunpack.c.l.b16 %v284
  %v859 = vunpack.c.h.b16 %v284
  %v860 = vunpack.c.l.b16 %v285
  %v861 = vunpack.c.h.b16 %v285
  %v862 = vunpack.c.l.b16 %v286
  %v863 = vunpack.c.h.b16 %v286
  %v864 = vunpack.c.l.b16 %v287
  %v865 = vunpack.c.h.b16 %v287
  %v866 = vunpack.c.l.b16 %v288
  %v867 = vunpack.c.l.b16 %v289
  %v868 = vunpack.c.h.b16 %v289
  %v869 = vunpack.c.l.b16 %v290
  %v870 = vunpack.c.h.b16 %v290
  %v871 = vunpack.c.l.b16 %v291
  %v872 = vunpack.c.h.b16 %v291
  %v873 = vunpack.c.l.b16 %v292
  %v874 = vunpack.c.h.b16 %v292
  %v875 = vunpack.c.l.b16 %v293
  %v876 = vunpack.c.h.b16 %v293
  %v877 = vunpack.c.l.b16 %v294
  %v878 = vunpack.c.h.b16 %v294
  %v879 = vunpack.c.l.b16 %v295
  %v880 = vunpack.c.h.b16 %v295
  %v881 = vunpack.c.l.b16 %v296
  %v882 = vunpack.c.h.b16 %v296
  %v883 = vunpack.c.l.b16 %v297
  %v884 = vunpack.c.h.b16 %v297
  %v885 = vunpack.c.l.b16 %v298
  %v886 = vunpack.c.h.b16 %v298
  %v887 = vunpack.c.l.b16 %v299
  %v888 = vunpack.c.h.b16 %v299
  %v889 = vunpack.c.l.b16 %v300
  %v890 = vunpack.c.h.b16 %v300
  %v891 = vunpack.c.l.b16 %v301
  %v892 = vunpack.c.l.b16 %v302
  %v893 = vunpack.c.h.b16 %v302
  %v894 = vunpack.c.l.b16 %v303
  %v895 = vunpack.c.h.b16 %v303
  %v896 = vunpack.c.l.b16 %v304
  %v897 = vunpack.c.h.b16 %v304
  %v898 = vunpack.c.l.b16 %v305
  %v899 = vunpack.c.h.b16 %v305
  %v900 = vunpack.c.l.b16 %v306
  %v901 = vunpack.c.h.b16 %v306
  %v902 = vunpack.c.l.b16 %v307
  %v903 = vunpack.c.h.b16 %v307
  %v904 = vunpack.c.l.b16 %v308
  %v905 = vunpack.c.h.b16 %v308
  %v906 = vunpack.c.l.b16 %v309
  %v907 = vunpack.c.h.b16 %v309
  %v908 = vunpack.c.l.b16 %v310
  %v909 = vunpack.c.h.b16 %v310
  %v910 = vunpack.c.l.b16 %v311
  %v911 = vunpack.c.h.b16 %v311
  %v912 = vunpack.c.l.b16 %v312
  %v913 = vunpack.c.h.b16 %v312
  %v914 = vunpack.c.l.b16 %v313
  %v915 = vunpack.c.h.b16 %v313
  %v916 = vunpack.c.l.b16 %v314
  %v917 = vunpack.c.l.b16 %v315
  %v918 = vunpack.c.h.b16 %v315
  %v919 = vunpack.c.l.b16 %v316
  %v920 = vunpack.c.h.b16 %v316
  %v921 = vunpack.c.l.b16 %v317
  %v922 = vunpack.c.h.b16 %v317
  %v923 = vunpack.c.l.b16 %v318
  %v924 = vunpack.c.h.b16 %v318
  %v925 = vunpack.c.l.b16 %v319
  %v926 = vunpack.c.h.b16 %v319
  %v927 = vunpack.c.l.b16 %v320
  %v928 = vunpack.c.h.b16 %v320
  %v929 = vunpack.c.l.b16 %v321
  %v930 = vunpack.c.h.b16 %v321
  %v931 = vunpack.c.l.b16 %v322
  %v932 = vunpack.c.h.b16 %v322
  %v933 = vunpack.c.l.b16 %v323
  %v934 = vunpack.c.h.b16 %v323
  %v935 = vunpack.c.l.b16 %v324
  %v936 = vunpack.c.h.b16 %v324
  %v937 = vunpack.c.l.b16 %v325
  %v938 = vunpack.c.h.b16 %v325
  %v939 = vunpack.c.l.b16 %v326
  %v940 = vunpack.c.h.b16 %v326
  %v941 = vunpack.c.l.b16 %v327
  %v942 = vpack.c.b16 %v567, %v542
  %v943 = vpack.c.b16 %v568, %v543
  %v944 = vpack.c.b16 %v569, %v544
  %v945 = vpack.c.b16 %v570, %v545
  %v946 = vpack.c.b16 %v571, %v546
  %v947 = vpack.c.b16 %v572, %v547
  %v948 = vpack.c.b16 %v573, %v548
  %v949 = vpack.c.b16 %v574, %v549
  %v950 = vpack.c.b16 %v575, %v550
  %v951 = vpack.c.b16 %v576, %v551
  %v952 = vpack.c.b16 %v577, %v552
  %v953 = vpack.c.b16 %v578, %v553
  %v954 = vpack.c.b16 %v579, %v554
  %v955 = vpack.c.b16 %v580, %v555
  %v956 = vpack.c.b16 %v581, %v556
  %v957 = vpack.c.b16 %v582, %v557
  %v958 = vpack.c.b16 %v583, %v558
  %v959 = vpack.c.b16 %v584, %v559
  %v960 = vpack.c.b16 %v585, %v560
  %v961 = vpack.c.b16 %v586, %v561
  %v962 = vpack.c.b16 %v587, %v562
  %v963 = vpack.c.b16 %v588, %v563
  %v964 = vpack.c.b16 %v589, %v564
  %v965 = vpack.c.b16 %v590, %v565
  %v966 = vpack.c.b16 %v591, %v566
  %v967 = vpack.c.b16 %v617, %v592
  %v968 = vpack.c.b16 %v618, %v593
  %v969 = vpack.c.b16 %v619, %v594
  %v970 = vpack.c.b16 %v620, %v595
  %v971 = vpack.c.b16 %v621, %v596
  %v972 = vpack.c.b16 %v622, %v597
  %v973 = vpack.c.b16 %v623, %v598
  %v974 = vpack.c.b16 %v624, %v599
  %v975 = vpack.c.b16 %v625, %v600
  %v976 = vpack.c.b16 %v626, %v601
  %v977 = vpack.c.b16 %v627, %v602
  %v978 = vpack.c.b16 %v628, %v603
  %v979 = vpack.c.b16 %v629, %v604
  %v980 = vpack.c.b16 %v630, %v605
  %v981 = vpack.c.b16 %v631, %v606
  %v982 = vpack.c.b16 %v632, %v607
  %v983 = vpack.c.b16 %v633, %v608
  %v984 = vpack.c.b16 %v634, %v609
  %v985 = vpack.c.b16 %v635, %v610
  %v986 = vpack.c.b16 %v636, %v611
  %v987 = vpack.c.b16 %v637, %v612
  %v988 = vpack.c.b16 %v638, %v613
  %v989 = vpack.c.b16 %v639, %v614
  %v990 = vpack.c.b16 %v640, %v615
  %v991 = vpack.c.b16 %v641, %v616
  %v992 = vpack.c.b16 %v667, %v642
  %v993 = vpack.c.b16 %v668, %v643
  %v994 = vpack.c.b16 %v669, %v644
  %v995 = vpack.c.b16 %v670, %v645
  %v996 = vpack.c.b16 %v671, %v646
  %v997 = vpack.c.b16 %v672, %v647
  %v998 = vpack.c.b16 %v673, %v648
  %v999 = vpack.c.b16 %v674, %v649
  %v1000 = vpack.c.b16 %v675, %v650
  %v1001 = vpack.c.b16 %v676, %v651
  %v1002 = vpack.c.b16 %v677, %v652
  %v1003 = vpack.c.b16 %v678, %v653
  %v1004 = vpack.c.b16 %v679, %v654
  %v1005 = vpack.c.b16 %v680, %v655
  %v1006 = vpack.c.b16 %v681, %v656
  %v1007 = vpack.c.b16 %v682, %v657
  %v1008 = vpack.c.b16 %v683, %v658
  %v1009 = vpack.c.b16 %v684, %v659
  %v1010 = vpack.c.b16 %v685, %v660
  %v1011 = vpack.c.b16 %v686, %v661
  %v1012 = vpack.c.b16 %v687, %v662
  %v1013 = vpack.c.b16 %v688, %v663
  %v1014 = vpack.c.b16 %v689, %v664
  %v1015 = vpack.c.b16 %v690, %v665
  %v1016 = vpack.c.b16 %v691, %v666
  %v1017 = vpack.c.b16 %v717, %v692
  %v1018 = vpack.c.b16 %v718, %v693
  %v1019 = vpack.c.b16 %v719, %v694
  %v1020 = vpack.c.b16 %v720, %v695
  %v1021 = vpack.c.b16 %v721, %v696
  %v1022 = vpack.c.b16 %v722, %v697
  %v1023 = vpack.c.b16 %v723, %v698
  %v1024 = vpack.c.b16 %v724, %v699
  %v1025 = vpack.c.b16 %v725, %v700
  %v1026 = vpack.c.b16 %v726, %v701
  %v1027 = vpack.c.b16 %v727, %v702
  %v1028 = vpack.c.b16 %v728, %v703
  %v1029 = vpack.c.b16 %v729, %v704
  %v1030 = vpack.c.b16 %v730, %v705
  %v1031 = vpack.c.b16 %v731, %v706
  %v1032 = vpack.c.b16 %v732, %v707
  %v1033 = vpack.c.b16 %v733, %v708
  %v1034 = vpack.c.b16 %v734, %v709
  %v1035 = vpack.c.b16 %v735, %v710
  %v1036 = vpack.c.b16 %v736, %v711
  %v1037 = vpack.c.b16 %v737, %v712
  %v1038 = vpack.c.b16 %v738, %v713
  %v1039 = vpack.c.b16 %v739, %v714
  %v1040 = vpack.c.b16 %v740, %v715
  %v1041 = vpack.c.b16 %v741, %v716
  %v1042 = vpack.c.b16 %v767, %v742
  %v1043 = vpack.c.b16 %v768, %v743
  %v1044 = vpack.c.b16 %v769, %v744
  %v1045 = vpack.c.b16 %v770, %v745
  %v1046 = vpack.c.b16 %v771, %v746
  %v1047 = vpack.c.b16 %v772, %v747
  %v1048 = vpack.c.b16 %v773, %v748
  %v1049 = vpack.c.b16 %v774, %v749
  %v1050 = vpack.c.b16 %v775, %v750
  %v1051 = vpack.c.b16 %v776, %v751
  %v1052 = vpack.c.b16 %v777, %v752
  %v1053 = vpack.c.b16 %v778, %v753
  %v1054 = vpack.c.b16 %v779, %v754
  %v1055 = vpack.c.b16 %v780, %v755
  %v1056 = vpack.c.b16 %v781, %v756
  %v1057 = vpack.c.b16 %v782, %v757
  %v1058 = vpack.c.b16 %v783, %v758
  %v1059 = vpack.c.b16 %v784, %v759
  %v1060 = vpack.c.b16 %v785, %v760
  %v1061 = vpack.c.b16 %v786, %v761
  %v1062 = vpack.c.b16 %v787, %v762
  %v1063 = vpack.c.b16 %v788, %v763
  %v1064 = vpack.c.b16 %v789, %v764
  %v1065 = vpack.c.b16 %v790, %v765
  %v1066 = vpack.c.b16 %v791, %v766
  %v1067 = vpack.c.b16 %v817, %v792
  %v1068 = vpack.c.b16 %v818, %v793
  %v1069 = vpack.c.b16 %v819, %v794
  %v1070 = vpack.c.b16 %v820, %v795
  %v1071 = vpack.c.b16 %v821, %v796
  %v1072 = vpack.c.b16 %v822, %v797
  %v1073 = vpack.c.b16 %v823, %v798
  %v1074 = vpack.c.b16 %v824, %v799
  %v1075 = vpack.c.b16 %v825, %v800
  %v1076 = vpack.c.b16 %v826, %v801
  %v1077 = vpack.c.b16 %v827, %v802
  %v1078 = vpack.c.b16 %v828, %v803
  %v1079 = vpack.c.b16 %v829, %v804
  %v1080 = vpack.c.b16 %v830, %v805
  %v1081 = vpack.c.b16 %v831, %v806
  %v1082 = vpack.c.b16 %v832, %v807
  %v1083 = vpack.c.b16 %v833, %v808
  %v1084 = vpack.c.b16 %v834, %v809
  %v1085 = vpack.c.b16 %v835, %v810
  %v1086 = vpack.c.b16 %v836, %v811
  %v1087 = vpack.c.b16 %v837, %v812
  %v1088 = vpack.c.b16 %v838, %v813
  %v1089 = vpack.c.b16 %v839, %v814
  %v1090 = vpack.c.b16 %v840, %v815
  %v1091 = vpack.c.b16 %v841, %v816
  %v1092 = vpack.c.b16 %v867, %v842
  %v1093 = vpack.c.b16 %v868, %v843
  %v1094 = vpack.c.b16 %v869, %v844
  %v1095 = vpack.c.b16 %v870, %v845
  %v1096 = vpack.c.b16 %v871, %v846
  %v1097 = vpack.c.b16 %v872, %v847
  %v1098 = vpack.c.b16 %v873, %v848
  %v1099 = vpack.c.b16 %v874, %v849
  %v1100 = vpack.c.b16 %v875, %v850
  %v1101 = vpack.c.b16 %v876, %v851
  %v1102 = vpack.c.b16 %v877, %v852
  %v1103 = vpack.c.b16 %v878, %v853
  %v1104 = vpack.c.b16 %v879, %v854
  %v1105 = vpack.c.b16 %v880, %v855
  %v1106 = vpack.c.b16 %v881, %v856
  %v1107 = vpack.c.b16 %v882, %v857
  %v1108 = vpack.c.b16 %v883, %v858
  %v1109 = vpack.c.b16 %v884, %v859
  %v1110 = vpack.c.b16 %v885, %v860
  %v1111 = vpack.c.b16 %v886, %v861
  %v1112 = vpack.c.b16 %v887, %v862
  %v1113 = vpack.c.b16 %v888, %v863
  %v1114 = vpack.c.b16 %v889, %v864
  %v1115 = vpack.c.b16 %v890, %v865
  %v1116 = vpack.c.b16 %v891, %v866
  %v1117 = vpack.c.b16 %v917, %v892
  %v1118 = vpack.c.b16 %v918, %v893
  %v1119 = vpack.c.b16 %v919, %v894
  %v1120 = vpack.c.b16 %v920, %v895
  %v1121 = vpack.c.b16 %v921, %v896
  %v1122 = vpack.c.b16 %v922, %v897
  %v1123 = vpack.c.b16 %v923, %v898
  %v1124 = vpack.c.b16 %v924, %v899
  %v1125 = vpack.c.b16 %v925, %v900
  %v1126 = vpack.c.b16 %v926, %v901
  %v1127 = vpack.c.b16 %v927, %v902
  %v1128 = vpack.c.b16 %v928, %v903
  %v1129 = vpack.c.b16 %v929, %v904
  %v1130 = vpack.c.b16 %v930, %v905
  %v1131 = vpack.c.b16 %v931, %v906
  %v1132 = vpack.c.b16 %v932, %v907
  %v1133 = vpack.c.b16 %v933, %v908
  %v1134 = vpack.c.b16 %v934, %v909
  %v1135 = vpack.c.b16 %v935, %v910
  %v1136 = vpack.c.b16 %v936, %v911
  %v1137 = vpack.c.b16 %v937, %v912
  %v1138 = vpack.c.b16 %v938, %v913
  %v1139 = vpack.c.b16 %v939, %v914
  %v1140 = vpack.c.b16 %v940, %v915
  %v1141 = vpack.c.b16 %v941, %v916
  %1342 = vmatpush.bf16.msra.mxu0 %v1117
  %1343 = vmatpush.bf16.msra.mxu0 %v1092
  %1344 = vmatpush.bf16.msra.mxu0 %v1067
  %1345 = vmatpush.bf16.msra.mxu0 %v1042
  %1346 = vmatpush.bf16.msra.mxu0 %v1017
  %1347 = vmatpush.bf16.msra.mxu0 %v992
  %1348 = vmatpush.bf16.msra.mxu0 %v967
  %1349 = vmatpush.bf16.msra.mxu0 %v942
  %1350 = vmatmul.bf16.gmra.mxu0 %v332
  %v1351 = vpop.f32.mrf.mxu0
  %v1352 = vadd.f32 0.0, %v1351
  %v1353 = vpop.f32.mrf.mxu0
  %v1354 = vadd.f32 0.0, %v1353
  %1355 = vdwg.mxu0
  %1356 = vmatpush.bf16.msra.mxu0 %v1118
  %1357 = vmatpush.bf16.msra.mxu0 %v1093
  %1358 = vmatpush.bf16.msra.mxu0 %v1068
  %1359 = vmatpush.bf16.msra.mxu0 %v1043
  %1360 = vmatpush.bf16.msra.mxu0 %v1018
  %1361 = vmatpush.bf16.msra.mxu0 %v993
  %1362 = vmatpush.bf16.msra.mxu0 %v968
  %1363 = vmatpush.bf16.msra.mxu0 %v943
  %1364 = vmatmul.bf16.gmra.mxu0 %v332
  %v1365 = vpop.f32.mrf.mxu0
  %v1366 = vadd.f32 0.0, %v1365
  %v1367 = vpop.f32.mrf.mxu0
  %v1368 = vadd.f32 0.0, %v1367
  %1369 = vdwg.mxu0
  %1370 = vmatpush.bf16.msra.mxu0 %v1119
  %1371 = vmatpush.bf16.msra.mxu0 %v1094
  %1372 = vmatpush.bf16.msra.mxu0 %v1069
  %1373 = vmatpush.bf16.msra.mxu0 %v1044
  %1374 = vmatpush.bf16.msra.mxu0 %v1019
  %1375 = vmatpush.bf16.msra.mxu0 %v994
  %1376 = vmatpush.bf16.msra.mxu0 %v969
  %1377 = vmatpush.bf16.msra.mxu0 %v944
  %1378 = vmatmul.bf16.gmra.mxu0 %v332
  %v1379 = vpop.f32.mrf.mxu0
  %v1380 = vadd.f32 0.0, %v1379
  %v1381 = vpop.f32.mrf.mxu0
  %v1382 = vadd.f32 0.0, %v1381
  %1383 = vdwg.mxu0
  %1384 = vmatpush.bf16.msra.mxu0 %v1120
  %1385 = vmatpush.bf16.msra.mxu0 %v1095
  %1386 = vmatpush.bf16.msra.mxu0 %v1070
  %1387 = vmatpush.bf16.msra.mxu0 %v1045
  %1388 = vmatpush.bf16.msra.mxu0 %v1020
  %1389 = vmatpush.bf16.msra.mxu0 %v995
  %1390 = vmatpush.bf16.msra.mxu0 %v970
  %1391 = vmatpush.bf16.msra.mxu0 %v945
  %1392 = vmatmul.bf16.gmra.mxu0 %v332
  %v1393 = vpop.f32.mrf.mxu0
  %v1394 = vadd.f32 0.0, %v1393
  %v1395 = vpop.f32.mrf.mxu0
  %v1396 = vadd.f32 0.0, %v1395
  %1397 = vdwg.mxu0
  %1398 = vmatpush.bf16.msra.mxu0 %v1121
  %1399 = vmatpush.bf16.msra.mxu0 %v1096
  %1400 = vmatpush.bf16.msra.mxu0 %v1071
  %1401 = vmatpush.bf16.msra.mxu0 %v1046
  %1402 = vmatpush.bf16.msra.mxu0 %v1021
  %1403 = vmatpush.bf16.msra.mxu0 %v996
  %1404 = vmatpush.bf16.msra.mxu0 %v971
  %1405 = vmatpush.bf16.msra.mxu0 %v946
  %1406 = vmatmul.bf16.gmra.mxu0 %v332
  %v1407 = vpop.f32.mrf.mxu0
  %v1408 = vadd.f32 0.0, %v1407
  %v1409 = vpop.f32.mrf.mxu0
  %v1410 = vadd.f32 0.0, %v1409
  %1411 = vdwg.mxu0
  %1412 = vmatpush.bf16.msra.mxu0 %v1122
  %1413 = vmatpush.bf16.msra.mxu0 %v1097
  %1414 = vmatpush.bf16.msra.mxu0 %v1072
  %1415 = vmatpush.bf16.msra.mxu0 %v1047
  %1416 = vmatpush.bf16.msra.mxu0 %v1022
  %1417 = vmatpush.bf16.msra.mxu0 %v997
  %1418 = vmatpush.bf16.msra.mxu0 %v972
  %1419 = vmatpush.bf16.msra.mxu0 %v947
  %1420 = vmatmul.bf16.gmra.mxu0 %v332
  %v1421 = vpop.f32.mrf.mxu0
  %v1422 = vadd.f32 0.0, %v1421
  %v1423 = vpop.f32.mrf.mxu0
  %v1424 = vadd.f32 0.0, %v1423
  %1425 = vdwg.mxu0
  %1426 = vmatpush.bf16.msra.mxu0 %v1123
  %1427 = vmatpush.bf16.msra.mxu0 %v1098
  %1428 = vmatpush.bf16.msra.mxu0 %v1073
  %1429 = vmatpush.bf16.msra.mxu0 %v1048
  %1430 = vmatpush.bf16.msra.mxu0 %v1023
  %1431 = vmatpush.bf16.msra.mxu0 %v998
  %1432 = vmatpush.bf16.msra.mxu0 %v973
  %1433 = vmatpush.bf16.msra.mxu0 %v948
  %1434 = vmatmul.bf16.gmra.mxu0 %v332
  %v1435 = vpop.f32.mrf.mxu0
  %v1436 = vadd.f32 0.0, %v1435
  %v1437 = vpop.f32.mrf.mxu0
  %v1438 = vadd.f32 0.0, %v1437
  %1439 = vdwg.mxu0
  %1440 = vmatpush.bf16.msra.mxu0 %v1124
  %1441 = vmatpush.bf16.msra.mxu0 %v1099
  %1442 = vmatpush.bf16.msra.mxu0 %v1074
  %1443 = vmatpush.bf16.msra.mxu0 %v1049
  %1444 = vmatpush.bf16.msra.mxu0 %v1024
  %1445 = vmatpush.bf16.msra.mxu0 %v999
  %1446 = vmatpush.bf16.msra.mxu0 %v974
  %1447 = vmatpush.bf16.msra.mxu0 %v949
  %1448 = vmatmul.bf16.gmra.mxu0 %v332
  %v1449 = vpop.f32.mrf.mxu0
  %v1450 = vadd.f32 0.0, %v1449
  %v1451 = vpop.f32.mrf.mxu0
  %v1452 = vadd.f32 0.0, %v1451
  %1453 = vdwg.mxu0
  %1454 = vmatpush.bf16.msra.mxu0 %v1125
  %1455 = vmatpush.bf16.msra.mxu0 %v1100
  %1456 = vmatpush.bf16.msra.mxu0 %v1075
  %1457 = vmatpush.bf16.msra.mxu0 %v1050
  %1458 = vmatpush.bf16.msra.mxu0 %v1025
  %1459 = vmatpush.bf16.msra.mxu0 %v1000
  %1460 = vmatpush.bf16.msra.mxu0 %v975
  %1461 = vmatpush.bf16.msra.mxu0 %v950
  %1462 = vmatmul.bf16.gmra.mxu0 %v332
  %v1463 = vpop.f32.mrf.mxu0
  %v1464 = vadd.f32 0.0, %v1463
  %v1465 = vpop.f32.mrf.mxu0
  %v1466 = vadd.f32 0.0, %v1465
  %1467 = vdwg.mxu0
  %1468 = vmatpush.bf16.msra.mxu0 %v1126
  %1469 = vmatpush.bf16.msra.mxu0 %v1101
  %1470 = vmatpush.bf16.msra.mxu0 %v1076
  %1471 = vmatpush.bf16.msra.mxu0 %v1051
  %1472 = vmatpush.bf16.msra.mxu0 %v1026
  %1473 = vmatpush.bf16.msra.mxu0 %v1001
  %1474 = vmatpush.bf16.msra.mxu0 %v976
  %1475 = vmatpush.bf16.msra.mxu0 %v951
  %1476 = vmatmul.bf16.gmra.mxu0 %v332
  %v1477 = vpop.f32.mrf.mxu0
  %v1478 = vadd.f32 0.0, %v1477
  %v1479 = vpop.f32.mrf.mxu0
  %v1480 = vadd.f32 0.0, %v1479
  %1481 = vdwg.mxu0
  %1482 = vmatpush.bf16.msra.mxu0 %v1127
  %1483 = vmatpush.bf16.msra.mxu0 %v1102
  %1484 = vmatpush.bf16.msra.mxu0 %v1077
  %1485 = vmatpush.bf16.msra.mxu0 %v1052
  %1486 = vmatpush.bf16.msra.mxu0 %v1027
  %1487 = vmatpush.bf16.msra.mxu0 %v1002
  %1488 = vmatpush.bf16.msra.mxu0 %v977
  %1489 = vmatpush.bf16.msra.mxu0 %v952
  %1490 = vmatmul.bf16.gmra.mxu0 %v332
  %v1491 = vpop.f32.mrf.mxu0
  %v1492 = vadd.f32 0.0, %v1491
  %v1493 = vpop.f32.mrf.mxu0
  %v1494 = vadd.f32 0.0, %v1493
  %1495 = vdwg.mxu0
  %1496 = vmatpush.bf16.msra.mxu0 %v1128
  %1497 = vmatpush.bf16.msra.mxu0 %v1103
  %1498 = vmatpush.bf16.msra.mxu0 %v1078
  %1499 = vmatpush.bf16.msra.mxu0 %v1053
  %1500 = vmatpush.bf16.msra.mxu0 %v1028
  %1501 = vmatpush.bf16.msra.mxu0 %v1003
  %1502 = vmatpush.bf16.msra.mxu0 %v978
  %1503 = vmatpush.bf16.msra.mxu0 %v953
  %1504 = vmatmul.bf16.gmra.mxu0 %v332
  %v1505 = vpop.f32.mrf.mxu0
  %v1506 = vadd.f32 0.0, %v1505
  %v1507 = vpop.f32.mrf.mxu0
  %v1508 = vadd.f32 0.0, %v1507
  %1509 = vdwg.mxu0
  %1510 = vmatpush.bf16.msra.mxu0 %v1129
  %1511 = vmatpush.bf16.msra.mxu0 %v1104
  %1512 = vmatpush.bf16.msra.mxu0 %v1079
  %1513 = vmatpush.bf16.msra.mxu0 %v1054
  %1514 = vmatpush.bf16.msra.mxu0 %v1029
  %1515 = vmatpush.bf16.msra.mxu0 %v1004
  %1516 = vmatpush.bf16.msra.mxu0 %v979
  %1517 = vmatpush.bf16.msra.mxu0 %v954
  %1518 = vmatmul.bf16.gmra.mxu0 %v332
  %v1519 = vpop.f32.mrf.mxu0
  %v1520 = vadd.f32 0.0, %v1519
  %v1521 = vpop.f32.mrf.mxu0
  %v1522 = vadd.f32 0.0, %v1521
  %1523 = vdwg.mxu0
  %1524 = vmatpush.bf16.msra.mxu0 %v1130
  %1525 = vmatpush.bf16.msra.mxu0 %v1105
  %1526 = vmatpush.bf16.msra.mxu0 %v1080
  %1527 = vmatpush.bf16.msra.mxu0 %v1055
  %1528 = vmatpush.bf16.msra.mxu0 %v1030
  %1529 = vmatpush.bf16.msra.mxu0 %v1005
  %1530 = vmatpush.bf16.msra.mxu0 %v980
  %1531 = vmatpush.bf16.msra.mxu0 %v955
  %1532 = vmatmul.bf16.gmra.mxu0 %v332
  %v1533 = vpop.f32.mrf.mxu0
  %v1534 = vadd.f32 0.0, %v1533
  %v1535 = vpop.f32.mrf.mxu0
  %v1536 = vadd.f32 0.0, %v1535
  %1537 = vdwg.mxu0
  %1538 = vmatpush.bf16.msra.mxu0 %v1131
  %1539 = vmatpush.bf16.msra.mxu0 %v1106
  %1540 = vmatpush.bf16.msra.mxu0 %v1081
  %1541 = vmatpush.bf16.msra.mxu0 %v1056
  %1542 = vmatpush.bf16.msra.mxu0 %v1031
  %1543 = vmatpush.bf16.msra.mxu0 %v1006
  %1544 = vmatpush.bf16.msra.mxu0 %v981
  %1545 = vmatpush.bf16.msra.mxu0 %v956
  %1546 = vmatmul.bf16.gmra.mxu0 %v332
  %v1547 = vpop.f32.mrf.mxu0
  %v1548 = vadd.f32 0.0, %v1547
  %v1549 = vpop.f32.mrf.mxu0
  %v1550 = vadd.f32 0.0, %v1549
  %1551 = vdwg.mxu0
  %1552 = vmatpush.bf16.msra.mxu0 %v1132
  %1553 = vmatpush.bf16.msra.mxu0 %v1107
  %1554 = vmatpush.bf16.msra.mxu0 %v1082
  %1555 = vmatpush.bf16.msra.mxu0 %v1057
  %1556 = vmatpush.bf16.msra.mxu0 %v1032
  %1557 = vmatpush.bf16.msra.mxu0 %v1007
  %1558 = vmatpush.bf16.msra.mxu0 %v982
  %1559 = vmatpush.bf16.msra.mxu0 %v957
  %1560 = vmatmul.bf16.gmra.mxu0 %v332
  %v1561 = vpop.f32.mrf.mxu0
  %v1562 = vadd.f32 0.0, %v1561
  %v1563 = vpop.f32.mrf.mxu0
  %v1564 = vadd.f32 0.0, %v1563
  %1565 = vdwg.mxu0
  %1566 = vmatpush.bf16.msra.mxu0 %v1133
  %1567 = vmatpush.bf16.msra.mxu0 %v1108
  %1568 = vmatpush.bf16.msra.mxu0 %v1083
  %1569 = vmatpush.bf16.msra.mxu0 %v1058
  %1570 = vmatpush.bf16.msra.mxu0 %v1033
  %1571 = vmatpush.bf16.msra.mxu0 %v1008
  %1572 = vmatpush.bf16.msra.mxu0 %v983
  %1573 = vmatpush.bf16.msra.mxu0 %v958
  %1574 = vmatmul.bf16.gmra.mxu0 %v332
  %v1575 = vpop.f32.mrf.mxu0
  %v1576 = vadd.f32 0.0, %v1575
  %v1577 = vpop.f32.mrf.mxu0
  %v1578 = vadd.f32 0.0, %v1577
  %1579 = vdwg.mxu0
  %1580 = vmatpush.bf16.msra.mxu0 %v1134
  %1581 = vmatpush.bf16.msra.mxu0 %v1109
  %1582 = vmatpush.bf16.msra.mxu0 %v1084
  %1583 = vmatpush.bf16.msra.mxu0 %v1059
  %1584 = vmatpush.bf16.msra.mxu0 %v1034
  %1585 = vmatpush.bf16.msra.mxu0 %v1009
  %1586 = vmatpush.bf16.msra.mxu0 %v984
  %1587 = vmatpush.bf16.msra.mxu0 %v959
  %1588 = vmatmul.bf16.gmra.mxu0 %v332
  %v1589 = vpop.f32.mrf.mxu0
  %v1590 = vadd.f32 0.0, %v1589
  %v1591 = vpop.f32.mrf.mxu0
  %v1592 = vadd.f32 0.0, %v1591
  %1593 = vdwg.mxu0
  %1594 = vmatpush.bf16.msra.mxu0 %v1135
  %1595 = vmatpush.bf16.msra.mxu0 %v1110
  %1596 = vmatpush.bf16.msra.mxu0 %v1085
  %1597 = vmatpush.bf16.msra.mxu0 %v1060
  %1598 = vmatpush.bf16.msra.mxu0 %v1035
  %1599 = vmatpush.bf16.msra.mxu0 %v1010
  %1600 = vmatpush.bf16.msra.mxu0 %v985
  %1601 = vmatpush.bf16.msra.mxu0 %v960
  %1602 = vmatmul.bf16.gmra.mxu0 %v332
  %v1603 = vpop.f32.mrf.mxu0
  %v1604 = vadd.f32 0.0, %v1603
  %v1605 = vpop.f32.mrf.mxu0
  %v1606 = vadd.f32 0.0, %v1605
  %1607 = vdwg.mxu0
  %1608 = vmatpush.bf16.msra.mxu0 %v1136
  %1609 = vmatpush.bf16.msra.mxu0 %v1111
  %1610 = vmatpush.bf16.msra.mxu0 %v1086
  %1611 = vmatpush.bf16.msra.mxu0 %v1061
  %1612 = vmatpush.bf16.msra.mxu0 %v1036
  %1613 = vmatpush.bf16.msra.mxu0 %v1011
  %1614 = vmatpush.bf16.msra.mxu0 %v986
  %1615 = vmatpush.bf16.msra.mxu0 %v961
  %1616 = vmatmul.bf16.gmra.mxu0 %v332
  %v1617 = vpop.f32.mrf.mxu0
  %v1618 = vadd.f32 0.0, %v1617
  %v1619 = vpop.f32.mrf.mxu0
  %v1620 = vadd.f32 0.0, %v1619
  %1621 = vdwg.mxu0
  %1622 = vmatpush.bf16.msra.mxu0 %v1137
  %1623 = vmatpush.bf16.msra.mxu0 %v1112
  %1624 = vmatpush.bf16.msra.mxu0 %v1087
  %1625 = vmatpush.bf16.msra.mxu0 %v1062
  %1626 = vmatpush.bf16.msra.mxu0 %v1037
  %1627 = vmatpush.bf16.msra.mxu0 %v1012
  %1628 = vmatpush.bf16.msra.mxu0 %v987
  %1629 = vmatpush.bf16.msra.mxu0 %v962
  %1630 = vmatmul.bf16.gmra.mxu0 %v332
  %v1631 = vpop.f32.mrf.mxu0
  %v1632 = vadd.f32 0.0, %v1631
  %v1633 = vpop.f32.mrf.mxu0
  %v1634 = vadd.f32 0.0, %v1633
  %1635 = vdwg.mxu0
  %1636 = vmatpush.bf16.msra.mxu0 %v1138
  %1637 = vmatpush.bf16.msra.mxu0 %v1113
  %1638 = vmatpush.bf16.msra.mxu0 %v1088
  %1639 = vmatpush.bf16.msra.mxu0 %v1063
  %1640 = vmatpush.bf16.msra.mxu0 %v1038
  %1641 = vmatpush.bf16.msra.mxu0 %v1013
  %1642 = vmatpush.bf16.msra.mxu0 %v988
  %1643 = vmatpush.bf16.msra.mxu0 %v963
  %1644 = vmatmul.bf16.gmra.mxu0 %v332
  %v1645 = vpop.f32.mrf.mxu0
  %v1646 = vadd.f32 0.0, %v1645
  %v1647 = vpop.f32.mrf.mxu0
  %v1648 = vadd.f32 0.0, %v1647
  %1649 = vdwg.mxu0
  %1650 = vmatpush.bf16.msra.mxu0 %v1139
  %1651 = vmatpush.bf16.msra.mxu0 %v1114
  %1652 = vmatpush.bf16.msra.mxu0 %v1089
  %1653 = vmatpush.bf16.msra.mxu0 %v1064
  %1654 = vmatpush.bf16.msra.mxu0 %v1039
  %1655 = vmatpush.bf16.msra.mxu0 %v1014
  %1656 = vmatpush.bf16.msra.mxu0 %v989
  %1657 = vmatpush.bf16.msra.mxu0 %v964
  %1658 = vmatmul.bf16.gmra.mxu0 %v332
  %v1659 = vpop.f32.mrf.mxu0
  %v1660 = vadd.f32 0.0, %v1659
  %v1661 = vpop.f32.mrf.mxu0
  %v1662 = vadd.f32 0.0, %v1661
  %1663 = vdwg.mxu0
  %1664 = vmatpush.bf16.msra.mxu0 %v1140
  %1665 = vmatpush.bf16.msra.mxu0 %v1115
  %1666 = vmatpush.bf16.msra.mxu0 %v1090
  %1667 = vmatpush.bf16.msra.mxu0 %v1065
  %1668 = vmatpush.bf16.msra.mxu0 %v1040
  %1669 = vmatpush.bf16.msra.mxu0 %v1015
  %1670 = vmatpush.bf16.msra.mxu0 %v990
  %1671 = vmatpush.bf16.msra.mxu0 %v965
  %1672 = vmatmul.bf16.gmra.mxu0 %v332
  %v1673 = vpop.f32.mrf.mxu0
  %v1674 = vadd.f32 0.0, %v1673
  %v1675 = vpop.f32.mrf.mxu0
  %v1676 = vadd.f32 0.0, %v1675
  %1677 = vdwg.mxu0
  %1678 = vmatpush.bf16.msra.mxu0 %v1141
  %1679 = vmatpush.bf16.msra.mxu0 %v1116
  %1680 = vmatpush.bf16.msra.mxu0 %v1091
  %1681 = vmatpush.bf16.msra.mxu0 %v1066
  %1682 = vmatpush.bf16.msra.mxu0 %v1041
  %1683 = vmatpush.bf16.msra.mxu0 %v1016
  %1684 = vmatpush.bf16.msra.mxu0 %v991
  %1685 = vmatpush.bf16.msra.mxu0 %v966
  %1686 = vmatmul.bf16.gmra.mxu0 %v332
  %v1687 = vpop.f32.mrf.mxu0
  %v1688 = vadd.f32 0.0, %v1687
  %v1689 = vpop.f32.mrf.mxu0
  %v1690 = vadd.f32 0.0, %v1689
  %1691 = vdwg.mxu0
  %v1692 = vadd.f32 %v68, %v1352
  %v1693 = vadd.f32 %v69, %v1366
  %v1694 = vadd.f32 %v70, %v1380
  %v1695 = vadd.f32 %v71, %v1394
  %v1696 = vadd.f32 %v72, %v1408
  %v1697 = vadd.f32 %v73, %v1422
  %v1698 = vadd.f32 %v74, %v1436
  %v1699 = vadd.f32 %v75, %v1450
  %v1700 = vadd.f32 %v76, %v1464
  %v1701 = vadd.f32 %v77, %v1478
  %v1702 = vadd.f32 %v78, %v1492
  %v1703 = vadd.f32 %v79, %v1506
  %v1704 = vadd.f32 %v80, %v1520
  %v1705 = vadd.f32 %v81, %v1534
  %v1706 = vadd.f32 %v82, %v1548
  %v1707 = vadd.f32 %v83, %v1562
  %v1708 = vadd.f32 %v84, %v1576
  %v1709 = vadd.f32 %v85, %v1590
  %v1710 = vadd.f32 %v86, %v1604
  %v1711 = vadd.f32 %v87, %v1618
  %v1712 = vadd.f32 %v88, %v1632
  %v1713 = vadd.f32 %v89, %v1646
  %v1714 = vadd.f32 %v90, %v1660
  %v1715 = vadd.f32 %v91, %v1674
  %v1716 = vadd.f32 %v92, %v1688
  %v1717 = vadd.f32 %v93, %v1354
  %v1718 = vadd.f32 %v94, %v1368
  %v1719 = vadd.f32 %v95, %v1382
  %v1720 = vadd.f32 %v96, %v1396
  %v1721 = vadd.f32 %v97, %v1410
  %v1722 = vadd.f32 %v98, %v1424
  %v1723 = vadd.f32 %v99, %v1438
  %v1724 = vadd.f32 %v100, %v1452
  %v1725 = vadd.f32 %v101, %v1466
  %v1726 = vadd.f32 %v102, %v1480
  %v1727 = vadd.f32 %v103, %v1494
  %v1728 = vadd.f32 %v104, %v1508
  %v1729 = vadd.f32 %v105, %v1522
  %v1730 = vadd.f32 %v106, %v1536
  %v1731 = vadd.f32 %v107, %v1550
  %v1732 = vadd.f32 %v108, %v1564
  %v1733 = vadd.f32 %v109, %v1578
  %v1734 = vadd.f32 %v110, %v1592
  %v1735 = vadd.f32 %v111, %v1606
  %v1736 = vadd.f32 %v112, %v1620
  %v1737 = vadd.f32 %v113, %v1634
  %v1738 = vadd.f32 %v114, %v1648
  %v1739 = vadd.f32 %v115, %v1662
  %v1740 = vadd.f32 %v116, %v1676
  %v1741 = vadd.f32 %v117, %v1690
  %1742 = vst [vmem:[#allocation2] sm:$0xff] %v1692
  %1743 = vst [vmem:[#allocation2 + $0x8] sm:$0xff] %v1693
  %1744 = vst [vmem:[#allocation2 + $0x10] sm:$0xff] %v1694
  %1745 = vst [vmem:[#allocation2 + $0x18] sm:$0xff] %v1695
  %1746 = vst [vmem:[#allocation2 + $0x20] sm:$0xff] %v1696
  %1747 = vst [vmem:[#allocation2 + $0x28] sm:$0xff] %v1697
  %1748 = vst [vmem:[#allocation2 + $0x30] sm:$0xff] %v1698
  %1749 = vst [vmem:[#allocation2 + $0x38] sm:$0xff] %v1699
  %1750 = vst [vmem:[#allocation2 + $0x40] sm:$0xff] %v1700
  %1751 = vst [vmem:[#allocation2 + $0x48] sm:$0xff] %v1701
  %1752 = vst [vmem:[#allocation2 + $0x50] sm:$0xff] %v1702
  %1753 = vst [vmem:[#allocation2 + $0x58] sm:$0xff] %v1703
  %1754 = vst [vmem:[#allocation2 + $0x60] sm:$0xff] %v1704
  %1755 = vst [vmem:[#allocation2 + $0x68] sm:$0xff] %v1705
  %1756 = vst [vmem:[#allocation2 + $0x70] sm:$0xff] %v1706
  %1757 = vst [vmem:[#allocation2 + $0x78] sm:$0xff] %v1707
  %1758 = vst [vmem:[#allocation2 + $0x80] sm:$0xff] %v1708
  %1759 = vst [vmem:[#allocation2 + $0x88] sm:$0xff] %v1709
  %1760 = vst [vmem:[#allocation2 + $0x90] sm:$0xff] %v1710
  %1761 = vst [vmem:[#allocation2 + $0x98] sm:$0xff] %v1711
  %1762 = vst [vmem:[#allocation2 + $0xa0] sm:$0xff] %v1712
  %1763 = vst [vmem:[#allocation2 + $0xa8] sm:$0xff] %v1713
  %1764 = vst [vmem:[#allocation2 + $0xb0] sm:$0xff] %v1714
  %1765 = vst [vmem:[#allocation2 + $0xb8] sm:$0xff] %v1715
  %1766 = vst [vmem:[#allocation2 + $0xc0] sm:$0xff] %v1716
  %1767 = vst [vmem:[#allocation2 + $0xc8] sm:$0xff] %v1717
  %1768 = vst [vmem:[#allocation2 + $0xd0] sm:$0xff] %v1718
  %1769 = vst [vmem:[#allocation2 + $0xd8] sm:$0xff] %v1719
  %1770 = vst [vmem:[#allocation2 + $0xe0] sm:$0xff] %v1720
  %1771 = vst [vmem:[#allocation2 + $0xe8] sm:$0xff] %v1721
  %1772 = vst [vmem:[#allocation2 + $0xf0] sm:$0xff] %v1722
  %1773 = vst [vmem:[#allocation2 + $0xf8] sm:$0xff] %v1723
  %1774 = vst [vmem:[#allocation2 + $0x100] sm:$0xff] %v1724
  %1775 = vst [vmem:[#allocation2 + $0x108] sm:$0xff] %v1725
  %1776 = vst [vmem:[#allocation2 + $0x110] sm:$0xff] %v1726
  %1777 = vst [vmem:[#allocation2 + $0x118] sm:$0xff] %v1727
  %1778 = vst [vmem:[#allocation2 + $0x120] sm:$0xff] %v1728
  %1779 = vst [vmem:[#allocation2 + $0x128] sm:$0xff] %v1729
  %1780 = vst [vmem:[#allocation2 + $0x130] sm:$0xff] %v1730
  %1781 = vst [vmem:[#allocation2 + $0x138] sm:$0xff] %v1731
  %1782 = vst [vmem:[#allocation2 + $0x140] sm:$0xff] %v1732
  %1783 = vst [vmem:[#allocation2 + $0x148] sm:$0xff] %v1733
  %1784 = vst [vmem:[#allocation2 + $0x150] sm:$0xff] %v1734
  %1785 = vst [vmem:[#allocation2 + $0x158] sm:$0xff] %v1735
  %1786 = vst [vmem:[#allocation2 + $0x160] sm:$0xff] %v1736
  %1787 = vst [vmem:[#allocation2 + $0x168] sm:$0xff] %v1737
  %1788 = vst [vmem:[#allocation2 + $0x170] sm:$0xff] %v1738
  %1789 = vst [vmem:[#allocation2 + $0x178] sm:$0xff] %v1739
  %1790 = vst [vmem:[#allocation2 + $0x180] sm:$0xff] %v1740
  %1791 = vst [vmem:[#allocation2 + $0x188] sm:$0xff] %v1741
  %v1792 = vld [vmem:[#allocation2] sm:$0xff]
  %v1793 = vld [vmem:[#allocation2 + $0x8] sm:$0xff]
  %v1794 = vld [vmem:[#allocation2 + $0x10] sm:$0xff]
  %v1795 = vld [vmem:[#allocation2 + $0x18] sm:$0xff]
  %v1796 = vld [vmem:[#allocation2 + $0x20] sm:$0xff]
  %v1797 = vld [vmem:[#allocation2 + $0x28] sm:$0xff]
  %v1798 = vld [vmem:[#allocation2 + $0x30] sm:$0xff]
  %v1799 = vld [vmem:[#allocation2 + $0x38] sm:$0xff]
  %v1800 = vld [vmem:[#allocation2 + $0x40] sm:$0xff]
  %v1801 = vld [vmem:[#allocation2 + $0x48] sm:$0xff]
  %v1802 = vld [vmem:[#allocation2 + $0x50] sm:$0xff]
  %v1803 = vld [vmem:[#allocation2 + $0x58] sm:$0xff]
  %v1804 = vld [vmem:[#allocation2 + $0x60] sm:$0xff]
  %v1805 = vld [vmem:[#allocation2 + $0x68] sm:$0xff]
  %v1806 = vld [vmem:[#allocation2 + $0x70] sm:$0xff]
  %v1807 = vld [vmem:[#allocation2 + $0x78] sm:$0xff]
  %v1808 = vld [vmem:[#allocation2 + $0x80] sm:$0xff]
  %v1809 = vld [vmem:[#allocation2 + $0x88] sm:$0xff]
  %v1810 = vld [vmem:[#allocation2 + $0x90] sm:$0xff]
  %v1811 = vld [vmem:[#allocation2 + $0x98] sm:$0xff]
  %v1812 = vld [vmem:[#allocation2 + $0xa0] sm:$0xff]
  %v1813 = vld [vmem:[#allocation2 + $0xa8] sm:$0xff]
  %v1814 = vld [vmem:[#allocation2 + $0xb0] sm:$0xff]
  %v1815 = vld [vmem:[#allocation2 + $0xb8] sm:$0xff]
  %v1816 = vld [vmem:[#allocation2 + $0xc0] sm:$0xff]
  %v1817 = vld [vmem:[#allocation2 + $0xc8] sm:$0xff]
  %v1818 = vld [vmem:[#allocation2 + $0xd0] sm:$0xff]
  %v1819 = vld [vmem:[#allocation2 + $0xd8] sm:$0xff]
  %v1820 = vld [vmem:[#allocation2 + $0xe0] sm:$0xff]
  %v1821 = vld [vmem:[#allocation2 + $0xe8] sm:$0xff]
  %v1822 = vld [vmem:[#allocation2 + $0xf0] sm:$0xff]
  %v1823 = vld [vmem:[#allocation2 + $0xf8] sm:$0xff]
  %v1824 = vld [vmem:[#allocation2 + $0x100] sm:$0xff]
  %v1825 = vld [vmem:[#allocation2 + $0x108] sm:$0xff]
  %v1826 = vld [vmem:[#allocation2 + $0x110] sm:$0xff]
  %v1827 = vld [vmem:[#allocation2 + $0x118] sm:$0xff]
  %v1828 = vld [vmem:[#allocation2 + $0x120] sm:$0xff]
  %v1829 = vld [vmem:[#allocation2 + $0x128] sm:$0xff]
  %v1830 = vld [vmem:[#allocation2 + $0x130] sm:$0xff]
  %v1831 = vld [vmem:[#allocation2 + $0x138] sm:$0xff]
  %v1832 = vld [vmem:[#allocation2 + $0x140] sm:$0xff]
  %v1833 = vld [vmem:[#allocation2 + $0x148] sm:$0xff]
  %v1834 = vld [vmem:[#allocation2 + $0x150] sm:$0xff]
  %v1835 = vld [vmem:[#allocation2 + $0x158] sm:$0xff]
  %v1836 = vld [vmem:[#allocation2 + $0x160] sm:$0xff]
  %v1837 = vld [vmem:[#allocation2 + $0x168] sm:$0xff]
  %v1838 = vld [vmem:[#allocation2 + $0x170] sm:$0xff]
  %v1839 = vld [vmem:[#allocation2 + $0x178] sm:$0xff]
  %v1840 = vld [vmem:[#allocation2 + $0x180] sm:$0xff]
  %v1841 = vld [vmem:[#allocation2 + $0x188] sm:$0xff]
  %v1842 = vld [vmem:[%s2] sm:$0xff]
  %v1843 = vld [vmem:[%s2 + $0x8] sm:$0xff]
  %v1844 = vld [vmem:[%s2 + $0x10] sm:$0xff]
  %v1845 = vld [vmem:[%s2 + $0x18] sm:$0x1]
  %v1850 = vperm.slane %v1842, 0
  %v1851 = vperm.slane %v1842, 1
  %v1852 = vperm.slane %v1842, 2
  %v1853 = vperm.slane %v1842, 3
  %v1854 = vperm.slane %v1842, 4
  %v1855 = vperm.slane %v1842, 5
  %v1856 = vperm.slane %v1842, 6
  %v1857 = vperm.slane %v1842, 7
  %v1858 = vperm.slane %v1843, 0
  %v1859 = vperm.slane %v1843, 1
  %v1860 = vperm.slane %v1843, 2
  %v1861 = vperm.slane %v1843, 3
  %v1862 = vperm.slane %v1843, 4
  %v1863 = vperm.slane %v1843, 5
  %v1864 = vperm.slane %v1843, 6
  %v1865 = vperm.slane %v1843, 7
  %v1866 = vperm.slane %v1844, 0
  %v1867 = vperm.slane %v1844, 1
  %v1868 = vperm.slane %v1844, 2
  %v1869 = vperm.slane %v1844, 3
  %v1870 = vperm.slane %v1844, 4
  %v1871 = vperm.slane %v1844, 5
  %v1872 = vperm.slane %v1844, 6
  %v1873 = vperm.slane %v1844, 7
  %v1874 = vperm.slane %v1845, 0
  %v1900 = vadd.f32 %v1792, %v1850
  %v1901 = vadd.f32 %v1793, %v1851
  %v1902 = vadd.f32 %v1794, %v1852
  %v1903 = vadd.f32 %v1795, %v1853
  %v1904 = vadd.f32 %v1796, %v1854
  %v1905 = vadd.f32 %v1797, %v1855
  %v1906 = vadd.f32 %v1798, %v1856
  %v1907 = vadd.f32 %v1799, %v1857
  %v1908 = vadd.f32 %v1800, %v1858
  %v1909 = vadd.f32 %v1801, %v1859
  %v1910 = vadd.f32 %v1802, %v1860
  %v1911 = vadd.f32 %v1803, %v1861
  %v1912 = vadd.f32 %v1804, %v1862
  %v1913 = vadd.f32 %v1805, %v1863
  %v1914 = vadd.f32 %v1806, %v1864
  %v1915 = vadd.f32 %v1807, %v1865
  %v1916 = vadd.f32 %v1808, %v1866
  %v1917 = vadd.f32 %v1809, %v1867
  %v1918 = vadd.f32 %v1810, %v1868
  %v1919 = vadd.f32 %v1811, %v1869
  %v1920 = vadd.f32 %v1812, %v1870
  %v1921 = vadd.f32 %v1813, %v1871
  %v1922 = vadd.f32 %v1814, %v1872
  %v1923 = vadd.f32 %v1815, %v1873
  %v1924 = vadd.f32 %v1816, %v1874
  %v1925 = vadd.f32 %v1817, %v1850
  %v1926 = vadd.f32 %v1818, %v1851
  %v1927 = vadd.f32 %v1819, %v1852
  %v1928 = vadd.f32 %v1820, %v1853
  %v1929 = vadd.f32 %v1821, %v1854
  %v1930 = vadd.f32 %v1822, %v1855
  %v1931 = vadd.f32 %v1823, %v1856
  %v1932 = vadd.f32 %v1824, %v1857
  %v1933 = vadd.f32 %v1825, %v1858
  %v1934 = vadd.f32 %v1826, %v1859
  %v1935 = vadd.f32 %v1827, %v1860
  %v1936 = vadd.f32 %v1828, %v1861
  %v1937 = vadd.f32 %v1829, %v1862
  %v1938 = vadd.f32 %v1830, %v1863
  %v1939 = vadd.f32 %v1831, %v1864
  %v1940 = vadd.f32 %v1832, %v1865
  %v1941 = vadd.f32 %v1833, %v1866
  %v1942 = vadd.f32 %v1834, %v1867
  %v1943 = vadd.f32 %v1835, %v1868
  %v1944 = vadd.f32 %v1836, %v1869
  %v1945 = vadd.f32 %v1837, %v1870
  %v1946 = vadd.f32 %v1838, %v1871
  %v1947 = vadd.f32 %v1839, %v1872
  %v1948 = vadd.f32 %v1840, %v1873
  %v1949 = vadd.f32 %v1841, %v1874
  %1950 = vst [vmem:[%s3] sm:$0xff] %v1900
  %1951 = vst [vmem:[%s3 + $0x8] sm:$0xff] %v1901
  %1952 = vst [vmem:[%s3 + $0x10] sm:$0xff] %v1902
  %1953 = vst [vmem:[%s3 + $0x18] sm:$0xff] %v1903
  %1954 = vst [vmem:[%s3 + $0x20] sm:$0xff] %v1904
  %1955 = vst [vmem:[%s3 + $0x28] sm:$0xff] %v1905
  %1956 = vst [vmem:[%s3 + $0x30] sm:$0xff] %v1906
  %1957 = vst [vmem:[%s3 + $0x38] sm:$0xff] %v1907
  %1958 = vst [vmem:[%s3 + $0x40] sm:$0xff] %v1908
  %1959 = vst [vmem:[%s3 + $0x48] sm:$0xff] %v1909
  %1960 = vst [vmem:[%s3 + $0x50] sm:$0xff] %v1910
  %1961 = vst [vmem:[%s3 + $0x58] sm:$0xff] %v1911
  %1962 = vst [vmem:[%s3 + $0x60] sm:$0xff] %v1912
  %1963 = vst [vmem:[%s3 + $0x68] sm:$0xff] %v1913
  %1964 = vst [vmem:[%s3 + $0x70] sm:$0xff] %v1914
  %1965 = vst [vmem:[%s3 + $0x78] sm:$0xff] %v1915
  %1966 = vst [vmem:[%s3 + $0x80] sm:$0xff] %v1916
  %1967 = vst [vmem:[%s3 + $0x88] sm:$0xff] %v1917
  %1968 = vst [vmem:[%s3 + $0x90] sm:$0xff] %v1918
  %1969 = vst [vmem:[%s3 + $0x98] sm:$0xff] %v1919
  %1970 = vst [vmem:[%s3 + $0xa0] sm:$0xff] %v1920
  %1971 = vst [vmem:[%s3 + $0xa8] sm:$0xff] %v1921
  %1972 = vst [vmem:[%s3 + $0xb0] sm:$0xff] %v1922
  %1973 = vst [vmem:[%s3 + $0xb8] sm:$0xff] %v1923
  %1974 = vst [vmem:[%s3 + $0xc0] sm:$0xff] %v1924
  %1975 = vst [vmem:[%s3 + $0xc8] sm:$0xff] %v1925
  %1976 = vst [vmem:[%s3 + $0xd0] sm:$0xff] %v1926
  %1977 = vst [vmem:[%s3 + $0xd8] sm:$0xff] %v1927
  %1978 = vst [vmem:[%s3 + $0xe0] sm:$0xff] %v1928
  %1979 = vst [vmem:[%s3 + $0xe8] sm:$0xff] %v1929
  %1980 = vst [vmem:[%s3 + $0xf0] sm:$0xff] %v1930
  %1981 = vst [vmem:[%s3 + $0xf8] sm:$0xff] %v1931
  %1982 = vst [vmem:[%s3 + $0x100] sm:$0xff] %v1932
  %1983 = vst [vmem:[%s3 + $0x108] sm:$0xff] %v1933
  %1984 = vst [vmem:[%s3 + $0x110] sm:$0xff] %v1934
  %1985 = vst [vmem:[%s3 + $0x118] sm:$0xff] %v1935
  %1986 = vst [vmem:[%s3 + $0x120] sm:$0xff] %v1936
  %1987 = vst [vmem:[%s3 + $0x128] sm:$0xff] %v1937
  %1988 = vst [vmem:[%s3 + $0x130] sm:$0xff] %v1938
  %1989 = vst [vmem:[%s3 + $0x138] sm:$0xff] %v1939
  %1990 = vst [vmem:[%s3 + $0x140] sm:$0xff] %v1940
  %1991 = vst [vmem:[%s3 + $0x148] sm:$0xff] %v1941
  %1992 = vst [vmem:[%s3 + $0x150] sm:$0xff] %v1942
  %1993 = vst [vmem:[%s3 + $0x158] sm:$0xff] %v1943
  %1994 = vst [vmem:[%s3 + $0x160] sm:$0xff] %v1944
  %1995 = vst [vmem:[%s3 + $0x168] sm:$0xff] %v1945
  %1996 = vst [vmem:[%s3 + $0x170] sm:$0xff] %v1946
  %1997 = vst [vmem:[%s3 + $0x178] sm:$0xff] %v1947
  %1998 = vst [vmem:[%s3 + $0x180] sm:$0xff] %v1948
  %1999 = vst [vmem:[%s3 + $0x188] sm:$0xff] %v1949
  // Predicated region
  $region18: #{video_autoencoder_lstm.18} parent=0 // pred_check
    _
  $region19: #{video_autoencoder_lstm.18} parent=0 // pred_check_branch
    %2001 = sbr.rel (0) target = $region21
  $region20: #{video_autoencoder_lstm.18} parent=0 // pred_region
    _
  $region21: #{video_autoencoder_lstm.18} parent=0 // pred_fallthru
    _
  // Predicated region
  $region22: #{video_autoencoder_lstm.18} parent=0 // pred_check
    _
  $region23: #{video_autoencoder_lstm.18} parent=0 // pred_check_branch
    %2003 = sbr.rel (0) target = $region25
  $region24: #{video_autoencoder_lstm.18} parent=0 // pred_region
    _
  $region25: #{video_autoencoder_lstm.18} parent=0 // pred_fallthru
    _

// kernel: video_autoencoder_lstm.19
$region0: #{video_autoencoder_lstm.19}
  #allocation0 [shape = 'u32[]', space=smem, size = 0x4, offset = 0x4, fixed_abs, tag = 'smem constant byte address 0x4 - core index']
  #allocation1 [shape = 'u32[72,128]{1,0:T(1,128)}', space=vmem, size = 0x9000, scoped, tag = 'internal scratch']
  #allocation2 [shape = 'f32[200,128]{1,0:T(8,128)}', space=vmem, size = 0x19000, scoped, tag = 'scratch operand']
  %s0 = inlined_call_operand.vmem [shape: bf16[200,128], index: 0, kind: input, shape index: {}]
  %s1 = inlined_call_operand.vmem [shape: bf16[128,128], index: 1, kind: input, shape index: {}]
  %s2 = inlined_call_operand.vmem [shape: f32[1,128], index: 2, kind: input, shape index: {}]
  %s3 = inlined_call_operand.vmem [shape: f32[200,128], index: 3, kind: output, shape index: {}]
  %s4 = sld [smem:[#allocation0]]
  $region26: #{video_autoencoder_lstm.19} parent=0
    _
  %s6 = ssub.s32 1, %s4
  %s7 = scalar_select 0, %s6, %s4
  // Predicated region
  $region2: #{video_autoencoder_lstm.19} parent=0 // pred_check
    _
  $region3: #{video_autoencoder_lstm.19} parent=0 // pred_check_branch
    %9 = sbr.rel (0) target = $region5
  $region4: #{video_autoencoder_lstm.19} parent=0 // pred_region
    _
  $region5: #{video_autoencoder_lstm.19} parent=0 // pred_fallthru
    _
  // Predicated region
  $region6: #{video_autoencoder_lstm.19} parent=0 // pred_check
    _
  $region7: #{video_autoencoder_lstm.19} parent=0 // pred_check_branch
    %11 = sbr.rel (0) target = $region9
  $region8: #{video_autoencoder_lstm.19} parent=0 // pred_region
    _
  $region9: #{video_autoencoder_lstm.19} parent=0 // pred_fallthru
    _
  // Predicated region
  $region10: #{video_autoencoder_lstm.19} parent=0 // pred_check
    _
  $region11: #{video_autoencoder_lstm.19} parent=0 // pred_check_branch
    %13 = sbr.rel (0) target = $region13
  $region12: #{video_autoencoder_lstm.19} parent=0 // pred_region
    _
  $region13: #{video_autoencoder_lstm.19} parent=0 // pred_fallthru
    _
  %p14 = scmp.eq.s32.totalorder 0, 0
  // Predicated region
  $region14: #{video_autoencoder_lstm.19} parent=0 // pred_check
    %p15 = pneg %p14
  $region15: #{video_autoencoder_lstm.19} parent=0 // pred_check_branch
    %17 = sbr.rel (%p15) target = $region17
  $region16: #{video_autoencoder_lstm.19} parent=0 // pred_region
    %18 = vst [vmem:[#allocation2] sm:$0xff] 0.0
    %19 = vst [vmem:[#allocation2 + $0x8] sm:$0xff] 0.0
    %20 = vst [vmem:[#allocation2 + $0x10] sm:$0xff] 0.0
    %21 = vst [vmem:[#allocation2 + $0x18] sm:$0xff] 0.0
    %22 = vst [vmem:[#allocation2 + $0x20] sm:$0xff] 0.0
    %23 = vst [vmem:[#allocation2 + $0x28] sm:$0xff] 0.0
    %24 = vst [vmem:[#allocation2 + $0x30] sm:$0xff] 0.0
    %25 = vst [vmem:[#allocation2 + $0x38] sm:$0xff] 0.0
    %26 = vst [vmem:[#allocation2 + $0x40] sm:$0xff] 0.0
    %27 = vst [vmem:[#allocation2 + $0x48] sm:$0xff] 0.0
    %28 = vst [vmem:[#allocation2 + $0x50] sm:$0xff] 0.0
    %29 = vst [vmem:[#allocation2 + $0x58] sm:$0xff] 0.0
    %30 = vst [vmem:[#allocation2 + $0x60] sm:$0xff] 0.0
    %31 = vst [vmem:[#allocation2 + $0x68] sm:$0xff] 0.0
    %32 = vst [vmem:[#allocation2 + $0x70] sm:$0xff] 0.0
    %33 = vst [vmem:[#allocation2 + $0x78] sm:$0xff] 0.0
    %34 = vst [vmem:[#allocation2 + $0x80] sm:$0xff] 0.0
    %35 = vst [vmem:[#allocation2 + $0x88] sm:$0xff] 0.0
    %36 = vst [vmem:[#allocation2 + $0x90] sm:$0xff] 0.0
    %37 = vst [vmem:[#allocation2 + $0x98] sm:$0xff] 0.0
    %38 = vst [vmem:[#allocation2 + $0xa0] sm:$0xff] 0.0
    %39 = vst [vmem:[#allocation2 + $0xa8] sm:$0xff] 0.0
    %40 = vst [vmem:[#allocation2 + $0xb0] sm:$0xff] 0.0
    %41 = vst [vmem:[#allocation2 + $0xb8] sm:$0xff] 0.0
    %42 = vst [vmem:[#allocation2 + $0xc0] sm:$0xff] 0.0
  $region17: #{video_autoencoder_lstm.19} parent=0 // pred_fallthru
    _
  %v43 = vld [vmem:[#allocation2] sm:$0xff]
  %v44 = vld [vmem:[#allocation2 + $0x8] sm:$0xff]
  %v45 = vld [vmem:[#allocation2 + $0x10] sm:$0xff]
  %v46 = vld [vmem:[#allocation2 + $0x18] sm:$0xff]
  %v47 = vld [vmem:[#allocation2 + $0x20] sm:$0xff]
  %v48 = vld [vmem:[#allocation2 + $0x28] sm:$0xff]
  %v49 = vld [vmem:[#allocation2 + $0x30] sm:$0xff]
  %v50 = vld [vmem:[#allocation2 + $0x38] sm:$0xff]
  %v51 = vld [vmem:[#allocation2 + $0x40] sm:$0xff]
  %v52 = vld [vmem:[#allocation2 + $0x48] sm:$0xff]
  %v53 = vld [vmem:[#allocation2 + $0x50] sm:$0xff]
  %v54 = vld [vmem:[#allocation2 + $0x58] sm:$0xff]
  %v55 = vld [vmem:[#allocation2 + $0x60] sm:$0xff]
  %v56 = vld [vmem:[#allocation2 + $0x68] sm:$0xff]
  %v57 = vld [vmem:[#allocation2 + $0x70] sm:$0xff]
  %v58 = vld [vmem:[#allocation2 + $0x78] sm:$0xff]
  %v59 = vld [vmem:[#allocation2 + $0x80] sm:$0xff]
  %v60 = vld [vmem:[#allocation2 + $0x88] sm:$0xff]
  %v61 = vld [vmem:[#allocation2 + $0x90] sm:$0xff]
  %v62 = vld [vmem:[#allocation2 + $0x98] sm:$0xff]
  %v63 = vld [vmem:[#allocation2 + $0xa0] sm:$0xff]
  %v64 = vld [vmem:[#allocation2 + $0xa8] sm:$0xff]
  %v65 = vld [vmem:[#allocation2 + $0xb0] sm:$0xff]
  %v66 = vld [vmem:[#allocation2 + $0xb8] sm:$0xff]
  %v67 = vld [vmem:[#allocation2 + $0xc0] sm:$0xff]
  %v68 = vld [vmem:[%s0] sm:$0xf]
  %v69 = vld [vmem:[%s0 + $0x4] sm:$0xf]
  %v70 = vld [vmem:[%s0 + $0x8] sm:$0xf]
  %v71 = vld [vmem:[%s0 + $0xc] sm:$0xf]
  %v72 = vld [vmem:[%s0 + $0x10] sm:$0xf]
  %v73 = vld [vmem:[%s0 + $0x14] sm:$0xf]
  %v74 = vld [vmem:[%s0 + $0x18] sm:$0xf]
  %v75 = vld [vmem:[%s0 + $0x1c] sm:$0xf]
  %v76 = vld [vmem:[%s0 + $0x20] sm:$0xf]
  %v77 = vld [vmem:[%s0 + $0x24] sm:$0xf]
  %v78 = vld [vmem:[%s0 + $0x28] sm:$0xf]
  %v79 = vld [vmem:[%s0 + $0x2c] sm:$0xf]
  %v80 = vld [vmem:[%s0 + $0x30] sm:$0xf]
  %v81 = vld [vmem:[%s0 + $0x34] sm:$0xf]
  %v82 = vld [vmem:[%s0 + $0x38] sm:$0xf]
  %v83 = vld [vmem:[%s0 + $0x3c] sm:$0xf]
  %v84 = vld [vmem:[%s0 + $0x40] sm:$0xf]
  %v85 = vld [vmem:[%s0 + $0x44] sm:$0xf]
  %v86 = vld [vmem:[%s0 + $0x48] sm:$0xf]
  %v87 = vld [vmem:[%s0 + $0x4c] sm:$0xf]
  %v88 = vld [vmem:[%s0 + $0x50] sm:$0xf]
  %v89 = vld [vmem:[%s0 + $0x54] sm:$0xf]
  %v90 = vld [vmem:[%s0 + $0x58] sm:$0xf]
  %v91 = vld [vmem:[%s0 + $0x5c] sm:$0xf]
  %v92 = vld [vmem:[%s0 + $0x60] sm:$0xf]
  %v93 = vld [vmem:[%s1] sm:$0xf]
  %v94 = vld [vmem:[%s1 + $0x4] sm:$0xf]
  %v95 = vld [vmem:[%s1 + $0x8] sm:$0xf]
  %v96 = vld [vmem:[%s1 + $0xc] sm:$0xf]
  %v97 = vld [vmem:[%s1 + $0x10] sm:$0xf]
  %v98 = vld [vmem:[%s1 + $0x14] sm:$0xf]
  %v99 = vld [vmem:[%s1 + $0x18] sm:$0xf]
  %v100 = vld [vmem:[%s1 + $0x1c] sm:$0xf]
  %v101 = vld [vmem:[%s1 + $0x20] sm:$0xf]
  %v102 = vld [vmem:[%s1 + $0x24] sm:$0xf]
  %v103 = vld [vmem:[%s1 + $0x28] sm:$0xf]
  %v104 = vld [vmem:[%s1 + $0x2c] sm:$0xf]
  %v105 = vld [vmem:[%s1 + $0x30] sm:$0xf]
  %v106 = vld [vmem:[%s1 + $0x34] sm:$0xf]
  %v107 = vld [vmem:[%s1 + $0x38] sm:$0xf]
  %v108 = vld [vmem:[%s1 + $0x3c] sm:$0xf]
  %v134 = vunpack.c.l.b16 %v68
  %v135 = vunpack.c.l.b16 %v69
  %v136 = vunpack.c.l.b16 %v70
  %v137 = vunpack.c.l.b16 %v71
  %v138 = vunpack.c.l.b16 %v72
  %v139 = vunpack.c.l.b16 %v73
  %v140 = vunpack.c.l.b16 %v74
  %v141 = vunpack.c.l.b16 %v75
  %v142 = vunpack.c.l.b16 %v76
  %v143 = vunpack.c.l.b16 %v77
  %v144 = vunpack.c.l.b16 %v78
  %v145 = vunpack.c.l.b16 %v79
  %v146 = vunpack.c.l.b16 %v80
  %v147 = vunpack.c.l.b16 %v81
  %v148 = vunpack.c.l.b16 %v82
  %v149 = vunpack.c.l.b16 %v83
  %v150 = vunpack.c.l.b16 %v84
  %v151 = vunpack.c.l.b16 %v85
  %v152 = vunpack.c.l.b16 %v86
  %v153 = vunpack.c.l.b16 %v87
  %v154 = vunpack.c.l.b16 %v88
  %v155 = vunpack.c.l.b16 %v89
  %v156 = vunpack.c.l.b16 %v90
  %v157 = vunpack.c.l.b16 %v91
  %v158 = vunpack.c.l.b16 %v92
  %v159 = vpack.c.b16 %v135, %v134
  %v160 = vpack.c.b16 %v137, %v136
  %v161 = vpack.c.b16 %v139, %v138
  %v162 = vpack.c.b16 %v141, %v140
  %v163 = vpack.c.b16 %v143, %v142
  %v164 = vpack.c.b16 %v145, %v144
  %v165 = vpack.c.b16 %v147, %v146
  %v166 = vpack.c.b16 %v149, %v148
  %v167 = vpack.c.b16 %v151, %v150
  %v168 = vpack.c.b16 %v153, %v152
  %v169 = vpack.c.b16 %v155, %v154
  %v170 = vpack.c.b16 %v157, %v156
  %v171 = vpack.c.b16 %v158, %v158
  %v201 = vunpack.c.l.b16 %v93
  %v202 = vunpack.c.l.b16 %v94
  %v203 = vunpack.c.l.b16 %v95
  %v204 = vunpack.c.l.b16 %v96
  %v205 = vunpack.c.l.b16 %v97
  %v206 = vunpack.c.l.b16 %v98
  %v207 = vunpack.c.l.b16 %v99
  %v208 = vunpack.c.l.b16 %v100
  %v209 = vunpack.c.l.b16 %v101
  %v210 = vunpack.c.l.b16 %v102
  %v211 = vunpack.c.l.b16 %v103
  %v212 = vunpack.c.l.b16 %v104
  %v213 = vunpack.c.l.b16 %v105
  %v214 = vunpack.c.l.b16 %v106
  %v215 = vunpack.c.l.b16 %v107
  %v216 = vunpack.c.l.b16 %v108
  %v217 = vpack.c.b16 %v202, %v201
  %v218 = vpack.c.b16 %v204, %v203
  %v219 = vpack.c.b16 %v206, %v205
  %v220 = vpack.c.b16 %v208, %v207
  %v221 = vpack.c.b16 %v210, %v209
  %v222 = vpack.c.b16 %v212, %v211
  %v223 = vpack.c.b16 %v214, %v213
  %v224 = vpack.c.b16 %v216, %v215
  %233 = vmatpush.bf16.msra.mxu0 %v224
  %234 = vmatpush.bf16.msra.mxu0 %v223
  %235 = vmatpush.bf16.msra.mxu0 %v222
  %236 = vmatpush.bf16.msra.mxu0 %v221
  %237 = vmatpush.bf16.msra.mxu0 %v220
  %238 = vmatpush.bf16.msra.mxu0 %v219
  %239 = vmatpush.bf16.msra.mxu0 %v218
  %240 = vmatpush.bf16.msra.mxu0 %v217
  %241 = vmatmul.bf16.gmra.mxu0 %v159
  %v242 = vpop.f32.mrf.mxu0
  %v243 = vadd.f32 0.0, %v242
  %v244 = vpop.f32.mrf.mxu0
  %v245 = vadd.f32 0.0, %v244
  %246 = vmatmul.bf16.gmra.mxu0 %v160
  %v247 = vpop.f32.mrf.mxu0
  %v248 = vadd.f32 0.0, %v247
  %v249 = vpop.f32.mrf.mxu0
  %v250 = vadd.f32 0.0, %v249
  %251 = vmatmul.bf16.gmra.mxu0 %v161
  %v252 = vpop.f32.mrf.mxu0
  %v253 = vadd.f32 0.0, %v252
  %v254 = vpop.f32.mrf.mxu0
  %v255 = vadd.f32 0.0, %v254
  %256 = vmatmul.bf16.gmra.mxu0 %v162
  %v257 = vpop.f32.mrf.mxu0
  %v258 = vadd.f32 0.0, %v257
  %v259 = vpop.f32.mrf.mxu0
  %v260 = vadd.f32 0.0, %v259
  %261 = vmatmul.bf16.gmra.mxu0 %v163
  %v262 = vpop.f32.mrf.mxu0
  %v263 = vadd.f32 0.0, %v262
  %v264 = vpop.f32.mrf.mxu0
  %v265 = vadd.f32 0.0, %v264
  %266 = vmatmul.bf16.gmra.mxu0 %v164
  %v267 = vpop.f32.mrf.mxu0
  %v268 = vadd.f32 0.0, %v267
  %v269 = vpop.f32.mrf.mxu0
  %v270 = vadd.f32 0.0, %v269
  %271 = vmatmul.bf16.gmra.mxu0 %v165
  %v272 = vpop.f32.mrf.mxu0
  %v273 = vadd.f32 0.0, %v272
  %v274 = vpop.f32.mrf.mxu0
  %v275 = vadd.f32 0.0, %v274
  %276 = vmatmul.bf16.gmra.mxu0 %v166
  %v277 = vpop.f32.mrf.mxu0
  %v278 = vadd.f32 0.0, %v277
  %v279 = vpop.f32.mrf.mxu0
  %v280 = vadd.f32 0.0, %v279
  %281 = vmatmul.bf16.gmra.mxu0 %v167
  %v282 = vpop.f32.mrf.mxu0
  %v283 = vadd.f32 0.0, %v282
  %v284 = vpop.f32.mrf.mxu0
  %v285 = vadd.f32 0.0, %v284
  %286 = vmatmul.bf16.gmra.mxu0 %v168
  %v287 = vpop.f32.mrf.mxu0
  %v288 = vadd.f32 0.0, %v287
  %v289 = vpop.f32.mrf.mxu0
  %v290 = vadd.f32 0.0, %v289
  %291 = vmatmul.bf16.gmra.mxu0 %v169
  %v292 = vpop.f32.mrf.mxu0
  %v293 = vadd.f32 0.0, %v292
  %v294 = vpop.f32.mrf.mxu0
  %v295 = vadd.f32 0.0, %v294
  %296 = vmatmul.bf16.gmra.mxu0 %v170
  %v297 = vpop.f32.mrf.mxu0
  %v298 = vadd.f32 0.0, %v297
  %v299 = vpop.f32.mrf.mxu0
  %v300 = vadd.f32 0.0, %v299
  %301 = vmatmul.bf16.gmra.mxu0 %v171
  %v302 = vpop.f32.mrf.mxu0
  %v303 = vadd.f32 0.0, %v302
  %v304 = vpop.f32.mrf.mxu0
  %305 = vdwg.mxu0
  %v306 = vadd.f32 %v43, %v243
  %v307 = vadd.f32 %v44, %v245
  %v308 = vadd.f32 %v45, %v248
  %v309 = vadd.f32 %v46, %v250
  %v310 = vadd.f32 %v47, %v253
  %v311 = vadd.f32 %v48, %v255
  %v312 = vadd.f32 %v49, %v258
  %v313 = vadd.f32 %v50, %v260
  %v314 = vadd.f32 %v51, %v263
  %v315 = vadd.f32 %v52, %v265
  %v316 = vadd.f32 %v53, %v268
  %v317 = vadd.f32 %v54, %v270
  %v318 = vadd.f32 %v55, %v273
  %v319 = vadd.f32 %v56, %v275
  %v320 = vadd.f32 %v57, %v278
  %v321 = vadd.f32 %v58, %v280
  %v322 = vadd.f32 %v59, %v283
  %v323 = vadd.f32 %v60, %v285
  %v324 = vadd.f32 %v61, %v288
  %v325 = vadd.f32 %v62, %v290
  %v326 = vadd.f32 %v63, %v293
  %v327 = vadd.f32 %v64, %v295
  %v328 = vadd.f32 %v65, %v298
  %v329 = vadd.f32 %v66, %v300
  %v330 = vadd.f32 %v67, %v303
  %331 = vst [vmem:[#allocation2] sm:$0xff] %v306
  %332 = vst [vmem:[#allocation2 + $0x8] sm:$0xff] %v307
  %333 = vst [vmem:[#allocation2 + $0x10] sm:$0xff] %v308
  %334 = vst [vmem:[#allocation2 + $0x18] sm:$0xff] %v309
  %335 = vst [vmem:[#allocation2 + $0x20] sm:$0xff] %v310
  %336 = vst [vmem:[#allocation2 + $0x28] sm:$0xff] %v311
  %337 = vst [vmem:[#allocation2 + $0x30] sm:$0xff] %v312
  %338 = vst [vmem:[#allocation2 + $0x38] sm:$0xff] %v313
  %339 = vst [vmem:[#allocation2 + $0x40] sm:$0xff] %v314
  %340 = vst [vmem:[#allocation2 + $0x48] sm:$0xff] %v315
  %341 = vst [vmem:[#allocation2 + $0x50] sm:$0xff] %v316
  %342 = vst [vmem:[#allocation2 + $0x58] sm:$0xff] %v317
  %343 = vst [vmem:[#allocation2 + $0x60] sm:$0xff] %v318
  %344 = vst [vmem:[#allocation2 + $0x68] sm:$0xff] %v319
  %345 = vst [vmem:[#allocation2 + $0x70] sm:$0xff] %v320
  %346 = vst [vmem:[#allocation2 + $0x78] sm:$0xff] %v321
  %347 = vst [vmem:[#allocation2 + $0x80] sm:$0xff] %v322
  %348 = vst [vmem:[#allocation2 + $0x88] sm:$0xff] %v323
  %349 = vst [vmem:[#allocation2 + $0x90] sm:$0xff] %v324
  %350 = vst [vmem:[#allocation2 + $0x98] sm:$0xff] %v325
  %351 = vst [vmem:[#allocation2 + $0xa0] sm:$0xff] %v326
  %352 = vst [vmem:[#allocation2 + $0xa8] sm:$0xff] %v327
  %353 = vst [vmem:[#allocation2 + $0xb0] sm:$0xff] %v328
  %354 = vst [vmem:[#allocation2 + $0xb8] sm:$0xff] %v329
  %355 = vst [vmem:[#allocation2 + $0xc0] sm:$0xff] %v330
  %v356 = vld [vmem:[#allocation2] sm:$0xff]
  %v357 = vld [vmem:[#allocation2 + $0x8] sm:$0xff]
  %v358 = vld [vmem:[#allocation2 + $0x10] sm:$0xff]
  %v359 = vld [vmem:[#allocation2 + $0x18] sm:$0xff]
  %v360 = vld [vmem:[#allocation2 + $0x20] sm:$0xff]
  %v361 = vld [vmem:[#allocation2 + $0x28] sm:$0xff]
  %v362 = vld [vmem:[#allocation2 + $0x30] sm:$0xff]
  %v363 = vld [vmem:[#allocation2 + $0x38] sm:$0xff]
  %v364 = vld [vmem:[#allocation2 + $0x40] sm:$0xff]
  %v365 = vld [vmem:[#allocation2 + $0x48] sm:$0xff]
  %v366 = vld [vmem:[#allocation2 + $0x50] sm:$0xff]
  %v367 = vld [vmem:[#allocation2 + $0x58] sm:$0xff]
  %v368 = vld [vmem:[#allocation2 + $0x60] sm:$0xff]
  %v369 = vld [vmem:[#allocation2 + $0x68] sm:$0xff]
  %v370 = vld [vmem:[#allocation2 + $0x70] sm:$0xff]
  %v371 = vld [vmem:[#allocation2 + $0x78] sm:$0xff]
  %v372 = vld [vmem:[#allocation2 + $0x80] sm:$0xff]
  %v373 = vld [vmem:[#allocation2 + $0x88] sm:$0xff]
  %v374 = vld [vmem:[#allocation2 + $0x90] sm:$0xff]
  %v375 = vld [vmem:[#allocation2 + $0x98] sm:$0xff]
  %v376 = vld [vmem:[#allocation2 + $0xa0] sm:$0xff]
  %v377 = vld [vmem:[#allocation2 + $0xa8] sm:$0xff]
  %v378 = vld [vmem:[#allocation2 + $0xb0] sm:$0xff]
  %v379 = vld [vmem:[#allocation2 + $0xb8] sm:$0xff]
  %v380 = vld [vmem:[#allocation2 + $0xc0] sm:$0xff]
  %v381 = vld [vmem:[%s2] sm:$0x1]
  %v383 = vperm.slane %v381, 0
  %v385 = vadd.f32 %v356, %v383
  %v386 = vadd.f32 %v357, %v383
  %v387 = vadd.f32 %v358, %v383
  %v388 = vadd.f32 %v359, %v383
  %v389 = vadd.f32 %v360, %v383
  %v390 = vadd.f32 %v361, %v383
  %v391 = vadd.f32 %v362, %v383
  %v392 = vadd.f32 %v363, %v383
  %v393 = vadd.f32 %v364, %v383
  %v394 = vadd.f32 %v365, %v383
  %v395 = vadd.f32 %v366, %v383
  %v396 = vadd.f32 %v367, %v383
  %v397 = vadd.f32 %v368, %v383
  %v398 = vadd.f32 %v369, %v383
  %v399 = vadd.f32 %v370, %v383
  %v400 = vadd.f32 %v371, %v383
  %v401 = vadd.f32 %v372, %v383
  %v402 = vadd.f32 %v373, %v383
  %v403 = vadd.f32 %v374, %v383
  %v404 = vadd.f32 %v375, %v383
  %v405 = vadd.f32 %v376, %v383
  %v406 = vadd.f32 %v377, %v383
  %v407 = vadd.f32 %v378, %v383
  %v408 = vadd.f32 %v379, %v383
  %v409 = vadd.f32 %v380, %v383
  %410 = vst [vmem:[%s3] sm:$0xff] %v385
  %411 = vst [vmem:[%s3 + $0x8] sm:$0xff] %v386
  %412 = vst [vmem:[%s3 + $0x10] sm:$0xff] %v387
  %413 = vst [vmem:[%s3 + $0x18] sm:$0xff] %v388
  %414 = vst [vmem:[%s3 + $0x20] sm:$0xff] %v389
  %415 = vst [vmem:[%s3 + $0x28] sm:$0xff] %v390
  %416 = vst [vmem:[%s3 + $0x30] sm:$0xff] %v391
  %417 = vst [vmem:[%s3 + $0x38] sm:$0xff] %v392
  %418 = vst [vmem:[%s3 + $0x40] sm:$0xff] %v393
  %419 = vst [vmem:[%s3 + $0x48] sm:$0xff] %v394
  %420 = vst [vmem:[%s3 + $0x50] sm:$0xff] %v395
  %421 = vst [vmem:[%s3 + $0x58] sm:$0xff] %v396
  %422 = vst [vmem:[%s3 + $0x60] sm:$0xff] %v397
  %423 = vst [vmem:[%s3 + $0x68] sm:$0xff] %v398
  %424 = vst [vmem:[%s3 + $0x70] sm:$0xff] %v399
  %425 = vst [vmem:[%s3 + $0x78] sm:$0xff] %v400
  %426 = vst [vmem:[%s3 + $0x80] sm:$0xff] %v401
  %427 = vst [vmem:[%s3 + $0x88] sm:$0xff] %v402
  %428 = vst [vmem:[%s3 + $0x90] sm:$0xff] %v403
  %429 = vst [vmem:[%s3 + $0x98] sm:$0xff] %v404
  %430 = vst [vmem:[%s3 + $0xa0] sm:$0xff] %v405
  %431 = vst [vmem:[%s3 + $0xa8] sm:$0xff] %v406
  %432 = vst [vmem:[%s3 + $0xb0] sm:$0xff] %v407
  %433 = vst [vmem:[%s3 + $0xb8] sm:$0xff] %v408
  %434 = vst [vmem:[%s3 + $0xc0] sm:$0xff] %v409
  // Predicated region
  $region18: #{video_autoencoder_lstm.19} parent=0 // pred_check
    _
  $region19: #{video_autoencoder_lstm.19} parent=0 // pred_check_branch
    %436 = sbr.rel (0) target = $region21
  $region20: #{video_autoencoder_lstm.19} parent=0 // pred_region
    _
  $region21: #{video_autoencoder_lstm.19} parent=0 // pred_fallthru
    _
  // Predicated region
  $region22: #{video_autoencoder_lstm.19} parent=0 // pred_check
    _
  $region23: #{video_autoencoder_lstm.19} parent=0 // pred_check_branch
    %438 = sbr.rel (0) target = $region25
  $region24: #{video_autoencoder_lstm.19} parent=0 // pred_region
    _
  $region25: #{video_autoencoder_lstm.19} parent=0 // pred_fallthru
    _

</llo_original>
